<compile_context>
chip_gen: v6e
topology: v6e:2x2x1
jax: 0.10.0
libtpu: 0.0.40
codegen_flags: <defaults>
</compile_context>

<pallas_src>
import functools

import numpy as np
import jax
import jax.numpy as jnp
from jax.experimental import pallas as pl
from jax.experimental.pallas import tpu as pltpu


def _cde_kernel(x0_ref, dx_ref,
                wi_ref, bi_ref,
                w0_ref, b0_ref, w1_ref, b1_ref, w2_ref, b2_ref,
                wo_ref, bo_ref, rsel_ref,
                ht_ref, *, n_steps, batch):
    """Single invocation: full Euler recurrence, statically unrolled over time.

    Weights (wi/w0/w1/w2/wo/rsel) are bf16; activations are cast to bf16 at
    each dot, accumulation is f32 (preferred_element_type); biases and all
    elementwise math stay f32.
    """

    def bdot(x, w_ref):
        return jnp.dot(x.astype(jnp.bfloat16), w_ref[...],
                       preferred_element_type=jnp.float32)

    # Hoist bias broadcasts out of the unrolled time loop (JAX does not CSE
    # broadcast_in_dim; inlining would emit one broadcast per bias per step).
    b0 = jnp.broadcast_to(b0_ref[...], (batch, b0_ref.shape[1]))   # (B, HH)
    b1 = jnp.broadcast_to(b1_ref[...], (batch, b1_ref.shape[1]))   # (B, HH)
    b2 = jnp.broadcast_to(b2_ref[...], (batch, b2_ref.shape[1]))   # (B, HH)
    bo = jnp.broadcast_to(bo_ref[...], (batch, bo_ref.shape[1]))   # (B, H*C)

    # h0 = initial(X_path(t0))
    z = bdot(x0_ref[...], wi_ref) + bi_ref[...]                    # (B, H) f32
    ht_ref[0] = z

    for i in range(1, n_steps):                                    # static unroll (T small)
        # FinalTanh vector field f(z): Linear->ReLU x3, Linear->tanh, all
        # channels fused into one wide (HH, H*C) matmul.
        h = jnp.maximum(bdot(z, w0_ref) + b0, 0.0)                 # (B, HH)
        h = jnp.maximum(bdot(h, w1_ref) + b1, 0.0)
        h = jnp.maximum(bdot(h, w2_ref) + b2, 0.0)
        f_full = jnp.tanh(bdot(h, wo_ref) + bo)                    # (B, H*C); f[b, h*C+c]
        # Euler step: dz[b, h] = sum_c f[b, h, c] * dX[b, c]
        prod = f_full * dx_ref[i - 1]                              # dX pre-tiled to (B, H*C)
        z = z + bdot(prod, rsel_ref)                               # (H*C, H) 0/1 selection
        ht_ref[i] = z


def run_neural_cde(batch_coeffs, params):
    """batch_coeffs: (B, T, C) linear-interpolation knots. Returns (ht, p_all)."""
    B, T, C = batch_coeffs.shape
    H = params['w_init'].shape[1]
    HC = H * C

    path = jnp.transpose(batch_coeffs, (1, 0, 2)).astype(jnp.float32)   # (T, B, C)
    x0 = path[0]                                                        # (B, C)
    # dX for each Euler interval, pre-tiled so dX_big[t, b, h*C + c] = dX[t, b, c]
    # (matches PyTorch's .view(batch, hidden, channels) flat index h*C + c).
    dX_big = jnp.tile(path[1:] - path[:-1], (1, 1, H))                  # (T-1, B, H*C)

    # 0/1 selection matrix: (prod @ R_sel)[b, h] = sum_c prod[b, h*C + c].
    rsel = (jnp.arange(HC)[:, None] // C
            == jnp.arange(H)[None, :]).astype(jnp.bfloat16)             # (H*C, H)

    bf16 = lambda w: w.astype(jnp.bfloat16)
    inputs = (x0, dX_big,
              bf16(params['w_init']), params['b_init'],
              bf16(params['w_in']),   params['b_in'],
              bf16(params['w_h1']),   params['b_h1'],
              bf16(params['w_h2']),   params['b_h2'],
              bf16(params['w_out']),  params['b_out'],
              rsel)

    vmem_spec = pl.BlockSpec(memory_space=pltpu.MemorySpace.VMEM)       # whole array in VMEM
    ht = pl.pallas_call(
        functools.partial(_cde_kernel, n_steps=T, batch=B),
        out_shape=jax.ShapeDtypeStruct((T, B, H), jnp.float32),
        in_specs=[vmem_spec] * len(inputs),
        out_specs=vmem_spec,
    )(*inputs)

    # p_model head (Linear -> ReLU -> Dropout(identity) -> Linear). Does not feed
    # the recurrence, so it is computed lane-dense outside the kernel in XLA.
    ph = jnp.maximum(jnp.einsum('tbh,hk->tbk', ht, params['w_p1']) + params['b_p1'], 0.0)
    p_all = jnp.einsum('tbk,kp->tbp', ph, params['w_p2']) + params['b_p2']
    return ht, p_all


def make_params(key, C, H, HH, input_orig):
    """Deterministic xavier_uniform weights, biases filled with 0.01 (as in init_weights)."""
    P = input_orig - 1
    ks = jax.random.split(key, 7)

    def xavier(k, fi, fo):
        bound = float(np.sqrt(6.0 / (fi + fo)))
        return jax.random.uniform(k, (fi, fo), jnp.float32, -bound, bound)

    bias = lambda n: jnp.full((1, n), 0.01, jnp.float32)
    return dict(
        w_init=xavier(ks[0], C, H),       b_init=bias(H),       # self.initial
        w_in=xavier(ks[1], H, HH),        b_in=bias(HH),        # FinalTanh.linear_in
        w_h1=xavier(ks[2], HH, HH),       b_h1=bias(HH),        # FinalTanh.linears[0]
        w_h2=xavier(ks[3], HH, HH),       b_h2=bias(HH),        # FinalTanh.linears[1]
        w_out=xavier(ks[4], HH, H * C),   b_out=bias(H * C),    # FinalTanh.linear_out
        w_p1=xavier(ks[5], H, H),         b_p1=bias(H),         # p_model[0]
        w_p2=xavier(ks[6], H, P),         b_p2=bias(P),         # p_model[3]
    )


if __name__ == "__main__":
    # args: input_size=4, sub_series=2, hidden_size=32, dropout=0.0, solver='euler'
    input_orig = 4
    sub_series = 2
    C = input_orig * sub_series + 1      # self.input_size = 4*2 + 1 = 9
    H = 32                               # hidden_size
    HH = 50                              # hidden_hidden_size
    B = 4                                # batch
    T = 8                                # number of observation times
    dt = 1.0
    P = input_orig - 1

    key = jax.random.PRNGKey(0)
    kp, kc, kx, km = jax.random.split(key, 4)
    params = make_params(kp, C, H, HH, input_orig)

    batch_coeffs = jax.random.normal(kc, (B, T, C), jnp.float32)
    obs_times = np.arange(T, dtype=np.float32) * dt
    event_pt = (np.arange(T + 1) * B).tolist()                 # B observations per time
    batch_idx = jnp.tile(jnp.arange(B, dtype=jnp.int32), T)    # (T*B,)
    N = T * B
    X = jax.random.normal(kx, (N, input_orig, 1), jnp.float32)
    M = (jax.random.uniform(km, (N, input_orig)) > 0.3).astype(jnp.float32)

    # --- Pallas hot path: CDE Euler integration (+ XLA p_model head) ---
    ht, p_all = jax.jit(run_neural_cde)(batch_coeffs, params)

    # --- Loss accumulation (glue, data-dependent gather kept in plain JAX) ---
    loss_mse = jnp.float32(0.0)
    loss_mae = jnp.float32(0.0)
    loss_mape = jnp.float32(0.0)
    total_M = jnp.float32(0.0)
    current_time = 0.0
    for i in range(T):
        start, end = event_pt[i], event_pt[i + 1]
        if current_time > 0:
            X_obs = X[start:end, :, 0][:, 1:]                  # (n, input_orig-1)
            M_obs = M[start:end, 1:]
            i_obs = batch_idx[start:end]
            p_obs = p_all[i][i_obs]                            # (n, P)
            loss_mse = loss_mse + jnp.sum(jnp.square(X_obs - p_obs) * M_obs)
            loss_mae = loss_mae + jnp.sum(jnp.abs(X_obs - p_obs) * M_obs)
            loss_mape = loss_mape + jnp.sum(jnp.abs(X_obs - p_obs) / (X_obs + 1e-8) * M_obs)
            total_M = total_M + jnp.sum(M_obs)
        current_time = current_time + dt

    out = (loss_mse / total_M, loss_mae / total_M, loss_mape / total_M)
    jax.block_until_ready((ht, p_all))
    jax.block_until_ready(out)
    print("KERNEL_OK")
</pallas_src>

<mosaic_0001>
module attributes {stable_mosaic.version = 11 : i64} {
  func.func @_cde_kernel(%arg0: memref<4x9xf32, #tpu.memory_space<vmem>>, %arg1: memref<7x4x288xf32, #tpu.memory_space<vmem>>, %arg2: memref<9x32xbf16, #tpu.memory_space<vmem>>, %arg3: memref<1x32xf32, #tpu.memory_space<vmem>>, %arg4: memref<32x50xbf16, #tpu.memory_space<vmem>>, %arg5: memref<1x50xf32, #tpu.memory_space<vmem>>, %arg6: memref<50x50xbf16, #tpu.memory_space<vmem>>, %arg7: memref<1x50xf32, #tpu.memory_space<vmem>>, %arg8: memref<50x50xbf16, #tpu.memory_space<vmem>>, %arg9: memref<1x50xf32, #tpu.memory_space<vmem>>, %arg10: memref<50x288xbf16, #tpu.memory_space<vmem>>, %arg11: memref<1x288xf32, #tpu.memory_space<vmem>>, %arg12: memref<288x32xbf16, #tpu.memory_space<vmem>>, %arg13: memref<8x4x32xf32, #tpu.memory_space<vmem>>) attributes {dimension_semantics = [], scalar_prefetch = 0 : i64, scratch_operands = 0 : i64, tpu.core_type = #tpu.core_type<tc>} {
    %c0 = arith.constant 0 : index
    %c0_0 = arith.constant 0 : index
    %0 = vector.load %arg5[%c0, %c0_0] : memref<1x50xf32, #tpu.memory_space<vmem>>, vector<1x50xf32>
    %1 = vector.shape_cast %0 : vector<1x50xf32> to vector<1x50xf32>
    %2 = vector.broadcast %1 : vector<1x50xf32> to vector<4x50xf32>
    %c0_1 = arith.constant 0 : index
    %c0_2 = arith.constant 0 : index
    %3 = vector.load %arg7[%c0_1, %c0_2] : memref<1x50xf32, #tpu.memory_space<vmem>>, vector<1x50xf32>
    %4 = vector.shape_cast %3 : vector<1x50xf32> to vector<1x50xf32>
    %5 = vector.broadcast %4 : vector<1x50xf32> to vector<4x50xf32>
    %c0_3 = arith.constant 0 : index
    %c0_4 = arith.constant 0 : index
    %6 = vector.load %arg9[%c0_3, %c0_4] : memref<1x50xf32, #tpu.memory_space<vmem>>, vector<1x50xf32>
    %7 = vector.shape_cast %6 : vector<1x50xf32> to vector<1x50xf32>
    %8 = vector.broadcast %7 : vector<1x50xf32> to vector<4x50xf32>
    %c0_5 = arith.constant 0 : index
    %c0_6 = arith.constant 0 : index
    %9 = vector.load %arg11[%c0_5, %c0_6] : memref<1x288xf32, #tpu.memory_space<vmem>>, vector<1x288xf32>
    %10 = vector.shape_cast %9 : vector<1x288xf32> to vector<1x288xf32>
    %11 = vector.broadcast %10 : vector<1x288xf32> to vector<4x288xf32>
    %c0_7 = arith.constant 0 : index
    %c0_8 = arith.constant 0 : index
    %12 = vector.load %arg0[%c0_7, %c0_8] : memref<4x9xf32, #tpu.memory_space<vmem>>, vector<4x9xf32>
    %13 = arith.truncf %12 : vector<4x9xf32> to vector<4x9xbf16>
    %c0_9 = arith.constant 0 : index
    %c0_10 = arith.constant 0 : index
    %14 = vector.load %arg2[%c0_9, %c0_10] : memref<9x32xbf16, #tpu.memory_space<vmem>>, vector<9x32xbf16>
    %cst = arith.constant dense<0.000000e+00> : vector<4x32xf32>
    %15 = tpu.matmul %13, %14, %cst {dimension_numbers = #tpu.dot_dimension_numbers<[1], [0], [0], [1], [0, 0, 1, 1], [], []>} : vector<4x9xbf16>, vector<9x32xbf16>, vector<4x32xf32> -> vector<4x32xf32>
    %c0_11 = arith.constant 0 : index
    %c0_12 = arith.constant 0 : index
    %16 = vector.load %arg3[%c0_11, %c0_12] : memref<1x32xf32, #tpu.memory_space<vmem>>, vector<1x32xf32>
    %17 = vector.broadcast %16 : vector<1x32xf32> to vector<4x32xf32>
    %18 = arith.addf %15, %17 : vector<4x32xf32>
    %c0_13 = arith.constant 0 : index
    %c0_14 = arith.constant 0 : index
    %c0_15 = arith.constant 0 : index
    %19 = vector.load %arg13[%c0_13, %c0_14, %c0_15] : memref<8x4x32xf32, #tpu.memory_space<vmem>>, vector<1x4x32xf32>
    %20 = vector.shape_cast %19 : vector<1x4x32xf32> to vector<4x32xf32>
    %21 = vector.shape_cast %18 : vector<4x32xf32> to vector<1x4x32xf32>
    tpu.vector_store %arg13[%c0_13, %c0_14, %c0_15], %21 {strides = array<i32>} : memref<8x4x32xf32, #tpu.memory_space<vmem>>, vector<1x4x32xf32>,
    %22 = arith.truncf %18 : vector<4x32xf32> to vector<4x32xbf16>
    %c0_16 = arith.constant 0 : index
    %c0_17 = arith.constant 0 : index
    %23 = vector.load %arg4[%c0_16, %c0_17] : memref<32x50xbf16, #tpu.memory_space<vmem>>, vector<32x50xbf16>
    %cst_18 = arith.constant dense<0.000000e+00> : vector<4x50xf32>
    %24 = tpu.matmul %22, %23, %cst_18 {dimension_numbers = #tpu.dot_dimension_numbers<[1], [0], [0], [1], [0, 0, 1, 1], [], []>} : vector<4x32xbf16>, vector<32x50xbf16>, vector<4x50xf32> -> vector<4x50xf32>
    %25 = arith.addf %24, %2 : vector<4x50xf32>
    %cst_19 = arith.constant 0.000000e+00 : f32
    %26 = vector.broadcast %cst_19 : f32 to vector<4x50xf32>
    %27 = arith.maximumf %25, %26 : vector<4x50xf32>
    %28 = arith.truncf %27 : vector<4x50xf32> to vector<4x50xbf16>
    %c0_20 = arith.constant 0 : index
    %c0_21 = arith.constant 0 : index
    %29 = vector.load %arg6[%c0_20, %c0_21] : memref<50x50xbf16, #tpu.memory_space<vmem>>, vector<50x50xbf16>
    %cst_22 = arith.constant dense<0.000000e+00> : vector<4x50xf32>
    %30 = tpu.matmul %28, %29, %cst_22 {dimension_numbers = #tpu.dot_dimension_numbers<[1], [0], [0], [1], [0, 0, 1, 1], [], []>} : vector<4x50xbf16>, vector<50x50xbf16>, vector<4x50xf32> -> vector<4x50xf32>
    %31 = arith.addf %30, %5 : vector<4x50xf32>
    %cst_23 = arith.constant 0.000000e+00 : f32
    %32 = vector.broadcast %cst_23 : f32 to vector<4x50xf32>
    %33 = arith.maximumf %31, %32 : vector<4x50xf32>
    %34 = arith.truncf %33 : vector<4x50xf32> to vector<4x50xbf16>
    %c0_24 = arith.constant 0 : index
    %c0_25 = arith.constant 0 : index
    %35 = vector.load %arg8[%c0_24, %c0_25] : memref<50x50xbf16, #tpu.memory_space<vmem>>, vector<50x50xbf16>
    %cst_26 = arith.constant dense<0.000000e+00> : vector<4x50xf32>
    %36 = tpu.matmul %34, %35, %cst_26 {dimension_numbers = #tpu.dot_dimension_numbers<[1], [0], [0], [1], [0, 0, 1, 1], [], []>} : vector<4x50xbf16>, vector<50x50xbf16>, vector<4x50xf32> -> vector<4x50xf32>
    %37 = arith.addf %36, %8 : vector<4x50xf32>
    %cst_27 = arith.constant 0.000000e+00 : f32
    %38 = vector.broadcast %cst_27 : f32 to vector<4x50xf32>
    %39 = arith.maximumf %37, %38 : vector<4x50xf32>
    %40 = arith.truncf %39 : vector<4x50xf32> to vector<4x50xbf16>
    %c0_28 = arith.constant 0 : index
    %c0_29 = arith.constant 0 : index
    %41 = vector.load %arg10[%c0_28, %c0_29] : memref<50x288xbf16, #tpu.memory_space<vmem>>, vector<50x288xbf16>
    %cst_30 = arith.constant dense<0.000000e+00> : vector<4x288xf32>
    %42 = tpu.matmul %40, %41, %cst_30 {dimension_numbers = #tpu.dot_dimension_numbers<[1], [0], [0], [1], [0, 0, 1, 1], [], []>} : vector<4x50xbf16>, vector<50x288xbf16>, vector<4x288xf32> -> vector<4x288xf32>
    %43 = arith.addf %42, %11 : vector<4x288xf32>
    %44 = math.tanh %43 : vector<4x288xf32>
    %c0_31 = arith.constant 0 : index
    %c0_32 = arith.constant 0 : index
    %c0_33 = arith.constant 0 : index
    %45 = vector.load %arg1[%c0_31, %c0_32, %c0_33] : memref<7x4x288xf32, #tpu.memory_space<vmem>>, vector<1x4x288xf32>
    %46 = vector.shape_cast %45 : vector<1x4x288xf32> to vector<4x288xf32>
    %47 = arith.mulf %44, %46 : vector<4x288xf32>
    %48 = arith.truncf %47 : vector<4x288xf32> to vector<4x288xbf16>
    %c0_34 = arith.constant 0 : index
    %c0_35 = arith.constant 0 : index
    %49 = vector.load %arg12[%c0_34, %c0_35] : memref<288x32xbf16, #tpu.memory_space<vmem>>, vector<288x32xbf16>
    %cst_36 = arith.constant dense<0.000000e+00> : vector<4x32xf32>
    %50 = tpu.matmul %48, %49, %cst_36 {dimension_numbers = #tpu.dot_dimension_numbers<[1], [0], [0], [1], [0, 0, 1, 1], [], []>} : vector<4x288xbf16>, vector<288x32xbf16>, vector<4x32xf32> -> vector<4x32xf32>
    %51 = arith.addf %18, %50 : vector<4x32xf32>
    %c1 = arith.constant 1 : index
    %c0_37 = arith.constant 0 : index
    %c0_38 = arith.constant 0 : index
    %52 = vector.load %arg13[%c1, %c0_37, %c0_38] : memref<8x4x32xf32, #tpu.memory_space<vmem>>, vector<1x4x32xf32>
    %53 = vector.shape_cast %52 : vector<1x4x32xf32> to vector<4x32xf32>
    %54 = vector.shape_cast %51 : vector<4x32xf32> to vector<1x4x32xf32>
    tpu.vector_store %arg13[%c1, %c0_37, %c0_38], %54 {strides = array<i32>} : memref<8x4x32xf32, #tpu.memory_space<vmem>>, vector<1x4x32xf32>,
    %55 = arith.truncf %51 : vector<4x32xf32> to vector<4x32xbf16>
    %c0_39 = arith.constant 0 : index
    %c0_40 = arith.constant 0 : index
    %56 = vector.load %arg4[%c0_39, %c0_40] : memref<32x50xbf16, #tpu.memory_space<vmem>>, vector<32x50xbf16>
    %cst_41 = arith.constant dense<0.000000e+00> : vector<4x50xf32>
    %57 = tpu.matmul %55, %56, %cst_41 {dimension_numbers = #tpu.dot_dimension_numbers<[1], [0], [0], [1], [0, 0, 1, 1], [], []>} : vector<4x32xbf16>, vector<32x50xbf16>, vector<4x50xf32> -> vector<4x50xf32>
    %58 = arith.addf %57, %2 : vector<4x50xf32>
    %cst_42 = arith.constant 0.000000e+00 : f32
    %59 = vector.broadcast %cst_42 : f32 to vector<4x50xf32>
    %60 = arith.maximumf %58, %59 : vector<4x50xf32>
    %61 = arith.truncf %60 : vector<4x50xf32> to vector<4x50xbf16>
    %c0_43 = arith.constant 0 : index
    %c0_44 = arith.constant 0 : index
    %62 = vector.load %arg6[%c0_43, %c0_44] : memref<50x50xbf16, #tpu.memory_space<vmem>>, vector<50x50xbf16>
    %cst_45 = arith.constant dense<0.000000e+00> : vector<4x50xf32>
    %63 = tpu.matmul %61, %62, %cst_45 {dimension_numbers = #tpu.dot_dimension_numbers<[1], [0], [0], [1], [0, 0, 1, 1], [], []>} : vector<4x50xbf16>, vector<50x50xbf16>, vector<4x50xf32> -> vector<4x50xf32>
    %64 = arith.addf %63, %5 : vector<4x50xf32>
    %cst_46 = arith.constant 0.000000e+00 : f32
    %65 = vector.broadcast %cst_46 : f32 to vector<4x50xf32>
    %66 = arith.maximumf %64, %65 : vector<4x50xf32>
    %67 = arith.truncf %66 : vector<4x50xf32> to vector<4x50xbf16>
    %c0_47 = arith.constant 0 : index
    %c0_48 = arith.constant 0 : index
    %68 = vector.load %arg8[%c0_47, %c0_48] : memref<50x50xbf16, #tpu.memory_space<vmem>>, vector<50x50xbf16>
    %cst_49 = arith.constant dense<0.000000e+00> : vector<4x50xf32>
    %69 = tpu.matmul %67, %68, %cst_49 {dimension_numbers = #tpu.dot_dimension_numbers<[1], [0], [0], [1], [0, 0, 1, 1], [], []>} : vector<4x50xbf16>, vector<50x50xbf16>, vector<4x50xf32> -> vector<4x50xf32>
    %70 = arith.addf %69, %8 : vector<4x50xf32>
    %cst_50 = arith.constant 0.000000e+00 : f32
    %71 = vector.broadcast %cst_50 : f32 to vector<4x50xf32>
    %72 = arith.maximumf %70, %71 : vector<4x50xf32>
    %73 = arith.truncf %72 : vector<4x50xf32> to vector<4x50xbf16>
    %c0_51 = arith.constant 0 : index
    %c0_52 = arith.constant 0 : index
    %74 = vector.load %arg10[%c0_51, %c0_52] : memref<50x288xbf16, #tpu.memory_space<vmem>>, vector<50x288xbf16>
    %cst_53 = arith.constant dense<0.000000e+00> : vector<4x288xf32>
    %75 = tpu.matmul %73, %74, %cst_53 {dimension_numbers = #tpu.dot_dimension_numbers<[1], [0], [0], [1], [0, 0, 1, 1], [], []>} : vector<4x50xbf16>, vector<50x288xbf16>, vector<4x288xf32> -> vector<4x288xf32>
    %76 = arith.addf %75, %11 : vector<4x288xf32>
    %77 = math.tanh %76 : vector<4x288xf32>
    %c1_54 = arith.constant 1 : index
    %c0_55 = arith.constant 0 : index
    %c0_56 = arith.constant 0 : index
    %78 = vector.load %arg1[%c1_54, %c0_55, %c0_56] : memref<7x4x288xf32, #tpu.memory_space<vmem>>, vector<1x4x288xf32>
    %79 = vector.shape_cast %78 : vector<1x4x288xf32> to vector<4x288xf32>
    %80 = arith.mulf %77, %79 : vector<4x288xf32>
    %81 = arith.truncf %80 : vector<4x288xf32> to vector<4x288xbf16>
    %c0_57 = arith.constant 0 : index
    %c0_58 = arith.constant 0 : index
    %82 = vector.load %arg12[%c0_57, %c0_58] : memref<288x32xbf16, #tpu.memory_space<vmem>>, vector<288x32xbf16>
    %cst_59 = arith.constant dense<0.000000e+00> : vector<4x32xf32>
    %83 = tpu.matmul %81, %82, %cst_59 {dimension_numbers = #tpu.dot_dimension_numbers<[1], [0], [0], [1], [0, 0, 1, 1], [], []>} : vector<4x288xbf16>, vector<288x32xbf16>, vector<4x32xf32> -> vector<4x32xf32>
    %84 = arith.addf %51, %83 : vector<4x32xf32>
    %c2 = arith.constant 2 : index
    %c0_60 = arith.constant 0 : index
    %c0_61 = arith.constant 0 : index
    %85 = vector.load %arg13[%c2, %c0_60, %c0_61] : memref<8x4x32xf32, #tpu.memory_space<vmem>>, vector<1x4x32xf32>
    %86 = vector.shape_cast %85 : vector<1x4x32xf32> to vector<4x32xf32>
    %87 = vector.shape_cast %84 : vector<4x32xf32> to vector<1x4x32xf32>
    tpu.vector_store %arg13[%c2, %c0_60, %c0_61], %87 {strides = array<i32>} : memref<8x4x32xf32, #tpu.memory_space<vmem>>, vector<1x4x32xf32>,
    %88 = arith.truncf %84 : vector<4x32xf32> to vector<4x32xbf16>
    %c0_62 = arith.constant 0 : index
    %c0_63 = arith.constant 0 : index
    %89 = vector.load %arg4[%c0_62, %c0_63] : memref<32x50xbf16, #tpu.memory_space<vmem>>, vector<32x50xbf16>
    %cst_64 = arith.constant dense<0.000000e+00> : vector<4x50xf32>
    %90 = tpu.matmul %88, %89, %cst_64 {dimension_numbers = #tpu.dot_dimension_numbers<[1], [0], [0], [1], [0, 0, 1, 1], [], []>} : vector<4x32xbf16>, vector<32x50xbf16>, vector<4x50xf32> -> vector<4x50xf32>
    %91 = arith.addf %90, %2 : vector<4x50xf32>
    %cst_65 = arith.constant 0.000000e+00 : f32
    %92 = vector.broadcast %cst_65 : f32 to vector<4x50xf32>
    %93 = arith.maximumf %91, %92 : vector<4x50xf32>
    %94 = arith.truncf %93 : vector<4x50xf32> to vector<4x50xbf16>
    %c0_66 = arith.constant 0 : index
    %c0_67 = arith.constant 0 : index
    %95 = vector.load %arg6[%c0_66, %c0_67] : memref<50x50xbf16, #tpu.memory_space<vmem>>, vector<50x50xbf16>
    %cst_68 = arith.constant dense<0.000000e+00> : vector<4x50xf32>
    %96 = tpu.matmul %94, %95, %cst_68 {dimension_numbers = #tpu.dot_dimension_numbers<[1], [0], [0], [1], [0, 0, 1, 1], [], []>} : vector<4x50xbf16>, vector<50x50xbf16>, vector<4x50xf32> -> vector<4x50xf32>
    %97 = arith.addf %96, %5 : vector<4x50xf32>
    %cst_69 = arith.constant 0.000000e+00 : f32
    %98 = vector.broadcast %cst_69 : f32 to vector<4x50xf32>
    %99 = arith.maximumf %97, %98 : vector<4x50xf32>
    %100 = arith.truncf %99 : vector<4x50xf32> to vector<4x50xbf16>
    %c0_70 = arith.constant 0 : index
    %c0_71 = arith.constant 0 : index
    %101 = vector.load %arg8[%c0_70, %c0_71] : memref<50x50xbf16, #tpu.memory_space<vmem>>, vector<50x50xbf16>
    %cst_72 = arith.constant dense<0.000000e+00> : vector<4x50xf32>
    %102 = tpu.matmul %100, %101, %cst_72 {dimension_numbers = #tpu.dot_dimension_numbers<[1], [0], [0], [1], [0, 0, 1, 1], [], []>} : vector<4x50xbf16>, vector<50x50xbf16>, vector<4x50xf32> -> vector<4x50xf32>
    %103 = arith.addf %102, %8 : vector<4x50xf32>
    %cst_73 = arith.constant 0.000000e+00 : f32
    %104 = vector.broadcast %cst_73 : f32 to vector<4x50xf32>
    %105 = arith.maximumf %103, %104 : vector<4x50xf32>
    %106 = arith.truncf %105 : vector<4x50xf32> to vector<4x50xbf16>
    %c0_74 = arith.constant 0 : index
    %c0_75 = arith.constant 0 : index
    %107 = vector.load %arg10[%c0_74, %c0_75] : memref<50x288xbf16, #tpu.memory_space<vmem>>, vector<50x288xbf16>
    %cst_76 = arith.constant dense<0.000000e+00> : vector<4x288xf32>
    %108 = tpu.matmul %106, %107, %cst_76 {dimension_numbers = #tpu.dot_dimension_numbers<[1], [0], [0], [1], [0, 0, 1, 1], [], []>} : vector<4x50xbf16>, vector<50x288xbf16>, vector<4x288xf32> -> vector<4x288xf32>
    %109 = arith.addf %108, %11 : vector<4x288xf32>
    %110 = math.tanh %109 : vector<4x288xf32>
    %c2_77 = arith.constant 2 : index
    %c0_78 = arith.constant 0 : index
    %c0_79 = arith.constant 0 : index
    %111 = vector.load %arg1[%c2_77, %c0_78, %c0_79] : memref<7x4x288xf32, #tpu.memory_space<vmem>>, vector<1x4x288xf32>
    %112 = vector.shape_cast %111 : vector<1x4x288xf32> to vector<4x288xf32>
    %113 = arith.mulf %110, %112 : vector<4x288xf32>
    %114 = arith.truncf %113 : vector<4x288xf32> to vector<4x288xbf16>
    %c0_80 = arith.constant 0 : index
    %c0_81 = arith.constant 0 : index
    %115 = vector.load %arg12[%c0_80, %c0_81] : memref<288x32xbf16, #tpu.memory_space<vmem>>, vector<288x32xbf16>
    %cst_82 = arith.constant dense<0.000000e+00> : vector<4x32xf32>
    %116 = tpu.matmul %114, %115, %cst_82 {dimension_numbers = #tpu.dot_dimension_numbers<[1], [0], [0], [1], [0, 0, 1, 1], [], []>} : vector<4x288xbf16>, vector<288x32xbf16>, vector<4x32xf32> -> vector<4x32xf32>
    %117 = arith.addf %84, %116 : vector<4x32xf32>
    %c3 = arith.constant 3 : index
    %c0_83 = arith.constant 0 : index
    %c0_84 = arith.constant 0 : index
    %118 = vector.load %arg13[%c3, %c0_83, %c0_84] : memref<8x4x32xf32, #tpu.memory_space<vmem>>, vector<1x4x32xf32>
    %119 = vector.shape_cast %118 : vector<1x4x32xf32> to vector<4x32xf32>
    %120 = vector.shape_cast %117 : vector<4x32xf32> to vector<1x4x32xf32>
    tpu.vector_store %arg13[%c3, %c0_83, %c0_84], %120 {strides = array<i32>} : memref<8x4x32xf32, #tpu.memory_space<vmem>>, vector<1x4x32xf32>,
    %121 = arith.truncf %117 : vector<4x32xf32> to vector<4x32xbf16>
    %c0_85 = arith.constant 0 : index
    %c0_86 = arith.constant 0 : index
    %122 = vector.load %arg4[%c0_85, %c0_86] : memref<32x50xbf16, #tpu.memory_space<vmem>>, vector<32x50xbf16>
    %cst_87 = arith.constant dense<0.000000e+00> : vector<4x50xf32>
    %123 = tpu.matmul %121, %122, %cst_87 {dimension_numbers = #tpu.dot_dimension_numbers<[1], [0], [0], [1], [0, 0, 1, 1], [], []>} : vector<4x32xbf16>, vector<32x50xbf16>, vector<4x50xf32> -> vector<4x50xf32>
    %124 = arith.addf %123, %2 : vector<4x50xf32>
    %cst_88 = arith.constant 0.000000e+00 : f32
    %125 = vector.broadcast %cst_88 : f32 to vector<4x50xf32>
    %126 = arith.maximumf %124, %125 : vector<4x50xf32>
    %127 = arith.truncf %126 : vector<4x50xf32> to vector<4x50xbf16>
    %c0_89 = arith.constant 0 : index
    %c0_90 = arith.constant 0 : index
    %128 = vector.load %arg6[%c0_89, %c0_90] : memref<50x50xbf16, #tpu.memory_space<vmem>>, vector<50x50xbf16>
    %cst_91 = arith.constant dense<0.000000e+00> : vector<4x50xf32>
    %129 = tpu.matmul %127, %128, %cst_91 {dimension_numbers = #tpu.dot_dimension_numbers<[1], [0], [0], [1], [0, 0, 1, 1], [], []>} : vector<4x50xbf16>, vector<50x50xbf16>, vector<4x50xf32> -> vector<4x50xf32>
    %130 = arith.addf %129, %5 : vector<4x50xf32>
    %cst_92 = arith.constant 0.000000e+00 : f32
    %131 = vector.broadcast %cst_92 : f32 to vector<4x50xf32>
    %132 = arith.maximumf %130, %131 : vector<4x50xf32>
    %133 = arith.truncf %132 : vector<4x50xf32> to vector<4x50xbf16>
    %c0_93 = arith.constant 0 : index
    %c0_94 = arith.constant 0 : index
    %134 = vector.load %arg8[%c0_93, %c0_94] : memref<50x50xbf16, #tpu.memory_space<vmem>>, vector<50x50xbf16>
    %cst_95 = arith.constant dense<0.000000e+00> : vector<4x50xf32>
    %135 = tpu.matmul %133, %134, %cst_95 {dimension_numbers = #tpu.dot_dimension_numbers<[1], [0], [0], [1], [0, 0, 1, 1], [], []>} : vector<4x50xbf16>, vector<50x50xbf16>, vector<4x50xf32> -> vector<4x50xf32>
    %136 = arith.addf %135, %8 : vector<4x50xf32>
    %cst_96 = arith.constant 0.000000e+00 : f32
    %137 = vector.broadcast %cst_96 : f32 to vector<4x50xf32>
    %138 = arith.maximumf %136, %137 : vector<4x50xf32>
    %139 = arith.truncf %138 : vector<4x50xf32> to vector<4x50xbf16>
    %c0_97 = arith.constant 0 : index
    %c0_98 = arith.constant 0 : index
    %140 = vector.load %arg10[%c0_97, %c0_98] : memref<50x288xbf16, #tpu.memory_space<vmem>>, vector<50x288xbf16>
    %cst_99 = arith.constant dense<0.000000e+00> : vector<4x288xf32>
    %141 = tpu.matmul %139, %140, %cst_99 {dimension_numbers = #tpu.dot_dimension_numbers<[1], [0], [0], [1], [0, 0, 1, 1], [], []>} : vector<4x50xbf16>, vector<50x288xbf16>, vector<4x288xf32> -> vector<4x288xf32>
    %142 = arith.addf %141, %11 : vector<4x288xf32>
    %143 = math.tanh %142 : vector<4x288xf32>
    %c3_100 = arith.constant 3 : index
    %c0_101 = arith.constant 0 : index
    %c0_102 = arith.constant 0 : index
    %144 = vector.load %arg1[%c3_100, %c0_101, %c0_102] : memref<7x4x288xf32, #tpu.memory_space<vmem>>, vector<1x4x288xf32>
    %145 = vector.shape_cast %144 : vector<1x4x288xf32> to vector<4x288xf32>
    %146 = arith.mulf %143, %145 : vector<4x288xf32>
    %147 = arith.truncf %146 : vector<4x288xf32> to vector<4x288xbf16>
    %c0_103 = arith.constant 0 : index
    %c0_104 = arith.constant 0 : index
    %148 = vector.load %arg12[%c0_103, %c0_104] : memref<288x32xbf16, #tpu.memory_space<vmem>>, vector<288x32xbf16>
    %cst_105 = arith.constant dense<0.000000e+00> : vector<4x32xf32>
    %149 = tpu.matmul %147, %148, %cst_105 {dimension_numbers = #tpu.dot_dimension_numbers<[1], [0], [0], [1], [0, 0, 1, 1], [], []>} : vector<4x288xbf16>, vector<288x32xbf16>, vector<4x32xf32> -> vector<4x32xf32>
    %150 = arith.addf %117, %149 : vector<4x32xf32>
    %c4 = arith.constant 4 : index
    %c0_106 = arith.constant 0 : index
    %c0_107 = arith.constant 0 : index
    %151 = vector.load %arg13[%c4, %c0_106, %c0_107] : memref<8x4x32xf32, #tpu.memory_space<vmem>>, vector<1x4x32xf32>
    %152 = vector.shape_cast %151 : vector<1x4x32xf32> to vector<4x32xf32>
    %153 = vector.shape_cast %150 : vector<4x32xf32> to vector<1x4x32xf32>
    tpu.vector_store %arg13[%c4, %c0_106, %c0_107], %153 {strides = array<i32>} : memref<8x4x32xf32, #tpu.memory_space<vmem>>, vector<1x4x32xf32>,
    %154 = arith.truncf %150 : vector<4x32xf32> to vector<4x32xbf16>
    %c0_108 = arith.constant 0 : index
    %c0_109 = arith.constant 0 : index
    %155 = vector.load %arg4[%c0_108, %c0_109] : memref<32x50xbf16, #tpu.memory_space<vmem>>, vector<32x50xbf16>
    %cst_110 = arith.constant dense<0.000000e+00> : vector<4x50xf32>
    %156 = tpu.matmul %154, %155, %cst_110 {dimension_numbers = #tpu.dot_dimension_numbers<[1], [0], [0], [1], [0, 0, 1, 1], [], []>} : vector<4x32xbf16>, vector<32x50xbf16>, vector<4x50xf32> -> vector<4x50xf32>
    %157 = arith.addf %156, %2 : vector<4x50xf32>
    %cst_111 = arith.constant 0.000000e+00 : f32
    %158 = vector.broadcast %cst_111 : f32 to vector<4x50xf32>
    %159 = arith.maximumf %157, %158 : vector<4x50xf32>
    %160 = arith.truncf %159 : vector<4x50xf32> to vector<4x50xbf16>
    %c0_112 = arith.constant 0 : index
    %c0_113 = arith.constant 0 : index
    %161 = vector.load %arg6[%c0_112, %c0_113] : memref<50x50xbf16, #tpu.memory_space<vmem>>, vector<50x50xbf16>
    %cst_114 = arith.constant dense<0.000000e+00> : vector<4x50xf32>
    %162 = tpu.matmul %160, %161, %cst_114 {dimension_numbers = #tpu.dot_dimension_numbers<[1], [0], [0], [1], [0, 0, 1, 1], [], []>} : vector<4x50xbf16>, vector<50x50xbf16>, vector<4x50xf32> -> vector<4x50xf32>
    %163 = arith.addf %162, %5 : vector<4x50xf32>
    %cst_115 = arith.constant 0.000000e+00 : f32
    %164 = vector.broadcast %cst_115 : f32 to vector<4x50xf32>
    %165 = arith.maximumf %163, %164 : vector<4x50xf32>
    %166 = arith.truncf %165 : vector<4x50xf32> to vector<4x50xbf16>
    %c0_116 = arith.constant 0 : index
    %c0_117 = arith.constant 0 : index
    %167 = vector.load %arg8[%c0_116, %c0_117] : memref<50x50xbf16, #tpu.memory_space<vmem>>, vector<50x50xbf16>
    %cst_118 = arith.constant dense<0.000000e+00> : vector<4x50xf32>
    %168 = tpu.matmul %166, %167, %cst_118 {dimension_numbers = #tpu.dot_dimension_numbers<[1], [0], [0], [1], [0, 0, 1, 1], [], []>} : vector<4x50xbf16>, vector<50x50xbf16>, vector<4x50xf32> -> vector<4x50xf32>
    %169 = arith.addf %168, %8 : vector<4x50xf32>
    %cst_119 = arith.constant 0.000000e+00 : f32
    %170 = vector.broadcast %cst_119 : f32 to vector<4x50xf32>
    %171 = arith.maximumf %169, %170 : vector<4x50xf32>
    %172 = arith.truncf %171 : vector<4x50xf32> to vector<4x50xbf16>
    %c0_120 = arith.constant 0 : index
    %c0_121 = arith.constant 0 : index
    %173 = vector.load %arg10[%c0_120, %c0_121] : memref<50x288xbf16, #tpu.memory_space<vmem>>, vector<50x288xbf16>
    %cst_122 = arith.constant dense<0.000000e+00> : vector<4x288xf32>
    %174 = tpu.matmul %172, %173, %cst_122 {dimension_numbers = #tpu.dot_dimension_numbers<[1], [0], [0], [1], [0, 0, 1, 1], [], []>} : vector<4x50xbf16>, vector<50x288xbf16>, vector<4x288xf32> -> vector<4x288xf32>
    %175 = arith.addf %174, %11 : vector<4x288xf32>
    %176 = math.tanh %175 : vector<4x288xf32>
    %c4_123 = arith.constant 4 : index
    %c0_124 = arith.constant 0 : index
    %c0_125 = arith.constant 0 : index
    %177 = vector.load %arg1[%c4_123, %c0_124, %c0_125] : memref<7x4x288xf32, #tpu.memory_space<vmem>>, vector<1x4x288xf32>
    %178 = vector.shape_cast %177 : vector<1x4x288xf32> to vector<4x288xf32>
    %179 = arith.mulf %176, %178 : vector<4x288xf32>
    %180 = arith.truncf %179 : vector<4x288xf32> to vector<4x288xbf16>
    %c0_126 = arith.constant 0 : index
    %c0_127 = arith.constant 0 : index
    %181 = vector.load %arg12[%c0_126, %c0_127] : memref<288x32xbf16, #tpu.memory_space<vmem>>, vector<288x32xbf16>
    %cst_128 = arith.constant dense<0.000000e+00> : vector<4x32xf32>
    %182 = tpu.matmul %180, %181, %cst_128 {dimension_numbers = #tpu.dot_dimension_numbers<[1], [0], [0], [1], [0, 0, 1, 1], [], []>} : vector<4x288xbf16>, vector<288x32xbf16>, vector<4x32xf32> -> vector<4x32xf32>
    %183 = arith.addf %150, %182 : vector<4x32xf32>
    %c5 = arith.constant 5 : index
    %c0_129 = arith.constant 0 : index
    %c0_130 = arith.constant 0 : index
    %184 = vector.load %arg13[%c5, %c0_129, %c0_130] : memref<8x4x32xf32, #tpu.memory_space<vmem>>, vector<1x4x32xf32>
    %185 = vector.shape_cast %184 : vector<1x4x32xf32> to vector<4x32xf32>
    %186 = vector.shape_cast %183 : vector<4x32xf32> to vector<1x4x32xf32>
    tpu.vector_store %arg13[%c5, %c0_129, %c0_130], %186 {strides = array<i32>} : memref<8x4x32xf32, #tpu.memory_space<vmem>>, vector<1x4x32xf32>,
    %187 = arith.truncf %183 : vector<4x32xf32> to vector<4x32xbf16>
    %c0_131 = arith.constant 0 : index
    %c0_132 = arith.constant 0 : index
    %188 = vector.load %arg4[%c0_131, %c0_132] : memref<32x50xbf16, #tpu.memory_space<vmem>>, vector<32x50xbf16>
    %cst_133 = arith.constant dense<0.000000e+00> : vector<4x50xf32>
    %189 = tpu.matmul %187, %188, %cst_133 {dimension_numbers = #tpu.dot_dimension_numbers<[1], [0], [0], [1], [0, 0, 1, 1], [], []>} : vector<4x32xbf16>, vector<32x50xbf16>, vector<4x50xf32> -> vector<4x50xf32>
    %190 = arith.addf %189, %2 : vector<4x50xf32>
    %cst_134 = arith.constant 0.000000e+00 : f32
    %191 = vector.broadcast %cst_134 : f32 to vector<4x50xf32>
    %192 = arith.maximumf %190, %191 : vector<4x50xf32>
    %193 = arith.truncf %192 : vector<4x50xf32> to vector<4x50xbf16>
    %c0_135 = arith.constant 0 : index
    %c0_136 = arith.constant 0 : index
    %194 = vector.load %arg6[%c0_135, %c0_136] : memref<50x50xbf16, #tpu.memory_space<vmem>>, vector<50x50xbf16>
    %cst_137 = arith.constant dense<0.000000e+00> : vector<4x50xf32>
    %195 = tpu.matmul %193, %194, %cst_137 {dimension_numbers = #tpu.dot_dimension_numbers<[1], [0], [0], [1], [0, 0, 1, 1], [], []>} : vector<4x50xbf16>, vector<50x50xbf16>, vector<4x50xf32> -> vector<4x50xf32>
    %196 = arith.addf %195, %5 : vector<4x50xf32>
    %cst_138 = arith.constant 0.000000e+00 : f32
    %197 = vector.broadcast %cst_138 : f32 to vector<4x50xf32>
    %198 = arith.maximumf %196, %197 : vector<4x50xf32>
    %199 = arith.truncf %198 : vector<4x50xf32> to vector<4x50xbf16>
    %c0_139 = arith.constant 0 : index
    %c0_140 = arith.constant 0 : index
    %200 = vector.load %arg8[%c0_139, %c0_140] : memref<50x50xbf16, #tpu.memory_space<vmem>>, vector<50x50xbf16>
    %cst_141 = arith.constant dense<0.000000e+00> : vector<4x50xf32>
    %201 = tpu.matmul %199, %200, %cst_141 {dimension_numbers = #tpu.dot_dimension_numbers<[1], [0], [0], [1], [0, 0, 1, 1], [], []>} : vector<4x50xbf16>, vector<50x50xbf16>, vector<4x50xf32> -> vector<4x50xf32>
    %202 = arith.addf %201, %8 : vector<4x50xf32>
    %cst_142 = arith.constant 0.000000e+00 : f32
    %203 = vector.broadcast %cst_142 : f32 to vector<4x50xf32>
    %204 = arith.maximumf %202, %203 : vector<4x50xf32>
    %205 = arith.truncf %204 : vector<4x50xf32> to vector<4x50xbf16>
    %c0_143 = arith.constant 0 : index
    %c0_144 = arith.constant 0 : index
    %206 = vector.load %arg10[%c0_143, %c0_144] : memref<50x288xbf16, #tpu.memory_space<vmem>>, vector<50x288xbf16>
    %cst_145 = arith.constant dense<0.000000e+00> : vector<4x288xf32>
    %207 = tpu.matmul %205, %206, %cst_145 {dimension_numbers = #tpu.dot_dimension_numbers<[1], [0], [0], [1], [0, 0, 1, 1], [], []>} : vector<4x50xbf16>, vector<50x288xbf16>, vector<4x288xf32> -> vector<4x288xf32>
    %208 = arith.addf %207, %11 : vector<4x288xf32>
    %209 = math.tanh %208 : vector<4x288xf32>
    %c5_146 = arith.constant 5 : index
    %c0_147 = arith.constant 0 : index
    %c0_148 = arith.constant 0 : index
    %210 = vector.load %arg1[%c5_146, %c0_147, %c0_148] : memref<7x4x288xf32, #tpu.memory_space<vmem>>, vector<1x4x288xf32>
    %211 = vector.shape_cast %210 : vector<1x4x288xf32> to vector<4x288xf32>
    %212 = arith.mulf %209, %211 : vector<4x288xf32>
    %213 = arith.truncf %212 : vector<4x288xf32> to vector<4x288xbf16>
    %c0_149 = arith.constant 0 : index
    %c0_150 = arith.constant 0 : index
    %214 = vector.load %arg12[%c0_149, %c0_150] : memref<288x32xbf16, #tpu.memory_space<vmem>>, vector<288x32xbf16>
    %cst_151 = arith.constant dense<0.000000e+00> : vector<4x32xf32>
    %215 = tpu.matmul %213, %214, %cst_151 {dimension_numbers = #tpu.dot_dimension_numbers<[1], [0], [0], [1], [0, 0, 1, 1], [], []>} : vector<4x288xbf16>, vector<288x32xbf16>, vector<4x32xf32> -> vector<4x32xf32>
    %216 = arith.addf %183, %215 : vector<4x32xf32>
    %c6 = arith.constant 6 : index
    %c0_152 = arith.constant 0 : index
    %c0_153 = arith.constant 0 : index
    %217 = vector.load %arg13[%c6, %c0_152, %c0_153] : memref<8x4x32xf32, #tpu.memory_space<vmem>>, vector<1x4x32xf32>
    %218 = vector.shape_cast %217 : vector<1x4x32xf32> to vector<4x32xf32>
    %219 = vector.shape_cast %216 : vector<4x32xf32> to vector<1x4x32xf32>
    tpu.vector_store %arg13[%c6, %c0_152, %c0_153], %219 {strides = array<i32>} : memref<8x4x32xf32, #tpu.memory_space<vmem>>, vector<1x4x32xf32>,
    %220 = arith.truncf %216 : vector<4x32xf32> to vector<4x32xbf16>
    %c0_154 = arith.constant 0 : index
    %c0_155 = arith.constant 0 : index
    %221 = vector.load %arg4[%c0_154, %c0_155] : memref<32x50xbf16, #tpu.memory_space<vmem>>, vector<32x50xbf16>
    %cst_156 = arith.constant dense<0.000000e+00> : vector<4x50xf32>
    %222 = tpu.matmul %220, %221, %cst_156 {dimension_numbers = #tpu.dot_dimension_numbers<[1], [0], [0], [1], [0, 0, 1, 1], [], []>} : vector<4x32xbf16>, vector<32x50xbf16>, vector<4x50xf32> -> vector<4x50xf32>
    %223 = arith.addf %222, %2 : vector<4x50xf32>
    %cst_157 = arith.constant 0.000000e+00 : f32
    %224 = vector.broadcast %cst_157 : f32 to vector<4x50xf32>
    %225 = arith.maximumf %223, %224 : vector<4x50xf32>
    %226 = arith.truncf %225 : vector<4x50xf32> to vector<4x50xbf16>
    %c0_158 = arith.constant 0 : index
    %c0_159 = arith.constant 0 : index
    %227 = vector.load %arg6[%c0_158, %c0_159] : memref<50x50xbf16, #tpu.memory_space<vmem>>, vector<50x50xbf16>
    %cst_160 = arith.constant dense<0.000000e+00> : vector<4x50xf32>
    %228 = tpu.matmul %226, %227, %cst_160 {dimension_numbers = #tpu.dot_dimension_numbers<[1], [0], [0], [1], [0, 0, 1, 1], [], []>} : vector<4x50xbf16>, vector<50x50xbf16>, vector<4x50xf32> -> vector<4x50xf32>
    %229 = arith.addf %228, %5 : vector<4x50xf32>
    %cst_161 = arith.constant 0.000000e+00 : f32
    %230 = vector.broadcast %cst_161 : f32 to vector<4x50xf32>
    %231 = arith.maximumf %229, %230 : vector<4x50xf32>
    %232 = arith.truncf %231 : vector<4x50xf32> to vector<4x50xbf16>
    %c0_162 = arith.constant 0 : index
    %c0_163 = arith.constant 0 : index
    %233 = vector.load %arg8[%c0_162, %c0_163] : memref<50x50xbf16, #tpu.memory_space<vmem>>, vector<50x50xbf16>
    %cst_164 = arith.constant dense<0.000000e+00> : vector<4x50xf32>
    %234 = tpu.matmul %232, %233, %cst_164 {dimension_numbers = #tpu.dot_dimension_numbers<[1], [0], [0], [1], [0, 0, 1, 1], [], []>} : vector<4x50xbf16>, vector<50x50xbf16>, vector<4x50xf32> -> vector<4x50xf32>
    %235 = arith.addf %234, %8 : vector<4x50xf32>
    %cst_165 = arith.constant 0.000000e+00 : f32
    %236 = vector.broadcast %cst_165 : f32 to vector<4x50xf32>
    %237 = arith.maximumf %235, %236 : vector<4x50xf32>
    %238 = arith.truncf %237 : vector<4x50xf32> to vector<4x50xbf16>
    %c0_166 = arith.constant 0 : index
    %c0_167 = arith.constant 0 : index
    %239 = vector.load %arg10[%c0_166, %c0_167] : memref<50x288xbf16, #tpu.memory_space<vmem>>, vector<50x288xbf16>
    %cst_168 = arith.constant dense<0.000000e+00> : vector<4x288xf32>
    %240 = tpu.matmul %238, %239, %cst_168 {dimension_numbers = #tpu.dot_dimension_numbers<[1], [0], [0], [1], [0, 0, 1, 1], [], []>} : vector<4x50xbf16>, vector<50x288xbf16>, vector<4x288xf32> -> vector<4x288xf32>
    %241 = arith.addf %240, %11 : vector<4x288xf32>
    %242 = math.tanh %241 : vector<4x288xf32>
    %c6_169 = arith.constant 6 : index
    %c0_170 = arith.constant 0 : index
    %c0_171 = arith.constant 0 : index
    %243 = vector.load %arg1[%c6_169, %c0_170, %c0_171] : memref<7x4x288xf32, #tpu.memory_space<vmem>>, vector<1x4x288xf32>
    %244 = vector.shape_cast %243 : vector<1x4x288xf32> to vector<4x288xf32>
    %245 = arith.mulf %242, %244 : vector<4x288xf32>
    %246 = arith.truncf %245 : vector<4x288xf32> to vector<4x288xbf16>
    %c0_172 = arith.constant 0 : index
    %c0_173 = arith.constant 0 : index
    %247 = vector.load %arg12[%c0_172, %c0_173] : memref<288x32xbf16, #tpu.memory_space<vmem>>, vector<288x32xbf16>
    %cst_174 = arith.constant dense<0.000000e+00> : vector<4x32xf32>
    %248 = tpu.matmul %246, %247, %cst_174 {dimension_numbers = #tpu.dot_dimension_numbers<[1], [0], [0], [1], [0, 0, 1, 1], [], []>} : vector<4x288xbf16>, vector<288x32xbf16>, vector<4x32xf32> -> vector<4x32xf32>
    %249 = arith.addf %216, %248 : vector<4x32xf32>
    %c7 = arith.constant 7 : index
    %c0_175 = arith.constant 0 : index
    %c0_176 = arith.constant 0 : index
    %250 = vector.load %arg13[%c7, %c0_175, %c0_176] : memref<8x4x32xf32, #tpu.memory_space<vmem>>, vector<1x4x32xf32>
    %251 = vector.shape_cast %250 : vector<1x4x32xf32> to vector<4x32xf32>
    %252 = vector.shape_cast %249 : vector<4x32xf32> to vector<1x4x32xf32>
    tpu.vector_store %arg13[%c7, %c0_175, %c0_176], %252 {strides = array<i32>} : memref<8x4x32xf32, #tpu.memory_space<vmem>>, vector<1x4x32xf32>,
    return
  }
}

</mosaic_0001>

<llo_original>
// kernel: tile.9
$region0: #{tile.9}
  %s0 = inlined_call_operand.vmem [shape: f32[7,4,32,9], index: 0, kind: input, shape index: {}]
  %s1 = inlined_call_operand.vmem [shape: f32[7,4,288], index: 1, kind: output, shape index: {}]
  $region1: #{tile.9} parent=0
    #allocation0 [shape = 'u8[86016]{0}', space=vmem, size = 0x15000, scoped, tag = 'scoped mem for output reshape']
    %v2 = vld [vmem:[%s0] sm:$0x1]
    %s3 = scalar_lea.vmem %s0, 31
    %v4 = vld [vmem:[%s3] sm:$0x2]
    %vm5 = vcmask 1041409
    %v6 = vsel %vm5, %v4, %v2
    %s7 = scalar_lea.vmem %s0, 62
    %v8 = vld [vmem:[%s7] sm:$0x4]
    %vm9 = vcmask 1042434
    %v10 = vsel %vm9, %v8, %v6
    %s11 = scalar_lea.vmem %s0, 93
    %v12 = vld [vmem:[%s11] sm:$0x8]
    %vm13 = vcmask 1043459
    %v14 = vsel %vm13, %v12, %v10
    %s15 = scalar_lea.vmem %s0, 124
    %v16 = vld [vmem:[%s15] sm:$0x10]
    %vm17 = vcmask 1044484
    %v18 = vsel %vm17, %v16, %v14
    %s19 = scalar_lea.vmem %s0, 155
    %v20 = vld [vmem:[%s19] sm:$0x20]
    %vm21 = vcmask 1045509
    %v22 = vsel %vm21, %v20, %v18
    %s23 = scalar_lea.vmem %s0, 186
    %v24 = vld [vmem:[%s23] sm:$0x40]
    %vm25 = vcmask 1046534
    %v26 = vsel %vm25, %v24, %v22
    %s27 = scalar_lea.vmem %s0, 217
    %v28 = vld [vmem:[%s27] sm:$0x80]
    %vm29 = vcmask 1047559
    %v30 = vsel %vm29, %v28, %v26
    %vm31 = vcmask 72704
    %32 = vst.msk [vmem:[#allocation0] sm:$0xf] %vm31, %v30
    %s33 = scalar_lea.vmem [#allocation0], 20
    %34 = vst.msk [vmem:[%s33] sm:$0xf0] %vm31, %v30
    %s35 = scalar_lea.vmem %s0, 256
    %v36 = vld [vmem:[%s35] sm:$0x1]
    %s37 = scalar_lea.vmem %s0, 287
    %v38 = vld [vmem:[%s37] sm:$0x2]
    %vm39 = vcmask 1041409
    %v40 = vsel %vm39, %v38, %v36
    %s41 = scalar_lea.vmem %s0, 318
    %v42 = vld [vmem:[%s41] sm:$0x4]
    %vm43 = vcmask 1042434
    %v44 = vsel %vm43, %v42, %v40
    %s45 = scalar_lea.vmem %s0, 349
    %v46 = vld [vmem:[%s45] sm:$0x8]
    %vm47 = vcmask 1043459
    %v48 = vsel %vm47, %v46, %v44
    %s49 = scalar_lea.vmem %s0, 380
    %v50 = vld [vmem:[%s49] sm:$0x10]
    %vm51 = vcmask 1044484
    %v52 = vsel %vm51, %v50, %v48
    %s53 = scalar_lea.vmem %s0, 411
    %v54 = vld [vmem:[%s53] sm:$0x20]
    %vm55 = vcmask 1045509
    %v56 = vsel %vm55, %v54, %v52
    %s57 = scalar_lea.vmem %s0, 442
    %v58 = vld [vmem:[%s57] sm:$0x40]
    %vm59 = vcmask 1046534
    %v60 = vsel %vm59, %v58, %v56
    %s61 = scalar_lea.vmem %s0, 473
    %v62 = vld [vmem:[%s61] sm:$0x80]
    %vm63 = vcmask 1047559
    %v64 = vsel %vm63, %v62, %v60
    %vm65 = vcmask 72704
    %s66 = scalar_lea.vmem [#allocation0], 48
    %67 = vst.msk [vmem:[%s66] sm:$0xf] %vm65, %v64
    %s68 = scalar_lea.vmem [#allocation0], 68
    %69 = vst.msk [vmem:[%s68] sm:$0xf0] %vm65, %v64
    %s70 = scalar_lea.vmem %s0, 512
    %v71 = vld [vmem:[%s70] sm:$0x1]
    %s72 = scalar_lea.vmem %s0, 543
    %v73 = vld [vmem:[%s72] sm:$0x2]
    %vm74 = vcmask 1041409
    %v75 = vsel %vm74, %v73, %v71
    %s76 = scalar_lea.vmem %s0, 574
    %v77 = vld [vmem:[%s76] sm:$0x4]
    %vm78 = vcmask 1042434
    %v79 = vsel %vm78, %v77, %v75
    %s80 = scalar_lea.vmem %s0, 605
    %v81 = vld [vmem:[%s80] sm:$0x8]
    %vm82 = vcmask 1043459
    %v83 = vsel %vm82, %v81, %v79
    %s84 = scalar_lea.vmem %s0, 636
    %v85 = vld [vmem:[%s84] sm:$0x10]
    %vm86 = vcmask 1044484
    %v87 = vsel %vm86, %v85, %v83
    %s88 = scalar_lea.vmem %s0, 667
    %v89 = vld [vmem:[%s88] sm:$0x20]
    %vm90 = vcmask 1045509
    %v91 = vsel %vm90, %v89, %v87
    %s92 = scalar_lea.vmem %s0, 698
    %v93 = vld [vmem:[%s92] sm:$0x40]
    %vm94 = vcmask 1046534
    %v95 = vsel %vm94, %v93, %v91
    %s96 = scalar_lea.vmem %s0, 729
    %v97 = vld [vmem:[%s96] sm:$0x80]
    %vm98 = vcmask 1047559
    %v99 = vsel %vm98, %v97, %v95
    %vm100 = vcmask 72704
    %s101 = scalar_lea.vmem [#allocation0], 96
    %102 = vst.msk [vmem:[%s101] sm:$0xf] %vm100, %v99
    %s103 = scalar_lea.vmem [#allocation0], 116
    %104 = vst.msk [vmem:[%s103] sm:$0xf0] %vm100, %v99
    %s105 = scalar_lea.vmem %s0, 768
    %v106 = vld [vmem:[%s105] sm:$0x1]
    %s107 = scalar_lea.vmem %s0, 799
    %v108 = vld [vmem:[%s107] sm:$0x2]
    %vm109 = vcmask 1041409
    %v110 = vsel %vm109, %v108, %v106
    %s111 = scalar_lea.vmem %s0, 830
    %v112 = vld [vmem:[%s111] sm:$0x4]
    %vm113 = vcmask 1042434
    %v114 = vsel %vm113, %v112, %v110
    %s115 = scalar_lea.vmem %s0, 861
    %v116 = vld [vmem:[%s115] sm:$0x8]
    %vm117 = vcmask 1043459
    %v118 = vsel %vm117, %v116, %v114
    %vm119 = vcmask 72704
    %s120 = scalar_lea.vmem [#allocation0], 144
    %121 = vst.msk [vmem:[%s120] sm:$0xf] %vm119, %v118
    %s122 = scalar_lea.vmem %s0, 142
    %v123 = vld [vmem:[%s122] sm:$0x1]
    %s124 = scalar_lea.vmem %s0, 173
    %v125 = vld [vmem:[%s124] sm:$0x2]
    %vm126 = vcmask 1041409
    %v127 = vsel %vm126, %v125, %v123
    %s128 = scalar_lea.vmem %s0, 204
    %v129 = vld [vmem:[%s128] sm:$0x4]
    %vm130 = vcmask 1042434
    %v131 = vsel %vm130, %v129, %v127
    %s132 = scalar_lea.vmem %s0, 235
    %v133 = vld [vmem:[%s132] sm:$0x8]
    %vm134 = vcmask 1043459
    %v135 = vsel %vm134, %v133, %v131
    %s136 = scalar_lea.vmem %s0, 10
    %v137 = vld [vmem:[%s136] sm:$0x10]
    %vm138 = vcmask 1044484
    %v139 = vsel %vm138, %v137, %v135
    %s140 = scalar_lea.vmem %s0, 41
    %v141 = vld [vmem:[%s140] sm:$0x20]
    %vm142 = vcmask 1045509
    %v143 = vsel %vm142, %v141, %v139
    %s144 = scalar_lea.vmem %s0, 72
    %v145 = vld [vmem:[%s144] sm:$0x40]
    %vm146 = vcmask 1046534
    %v147 = vsel %vm146, %v145, %v143
    %s148 = scalar_lea.vmem %s0, 103
    %v149 = vld [vmem:[%s148] sm:$0x80]
    %vm150 = vcmask 1047559
    %v151 = vsel %vm150, %v149, %v147
    %152 = vrot.lane.b32.xlu0 %v151, 126
    %v153 = vpop.permute.xlu0 %152
    %vm154 = vcmask 56320
    %s155 = scalar_lea.vmem [#allocation0], 32
    %156 = vst.msk [vmem:[%s155] sm:$0xf] %vm154, %v153
    %s157 = scalar_lea.vmem [#allocation0], 4
    %158 = vst.msk [vmem:[%s157] sm:$0xf0] %vm154, %v153
    %s159 = scalar_lea.vmem %s0, 14
    %v160 = vld [vmem:[%s159] sm:$0x1]
    %s161 = scalar_lea.vmem %s0, 45
    %v162 = vld [vmem:[%s161] sm:$0x2]
    %vm163 = vcmask 1041409
    %v164 = vsel %vm163, %v162, %v160
    %s165 = scalar_lea.vmem %s0, 76
    %v166 = vld [vmem:[%s165] sm:$0x4]
    %vm167 = vcmask 1042434
    %v168 = vsel %vm167, %v166, %v164
    %s169 = scalar_lea.vmem %s0, 107
    %v170 = vld [vmem:[%s169] sm:$0x8]
    %vm171 = vcmask 1043459
    %v172 = vsel %vm171, %v170, %v168
    %s173 = scalar_lea.vmem %s0, 394
    %v174 = vld [vmem:[%s173] sm:$0x10]
    %vm175 = vcmask 1044484
    %v176 = vsel %vm175, %v174, %v172
    %s177 = scalar_lea.vmem %s0, 425
    %v178 = vld [vmem:[%s177] sm:$0x20]
    %vm179 = vcmask 1045509
    %v180 = vsel %vm179, %v178, %v176
    %s181 = scalar_lea.vmem %s0, 456
    %v182 = vld [vmem:[%s181] sm:$0x40]
    %vm183 = vcmask 1046534
    %v184 = vsel %vm183, %v182, %v180
    %s185 = scalar_lea.vmem %s0, 487
    %v186 = vld [vmem:[%s185] sm:$0x80]
    %vm187 = vcmask 1047559
    %v188 = vsel %vm187, %v186, %v184
    %189 = vrot.lane.b32.xlu0 %v188, 126
    %v190 = vpop.permute.xlu0 %189
    %vm191 = vcmask 1048560
    %192 = vst.msk [vmem:[#allocation0] sm:$0xf] %vm191, %v190
    %s193 = scalar_lea.vmem [#allocation0], 68
    %194 = vst.msk [vmem:[%s193] sm:$0xf0] %vm191, %v190
    %s195 = scalar_lea.vmem %s0, 654
    %v196 = vld [vmem:[%s195] sm:$0x1]
    %s197 = scalar_lea.vmem %s0, 685
    %v198 = vld [vmem:[%s197] sm:$0x2]
    %vm199 = vcmask 1041409
    %v200 = vsel %vm199, %v198, %v196
    %s201 = scalar_lea.vmem %s0, 716
    %v202 = vld [vmem:[%s201] sm:$0x4]
    %vm203 = vcmask 1042434
    %v204 = vsel %vm203, %v202, %v200
    %s205 = scalar_lea.vmem %s0, 747
    %v206 = vld [vmem:[%s205] sm:$0x8]
    %vm207 = vcmask 1043459
    %v208 = vsel %vm207, %v206, %v204
    %s209 = scalar_lea.vmem %s0, 522
    %v210 = vld [vmem:[%s209] sm:$0x10]
    %vm211 = vcmask 1044484
    %v212 = vsel %vm211, %v210, %v208
    %s213 = scalar_lea.vmem %s0, 553
    %v214 = vld [vmem:[%s213] sm:$0x20]
    %vm215 = vcmask 1045509
    %v216 = vsel %vm215, %v214, %v212
    %s217 = scalar_lea.vmem %s0, 584
    %v218 = vld [vmem:[%s217] sm:$0x40]
    %vm219 = vcmask 1046534
    %v220 = vsel %vm219, %v218, %v216
    %s221 = scalar_lea.vmem %s0, 615
    %v222 = vld [vmem:[%s221] sm:$0x80]
    %vm223 = vcmask 1047559
    %v224 = vsel %vm223, %v222, %v220
    %225 = vrot.lane.b32.xlu0 %v224, 126
    %v226 = vpop.permute.xlu0 %225
    %vm227 = vcmask 56320
    %s228 = scalar_lea.vmem [#allocation0], 128
    %229 = vst.msk [vmem:[%s228] sm:$0xf] %vm227, %v226
    %s230 = scalar_lea.vmem [#allocation0], 100
    %231 = vst.msk [vmem:[%s230] sm:$0xf0] %vm227, %v226
    %s232 = scalar_lea.vmem %s0, 526
    %v233 = vld [vmem:[%s232] sm:$0x1]
    %s234 = scalar_lea.vmem %s0, 557
    %v235 = vld [vmem:[%s234] sm:$0x2]
    %vm236 = vcmask 1041409
    %v237 = vsel %vm236, %v235, %v233
    %s238 = scalar_lea.vmem %s0, 588
    %v239 = vld [vmem:[%s238] sm:$0x4]
    %vm240 = vcmask 1042434
    %v241 = vsel %vm240, %v239, %v237
    %s242 = scalar_lea.vmem %s0, 619
    %v243 = vld [vmem:[%s242] sm:$0x8]
    %vm244 = vcmask 1043459
    %v245 = vsel %vm244, %v243, %v241
    %s246 = scalar_lea.vmem %s0, 266
    %v247 = vld [vmem:[%s246] sm:$0x10]
    %vm248 = vcmask 1044484
    %v249 = vsel %vm248, %v247, %v245
    %s250 = scalar_lea.vmem %s0, 297
    %v251 = vld [vmem:[%s250] sm:$0x20]
    %vm252 = vcmask 1045509
    %v253 = vsel %vm252, %v251, %v249
    %s254 = scalar_lea.vmem %s0, 328
    %v255 = vld [vmem:[%s254] sm:$0x40]
    %vm256 = vcmask 1046534
    %v257 = vsel %vm256, %v255, %v253
    %s258 = scalar_lea.vmem %s0, 359
    %v259 = vld [vmem:[%s258] sm:$0x80]
    %vm260 = vcmask 1047559
    %v261 = vsel %vm260, %v259, %v257
    %262 = vrot.lane.b32.xlu0 %v261, 126
    %v263 = vpop.permute.xlu0 %262
    %vm264 = vcmask 1048560
    %s265 = scalar_lea.vmem [#allocation0], 96
    %266 = vst.msk [vmem:[%s265] sm:$0xf] %vm264, %v263
    %s267 = scalar_lea.vmem [#allocation0], 44
    %268 = vst.msk [vmem:[%s267] sm:$0xf0] %vm264, %v263
    %s269 = scalar_lea.vmem %s0, 398
    %v270 = vld [vmem:[%s269] sm:$0x1]
    %s271 = scalar_lea.vmem %s0, 429
    %v272 = vld [vmem:[%s271] sm:$0x2]
    %vm273 = vcmask 1041409
    %v274 = vsel %vm273, %v272, %v270
    %s275 = scalar_lea.vmem %s0, 460
    %v276 = vld [vmem:[%s275] sm:$0x4]
    %vm277 = vcmask 1042434
    %v278 = vsel %vm277, %v276, %v274
    %s279 = scalar_lea.vmem %s0, 491
    %v280 = vld [vmem:[%s279] sm:$0x8]
    %vm281 = vcmask 1043459
    %v282 = vsel %vm281, %v280, %v278
    %s283 = scalar_lea.vmem %s0, 266
    %v284 = vld [vmem:[%s283] sm:$0x10]
    %vm285 = vcmask 1044484
    %v286 = vsel %vm285, %v284, %v282
    %s287 = scalar_lea.vmem %s0, 297
    %v288 = vld [vmem:[%s287] sm:$0x20]
    %vm289 = vcmask 1045509
    %v290 = vsel %vm289, %v288, %v286
    %s291 = scalar_lea.vmem %s0, 328
    %v292 = vld [vmem:[%s291] sm:$0x40]
    %vm293 = vcmask 1046534
    %v294 = vsel %vm293, %v292, %v290
    %s295 = scalar_lea.vmem %s0, 359
    %v296 = vld [vmem:[%s295] sm:$0x80]
    %vm297 = vcmask 1047559
    %v298 = vsel %vm297, %v296, %v294
    %299 = vrot.lane.b32.xlu0 %v298, 126
    %v300 = vpop.permute.xlu0 %299
    %vm301 = vcmask 56320
    %s302 = scalar_lea.vmem [#allocation0], 80
    %303 = vst.msk [vmem:[%s302] sm:$0xf] %vm301, %v300
    %s304 = scalar_lea.vmem [#allocation0], 52
    %305 = vst.msk [vmem:[%s304] sm:$0xf0] %vm301, %v300
    %s306 = scalar_lea.vmem %s0, 782
    %v307 = vld [vmem:[%s306] sm:$0x1]
    %s308 = scalar_lea.vmem %s0, 813
    %v309 = vld [vmem:[%s308] sm:$0x2]
    %vm310 = vcmask 1041409
    %v311 = vsel %vm310, %v309, %v307
    %s312 = scalar_lea.vmem %s0, 844
    %v313 = vld [vmem:[%s312] sm:$0x4]
    %vm314 = vcmask 1042434
    %v315 = vsel %vm314, %v313, %v311
    %s316 = scalar_lea.vmem %s0, 875
    %v317 = vld [vmem:[%s316] sm:$0x8]
    %vm318 = vcmask 1043459
    %v319 = vsel %vm318, %v317, %v315
    %s320 = scalar_lea.vmem %s0, 138
    %v321 = vld [vmem:[%s320] sm:$0x10]
    %vm322 = vcmask 1044484
    %v323 = vsel %vm322, %v321, %v319
    %s324 = scalar_lea.vmem %s0, 169
    %v325 = vld [vmem:[%s324] sm:$0x20]
    %vm326 = vcmask 1045509
    %v327 = vsel %vm326, %v325, %v323
    %s328 = scalar_lea.vmem %s0, 200
    %v329 = vld [vmem:[%s328] sm:$0x40]
    %vm330 = vcmask 1046534
    %v331 = vsel %vm330, %v329, %v327
    %s332 = scalar_lea.vmem %s0, 231
    %v333 = vld [vmem:[%s332] sm:$0x80]
    %vm334 = vcmask 1047559
    %v335 = vsel %vm334, %v333, %v331
    %336 = vrot.lane.b32.xlu0 %v335, 126
    %v337 = vpop.permute.xlu0 %336
    %vm338 = vcmask 1048560
    %s339 = scalar_lea.vmem [#allocation0], 144
    %340 = vst.msk [vmem:[%s339] sm:$0xf] %vm338, %v337
    %s341 = scalar_lea.vmem [#allocation0], 20
    %342 = vst.msk [vmem:[%s341] sm:$0xf0] %vm338, %v337
    %s343 = scalar_lea.vmem %s0, 782
    %v344 = vld [vmem:[%s343] sm:$0x1]
    %s345 = scalar_lea.vmem %s0, 813
    %v346 = vld [vmem:[%s345] sm:$0x2]
    %vm347 = vcmask 1041409
    %v348 = vsel %vm347, %v346, %v344
    %s349 = scalar_lea.vmem %s0, 844
    %v350 = vld [vmem:[%s349] sm:$0x4]
    %vm351 = vcmask 1042434
    %v352 = vsel %vm351, %v350, %v348
    %s353 = scalar_lea.vmem %s0, 875
    %v354 = vld [vmem:[%s353] sm:$0x8]
    %vm355 = vcmask 1043459
    %v356 = vsel %vm355, %v354, %v352
    %s357 = scalar_lea.vmem %s0, 654
    %v358 = vld [vmem:[%s357] sm:$0x1]
    %s359 = scalar_lea.vmem %s0, 685
    %v360 = vld [vmem:[%s359] sm:$0x2]
    %vm361 = vcmask 1041409
    %v362 = vsel %vm361, %v360, %v358
    %s363 = scalar_lea.vmem %s0, 716
    %v364 = vld [vmem:[%s363] sm:$0x4]
    %vm365 = vcmask 1042434
    %v366 = vsel %vm365, %v364, %v362
    %s367 = scalar_lea.vmem %s0, 747
    %v368 = vld [vmem:[%s367] sm:$0x8]
    %vm369 = vcmask 1043459
    %v370 = vsel %vm369, %v368, %v366
    %vm371 = vcmask 15360
    %v372 = vsel %vm371, %v370, %v356
    %373 = vrot.lane.b32.xlu0 %v372, 126
    %v374 = vpop.permute.xlu0 %373
    %vm375 = vcmask 56320
    %s376 = scalar_lea.vmem [#allocation0], 152
    %377 = vst.msk [vmem:[%s376] sm:$0xf] %vm375, %v374
    %vm378 = vcmask 1048560
    %s379 = scalar_lea.vmem [#allocation0], 120
    %380 = vst.msk [vmem:[%s379] sm:$0xf] %vm378, %v374
    %s381 = scalar_lea.vmem %s0, 284
    %v382 = vld [vmem:[%s381] sm:$0x1]
    %s383 = scalar_lea.vmem %s0, 315
    %v384 = vld [vmem:[%s383] sm:$0x2]
    %vm385 = vcmask 1041409
    %v386 = vsel %vm385, %v384, %v382
    %s387 = scalar_lea.vmem %s0, 346
    %v388 = vld [vmem:[%s387] sm:$0x4]
    %vm389 = vcmask 1042434
    %v390 = vsel %vm389, %v388, %v386
    %s391 = scalar_lea.vmem %s0, 377
    %v392 = vld [vmem:[%s391] sm:$0x8]
    %vm393 = vcmask 1043459
    %v394 = vsel %vm393, %v392, %v390
    %s395 = scalar_lea.vmem %s0, 152
    %v396 = vld [vmem:[%s395] sm:$0x10]
    %vm397 = vcmask 1044484
    %v398 = vsel %vm397, %v396, %v394
    %s399 = scalar_lea.vmem %s0, 183
    %v400 = vld [vmem:[%s399] sm:$0x20]
    %vm401 = vcmask 1045509
    %v402 = vsel %vm401, %v400, %v398
    %s403 = scalar_lea.vmem %s0, 214
    %v404 = vld [vmem:[%s403] sm:$0x40]
    %vm405 = vcmask 1046534
    %v406 = vsel %vm405, %v404, %v402
    %s407 = scalar_lea.vmem %s0, 245
    %v408 = vld [vmem:[%s407] sm:$0x80]
    %vm409 = vcmask 1047559
    %v410 = vsel %vm409, %v408, %v406
    %411 = vrot.lane.b32.xlu0 %v410, 124
    %v412 = vpop.permute.xlu0 %411
    %vm413 = vcmask 39936
    %s414 = scalar_lea.vmem [#allocation0], 64
    %415 = vst.msk [vmem:[%s414] sm:$0xf] %vm413, %v412
    %s416 = scalar_lea.vmem [#allocation0], 36
    %417 = vst.msk [vmem:[%s416] sm:$0xf0] %vm413, %v412
    %s418 = scalar_lea.vmem %s0, 156
    %v419 = vld [vmem:[%s418] sm:$0x1]
    %s420 = scalar_lea.vmem %s0, 187
    %v421 = vld [vmem:[%s420] sm:$0x2]
    %vm422 = vcmask 1041409
    %v423 = vsel %vm422, %v421, %v419
    %s424 = scalar_lea.vmem %s0, 218
    %v425 = vld [vmem:[%s424] sm:$0x4]
    %vm426 = vcmask 1042434
    %v427 = vsel %vm426, %v425, %v423
    %s428 = scalar_lea.vmem %s0, 249
    %v429 = vld [vmem:[%s428] sm:$0x8]
    %vm430 = vcmask 1043459
    %v431 = vsel %vm430, %v429, %v427
    %s432 = scalar_lea.vmem %s0, 24
    %v433 = vld [vmem:[%s432] sm:$0x10]
    %vm434 = vcmask 1044484
    %v435 = vsel %vm434, %v433, %v431
    %s436 = scalar_lea.vmem %s0, 55
    %v437 = vld [vmem:[%s436] sm:$0x20]
    %vm438 = vcmask 1045509
    %v439 = vsel %vm438, %v437, %v435
    %s440 = scalar_lea.vmem %s0, 86
    %v441 = vld [vmem:[%s440] sm:$0x40]
    %vm442 = vcmask 1046534
    %v443 = vsel %vm442, %v441, %v439
    %s444 = scalar_lea.vmem %s0, 117
    %v445 = vld [vmem:[%s444] sm:$0x80]
    %vm446 = vcmask 1047559
    %v447 = vsel %vm446, %v445, %v443
    %448 = vrot.lane.b32.xlu0 %v447, 124
    %v449 = vpop.permute.xlu0 %448
    %vm450 = vcmask 1048544
    %s451 = scalar_lea.vmem [#allocation0], 32
    %452 = vst.msk [vmem:[%s451] sm:$0xf] %vm450, %v449
    %s453 = scalar_lea.vmem [#allocation0], 4
    %454 = vst.msk [vmem:[%s453] sm:$0xf0] %vm450, %v449
    %s455 = scalar_lea.vmem %s0, 796
    %v456 = vld [vmem:[%s455] sm:$0x1]
    %s457 = scalar_lea.vmem %s0, 827
    %v458 = vld [vmem:[%s457] sm:$0x2]
    %vm459 = vcmask 1041409
    %v460 = vsel %vm459, %v458, %v456
    %s461 = scalar_lea.vmem %s0, 858
    %v462 = vld [vmem:[%s461] sm:$0x4]
    %vm463 = vcmask 1042434
    %v464 = vsel %vm463, %v462, %v460
    %s465 = scalar_lea.vmem %s0, 889
    %v466 = vld [vmem:[%s465] sm:$0x8]
    %vm467 = vcmask 1043459
    %v468 = vsel %vm467, %v466, %v464
    %s469 = scalar_lea.vmem %s0, 664
    %v470 = vld [vmem:[%s469] sm:$0x10]
    %vm471 = vcmask 1044484
    %v472 = vsel %vm471, %v470, %v468
    %s473 = scalar_lea.vmem %s0, 695
    %v474 = vld [vmem:[%s473] sm:$0x20]
    %vm475 = vcmask 1045509
    %v476 = vsel %vm475, %v474, %v472
    %s477 = scalar_lea.vmem %s0, 726
    %v478 = vld [vmem:[%s477] sm:$0x40]
    %vm479 = vcmask 1046534
    %v480 = vsel %vm479, %v478, %v476
    %s481 = scalar_lea.vmem %s0, 757
    %v482 = vld [vmem:[%s481] sm:$0x80]
    %vm483 = vcmask 1047559
    %v484 = vsel %vm483, %v482, %v480
    %485 = vrot.lane.b32.xlu0 %v484, 124
    %v486 = vpop.permute.xlu0 %485
    %vm487 = vcmask 39936
    %s488 = scalar_lea.vmem [#allocation0], 160
    %489 = vst.msk [vmem:[%s488] sm:$0xf] %vm487, %v486
    %s490 = scalar_lea.vmem [#allocation0], 132
    %491 = vst.msk [vmem:[%s490] sm:$0xf0] %vm487, %v486
    %s492 = scalar_lea.vmem %s0, 668
    %v493 = vld [vmem:[%s492] sm:$0x1]
    %s494 = scalar_lea.vmem %s0, 699
    %v495 = vld [vmem:[%s494] sm:$0x2]
    %vm496 = vcmask 1041409
    %v497 = vsel %vm496, %v495, %v493
    %s498 = scalar_lea.vmem %s0, 730
    %v499 = vld [vmem:[%s498] sm:$0x4]
    %vm500 = vcmask 1042434
    %v501 = vsel %vm500, %v499, %v497
    %s502 = scalar_lea.vmem %s0, 761
    %v503 = vld [vmem:[%s502] sm:$0x8]
    %vm504 = vcmask 1043459
    %v505 = vsel %vm504, %v503, %v501
    %s506 = scalar_lea.vmem %s0, 536
    %v507 = vld [vmem:[%s506] sm:$0x10]
    %vm508 = vcmask 1044484
    %v509 = vsel %vm508, %v507, %v505
    %s510 = scalar_lea.vmem %s0, 567
    %v511 = vld [vmem:[%s510] sm:$0x20]
    %vm512 = vcmask 1045509
    %v513 = vsel %vm512, %v511, %v509
    %s514 = scalar_lea.vmem %s0, 598
    %v515 = vld [vmem:[%s514] sm:$0x40]
    %vm516 = vcmask 1046534
    %v517 = vsel %vm516, %v515, %v513
    %s518 = scalar_lea.vmem %s0, 629
    %v519 = vld [vmem:[%s518] sm:$0x80]
    %vm520 = vcmask 1047559
    %v521 = vsel %vm520, %v519, %v517
    %522 = vrot.lane.b32.xlu0 %v521, 124
    %v523 = vpop.permute.xlu0 %522
    %vm524 = vcmask 1048544
    %s525 = scalar_lea.vmem [#allocation0], 128
    %526 = vst.msk [vmem:[%s525] sm:$0xf] %vm524, %v523
    %s527 = scalar_lea.vmem [#allocation0], 100
    %528 = vst.msk [vmem:[%s527] sm:$0xf0] %vm524, %v523
    %s529 = scalar_lea.vmem %s0, 28
    %v530 = vld [vmem:[%s529] sm:$0x1]
    %s531 = scalar_lea.vmem %s0, 59
    %v532 = vld [vmem:[%s531] sm:$0x2]
    %vm533 = vcmask 1041409
    %v534 = vsel %vm533, %v532, %v530
    %s535 = scalar_lea.vmem %s0, 90
    %v536 = vld [vmem:[%s535] sm:$0x4]
    %vm537 = vcmask 1042434
    %v538 = vsel %vm537, %v536, %v534
    %s539 = scalar_lea.vmem %s0, 121
    %v540 = vld [vmem:[%s539] sm:$0x8]
    %vm541 = vcmask 1043459
    %v542 = vsel %vm541, %v540, %v538
    %s543 = scalar_lea.vmem %s0, 408
    %v544 = vld [vmem:[%s543] sm:$0x10]
    %vm545 = vcmask 1044484
    %v546 = vsel %vm545, %v544, %v542
    %s547 = scalar_lea.vmem %s0, 439
    %v548 = vld [vmem:[%s547] sm:$0x20]
    %vm549 = vcmask 1045509
    %v550 = vsel %vm549, %v548, %v546
    %s551 = scalar_lea.vmem %s0, 470
    %v552 = vld [vmem:[%s551] sm:$0x40]
    %vm553 = vcmask 1046534
    %v554 = vsel %vm553, %v552, %v550
    %s555 = scalar_lea.vmem %s0, 501
    %v556 = vld [vmem:[%s555] sm:$0x80]
    %vm557 = vcmask 1047559
    %v558 = vsel %vm557, %v556, %v554
    %559 = vrot.lane.b32.xlu0 %v558, 124
    %v560 = vpop.permute.xlu0 %559
    %vm561 = vcmask 39936
    %s562 = scalar_lea.vmem [#allocation0], 16
    %563 = vst.msk [vmem:[%s562] sm:$0xf] %vm561, %v560
    %s564 = scalar_lea.vmem [#allocation0], 84
    %565 = vst.msk [vmem:[%s564] sm:$0xf0] %vm561, %v560
    %s566 = scalar_lea.vmem %s0, 412
    %v567 = vld [vmem:[%s566] sm:$0x1]
    %s568 = scalar_lea.vmem %s0, 443
    %v569 = vld [vmem:[%s568] sm:$0x2]
    %vm570 = vcmask 1041409
    %v571 = vsel %vm570, %v569, %v567
    %s572 = scalar_lea.vmem %s0, 474
    %v573 = vld [vmem:[%s572] sm:$0x4]
    %vm574 = vcmask 1042434
    %v575 = vsel %vm574, %v573, %v571
    %s576 = scalar_lea.vmem %s0, 505
    %v577 = vld [vmem:[%s576] sm:$0x8]
    %vm578 = vcmask 1043459
    %v579 = vsel %vm578, %v577, %v575
    %s580 = scalar_lea.vmem %s0, 280
    %v581 = vld [vmem:[%s580] sm:$0x10]
    %vm582 = vcmask 1044484
    %v583 = vsel %vm582, %v581, %v579
    %s584 = scalar_lea.vmem %s0, 311
    %v585 = vld [vmem:[%s584] sm:$0x20]
    %vm586 = vcmask 1045509
    %v587 = vsel %vm586, %v585, %v583
    %s588 = scalar_lea.vmem %s0, 342
    %v589 = vld [vmem:[%s588] sm:$0x40]
    %vm590 = vcmask 1046534
    %v591 = vsel %vm590, %v589, %v587
    %s592 = scalar_lea.vmem %s0, 373
    %v593 = vld [vmem:[%s592] sm:$0x80]
    %vm594 = vcmask 1047559
    %v595 = vsel %vm594, %v593, %v591
    %596 = vrot.lane.b32.xlu0 %v595, 124
    %v597 = vpop.permute.xlu0 %596
    %vm598 = vcmask 1048544
    %s599 = scalar_lea.vmem [#allocation0], 80
    %600 = vst.msk [vmem:[%s599] sm:$0xf] %vm598, %v597
    %s601 = scalar_lea.vmem [#allocation0], 52
    %602 = vst.msk [vmem:[%s601] sm:$0xf0] %vm598, %v597
    %s603 = scalar_lea.vmem %s0, 540
    %v604 = vld [vmem:[%s603] sm:$0x1]
    %s605 = scalar_lea.vmem %s0, 571
    %v606 = vld [vmem:[%s605] sm:$0x2]
    %vm607 = vcmask 1041409
    %v608 = vsel %vm607, %v606, %v604
    %s609 = scalar_lea.vmem %s0, 602
    %v610 = vld [vmem:[%s609] sm:$0x4]
    %vm611 = vcmask 1042434
    %v612 = vsel %vm611, %v610, %v608
    %s613 = scalar_lea.vmem %s0, 633
    %v614 = vld [vmem:[%s613] sm:$0x8]
    %vm615 = vcmask 1043459
    %v616 = vsel %vm615, %v614, %v612
    %s617 = scalar_lea.vmem %s0, 796
    %v618 = vld [vmem:[%s617] sm:$0x1]
    %s619 = scalar_lea.vmem %s0, 827
    %v620 = vld [vmem:[%s619] sm:$0x2]
    %vm621 = vcmask 1041409
    %v622 = vsel %vm621, %v620, %v618
    %s623 = scalar_lea.vmem %s0, 858
    %v624 = vld [vmem:[%s623] sm:$0x4]
    %vm625 = vcmask 1042434
    %v626 = vsel %vm625, %v624, %v622
    %s627 = scalar_lea.vmem %s0, 889
    %v628 = vld [vmem:[%s627] sm:$0x8]
    %vm629 = vcmask 1043459
    %v630 = vsel %vm629, %v628, %v626
    %vm631 = vcmask 31744
    %v632 = vsel %vm631, %v630, %v616
    %633 = vrot.lane.b32.xlu0 %v632, 124
    %v634 = vpop.permute.xlu0 %633
    %vm635 = vcmask 39936
    %s636 = scalar_lea.vmem [#allocation0], 112
    %637 = vst.msk [vmem:[%s636] sm:$0xf] %vm635, %v634
    %vm638 = vcmask 1048544
    %s639 = scalar_lea.vmem [#allocation0], 152
    %640 = vst.msk [vmem:[%s639] sm:$0xf] %vm638, %v634
    %s641 = scalar_lea.vmem %s0, 13
    %v642 = vld [vmem:[%s641] sm:$0x1]
    %s643 = scalar_lea.vmem %s0, 44
    %v644 = vld [vmem:[%s643] sm:$0x2]
    %vm645 = vcmask 1041409
    %v646 = vsel %vm645, %v644, %v642
    %s647 = scalar_lea.vmem %s0, 75
    %v648 = vld [vmem:[%s647] sm:$0x4]
    %vm649 = vcmask 1042434
    %v650 = vsel %vm649, %v648, %v646
    %s651 = scalar_lea.vmem %s0, 106
    %v652 = vld [vmem:[%s651] sm:$0x8]
    %vm653 = vcmask 1043459
    %v654 = vsel %vm653, %v652, %v650
    %s655 = scalar_lea.vmem %s0, 393
    %v656 = vld [vmem:[%s655] sm:$0x10]
    %vm657 = vcmask 1044484
    %v658 = vsel %vm657, %v656, %v654
    %s659 = scalar_lea.vmem %s0, 424
    %v660 = vld [vmem:[%s659] sm:$0x20]
    %vm661 = vcmask 1045509
    %v662 = vsel %vm661, %v660, %v658
    %s663 = scalar_lea.vmem %s0, 455
    %v664 = vld [vmem:[%s663] sm:$0x40]
    %vm665 = vcmask 1046534
    %v666 = vsel %vm665, %v664, %v662
    %s667 = scalar_lea.vmem %s0, 486
    %v668 = vld [vmem:[%s667] sm:$0x80]
    %vm669 = vcmask 1047559
    %v670 = vsel %vm669, %v668, %v666
    %671 = vrot.lane.b32.xlu0 %v670, 117
    %v672 = vpop.permute.xlu0 %671
    %vm673 = vcmask 1032104
    %674 = vst.msk [vmem:[#allocation0] sm:$0xf] %vm673, %v672
    %s675 = scalar_lea.vmem [#allocation0], 68
    %676 = vst.msk [vmem:[%s675] sm:$0xf0] %vm673, %v672
    %s677 = scalar_lea.vmem %s0, 525
    %v678 = vld [vmem:[%s677] sm:$0x1]
    %s679 = scalar_lea.vmem %s0, 556
    %v680 = vld [vmem:[%s679] sm:$0x2]
    %vm681 = vcmask 1041409
    %v682 = vsel %vm681, %v680, %v678
    %s683 = scalar_lea.vmem %s0, 587
    %v684 = vld [vmem:[%s683] sm:$0x4]
    %vm685 = vcmask 1042434
    %v686 = vsel %vm685, %v684, %v682
    %s687 = scalar_lea.vmem %s0, 618
    %v688 = vld [vmem:[%s687] sm:$0x8]
    %vm689 = vcmask 1043459
    %v690 = vsel %vm689, %v688, %v686
    %s691 = scalar_lea.vmem %s0, 265
    %v692 = vld [vmem:[%s691] sm:$0x10]
    %vm693 = vcmask 1044484
    %v694 = vsel %vm693, %v692, %v690
    %s695 = scalar_lea.vmem %s0, 296
    %v696 = vld [vmem:[%s695] sm:$0x20]
    %vm697 = vcmask 1045509
    %v698 = vsel %vm697, %v696, %v694
    %s699 = scalar_lea.vmem %s0, 327
    %v700 = vld [vmem:[%s699] sm:$0x40]
    %vm701 = vcmask 1046534
    %v702 = vsel %vm701, %v700, %v698
    %s703 = scalar_lea.vmem %s0, 358
    %v704 = vld [vmem:[%s703] sm:$0x80]
    %vm705 = vcmask 1047559
    %v706 = vsel %vm705, %v704, %v702
    %707 = vrot.lane.b32.xlu0 %v706, 117
    %v708 = vpop.permute.xlu0 %707
    %vm709 = vcmask 1032104
    %s710 = scalar_lea.vmem [#allocation0], 96
    %711 = vst.msk [vmem:[%s710] sm:$0xf] %vm709, %v708
    %s712 = scalar_lea.vmem [#allocation0], 44
    %713 = vst.msk [vmem:[%s712] sm:$0xf0] %vm709, %v708
    %s714 = scalar_lea.vmem %s0, 781
    %v715 = vld [vmem:[%s714] sm:$0x1]
    %s716 = scalar_lea.vmem %s0, 812
    %v717 = vld [vmem:[%s716] sm:$0x2]
    %vm718 = vcmask 1041409
    %v719 = vsel %vm718, %v717, %v715
    %s720 = scalar_lea.vmem %s0, 843
    %v721 = vld [vmem:[%s720] sm:$0x4]
    %vm722 = vcmask 1042434
    %v723 = vsel %vm722, %v721, %v719
    %s724 = scalar_lea.vmem %s0, 874
    %v725 = vld [vmem:[%s724] sm:$0x8]
    %vm726 = vcmask 1043459
    %v727 = vsel %vm726, %v725, %v723
    %s728 = scalar_lea.vmem %s0, 137
    %v729 = vld [vmem:[%s728] sm:$0x10]
    %vm730 = vcmask 1044484
    %v731 = vsel %vm730, %v729, %v727
    %s732 = scalar_lea.vmem %s0, 168
    %v733 = vld [vmem:[%s732] sm:$0x20]
    %vm734 = vcmask 1045509
    %v735 = vsel %vm734, %v733, %v731
    %s736 = scalar_lea.vmem %s0, 199
    %v737 = vld [vmem:[%s736] sm:$0x40]
    %vm738 = vcmask 1046534
    %v739 = vsel %vm738, %v737, %v735
    %s740 = scalar_lea.vmem %s0, 230
    %v741 = vld [vmem:[%s740] sm:$0x80]
    %vm742 = vcmask 1047559
    %v743 = vsel %vm742, %v741, %v739
    %744 = vrot.lane.b32.xlu0 %v743, 117
    %v745 = vpop.permute.xlu0 %744
    %vm746 = vcmask 1032104
    %s747 = scalar_lea.vmem [#allocation0], 144
    %748 = vst.msk [vmem:[%s747] sm:$0xf] %vm746, %v745
    %s749 = scalar_lea.vmem [#allocation0], 20
    %750 = vst.msk [vmem:[%s749] sm:$0xf0] %vm746, %v745
    %s751 = scalar_lea.vmem %s0, 653
    %v752 = vld [vmem:[%s751] sm:$0x1]
    %s753 = scalar_lea.vmem %s0, 684
    %v754 = vld [vmem:[%s753] sm:$0x2]
    %vm755 = vcmask 1041409
    %v756 = vsel %vm755, %v754, %v752
    %s757 = scalar_lea.vmem %s0, 715
    %v758 = vld [vmem:[%s757] sm:$0x4]
    %vm759 = vcmask 1042434
    %v760 = vsel %vm759, %v758, %v756
    %s761 = scalar_lea.vmem %s0, 746
    %v762 = vld [vmem:[%s761] sm:$0x8]
    %vm763 = vcmask 1043459
    %v764 = vsel %vm763, %v762, %v760
    %765 = vrot.lane.b32.xlu0 %v764, 117
    %v766 = vpop.permute.xlu0 %765
    %vm767 = vcmask 1032104
    %s768 = scalar_lea.vmem [#allocation0], 120
    %769 = vst.msk [vmem:[%s768] sm:$0xf] %vm767, %v766
    %s770 = scalar_lea.vmem %s0, 155
    %v771 = vld [vmem:[%s770] sm:$0x1]
    %s772 = scalar_lea.vmem %s0, 186
    %v773 = vld [vmem:[%s772] sm:$0x2]
    %vm774 = vcmask 1041409
    %v775 = vsel %vm774, %v773, %v771
    %s776 = scalar_lea.vmem %s0, 217
    %v777 = vld [vmem:[%s776] sm:$0x4]
    %vm778 = vcmask 1042434
    %v779 = vsel %vm778, %v777, %v775
    %s780 = scalar_lea.vmem %s0, 248
    %v781 = vld [vmem:[%s780] sm:$0x8]
    %vm782 = vcmask 1043459
    %v783 = vsel %vm782, %v781, %v779
    %s784 = scalar_lea.vmem %s0, 23
    %v785 = vld [vmem:[%s784] sm:$0x10]
    %vm786 = vcmask 1044484
    %v787 = vsel %vm786, %v785, %v783
    %s788 = scalar_lea.vmem %s0, 54
    %v789 = vld [vmem:[%s788] sm:$0x20]
    %vm790 = vcmask 1045509
    %v791 = vsel %vm790, %v789, %v787
    %s792 = scalar_lea.vmem %s0, 85
    %v793 = vld [vmem:[%s792] sm:$0x40]
    %vm794 = vcmask 1046534
    %v795 = vsel %vm794, %v793, %v791
    %s796 = scalar_lea.vmem %s0, 116
    %v797 = vld [vmem:[%s796] sm:$0x80]
    %vm798 = vcmask 1047559
    %v799 = vsel %vm798, %v797, %v795
    %800 = vrot.lane.b32.xlu0 %v799, 115
    %v801 = vpop.permute.xlu0 %800
    %vm802 = vcmask 1015704
    %s803 = scalar_lea.vmem [#allocation0], 32
    %804 = vst.msk [vmem:[%s803] sm:$0xf] %vm802, %v801
    %s805 = scalar_lea.vmem [#allocation0], 4
    %806 = vst.msk [vmem:[%s805] sm:$0xf0] %vm802, %v801
    %s807 = scalar_lea.vmem %s0, 667
    %v808 = vld [vmem:[%s807] sm:$0x1]
    %s809 = scalar_lea.vmem %s0, 698
    %v810 = vld [vmem:[%s809] sm:$0x2]
    %vm811 = vcmask 1041409
    %v812 = vsel %vm811, %v810, %v808
    %s813 = scalar_lea.vmem %s0, 729
    %v814 = vld [vmem:[%s813] sm:$0x4]
    %vm815 = vcmask 1042434
    %v816 = vsel %vm815, %v814, %v812
    %s817 = scalar_lea.vmem %s0, 760
    %v818 = vld [vmem:[%s817] sm:$0x8]
    %vm819 = vcmask 1043459
    %v820 = vsel %vm819, %v818, %v816
    %s821 = scalar_lea.vmem %s0, 535
    %v822 = vld [vmem:[%s821] sm:$0x10]
    %vm823 = vcmask 1044484
    %v824 = vsel %vm823, %v822, %v820
    %s825 = scalar_lea.vmem %s0, 566
    %v826 = vld [vmem:[%s825] sm:$0x20]
    %vm827 = vcmask 1045509
    %v828 = vsel %vm827, %v826, %v824
    %s829 = scalar_lea.vmem %s0, 597
    %v830 = vld [vmem:[%s829] sm:$0x40]
    %vm831 = vcmask 1046534
    %v832 = vsel %vm831, %v830, %v828
    %s833 = scalar_lea.vmem %s0, 628
    %v834 = vld [vmem:[%s833] sm:$0x80]
    %vm835 = vcmask 1047559
    %v836 = vsel %vm835, %v834, %v832
    %837 = vrot.lane.b32.xlu0 %v836, 115
    %v838 = vpop.permute.xlu0 %837
    %vm839 = vcmask 1015704
    %s840 = scalar_lea.vmem [#allocation0], 128
    %841 = vst.msk [vmem:[%s840] sm:$0xf] %vm839, %v838
    %s842 = scalar_lea.vmem [#allocation0], 100
    %843 = vst.msk [vmem:[%s842] sm:$0xf0] %vm839, %v838
    %s844 = scalar_lea.vmem %s0, 411
    %v845 = vld [vmem:[%s844] sm:$0x1]
    %s846 = scalar_lea.vmem %s0, 442
    %v847 = vld [vmem:[%s846] sm:$0x2]
    %vm848 = vcmask 1041409
    %v849 = vsel %vm848, %v847, %v845
    %s850 = scalar_lea.vmem %s0, 473
    %v851 = vld [vmem:[%s850] sm:$0x4]
    %vm852 = vcmask 1042434
    %v853 = vsel %vm852, %v851, %v849
    %s854 = scalar_lea.vmem %s0, 504
    %v855 = vld [vmem:[%s854] sm:$0x8]
    %vm856 = vcmask 1043459
    %v857 = vsel %vm856, %v855, %v853
    %s858 = scalar_lea.vmem %s0, 279
    %v859 = vld [vmem:[%s858] sm:$0x10]
    %vm860 = vcmask 1044484
    %v861 = vsel %vm860, %v859, %v857
    %s862 = scalar_lea.vmem %s0, 310
    %v863 = vld [vmem:[%s862] sm:$0x20]
    %vm864 = vcmask 1045509
    %v865 = vsel %vm864, %v863, %v861
    %s866 = scalar_lea.vmem %s0, 341
    %v867 = vld [vmem:[%s866] sm:$0x40]
    %vm868 = vcmask 1046534
    %v869 = vsel %vm868, %v867, %v865
    %s870 = scalar_lea.vmem %s0, 372
    %v871 = vld [vmem:[%s870] sm:$0x80]
    %vm872 = vcmask 1047559
    %v873 = vsel %vm872, %v871, %v869
    %874 = vrot.lane.b32.xlu0 %v873, 115
    %v875 = vpop.permute.xlu0 %874
    %vm876 = vcmask 1015704
    %s877 = scalar_lea.vmem [#allocation0], 80
    %878 = vst.msk [vmem:[%s877] sm:$0xf] %vm876, %v875
    %s879 = scalar_lea.vmem [#allocation0], 52
    %880 = vst.msk [vmem:[%s879] sm:$0xf0] %vm876, %v875
    %s881 = scalar_lea.vmem %s0, 795
    %v882 = vld [vmem:[%s881] sm:$0x1]
    %s883 = scalar_lea.vmem %s0, 826
    %v884 = vld [vmem:[%s883] sm:$0x2]
    %vm885 = vcmask 1041409
    %v886 = vsel %vm885, %v884, %v882
    %s887 = scalar_lea.vmem %s0, 857
    %v888 = vld [vmem:[%s887] sm:$0x4]
    %vm889 = vcmask 1042434
    %v890 = vsel %vm889, %v888, %v886
    %s891 = scalar_lea.vmem %s0, 888
    %v892 = vld [vmem:[%s891] sm:$0x8]
    %vm893 = vcmask 1043459
    %v894 = vsel %vm893, %v892, %v890
    %895 = vrot.lane.b32.xlu0 %v894, 115
    %v896 = vpop.permute.xlu0 %895
    %vm897 = vcmask 1015704
    %s898 = scalar_lea.vmem [#allocation0], 152
    %899 = vst.msk [vmem:[%s898] sm:$0xf] %vm897, %v896
    %s900 = scalar_lea.vmem %s0, 12
    %v901 = vld [vmem:[%s900] sm:$0x1]
    %s902 = scalar_lea.vmem %s0, 43
    %v903 = vld [vmem:[%s902] sm:$0x2]
    %vm904 = vcmask 1041409
    %v905 = vsel %vm904, %v903, %v901
    %s906 = scalar_lea.vmem %s0, 74
    %v907 = vld [vmem:[%s906] sm:$0x4]
    %vm908 = vcmask 1042434
    %v909 = vsel %vm908, %v907, %v905
    %s910 = scalar_lea.vmem %s0, 105
    %v911 = vld [vmem:[%s910] sm:$0x8]
    %vm912 = vcmask 1043459
    %v913 = vsel %vm912, %v911, %v909
    %s914 = scalar_lea.vmem %s0, 392
    %v915 = vld [vmem:[%s914] sm:$0x10]
    %vm916 = vcmask 1044484
    %v917 = vsel %vm916, %v915, %v913
    %s918 = scalar_lea.vmem %s0, 423
    %v919 = vld [vmem:[%s918] sm:$0x20]
    %vm920 = vcmask 1045509
    %v921 = vsel %vm920, %v919, %v917
    %s922 = scalar_lea.vmem %s0, 454
    %v923 = vld [vmem:[%s922] sm:$0x40]
    %vm924 = vcmask 1046534
    %v925 = vsel %vm924, %v923, %v921
    %s926 = scalar_lea.vmem %s0, 485
    %v927 = vld [vmem:[%s926] sm:$0x80]
    %vm928 = vcmask 1047559
    %v929 = vsel %vm928, %v927, %v925
    %930 = vrot.lane.b32.xlu0 %v929, 108
    %v931 = vpop.permute.xlu0 %930
    %vm932 = vcmask 958304
    %933 = vst.msk [vmem:[#allocation0] sm:$0xf] %vm932, %v931
    %s934 = scalar_lea.vmem [#allocation0], 68
    %935 = vst.msk [vmem:[%s934] sm:$0xf0] %vm932, %v931
    %s936 = scalar_lea.vmem %s0, 524
    %v937 = vld [vmem:[%s936] sm:$0x1]
    %s938 = scalar_lea.vmem %s0, 555
    %v939 = vld [vmem:[%s938] sm:$0x2]
    %vm940 = vcmask 1041409
    %v941 = vsel %vm940, %v939, %v937
    %s942 = scalar_lea.vmem %s0, 586
    %v943 = vld [vmem:[%s942] sm:$0x4]
    %vm944 = vcmask 1042434
    %v945 = vsel %vm944, %v943, %v941
    %s946 = scalar_lea.vmem %s0, 617
    %v947 = vld [vmem:[%s946] sm:$0x8]
    %vm948 = vcmask 1043459
    %v949 = vsel %vm948, %v947, %v945
    %s950 = scalar_lea.vmem %s0, 264
    %v951 = vld [vmem:[%s950] sm:$0x10]
    %vm952 = vcmask 1044484
    %v953 = vsel %vm952, %v951, %v949
    %s954 = scalar_lea.vmem %s0, 295
    %v955 = vld [vmem:[%s954] sm:$0x20]
    %vm956 = vcmask 1045509
    %v957 = vsel %vm956, %v955, %v953
    %s958 = scalar_lea.vmem %s0, 326
    %v959 = vld [vmem:[%s958] sm:$0x40]
    %vm960 = vcmask 1046534
    %v961 = vsel %vm960, %v959, %v957
    %s962 = scalar_lea.vmem %s0, 357
    %v963 = vld [vmem:[%s962] sm:$0x80]
    %vm964 = vcmask 1047559
    %v965 = vsel %vm964, %v963, %v961
    %966 = vrot.lane.b32.xlu0 %v965, 108
    %v967 = vpop.permute.xlu0 %966
    %vm968 = vcmask 958304
    %s969 = scalar_lea.vmem [#allocation0], 96
    %970 = vst.msk [vmem:[%s969] sm:$0xf] %vm968, %v967
    %s971 = scalar_lea.vmem [#allocation0], 44
    %972 = vst.msk [vmem:[%s971] sm:$0xf0] %vm968, %v967
    %s973 = scalar_lea.vmem %s0, 780
    %v974 = vld [vmem:[%s973] sm:$0x1]
    %s975 = scalar_lea.vmem %s0, 811
    %v976 = vld [vmem:[%s975] sm:$0x2]
    %vm977 = vcmask 1041409
    %v978 = vsel %vm977, %v976, %v974
    %s979 = scalar_lea.vmem %s0, 842
    %v980 = vld [vmem:[%s979] sm:$0x4]
    %vm981 = vcmask 1042434
    %v982 = vsel %vm981, %v980, %v978
    %s983 = scalar_lea.vmem %s0, 873
    %v984 = vld [vmem:[%s983] sm:$0x8]
    %vm985 = vcmask 1043459
    %v986 = vsel %vm985, %v984, %v982
    %s987 = scalar_lea.vmem %s0, 136
    %v988 = vld [vmem:[%s987] sm:$0x10]
    %vm989 = vcmask 1044484
    %v990 = vsel %vm989, %v988, %v986
    %s991 = scalar_lea.vmem %s0, 167
    %v992 = vld [vmem:[%s991] sm:$0x20]
    %vm993 = vcmask 1045509
    %v994 = vsel %vm993, %v992, %v990
    %s995 = scalar_lea.vmem %s0, 198
    %v996 = vld [vmem:[%s995] sm:$0x40]
    %vm997 = vcmask 1046534
    %v998 = vsel %vm997, %v996, %v994
    %s999 = scalar_lea.vmem %s0, 229
    %v1000 = vld [vmem:[%s999] sm:$0x80]
    %vm1001 = vcmask 1047559
    %v1002 = vsel %vm1001, %v1000, %v998
    %1003 = vrot.lane.b32.xlu0 %v1002, 108
    %v1004 = vpop.permute.xlu0 %1003
    %vm1005 = vcmask 958304
    %s1006 = scalar_lea.vmem [#allocation0], 144
    %1007 = vst.msk [vmem:[%s1006] sm:$0xf] %vm1005, %v1004
    %s1008 = scalar_lea.vmem [#allocation0], 20
    %1009 = vst.msk [vmem:[%s1008] sm:$0xf0] %vm1005, %v1004
    %s1010 = scalar_lea.vmem %s0, 652
    %v1011 = vld [vmem:[%s1010] sm:$0x1]
    %s1012 = scalar_lea.vmem %s0, 683
    %v1013 = vld [vmem:[%s1012] sm:$0x2]
    %vm1014 = vcmask 1041409
    %v1015 = vsel %vm1014, %v1013, %v1011
    %s1016 = scalar_lea.vmem %s0, 714
    %v1017 = vld [vmem:[%s1016] sm:$0x4]
    %vm1018 = vcmask 1042434
    %v1019 = vsel %vm1018, %v1017, %v1015
    %s1020 = scalar_lea.vmem %s0, 745
    %v1021 = vld [vmem:[%s1020] sm:$0x8]
    %vm1022 = vcmask 1043459
    %v1023 = vsel %vm1022, %v1021, %v1019
    %1024 = vrot.lane.b32.xlu0 %v1023, 108
    %v1025 = vpop.permute.xlu0 %1024
    %vm1026 = vcmask 958304
    %s1027 = scalar_lea.vmem [#allocation0], 120
    %1028 = vst.msk [vmem:[%s1027] sm:$0xf] %vm1026, %v1025
    %s1029 = scalar_lea.vmem %s0, 154
    %v1030 = vld [vmem:[%s1029] sm:$0x1]
    %s1031 = scalar_lea.vmem %s0, 185
    %v1032 = vld [vmem:[%s1031] sm:$0x2]
    %vm1033 = vcmask 1041409
    %v1034 = vsel %vm1033, %v1032, %v1030
    %s1035 = scalar_lea.vmem %s0, 216
    %v1036 = vld [vmem:[%s1035] sm:$0x4]
    %vm1037 = vcmask 1042434
    %v1038 = vsel %vm1037, %v1036, %v1034
    %s1039 = scalar_lea.vmem %s0, 247
    %v1040 = vld [vmem:[%s1039] sm:$0x8]
    %vm1041 = vcmask 1043459
    %v1042 = vsel %vm1041, %v1040, %v1038
    %s1043 = scalar_lea.vmem %s0, 22
    %v1044 = vld [vmem:[%s1043] sm:$0x10]
    %vm1045 = vcmask 1044484
    %v1046 = vsel %vm1045, %v1044, %v1042
    %s1047 = scalar_lea.vmem %s0, 53
    %v1048 = vld [vmem:[%s1047] sm:$0x20]
    %vm1049 = vcmask 1045509
    %v1050 = vsel %vm1049, %v1048, %v1046
    %s1051 = scalar_lea.vmem %s0, 84
    %v1052 = vld [vmem:[%s1051] sm:$0x40]
    %vm1053 = vcmask 1046534
    %v1054 = vsel %vm1053, %v1052, %v1050
    %s1055 = scalar_lea.vmem %s0, 115
    %v1056 = vld [vmem:[%s1055] sm:$0x80]
    %vm1057 = vcmask 1047559
    %v1058 = vsel %vm1057, %v1056, %v1054
    %1059 = vrot.lane.b32.xlu0 %v1058, 106
    %v1060 = vpop.permute.xlu0 %1059
    %vm1061 = vcmask 941904
    %s1062 = scalar_lea.vmem [#allocation0], 32
    %1063 = vst.msk [vmem:[%s1062] sm:$0xf] %vm1061, %v1060
    %s1064 = scalar_lea.vmem [#allocation0], 4
    %1065 = vst.msk [vmem:[%s1064] sm:$0xf0] %vm1061, %v1060
    %s1066 = scalar_lea.vmem %s0, 666
    %v1067 = vld [vmem:[%s1066] sm:$0x1]
    %s1068 = scalar_lea.vmem %s0, 697
    %v1069 = vld [vmem:[%s1068] sm:$0x2]
    %vm1070 = vcmask 1041409
    %v1071 = vsel %vm1070, %v1069, %v1067
    %s1072 = scalar_lea.vmem %s0, 728
    %v1073 = vld [vmem:[%s1072] sm:$0x4]
    %vm1074 = vcmask 1042434
    %v1075 = vsel %vm1074, %v1073, %v1071
    %s1076 = scalar_lea.vmem %s0, 759
    %v1077 = vld [vmem:[%s1076] sm:$0x8]
    %vm1078 = vcmask 1043459
    %v1079 = vsel %vm1078, %v1077, %v1075
    %s1080 = scalar_lea.vmem %s0, 534
    %v1081 = vld [vmem:[%s1080] sm:$0x10]
    %vm1082 = vcmask 1044484
    %v1083 = vsel %vm1082, %v1081, %v1079
    %s1084 = scalar_lea.vmem %s0, 565
    %v1085 = vld [vmem:[%s1084] sm:$0x20]
    %vm1086 = vcmask 1045509
    %v1087 = vsel %vm1086, %v1085, %v1083
    %s1088 = scalar_lea.vmem %s0, 596
    %v1089 = vld [vmem:[%s1088] sm:$0x40]
    %vm1090 = vcmask 1046534
    %v1091 = vsel %vm1090, %v1089, %v1087
    %s1092 = scalar_lea.vmem %s0, 627
    %v1093 = vld [vmem:[%s1092] sm:$0x80]
    %vm1094 = vcmask 1047559
    %v1095 = vsel %vm1094, %v1093, %v1091
    %1096 = vrot.lane.b32.xlu0 %v1095, 106
    %v1097 = vpop.permute.xlu0 %1096
    %vm1098 = vcmask 941904
    %s1099 = scalar_lea.vmem [#allocation0], 128
    %1100 = vst.msk [vmem:[%s1099] sm:$0xf] %vm1098, %v1097
    %s1101 = scalar_lea.vmem [#allocation0], 100
    %1102 = vst.msk [vmem:[%s1101] sm:$0xf0] %vm1098, %v1097
    %s1103 = scalar_lea.vmem %s0, 410
    %v1104 = vld [vmem:[%s1103] sm:$0x1]
    %s1105 = scalar_lea.vmem %s0, 441
    %v1106 = vld [vmem:[%s1105] sm:$0x2]
    %vm1107 = vcmask 1041409
    %v1108 = vsel %vm1107, %v1106, %v1104
    %s1109 = scalar_lea.vmem %s0, 472
    %v1110 = vld [vmem:[%s1109] sm:$0x4]
    %vm1111 = vcmask 1042434
    %v1112 = vsel %vm1111, %v1110, %v1108
    %s1113 = scalar_lea.vmem %s0, 503
    %v1114 = vld [vmem:[%s1113] sm:$0x8]
    %vm1115 = vcmask 1043459
    %v1116 = vsel %vm1115, %v1114, %v1112
    %s1117 = scalar_lea.vmem %s0, 278
    %v1118 = vld [vmem:[%s1117] sm:$0x10]
    %vm1119 = vcmask 1044484
    %v1120 = vsel %vm1119, %v1118, %v1116
    %s1121 = scalar_lea.vmem %s0, 309
    %v1122 = vld [vmem:[%s1121] sm:$0x20]
    %vm1123 = vcmask 1045509
    %v1124 = vsel %vm1123, %v1122, %v1120
    %s1125 = scalar_lea.vmem %s0, 340
    %v1126 = vld [vmem:[%s1125] sm:$0x40]
    %vm1127 = vcmask 1046534
    %v1128 = vsel %vm1127, %v1126, %v1124
    %s1129 = scalar_lea.vmem %s0, 371
    %v1130 = vld [vmem:[%s1129] sm:$0x80]
    %vm1131 = vcmask 1047559
    %v1132 = vsel %vm1131, %v1130, %v1128
    %1133 = vrot.lane.b32.xlu0 %v1132, 106
    %v1134 = vpop.permute.xlu0 %1133
    %vm1135 = vcmask 941904
    %s1136 = scalar_lea.vmem [#allocation0], 80
    %1137 = vst.msk [vmem:[%s1136] sm:$0xf] %vm1135, %v1134
    %s1138 = scalar_lea.vmem [#allocation0], 52
    %1139 = vst.msk [vmem:[%s1138] sm:$0xf0] %vm1135, %v1134
    %s1140 = scalar_lea.vmem %s0, 794
    %v1141 = vld [vmem:[%s1140] sm:$0x1]
    %s1142 = scalar_lea.vmem %s0, 825
    %v1143 = vld [vmem:[%s1142] sm:$0x2]
    %vm1144 = vcmask 1041409
    %v1145 = vsel %vm1144, %v1143, %v1141
    %s1146 = scalar_lea.vmem %s0, 856
    %v1147 = vld [vmem:[%s1146] sm:$0x4]
    %vm1148 = vcmask 1042434
    %v1149 = vsel %vm1148, %v1147, %v1145
    %s1150 = scalar_lea.vmem %s0, 887
    %v1151 = vld [vmem:[%s1150] sm:$0x8]
    %vm1152 = vcmask 1043459
    %v1153 = vsel %vm1152, %v1151, %v1149
    %1154 = vrot.lane.b32.xlu0 %v1153, 106
    %v1155 = vpop.permute.xlu0 %1154
    %vm1156 = vcmask 941904
    %s1157 = scalar_lea.vmem [#allocation0], 152
    %1158 = vst.msk [vmem:[%s1157] sm:$0xf] %vm1156, %v1155
    %s1159 = scalar_lea.vmem %s0, 11
    %v1160 = vld [vmem:[%s1159] sm:$0x1]
    %s1161 = scalar_lea.vmem %s0, 42
    %v1162 = vld [vmem:[%s1161] sm:$0x2]
    %vm1163 = vcmask 1041409
    %v1164 = vsel %vm1163, %v1162, %v1160
    %s1165 = scalar_lea.vmem %s0, 73
    %v1166 = vld [vmem:[%s1165] sm:$0x4]
    %vm1167 = vcmask 1042434
    %v1168 = vsel %vm1167, %v1166, %v1164
    %s1169 = scalar_lea.vmem %s0, 104
    %v1170 = vld [vmem:[%s1169] sm:$0x8]
    %vm1171 = vcmask 1043459
    %v1172 = vsel %vm1171, %v1170, %v1168
    %s1173 = scalar_lea.vmem %s0, 391
    %v1174 = vld [vmem:[%s1173] sm:$0x10]
    %vm1175 = vcmask 1044484
    %v1176 = vsel %vm1175, %v1174, %v1172
    %s1177 = scalar_lea.vmem %s0, 422
    %v1178 = vld [vmem:[%s1177] sm:$0x20]
    %vm1179 = vcmask 1045509
    %v1180 = vsel %vm1179, %v1178, %v1176
    %s1181 = scalar_lea.vmem %s0, 453
    %v1182 = vld [vmem:[%s1181] sm:$0x40]
    %vm1183 = vcmask 1046534
    %v1184 = vsel %vm1183, %v1182, %v1180
    %s1185 = scalar_lea.vmem %s0, 484
    %v1186 = vld [vmem:[%s1185] sm:$0x80]
    %vm1187 = vcmask 1047559
    %v1188 = vsel %vm1187, %v1186, %v1184
    %1189 = vrot.lane.b32.xlu0 %v1188, 99
    %v1190 = vpop.permute.xlu0 %1189
    %vm1191 = vcmask 884504
    %1192 = vst.msk [vmem:[#allocation0] sm:$0xf] %vm1191, %v1190
    %s1193 = scalar_lea.vmem [#allocation0], 68
    %1194 = vst.msk [vmem:[%s1193] sm:$0xf0] %vm1191, %v1190
    %s1195 = scalar_lea.vmem %s0, 523
    %v1196 = vld [vmem:[%s1195] sm:$0x1]
    %s1197 = scalar_lea.vmem %s0, 554
    %v1198 = vld [vmem:[%s1197] sm:$0x2]
    %vm1199 = vcmask 1041409
    %v1200 = vsel %vm1199, %v1198, %v1196
    %s1201 = scalar_lea.vmem %s0, 585
    %v1202 = vld [vmem:[%s1201] sm:$0x4]
    %vm1203 = vcmask 1042434
    %v1204 = vsel %vm1203, %v1202, %v1200
    %s1205 = scalar_lea.vmem %s0, 616
    %v1206 = vld [vmem:[%s1205] sm:$0x8]
    %vm1207 = vcmask 1043459
    %v1208 = vsel %vm1207, %v1206, %v1204
    %s1209 = scalar_lea.vmem %s0, 263
    %v1210 = vld [vmem:[%s1209] sm:$0x10]
    %vm1211 = vcmask 1044484
    %v1212 = vsel %vm1211, %v1210, %v1208
    %s1213 = scalar_lea.vmem %s0, 294
    %v1214 = vld [vmem:[%s1213] sm:$0x20]
    %vm1215 = vcmask 1045509
    %v1216 = vsel %vm1215, %v1214, %v1212
    %s1217 = scalar_lea.vmem %s0, 325
    %v1218 = vld [vmem:[%s1217] sm:$0x40]
    %vm1219 = vcmask 1046534
    %v1220 = vsel %vm1219, %v1218, %v1216
    %s1221 = scalar_lea.vmem %s0, 356
    %v1222 = vld [vmem:[%s1221] sm:$0x80]
    %vm1223 = vcmask 1047559
    %v1224 = vsel %vm1223, %v1222, %v1220
    %1225 = vrot.lane.b32.xlu0 %v1224, 99
    %v1226 = vpop.permute.xlu0 %1225
    %vm1227 = vcmask 884504
    %s1228 = scalar_lea.vmem [#allocation0], 96
    %1229 = vst.msk [vmem:[%s1228] sm:$0xf] %vm1227, %v1226
    %s1230 = scalar_lea.vmem [#allocation0], 44
    %1231 = vst.msk [vmem:[%s1230] sm:$0xf0] %vm1227, %v1226
    %s1232 = scalar_lea.vmem %s0, 779
    %v1233 = vld [vmem:[%s1232] sm:$0x1]
    %s1234 = scalar_lea.vmem %s0, 810
    %v1235 = vld [vmem:[%s1234] sm:$0x2]
    %vm1236 = vcmask 1041409
    %v1237 = vsel %vm1236, %v1235, %v1233
    %s1238 = scalar_lea.vmem %s0, 841
    %v1239 = vld [vmem:[%s1238] sm:$0x4]
    %vm1240 = vcmask 1042434
    %v1241 = vsel %vm1240, %v1239, %v1237
    %s1242 = scalar_lea.vmem %s0, 872
    %v1243 = vld [vmem:[%s1242] sm:$0x8]
    %vm1244 = vcmask 1043459
    %v1245 = vsel %vm1244, %v1243, %v1241
    %s1246 = scalar_lea.vmem %s0, 135
    %v1247 = vld [vmem:[%s1246] sm:$0x10]
    %vm1248 = vcmask 1044484
    %v1249 = vsel %vm1248, %v1247, %v1245
    %s1250 = scalar_lea.vmem %s0, 166
    %v1251 = vld [vmem:[%s1250] sm:$0x20]
    %vm1252 = vcmask 1045509
    %v1253 = vsel %vm1252, %v1251, %v1249
    %s1254 = scalar_lea.vmem %s0, 197
    %v1255 = vld [vmem:[%s1254] sm:$0x40]
    %vm1256 = vcmask 1046534
    %v1257 = vsel %vm1256, %v1255, %v1253
    %s1258 = scalar_lea.vmem %s0, 228
    %v1259 = vld [vmem:[%s1258] sm:$0x80]
    %vm1260 = vcmask 1047559
    %v1261 = vsel %vm1260, %v1259, %v1257
    %1262 = vrot.lane.b32.xlu0 %v1261, 99
    %v1263 = vpop.permute.xlu0 %1262
    %vm1264 = vcmask 884504
    %s1265 = scalar_lea.vmem [#allocation0], 144
    %1266 = vst.msk [vmem:[%s1265] sm:$0xf] %vm1264, %v1263
    %s1267 = scalar_lea.vmem [#allocation0], 20
    %1268 = vst.msk [vmem:[%s1267] sm:$0xf0] %vm1264, %v1263
    %s1269 = scalar_lea.vmem %s0, 651
    %v1270 = vld [vmem:[%s1269] sm:$0x1]
    %s1271 = scalar_lea.vmem %s0, 682
    %v1272 = vld [vmem:[%s1271] sm:$0x2]
    %vm1273 = vcmask 1041409
    %v1274 = vsel %vm1273, %v1272, %v1270
    %s1275 = scalar_lea.vmem %s0, 713
    %v1276 = vld [vmem:[%s1275] sm:$0x4]
    %vm1277 = vcmask 1042434
    %v1278 = vsel %vm1277, %v1276, %v1274
    %s1279 = scalar_lea.vmem %s0, 744
    %v1280 = vld [vmem:[%s1279] sm:$0x8]
    %vm1281 = vcmask 1043459
    %v1282 = vsel %vm1281, %v1280, %v1278
    %1283 = vrot.lane.b32.xlu0 %v1282, 99
    %v1284 = vpop.permute.xlu0 %1283
    %vm1285 = vcmask 884504
    %s1286 = scalar_lea.vmem [#allocation0], 120
    %1287 = vst.msk [vmem:[%s1286] sm:$0xf] %vm1285, %v1284
    %s1288 = scalar_lea.vmem %s0, 153
    %v1289 = vld [vmem:[%s1288] sm:$0x1]
    %s1290 = scalar_lea.vmem %s0, 184
    %v1291 = vld [vmem:[%s1290] sm:$0x2]
    %vm1292 = vcmask 1041409
    %v1293 = vsel %vm1292, %v1291, %v1289
    %s1294 = scalar_lea.vmem %s0, 215
    %v1295 = vld [vmem:[%s1294] sm:$0x4]
    %vm1296 = vcmask 1042434
    %v1297 = vsel %vm1296, %v1295, %v1293
    %s1298 = scalar_lea.vmem %s0, 246
    %v1299 = vld [vmem:[%s1298] sm:$0x8]
    %vm1300 = vcmask 1043459
    %v1301 = vsel %vm1300, %v1299, %v1297
    %s1302 = scalar_lea.vmem %s0, 21
    %v1303 = vld [vmem:[%s1302] sm:$0x10]
    %vm1304 = vcmask 1044484
    %v1305 = vsel %vm1304, %v1303, %v1301
    %s1306 = scalar_lea.vmem %s0, 52
    %v1307 = vld [vmem:[%s1306] sm:$0x20]
    %vm1308 = vcmask 1045509
    %v1309 = vsel %vm1308, %v1307, %v1305
    %s1310 = scalar_lea.vmem %s0, 83
    %v1311 = vld [vmem:[%s1310] sm:$0x40]
    %vm1312 = vcmask 1046534
    %v1313 = vsel %vm1312, %v1311, %v1309
    %s1314 = scalar_lea.vmem %s0, 114
    %v1315 = vld [vmem:[%s1314] sm:$0x80]
    %vm1316 = vcmask 1047559
    %v1317 = vsel %vm1316, %v1315, %v1313
    %1318 = vrot.lane.b32.xlu0 %v1317, 97
    %v1319 = vpop.permute.xlu0 %1318
    %vm1320 = vcmask 868104
    %s1321 = scalar_lea.vmem [#allocation0], 32
    %1322 = vst.msk [vmem:[%s1321] sm:$0xf] %vm1320, %v1319
    %s1323 = scalar_lea.vmem [#allocation0], 4
    %1324 = vst.msk [vmem:[%s1323] sm:$0xf0] %vm1320, %v1319
    %s1325 = scalar_lea.vmem %s0, 665
    %v1326 = vld [vmem:[%s1325] sm:$0x1]
    %s1327 = scalar_lea.vmem %s0, 696
    %v1328 = vld [vmem:[%s1327] sm:$0x2]
    %vm1329 = vcmask 1041409
    %v1330 = vsel %vm1329, %v1328, %v1326
    %s1331 = scalar_lea.vmem %s0, 727
    %v1332 = vld [vmem:[%s1331] sm:$0x4]
    %vm1333 = vcmask 1042434
    %v1334 = vsel %vm1333, %v1332, %v1330
    %s1335 = scalar_lea.vmem %s0, 758
    %v1336 = vld [vmem:[%s1335] sm:$0x8]
    %vm1337 = vcmask 1043459
    %v1338 = vsel %vm1337, %v1336, %v1334
    %s1339 = scalar_lea.vmem %s0, 533
    %v1340 = vld [vmem:[%s1339] sm:$0x10]
    %vm1341 = vcmask 1044484
    %v1342 = vsel %vm1341, %v1340, %v1338
    %s1343 = scalar_lea.vmem %s0, 564
    %v1344 = vld [vmem:[%s1343] sm:$0x20]
    %vm1345 = vcmask 1045509
    %v1346 = vsel %vm1345, %v1344, %v1342
    %s1347 = scalar_lea.vmem %s0, 595
    %v1348 = vld [vmem:[%s1347] sm:$0x40]
    %vm1349 = vcmask 1046534
    %v1350 = vsel %vm1349, %v1348, %v1346
    %s1351 = scalar_lea.vmem %s0, 626
    %v1352 = vld [vmem:[%s1351] sm:$0x80]
    %vm1353 = vcmask 1047559
    %v1354 = vsel %vm1353, %v1352, %v1350
    %1355 = vrot.lane.b32.xlu0 %v1354, 97
    %v1356 = vpop.permute.xlu0 %1355
    %vm1357 = vcmask 868104
    %s1358 = scalar_lea.vmem [#allocation0], 128
    %1359 = vst.msk [vmem:[%s1358] sm:$0xf] %vm1357, %v1356
    %s1360 = scalar_lea.vmem [#allocation0], 100
    %1361 = vst.msk [vmem:[%s1360] sm:$0xf0] %vm1357, %v1356
    %s1362 = scalar_lea.vmem %s0, 409
    %v1363 = vld [vmem:[%s1362] sm:$0x1]
    %s1364 = scalar_lea.vmem %s0, 440
    %v1365 = vld [vmem:[%s1364] sm:$0x2]
    %vm1366 = vcmask 1041409
    %v1367 = vsel %vm1366, %v1365, %v1363
    %s1368 = scalar_lea.vmem %s0, 471
    %v1369 = vld [vmem:[%s1368] sm:$0x4]
    %vm1370 = vcmask 1042434
    %v1371 = vsel %vm1370, %v1369, %v1367
    %s1372 = scalar_lea.vmem %s0, 502
    %v1373 = vld [vmem:[%s1372] sm:$0x8]
    %vm1374 = vcmask 1043459
    %v1375 = vsel %vm1374, %v1373, %v1371
    %s1376 = scalar_lea.vmem %s0, 277
    %v1377 = vld [vmem:[%s1376] sm:$0x10]
    %vm1378 = vcmask 1044484
    %v1379 = vsel %vm1378, %v1377, %v1375
    %s1380 = scalar_lea.vmem %s0, 308
    %v1381 = vld [vmem:[%s1380] sm:$0x20]
    %vm1382 = vcmask 1045509
    %v1383 = vsel %vm1382, %v1381, %v1379
    %s1384 = scalar_lea.vmem %s0, 339
    %v1385 = vld [vmem:[%s1384] sm:$0x40]
    %vm1386 = vcmask 1046534
    %v1387 = vsel %vm1386, %v1385, %v1383
    %s1388 = scalar_lea.vmem %s0, 370
    %v1389 = vld [vmem:[%s1388] sm:$0x80]
    %vm1390 = vcmask 1047559
    %v1391 = vsel %vm1390, %v1389, %v1387
    %1392 = vrot.lane.b32.xlu0 %v1391, 97
    %v1393 = vpop.permute.xlu0 %1392
    %vm1394 = vcmask 868104
    %s1395 = scalar_lea.vmem [#allocation0], 80
    %1396 = vst.msk [vmem:[%s1395] sm:$0xf] %vm1394, %v1393
    %s1397 = scalar_lea.vmem [#allocation0], 52
    %1398 = vst.msk [vmem:[%s1397] sm:$0xf0] %vm1394, %v1393
    %s1399 = scalar_lea.vmem %s0, 793
    %v1400 = vld [vmem:[%s1399] sm:$0x1]
    %s1401 = scalar_lea.vmem %s0, 824
    %v1402 = vld [vmem:[%s1401] sm:$0x2]
    %vm1403 = vcmask 1041409
    %v1404 = vsel %vm1403, %v1402, %v1400
    %s1405 = scalar_lea.vmem %s0, 855
    %v1406 = vld [vmem:[%s1405] sm:$0x4]
    %vm1407 = vcmask 1042434
    %v1408 = vsel %vm1407, %v1406, %v1404
    %s1409 = scalar_lea.vmem %s0, 886
    %v1410 = vld [vmem:[%s1409] sm:$0x8]
    %vm1411 = vcmask 1043459
    %v1412 = vsel %vm1411, %v1410, %v1408
    %1413 = vrot.lane.b32.xlu0 %v1412, 97
    %v1414 = vpop.permute.xlu0 %1413
    %vm1415 = vcmask 868104
    %s1416 = scalar_lea.vmem [#allocation0], 152
    %1417 = vst.msk [vmem:[%s1416] sm:$0xf] %vm1415, %v1414
    %s1418 = scalar_lea.vmem %s0, 10
    %v1419 = vld [vmem:[%s1418] sm:$0x1]
    %s1420 = scalar_lea.vmem %s0, 41
    %v1421 = vld [vmem:[%s1420] sm:$0x2]
    %vm1422 = vcmask 1041409
    %v1423 = vsel %vm1422, %v1421, %v1419
    %s1424 = scalar_lea.vmem %s0, 72
    %v1425 = vld [vmem:[%s1424] sm:$0x4]
    %vm1426 = vcmask 1042434
    %v1427 = vsel %vm1426, %v1425, %v1423
    %s1428 = scalar_lea.vmem %s0, 103
    %v1429 = vld [vmem:[%s1428] sm:$0x8]
    %vm1430 = vcmask 1043459
    %v1431 = vsel %vm1430, %v1429, %v1427
    %s1432 = scalar_lea.vmem %s0, 390
    %v1433 = vld [vmem:[%s1432] sm:$0x10]
    %vm1434 = vcmask 1044484
    %v1435 = vsel %vm1434, %v1433, %v1431
    %s1436 = scalar_lea.vmem %s0, 421
    %v1437 = vld [vmem:[%s1436] sm:$0x20]
    %vm1438 = vcmask 1045509
    %v1439 = vsel %vm1438, %v1437, %v1435
    %s1440 = scalar_lea.vmem %s0, 452
    %v1441 = vld [vmem:[%s1440] sm:$0x40]
    %vm1442 = vcmask 1046534
    %v1443 = vsel %vm1442, %v1441, %v1439
    %s1444 = scalar_lea.vmem %s0, 483
    %v1445 = vld [vmem:[%s1444] sm:$0x80]
    %vm1446 = vcmask 1047559
    %v1447 = vsel %vm1446, %v1445, %v1443
    %1448 = vrot.lane.b32.xlu0 %v1447, 90
    %v1449 = vpop.permute.xlu0 %1448
    %vm1450 = vcmask 810704
    %1451 = vst.msk [vmem:[#allocation0] sm:$0xf] %vm1450, %v1449
    %s1452 = scalar_lea.vmem [#allocation0], 68
    %1453 = vst.msk [vmem:[%s1452] sm:$0xf0] %vm1450, %v1449
    %s1454 = scalar_lea.vmem %s0, 522
    %v1455 = vld [vmem:[%s1454] sm:$0x1]
    %s1456 = scalar_lea.vmem %s0, 553
    %v1457 = vld [vmem:[%s1456] sm:$0x2]
    %vm1458 = vcmask 1041409
    %v1459 = vsel %vm1458, %v1457, %v1455
    %s1460 = scalar_lea.vmem %s0, 584
    %v1461 = vld [vmem:[%s1460] sm:$0x4]
    %vm1462 = vcmask 1042434
    %v1463 = vsel %vm1462, %v1461, %v1459
    %s1464 = scalar_lea.vmem %s0, 615
    %v1465 = vld [vmem:[%s1464] sm:$0x8]
    %vm1466 = vcmask 1043459
    %v1467 = vsel %vm1466, %v1465, %v1463
    %s1468 = scalar_lea.vmem %s0, 262
    %v1469 = vld [vmem:[%s1468] sm:$0x10]
    %vm1470 = vcmask 1044484
    %v1471 = vsel %vm1470, %v1469, %v1467
    %s1472 = scalar_lea.vmem %s0, 293
    %v1473 = vld [vmem:[%s1472] sm:$0x20]
    %vm1474 = vcmask 1045509
    %v1475 = vsel %vm1474, %v1473, %v1471
    %s1476 = scalar_lea.vmem %s0, 324
    %v1477 = vld [vmem:[%s1476] sm:$0x40]
    %vm1478 = vcmask 1046534
    %v1479 = vsel %vm1478, %v1477, %v1475
    %s1480 = scalar_lea.vmem %s0, 355
    %v1481 = vld [vmem:[%s1480] sm:$0x80]
    %vm1482 = vcmask 1047559
    %v1483 = vsel %vm1482, %v1481, %v1479
    %1484 = vrot.lane.b32.xlu0 %v1483, 90
    %v1485 = vpop.permute.xlu0 %1484
    %vm1486 = vcmask 810704
    %s1487 = scalar_lea.vmem [#allocation0], 96
    %1488 = vst.msk [vmem:[%s1487] sm:$0xf] %vm1486, %v1485
    %s1489 = scalar_lea.vmem [#allocation0], 44
    %1490 = vst.msk [vmem:[%s1489] sm:$0xf0] %vm1486, %v1485
    %s1491 = scalar_lea.vmem %s0, 778
    %v1492 = vld [vmem:[%s1491] sm:$0x1]
    %s1493 = scalar_lea.vmem %s0, 809
    %v1494 = vld [vmem:[%s1493] sm:$0x2]
    %vm1495 = vcmask 1041409
    %v1496 = vsel %vm1495, %v1494, %v1492
    %s1497 = scalar_lea.vmem %s0, 840
    %v1498 = vld [vmem:[%s1497] sm:$0x4]
    %vm1499 = vcmask 1042434
    %v1500 = vsel %vm1499, %v1498, %v1496
    %s1501 = scalar_lea.vmem %s0, 871
    %v1502 = vld [vmem:[%s1501] sm:$0x8]
    %vm1503 = vcmask 1043459
    %v1504 = vsel %vm1503, %v1502, %v1500
    %s1505 = scalar_lea.vmem %s0, 134
    %v1506 = vld [vmem:[%s1505] sm:$0x10]
    %vm1507 = vcmask 1044484
    %v1508 = vsel %vm1507, %v1506, %v1504
    %s1509 = scalar_lea.vmem %s0, 165
    %v1510 = vld [vmem:[%s1509] sm:$0x20]
    %vm1511 = vcmask 1045509
    %v1512 = vsel %vm1511, %v1510, %v1508
    %s1513 = scalar_lea.vmem %s0, 196
    %v1514 = vld [vmem:[%s1513] sm:$0x40]
    %vm1515 = vcmask 1046534
    %v1516 = vsel %vm1515, %v1514, %v1512
    %s1517 = scalar_lea.vmem %s0, 227
    %v1518 = vld [vmem:[%s1517] sm:$0x80]
    %vm1519 = vcmask 1047559
    %v1520 = vsel %vm1519, %v1518, %v1516
    %1521 = vrot.lane.b32.xlu0 %v1520, 90
    %v1522 = vpop.permute.xlu0 %1521
    %vm1523 = vcmask 810704
    %s1524 = scalar_lea.vmem [#allocation0], 144
    %1525 = vst.msk [vmem:[%s1524] sm:$0xf] %vm1523, %v1522
    %s1526 = scalar_lea.vmem [#allocation0], 20
    %1527 = vst.msk [vmem:[%s1526] sm:$0xf0] %vm1523, %v1522
    %s1528 = scalar_lea.vmem %s0, 650
    %v1529 = vld [vmem:[%s1528] sm:$0x1]
    %s1530 = scalar_lea.vmem %s0, 681
    %v1531 = vld [vmem:[%s1530] sm:$0x2]
    %vm1532 = vcmask 1041409
    %v1533 = vsel %vm1532, %v1531, %v1529
    %s1534 = scalar_lea.vmem %s0, 712
    %v1535 = vld [vmem:[%s1534] sm:$0x4]
    %vm1536 = vcmask 1042434
    %v1537 = vsel %vm1536, %v1535, %v1533
    %s1538 = scalar_lea.vmem %s0, 743
    %v1539 = vld [vmem:[%s1538] sm:$0x8]
    %vm1540 = vcmask 1043459
    %v1541 = vsel %vm1540, %v1539, %v1537
    %1542 = vrot.lane.b32.xlu0 %v1541, 90
    %v1543 = vpop.permute.xlu0 %1542
    %vm1544 = vcmask 810704
    %s1545 = scalar_lea.vmem [#allocation0], 120
    %1546 = vst.msk [vmem:[%s1545] sm:$0xf] %vm1544, %v1543
    %s1547 = scalar_lea.vmem %s0, 152
    %v1548 = vld [vmem:[%s1547] sm:$0x1]
    %s1549 = scalar_lea.vmem %s0, 183
    %v1550 = vld [vmem:[%s1549] sm:$0x2]
    %vm1551 = vcmask 1041409
    %v1552 = vsel %vm1551, %v1550, %v1548
    %s1553 = scalar_lea.vmem %s0, 214
    %v1554 = vld [vmem:[%s1553] sm:$0x4]
    %vm1555 = vcmask 1042434
    %v1556 = vsel %vm1555, %v1554, %v1552
    %s1557 = scalar_lea.vmem %s0, 245
    %v1558 = vld [vmem:[%s1557] sm:$0x8]
    %vm1559 = vcmask 1043459
    %v1560 = vsel %vm1559, %v1558, %v1556
    %s1561 = scalar_lea.vmem %s0, 20
    %v1562 = vld [vmem:[%s1561] sm:$0x10]
    %vm1563 = vcmask 1044484
    %v1564 = vsel %vm1563, %v1562, %v1560
    %s1565 = scalar_lea.vmem %s0, 51
    %v1566 = vld [vmem:[%s1565] sm:$0x20]
    %vm1567 = vcmask 1045509
    %v1568 = vsel %vm1567, %v1566, %v1564
    %s1569 = scalar_lea.vmem %s0, 82
    %v1570 = vld [vmem:[%s1569] sm:$0x40]
    %vm1571 = vcmask 1046534
    %v1572 = vsel %vm1571, %v1570, %v1568
    %s1573 = scalar_lea.vmem %s0, 113
    %v1574 = vld [vmem:[%s1573] sm:$0x80]
    %vm1575 = vcmask 1047559
    %v1576 = vsel %vm1575, %v1574, %v1572
    %1577 = vrot.lane.b32.xlu0 %v1576, 88
    %v1578 = vpop.permute.xlu0 %1577
    %vm1579 = vcmask 794304
    %s1580 = scalar_lea.vmem [#allocation0], 32
    %1581 = vst.msk [vmem:[%s1580] sm:$0xf] %vm1579, %v1578
    %s1582 = scalar_lea.vmem [#allocation0], 4
    %1583 = vst.msk [vmem:[%s1582] sm:$0xf0] %vm1579, %v1578
    %s1584 = scalar_lea.vmem %s0, 664
    %v1585 = vld [vmem:[%s1584] sm:$0x1]
    %s1586 = scalar_lea.vmem %s0, 695
    %v1587 = vld [vmem:[%s1586] sm:$0x2]
    %vm1588 = vcmask 1041409
    %v1589 = vsel %vm1588, %v1587, %v1585
    %s1590 = scalar_lea.vmem %s0, 726
    %v1591 = vld [vmem:[%s1590] sm:$0x4]
    %vm1592 = vcmask 1042434
    %v1593 = vsel %vm1592, %v1591, %v1589
    %s1594 = scalar_lea.vmem %s0, 757
    %v1595 = vld [vmem:[%s1594] sm:$0x8]
    %vm1596 = vcmask 1043459
    %v1597 = vsel %vm1596, %v1595, %v1593
    %s1598 = scalar_lea.vmem %s0, 532
    %v1599 = vld [vmem:[%s1598] sm:$0x10]
    %vm1600 = vcmask 1044484
    %v1601 = vsel %vm1600, %v1599, %v1597
    %s1602 = scalar_lea.vmem %s0, 563
    %v1603 = vld [vmem:[%s1602] sm:$0x20]
    %vm1604 = vcmask 1045509
    %v1605 = vsel %vm1604, %v1603, %v1601
    %s1606 = scalar_lea.vmem %s0, 594
    %v1607 = vld [vmem:[%s1606] sm:$0x40]
    %vm1608 = vcmask 1046534
    %v1609 = vsel %vm1608, %v1607, %v1605
    %s1610 = scalar_lea.vmem %s0, 625
    %v1611 = vld [vmem:[%s1610] sm:$0x80]
    %vm1612 = vcmask 1047559
    %v1613 = vsel %vm1612, %v1611, %v1609
    %1614 = vrot.lane.b32.xlu0 %v1613, 88
    %v1615 = vpop.permute.xlu0 %1614
    %vm1616 = vcmask 794304
    %s1617 = scalar_lea.vmem [#allocation0], 128
    %1618 = vst.msk [vmem:[%s1617] sm:$0xf] %vm1616, %v1615
    %s1619 = scalar_lea.vmem [#allocation0], 100
    %1620 = vst.msk [vmem:[%s1619] sm:$0xf0] %vm1616, %v1615
    %s1621 = scalar_lea.vmem %s0, 408
    %v1622 = vld [vmem:[%s1621] sm:$0x1]
    %s1623 = scalar_lea.vmem %s0, 439
    %v1624 = vld [vmem:[%s1623] sm:$0x2]
    %vm1625 = vcmask 1041409
    %v1626 = vsel %vm1625, %v1624, %v1622
    %s1627 = scalar_lea.vmem %s0, 470
    %v1628 = vld [vmem:[%s1627] sm:$0x4]
    %vm1629 = vcmask 1042434
    %v1630 = vsel %vm1629, %v1628, %v1626
    %s1631 = scalar_lea.vmem %s0, 501
    %v1632 = vld [vmem:[%s1631] sm:$0x8]
    %vm1633 = vcmask 1043459
    %v1634 = vsel %vm1633, %v1632, %v1630
    %s1635 = scalar_lea.vmem %s0, 276
    %v1636 = vld [vmem:[%s1635] sm:$0x10]
    %vm1637 = vcmask 1044484
    %v1638 = vsel %vm1637, %v1636, %v1634
    %s1639 = scalar_lea.vmem %s0, 307
    %v1640 = vld [vmem:[%s1639] sm:$0x20]
    %vm1641 = vcmask 1045509
    %v1642 = vsel %vm1641, %v1640, %v1638
    %s1643 = scalar_lea.vmem %s0, 338
    %v1644 = vld [vmem:[%s1643] sm:$0x40]
    %vm1645 = vcmask 1046534
    %v1646 = vsel %vm1645, %v1644, %v1642
    %s1647 = scalar_lea.vmem %s0, 369
    %v1648 = vld [vmem:[%s1647] sm:$0x80]
    %vm1649 = vcmask 1047559
    %v1650 = vsel %vm1649, %v1648, %v1646
    %1651 = vrot.lane.b32.xlu0 %v1650, 88
    %v1652 = vpop.permute.xlu0 %1651
    %vm1653 = vcmask 794304
    %s1654 = scalar_lea.vmem [#allocation0], 80
    %1655 = vst.msk [vmem:[%s1654] sm:$0xf] %vm1653, %v1652
    %s1656 = scalar_lea.vmem [#allocation0], 52
    %1657 = vst.msk [vmem:[%s1656] sm:$0xf0] %vm1653, %v1652
    %s1658 = scalar_lea.vmem %s0, 792
    %v1659 = vld [vmem:[%s1658] sm:$0x1]
    %s1660 = scalar_lea.vmem %s0, 823
    %v1661 = vld [vmem:[%s1660] sm:$0x2]
    %vm1662 = vcmask 1041409
    %v1663 = vsel %vm1662, %v1661, %v1659
    %s1664 = scalar_lea.vmem %s0, 854
    %v1665 = vld [vmem:[%s1664] sm:$0x4]
    %vm1666 = vcmask 1042434
    %v1667 = vsel %vm1666, %v1665, %v1663
    %s1668 = scalar_lea.vmem %s0, 885
    %v1669 = vld [vmem:[%s1668] sm:$0x8]
    %vm1670 = vcmask 1043459
    %v1671 = vsel %vm1670, %v1669, %v1667
    %1672 = vrot.lane.b32.xlu0 %v1671, 88
    %v1673 = vpop.permute.xlu0 %1672
    %vm1674 = vcmask 794304
    %s1675 = scalar_lea.vmem [#allocation0], 152
    %1676 = vst.msk [vmem:[%s1675] sm:$0xf] %vm1674, %v1673
    %s1677 = scalar_lea.vmem %s0, 9
    %v1678 = vld [vmem:[%s1677] sm:$0x1]
    %s1679 = scalar_lea.vmem %s0, 40
    %v1680 = vld [vmem:[%s1679] sm:$0x2]
    %vm1681 = vcmask 1041409
    %v1682 = vsel %vm1681, %v1680, %v1678
    %s1683 = scalar_lea.vmem %s0, 71
    %v1684 = vld [vmem:[%s1683] sm:$0x4]
    %vm1685 = vcmask 1042434
    %v1686 = vsel %vm1685, %v1684, %v1682
    %s1687 = scalar_lea.vmem %s0, 102
    %v1688 = vld [vmem:[%s1687] sm:$0x8]
    %vm1689 = vcmask 1043459
    %v1690 = vsel %vm1689, %v1688, %v1686
    %s1691 = scalar_lea.vmem %s0, 389
    %v1692 = vld [vmem:[%s1691] sm:$0x10]
    %vm1693 = vcmask 1044484
    %v1694 = vsel %vm1693, %v1692, %v1690
    %s1695 = scalar_lea.vmem %s0, 420
    %v1696 = vld [vmem:[%s1695] sm:$0x20]
    %vm1697 = vcmask 1045509
    %v1698 = vsel %vm1697, %v1696, %v1694
    %s1699 = scalar_lea.vmem %s0, 451
    %v1700 = vld [vmem:[%s1699] sm:$0x40]
    %vm1701 = vcmask 1046534
    %v1702 = vsel %vm1701, %v1700, %v1698
    %s1703 = scalar_lea.vmem %s0, 482
    %v1704 = vld [vmem:[%s1703] sm:$0x80]
    %vm1705 = vcmask 1047559
    %v1706 = vsel %vm1705, %v1704, %v1702
    %1707 = vrot.lane.b32.xlu0 %v1706, 81
    %v1708 = vpop.permute.xlu0 %1707
    %vm1709 = vcmask 736904
    %1710 = vst.msk [vmem:[#allocation0] sm:$0xf] %vm1709, %v1708
    %s1711 = scalar_lea.vmem [#allocation0], 68
    %1712 = vst.msk [vmem:[%s1711] sm:$0xf0] %vm1709, %v1708
    %s1713 = scalar_lea.vmem %s0, 521
    %v1714 = vld [vmem:[%s1713] sm:$0x1]
    %s1715 = scalar_lea.vmem %s0, 552
    %v1716 = vld [vmem:[%s1715] sm:$0x2]
    %vm1717 = vcmask 1041409
    %v1718 = vsel %vm1717, %v1716, %v1714
    %s1719 = scalar_lea.vmem %s0, 583
    %v1720 = vld [vmem:[%s1719] sm:$0x4]
    %vm1721 = vcmask 1042434
    %v1722 = vsel %vm1721, %v1720, %v1718
    %s1723 = scalar_lea.vmem %s0, 614
    %v1724 = vld [vmem:[%s1723] sm:$0x8]
    %vm1725 = vcmask 1043459
    %v1726 = vsel %vm1725, %v1724, %v1722
    %s1727 = scalar_lea.vmem %s0, 261
    %v1728 = vld [vmem:[%s1727] sm:$0x10]
    %vm1729 = vcmask 1044484
    %v1730 = vsel %vm1729, %v1728, %v1726
    %s1731 = scalar_lea.vmem %s0, 292
    %v1732 = vld [vmem:[%s1731] sm:$0x20]
    %vm1733 = vcmask 1045509
    %v1734 = vsel %vm1733, %v1732, %v1730
    %s1735 = scalar_lea.vmem %s0, 323
    %v1736 = vld [vmem:[%s1735] sm:$0x40]
    %vm1737 = vcmask 1046534
    %v1738 = vsel %vm1737, %v1736, %v1734
    %s1739 = scalar_lea.vmem %s0, 354
    %v1740 = vld [vmem:[%s1739] sm:$0x80]
    %vm1741 = vcmask 1047559
    %v1742 = vsel %vm1741, %v1740, %v1738
    %1743 = vrot.lane.b32.xlu0 %v1742, 81
    %v1744 = vpop.permute.xlu0 %1743
    %vm1745 = vcmask 736904
    %s1746 = scalar_lea.vmem [#allocation0], 96
    %1747 = vst.msk [vmem:[%s1746] sm:$0xf] %vm1745, %v1744
    %s1748 = scalar_lea.vmem [#allocation0], 44
    %1749 = vst.msk [vmem:[%s1748] sm:$0xf0] %vm1745, %v1744
    %s1750 = scalar_lea.vmem %s0, 777
    %v1751 = vld [vmem:[%s1750] sm:$0x1]
    %s1752 = scalar_lea.vmem %s0, 808
    %v1753 = vld [vmem:[%s1752] sm:$0x2]
    %vm1754 = vcmask 1041409
    %v1755 = vsel %vm1754, %v1753, %v1751
    %s1756 = scalar_lea.vmem %s0, 839
    %v1757 = vld [vmem:[%s1756] sm:$0x4]
    %vm1758 = vcmask 1042434
    %v1759 = vsel %vm1758, %v1757, %v1755
    %s1760 = scalar_lea.vmem %s0, 870
    %v1761 = vld [vmem:[%s1760] sm:$0x8]
    %vm1762 = vcmask 1043459
    %v1763 = vsel %vm1762, %v1761, %v1759
    %s1764 = scalar_lea.vmem %s0, 133
    %v1765 = vld [vmem:[%s1764] sm:$0x10]
    %vm1766 = vcmask 1044484
    %v1767 = vsel %vm1766, %v1765, %v1763
    %s1768 = scalar_lea.vmem %s0, 164
    %v1769 = vld [vmem:[%s1768] sm:$0x20]
    %vm1770 = vcmask 1045509
    %v1771 = vsel %vm1770, %v1769, %v1767
    %s1772 = scalar_lea.vmem %s0, 195
    %v1773 = vld [vmem:[%s1772] sm:$0x40]
    %vm1774 = vcmask 1046534
    %v1775 = vsel %vm1774, %v1773, %v1771
    %s1776 = scalar_lea.vmem %s0, 226
    %v1777 = vld [vmem:[%s1776] sm:$0x80]
    %vm1778 = vcmask 1047559
    %v1779 = vsel %vm1778, %v1777, %v1775
    %1780 = vrot.lane.b32.xlu0 %v1779, 81
    %v1781 = vpop.permute.xlu0 %1780
    %vm1782 = vcmask 736904
    %s1783 = scalar_lea.vmem [#allocation0], 144
    %1784 = vst.msk [vmem:[%s1783] sm:$0xf] %vm1782, %v1781
    %s1785 = scalar_lea.vmem [#allocation0], 20
    %1786 = vst.msk [vmem:[%s1785] sm:$0xf0] %vm1782, %v1781
    %s1787 = scalar_lea.vmem %s0, 649
    %v1788 = vld [vmem:[%s1787] sm:$0x1]
    %s1789 = scalar_lea.vmem %s0, 680
    %v1790 = vld [vmem:[%s1789] sm:$0x2]
    %vm1791 = vcmask 1041409
    %v1792 = vsel %vm1791, %v1790, %v1788
    %s1793 = scalar_lea.vmem %s0, 711
    %v1794 = vld [vmem:[%s1793] sm:$0x4]
    %vm1795 = vcmask 1042434
    %v1796 = vsel %vm1795, %v1794, %v1792
    %s1797 = scalar_lea.vmem %s0, 742
    %v1798 = vld [vmem:[%s1797] sm:$0x8]
    %vm1799 = vcmask 1043459
    %v1800 = vsel %vm1799, %v1798, %v1796
    %1801 = vrot.lane.b32.xlu0 %v1800, 81
    %v1802 = vpop.permute.xlu0 %1801
    %vm1803 = vcmask 736904
    %s1804 = scalar_lea.vmem [#allocation0], 120
    %1805 = vst.msk [vmem:[%s1804] sm:$0xf] %vm1803, %v1802
    %s1806 = scalar_lea.vmem %s0, 151
    %v1807 = vld [vmem:[%s1806] sm:$0x1]
    %s1808 = scalar_lea.vmem %s0, 182
    %v1809 = vld [vmem:[%s1808] sm:$0x2]
    %vm1810 = vcmask 1041409
    %v1811 = vsel %vm1810, %v1809, %v1807
    %s1812 = scalar_lea.vmem %s0, 213
    %v1813 = vld [vmem:[%s1812] sm:$0x4]
    %vm1814 = vcmask 1042434
    %v1815 = vsel %vm1814, %v1813, %v1811
    %s1816 = scalar_lea.vmem %s0, 244
    %v1817 = vld [vmem:[%s1816] sm:$0x8]
    %vm1818 = vcmask 1043459
    %v1819 = vsel %vm1818, %v1817, %v1815
    %s1820 = scalar_lea.vmem %s0, 19
    %v1821 = vld [vmem:[%s1820] sm:$0x10]
    %vm1822 = vcmask 1044484
    %v1823 = vsel %vm1822, %v1821, %v1819
    %s1824 = scalar_lea.vmem %s0, 50
    %v1825 = vld [vmem:[%s1824] sm:$0x20]
    %vm1826 = vcmask 1045509
    %v1827 = vsel %vm1826, %v1825, %v1823
    %s1828 = scalar_lea.vmem %s0, 81
    %v1829 = vld [vmem:[%s1828] sm:$0x40]
    %vm1830 = vcmask 1046534
    %v1831 = vsel %vm1830, %v1829, %v1827
    %s1832 = scalar_lea.vmem %s0, 112
    %v1833 = vld [vmem:[%s1832] sm:$0x80]
    %vm1834 = vcmask 1047559
    %v1835 = vsel %vm1834, %v1833, %v1831
    %1836 = vrot.lane.b32.xlu0 %v1835, 79
    %v1837 = vpop.permute.xlu0 %1836
    %vm1838 = vcmask 720504
    %s1839 = scalar_lea.vmem [#allocation0], 32
    %1840 = vst.msk [vmem:[%s1839] sm:$0xf] %vm1838, %v1837
    %s1841 = scalar_lea.vmem [#allocation0], 4
    %1842 = vst.msk [vmem:[%s1841] sm:$0xf0] %vm1838, %v1837
    %s1843 = scalar_lea.vmem %s0, 663
    %v1844 = vld [vmem:[%s1843] sm:$0x1]
    %s1845 = scalar_lea.vmem %s0, 694
    %v1846 = vld [vmem:[%s1845] sm:$0x2]
    %vm1847 = vcmask 1041409
    %v1848 = vsel %vm1847, %v1846, %v1844
    %s1849 = scalar_lea.vmem %s0, 725
    %v1850 = vld [vmem:[%s1849] sm:$0x4]
    %vm1851 = vcmask 1042434
    %v1852 = vsel %vm1851, %v1850, %v1848
    %s1853 = scalar_lea.vmem %s0, 756
    %v1854 = vld [vmem:[%s1853] sm:$0x8]
    %vm1855 = vcmask 1043459
    %v1856 = vsel %vm1855, %v1854, %v1852
    %s1857 = scalar_lea.vmem %s0, 531
    %v1858 = vld [vmem:[%s1857] sm:$0x10]
    %vm1859 = vcmask 1044484
    %v1860 = vsel %vm1859, %v1858, %v1856
    %s1861 = scalar_lea.vmem %s0, 562
    %v1862 = vld [vmem:[%s1861] sm:$0x20]
    %vm1863 = vcmask 1045509
    %v1864 = vsel %vm1863, %v1862, %v1860
    %s1865 = scalar_lea.vmem %s0, 593
    %v1866 = vld [vmem:[%s1865] sm:$0x40]
    %vm1867 = vcmask 1046534
    %v1868 = vsel %vm1867, %v1866, %v1864
    %s1869 = scalar_lea.vmem %s0, 624
    %v1870 = vld [vmem:[%s1869] sm:$0x80]
    %vm1871 = vcmask 1047559
    %v1872 = vsel %vm1871, %v1870, %v1868
    %1873 = vrot.lane.b32.xlu0 %v1872, 79
    %v1874 = vpop.permute.xlu0 %1873
    %vm1875 = vcmask 720504
    %s1876 = scalar_lea.vmem [#allocation0], 128
    %1877 = vst.msk [vmem:[%s1876] sm:$0xf] %vm1875, %v1874
    %s1878 = scalar_lea.vmem [#allocation0], 100
    %1879 = vst.msk [vmem:[%s1878] sm:$0xf0] %vm1875, %v1874
    %s1880 = scalar_lea.vmem %s0, 407
    %v1881 = vld [vmem:[%s1880] sm:$0x1]
    %s1882 = scalar_lea.vmem %s0, 438
    %v1883 = vld [vmem:[%s1882] sm:$0x2]
    %vm1884 = vcmask 1041409
    %v1885 = vsel %vm1884, %v1883, %v1881
    %s1886 = scalar_lea.vmem %s0, 469
    %v1887 = vld [vmem:[%s1886] sm:$0x4]
    %vm1888 = vcmask 1042434
    %v1889 = vsel %vm1888, %v1887, %v1885
    %s1890 = scalar_lea.vmem %s0, 500
    %v1891 = vld [vmem:[%s1890] sm:$0x8]
    %vm1892 = vcmask 1043459
    %v1893 = vsel %vm1892, %v1891, %v1889
    %s1894 = scalar_lea.vmem %s0, 275
    %v1895 = vld [vmem:[%s1894] sm:$0x10]
    %vm1896 = vcmask 1044484
    %v1897 = vsel %vm1896, %v1895, %v1893
    %s1898 = scalar_lea.vmem %s0, 306
    %v1899 = vld [vmem:[%s1898] sm:$0x20]
    %vm1900 = vcmask 1045509
    %v1901 = vsel %vm1900, %v1899, %v1897
    %s1902 = scalar_lea.vmem %s0, 337
    %v1903 = vld [vmem:[%s1902] sm:$0x40]
    %vm1904 = vcmask 1046534
    %v1905 = vsel %vm1904, %v1903, %v1901
    %s1906 = scalar_lea.vmem %s0, 368
    %v1907 = vld [vmem:[%s1906] sm:$0x80]
    %vm1908 = vcmask 1047559
    %v1909 = vsel %vm1908, %v1907, %v1905
    %1910 = vrot.lane.b32.xlu0 %v1909, 79
    %v1911 = vpop.permute.xlu0 %1910
    %vm1912 = vcmask 720504
    %s1913 = scalar_lea.vmem [#allocation0], 80
    %1914 = vst.msk [vmem:[%s1913] sm:$0xf] %vm1912, %v1911
    %s1915 = scalar_lea.vmem [#allocation0], 52
    %1916 = vst.msk [vmem:[%s1915] sm:$0xf0] %vm1912, %v1911
    %s1917 = scalar_lea.vmem %s0, 791
    %v1918 = vld [vmem:[%s1917] sm:$0x1]
    %s1919 = scalar_lea.vmem %s0, 822
    %v1920 = vld [vmem:[%s1919] sm:$0x2]
    %vm1921 = vcmask 1041409
    %v1922 = vsel %vm1921, %v1920, %v1918
    %s1923 = scalar_lea.vmem %s0, 853
    %v1924 = vld [vmem:[%s1923] sm:$0x4]
    %vm1925 = vcmask 1042434
    %v1926 = vsel %vm1925, %v1924, %v1922
    %s1927 = scalar_lea.vmem %s0, 884
    %v1928 = vld [vmem:[%s1927] sm:$0x8]
    %vm1929 = vcmask 1043459
    %v1930 = vsel %vm1929, %v1928, %v1926
    %1931 = vrot.lane.b32.xlu0 %v1930, 79
    %v1932 = vpop.permute.xlu0 %1931
    %vm1933 = vcmask 720504
    %s1934 = scalar_lea.vmem [#allocation0], 152
    %1935 = vst.msk [vmem:[%s1934] sm:$0xf] %vm1933, %v1932
    %s1936 = scalar_lea.vmem %s0, 8
    %v1937 = vld [vmem:[%s1936] sm:$0x1]
    %s1938 = scalar_lea.vmem %s0, 39
    %v1939 = vld [vmem:[%s1938] sm:$0x2]
    %vm1940 = vcmask 1041409
    %v1941 = vsel %vm1940, %v1939, %v1937
    %s1942 = scalar_lea.vmem %s0, 70
    %v1943 = vld [vmem:[%s1942] sm:$0x4]
    %vm1944 = vcmask 1042434
    %v1945 = vsel %vm1944, %v1943, %v1941
    %s1946 = scalar_lea.vmem %s0, 101
    %v1947 = vld [vmem:[%s1946] sm:$0x8]
    %vm1948 = vcmask 1043459
    %v1949 = vsel %vm1948, %v1947, %v1945
    %s1950 = scalar_lea.vmem %s0, 388
    %v1951 = vld [vmem:[%s1950] sm:$0x10]
    %vm1952 = vcmask 1044484
    %v1953 = vsel %vm1952, %v1951, %v1949
    %s1954 = scalar_lea.vmem %s0, 419
    %v1955 = vld [vmem:[%s1954] sm:$0x20]
    %vm1956 = vcmask 1045509
    %v1957 = vsel %vm1956, %v1955, %v1953
    %s1958 = scalar_lea.vmem %s0, 450
    %v1959 = vld [vmem:[%s1958] sm:$0x40]
    %vm1960 = vcmask 1046534
    %v1961 = vsel %vm1960, %v1959, %v1957
    %s1962 = scalar_lea.vmem %s0, 481
    %v1963 = vld [vmem:[%s1962] sm:$0x80]
    %vm1964 = vcmask 1047559
    %v1965 = vsel %vm1964, %v1963, %v1961
    %1966 = vrot.lane.b32.xlu0 %v1965, 72
    %v1967 = vpop.permute.xlu0 %1966
    %vm1968 = vcmask 663104
    %1969 = vst.msk [vmem:[#allocation0] sm:$0xf] %vm1968, %v1967
    %s1970 = scalar_lea.vmem [#allocation0], 68
    %1971 = vst.msk [vmem:[%s1970] sm:$0xf0] %vm1968, %v1967
    %s1972 = scalar_lea.vmem %s0, 520
    %v1973 = vld [vmem:[%s1972] sm:$0x1]
    %s1974 = scalar_lea.vmem %s0, 551
    %v1975 = vld [vmem:[%s1974] sm:$0x2]
    %vm1976 = vcmask 1041409
    %v1977 = vsel %vm1976, %v1975, %v1973
    %s1978 = scalar_lea.vmem %s0, 582
    %v1979 = vld [vmem:[%s1978] sm:$0x4]
    %vm1980 = vcmask 1042434
    %v1981 = vsel %vm1980, %v1979, %v1977
    %s1982 = scalar_lea.vmem %s0, 613
    %v1983 = vld [vmem:[%s1982] sm:$0x8]
    %vm1984 = vcmask 1043459
    %v1985 = vsel %vm1984, %v1983, %v1981
    %s1986 = scalar_lea.vmem %s0, 260
    %v1987 = vld [vmem:[%s1986] sm:$0x10]
    %vm1988 = vcmask 1044484
    %v1989 = vsel %vm1988, %v1987, %v1985
    %s1990 = scalar_lea.vmem %s0, 291
    %v1991 = vld [vmem:[%s1990] sm:$0x20]
    %vm1992 = vcmask 1045509
    %v1993 = vsel %vm1992, %v1991, %v1989
    %s1994 = scalar_lea.vmem %s0, 322
    %v1995 = vld [vmem:[%s1994] sm:$0x40]
    %vm1996 = vcmask 1046534
    %v1997 = vsel %vm1996, %v1995, %v1993
    %s1998 = scalar_lea.vmem %s0, 353
    %v1999 = vld [vmem:[%s1998] sm:$0x80]
    %vm2000 = vcmask 1047559
    %v2001 = vsel %vm2000, %v1999, %v1997
    %2002 = vrot.lane.b32.xlu0 %v2001, 72
    %v2003 = vpop.permute.xlu0 %2002
    %vm2004 = vcmask 663104
    %s2005 = scalar_lea.vmem [#allocation0], 96
    %2006 = vst.msk [vmem:[%s2005] sm:$0xf] %vm2004, %v2003
    %s2007 = scalar_lea.vmem [#allocation0], 44
    %2008 = vst.msk [vmem:[%s2007] sm:$0xf0] %vm2004, %v2003
    %s2009 = scalar_lea.vmem %s0, 776
    %v2010 = vld [vmem:[%s2009] sm:$0x1]
    %s2011 = scalar_lea.vmem %s0, 807
    %v2012 = vld [vmem:[%s2011] sm:$0x2]
    %vm2013 = vcmask 1041409
    %v2014 = vsel %vm2013, %v2012, %v2010
    %s2015 = scalar_lea.vmem %s0, 838
    %v2016 = vld [vmem:[%s2015] sm:$0x4]
    %vm2017 = vcmask 1042434
    %v2018 = vsel %vm2017, %v2016, %v2014
    %s2019 = scalar_lea.vmem %s0, 869
    %v2020 = vld [vmem:[%s2019] sm:$0x8]
    %vm2021 = vcmask 1043459
    %v2022 = vsel %vm2021, %v2020, %v2018
    %s2023 = scalar_lea.vmem %s0, 132
    %v2024 = vld [vmem:[%s2023] sm:$0x10]
    %vm2025 = vcmask 1044484
    %v2026 = vsel %vm2025, %v2024, %v2022
    %s2027 = scalar_lea.vmem %s0, 163
    %v2028 = vld [vmem:[%s2027] sm:$0x20]
    %vm2029 = vcmask 1045509
    %v2030 = vsel %vm2029, %v2028, %v2026
    %s2031 = scalar_lea.vmem %s0, 194
    %v2032 = vld [vmem:[%s2031] sm:$0x40]
    %vm2033 = vcmask 1046534
    %v2034 = vsel %vm2033, %v2032, %v2030
    %s2035 = scalar_lea.vmem %s0, 225
    %v2036 = vld [vmem:[%s2035] sm:$0x80]
    %vm2037 = vcmask 1047559
    %v2038 = vsel %vm2037, %v2036, %v2034
    %2039 = vrot.lane.b32.xlu0 %v2038, 72
    %v2040 = vpop.permute.xlu0 %2039
    %vm2041 = vcmask 663104
    %s2042 = scalar_lea.vmem [#allocation0], 144
    %2043 = vst.msk [vmem:[%s2042] sm:$0xf] %vm2041, %v2040
    %s2044 = scalar_lea.vmem [#allocation0], 20
    %2045 = vst.msk [vmem:[%s2044] sm:$0xf0] %vm2041, %v2040
    %s2046 = scalar_lea.vmem %s0, 648
    %v2047 = vld [vmem:[%s2046] sm:$0x1]
    %s2048 = scalar_lea.vmem %s0, 679
    %v2049 = vld [vmem:[%s2048] sm:$0x2]
    %vm2050 = vcmask 1041409
    %v2051 = vsel %vm2050, %v2049, %v2047
    %s2052 = scalar_lea.vmem %s0, 710
    %v2053 = vld [vmem:[%s2052] sm:$0x4]
    %vm2054 = vcmask 1042434
    %v2055 = vsel %vm2054, %v2053, %v2051
    %s2056 = scalar_lea.vmem %s0, 741
    %v2057 = vld [vmem:[%s2056] sm:$0x8]
    %vm2058 = vcmask 1043459
    %v2059 = vsel %vm2058, %v2057, %v2055
    %2060 = vrot.lane.b32.xlu0 %v2059, 72
    %v2061 = vpop.permute.xlu0 %2060
    %vm2062 = vcmask 663104
    %s2063 = scalar_lea.vmem [#allocation0], 120
    %2064 = vst.msk [vmem:[%s2063] sm:$0xf] %vm2062, %v2061
    %s2065 = scalar_lea.vmem %s0, 150
    %v2066 = vld [vmem:[%s2065] sm:$0x1]
    %s2067 = scalar_lea.vmem %s0, 181
    %v2068 = vld [vmem:[%s2067] sm:$0x2]
    %vm2069 = vcmask 1041409
    %v2070 = vsel %vm2069, %v2068, %v2066
    %s2071 = scalar_lea.vmem %s0, 212
    %v2072 = vld [vmem:[%s2071] sm:$0x4]
    %vm2073 = vcmask 1042434
    %v2074 = vsel %vm2073, %v2072, %v2070
    %s2075 = scalar_lea.vmem %s0, 243
    %v2076 = vld [vmem:[%s2075] sm:$0x8]
    %vm2077 = vcmask 1043459
    %v2078 = vsel %vm2077, %v2076, %v2074
    %s2079 = scalar_lea.vmem %s0, 18
    %v2080 = vld [vmem:[%s2079] sm:$0x10]
    %vm2081 = vcmask 1044484
    %v2082 = vsel %vm2081, %v2080, %v2078
    %s2083 = scalar_lea.vmem %s0, 49
    %v2084 = vld [vmem:[%s2083] sm:$0x20]
    %vm2085 = vcmask 1045509
    %v2086 = vsel %vm2085, %v2084, %v2082
    %s2087 = scalar_lea.vmem %s0, 80
    %v2088 = vld [vmem:[%s2087] sm:$0x40]
    %vm2089 = vcmask 1046534
    %v2090 = vsel %vm2089, %v2088, %v2086
    %s2091 = scalar_lea.vmem %s0, 111
    %v2092 = vld [vmem:[%s2091] sm:$0x80]
    %vm2093 = vcmask 1047559
    %v2094 = vsel %vm2093, %v2092, %v2090
    %2095 = vrot.lane.b32.xlu0 %v2094, 70
    %v2096 = vpop.permute.xlu0 %2095
    %vm2097 = vcmask 646704
    %s2098 = scalar_lea.vmem [#allocation0], 32
    %2099 = vst.msk [vmem:[%s2098] sm:$0xf] %vm2097, %v2096
    %s2100 = scalar_lea.vmem [#allocation0], 4
    %2101 = vst.msk [vmem:[%s2100] sm:$0xf0] %vm2097, %v2096
    %s2102 = scalar_lea.vmem %s0, 662
    %v2103 = vld [vmem:[%s2102] sm:$0x1]
    %s2104 = scalar_lea.vmem %s0, 693
    %v2105 = vld [vmem:[%s2104] sm:$0x2]
    %vm2106 = vcmask 1041409
    %v2107 = vsel %vm2106, %v2105, %v2103
    %s2108 = scalar_lea.vmem %s0, 724
    %v2109 = vld [vmem:[%s2108] sm:$0x4]
    %vm2110 = vcmask 1042434
    %v2111 = vsel %vm2110, %v2109, %v2107
    %s2112 = scalar_lea.vmem %s0, 755
    %v2113 = vld [vmem:[%s2112] sm:$0x8]
    %vm2114 = vcmask 1043459
    %v2115 = vsel %vm2114, %v2113, %v2111
    %s2116 = scalar_lea.vmem %s0, 530
    %v2117 = vld [vmem:[%s2116] sm:$0x10]
    %vm2118 = vcmask 1044484
    %v2119 = vsel %vm2118, %v2117, %v2115
    %s2120 = scalar_lea.vmem %s0, 561
    %v2121 = vld [vmem:[%s2120] sm:$0x20]
    %vm2122 = vcmask 1045509
    %v2123 = vsel %vm2122, %v2121, %v2119
    %s2124 = scalar_lea.vmem %s0, 592
    %v2125 = vld [vmem:[%s2124] sm:$0x40]
    %vm2126 = vcmask 1046534
    %v2127 = vsel %vm2126, %v2125, %v2123
    %s2128 = scalar_lea.vmem %s0, 623
    %v2129 = vld [vmem:[%s2128] sm:$0x80]
    %vm2130 = vcmask 1047559
    %v2131 = vsel %vm2130, %v2129, %v2127
    %2132 = vrot.lane.b32.xlu0 %v2131, 70
    %v2133 = vpop.permute.xlu0 %2132
    %vm2134 = vcmask 646704
    %s2135 = scalar_lea.vmem [#allocation0], 128
    %2136 = vst.msk [vmem:[%s2135] sm:$0xf] %vm2134, %v2133
    %s2137 = scalar_lea.vmem [#allocation0], 100
    %2138 = vst.msk [vmem:[%s2137] sm:$0xf0] %vm2134, %v2133
    %s2139 = scalar_lea.vmem %s0, 406
    %v2140 = vld [vmem:[%s2139] sm:$0x1]
    %s2141 = scalar_lea.vmem %s0, 437
    %v2142 = vld [vmem:[%s2141] sm:$0x2]
    %vm2143 = vcmask 1041409
    %v2144 = vsel %vm2143, %v2142, %v2140
    %s2145 = scalar_lea.vmem %s0, 468
    %v2146 = vld [vmem:[%s2145] sm:$0x4]
    %vm2147 = vcmask 1042434
    %v2148 = vsel %vm2147, %v2146, %v2144
    %s2149 = scalar_lea.vmem %s0, 499
    %v2150 = vld [vmem:[%s2149] sm:$0x8]
    %vm2151 = vcmask 1043459
    %v2152 = vsel %vm2151, %v2150, %v2148
    %s2153 = scalar_lea.vmem %s0, 274
    %v2154 = vld [vmem:[%s2153] sm:$0x10]
    %vm2155 = vcmask 1044484
    %v2156 = vsel %vm2155, %v2154, %v2152
    %s2157 = scalar_lea.vmem %s0, 305
    %v2158 = vld [vmem:[%s2157] sm:$0x20]
    %vm2159 = vcmask 1045509
    %v2160 = vsel %vm2159, %v2158, %v2156
    %s2161 = scalar_lea.vmem %s0, 336
    %v2162 = vld [vmem:[%s2161] sm:$0x40]
    %vm2163 = vcmask 1046534
    %v2164 = vsel %vm2163, %v2162, %v2160
    %s2165 = scalar_lea.vmem %s0, 367
    %v2166 = vld [vmem:[%s2165] sm:$0x80]
    %vm2167 = vcmask 1047559
    %v2168 = vsel %vm2167, %v2166, %v2164
    %2169 = vrot.lane.b32.xlu0 %v2168, 70
    %v2170 = vpop.permute.xlu0 %2169
    %vm2171 = vcmask 646704
    %s2172 = scalar_lea.vmem [#allocation0], 80
    %2173 = vst.msk [vmem:[%s2172] sm:$0xf] %vm2171, %v2170
    %s2174 = scalar_lea.vmem [#allocation0], 52
    %2175 = vst.msk [vmem:[%s2174] sm:$0xf0] %vm2171, %v2170
    %s2176 = scalar_lea.vmem %s0, 790
    %v2177 = vld [vmem:[%s2176] sm:$0x1]
    %s2178 = scalar_lea.vmem %s0, 821
    %v2179 = vld [vmem:[%s2178] sm:$0x2]
    %vm2180 = vcmask 1041409
    %v2181 = vsel %vm2180, %v2179, %v2177
    %s2182 = scalar_lea.vmem %s0, 852
    %v2183 = vld [vmem:[%s2182] sm:$0x4]
    %vm2184 = vcmask 1042434
    %v2185 = vsel %vm2184, %v2183, %v2181
    %s2186 = scalar_lea.vmem %s0, 883
    %v2187 = vld [vmem:[%s2186] sm:$0x8]
    %vm2188 = vcmask 1043459
    %v2189 = vsel %vm2188, %v2187, %v2185
    %2190 = vrot.lane.b32.xlu0 %v2189, 70
    %v2191 = vpop.permute.xlu0 %2190
    %vm2192 = vcmask 646704
    %s2193 = scalar_lea.vmem [#allocation0], 152
    %2194 = vst.msk [vmem:[%s2193] sm:$0xf] %vm2192, %v2191
    %s2195 = scalar_lea.vmem %s0, 7
    %v2196 = vld [vmem:[%s2195] sm:$0x1]
    %s2197 = scalar_lea.vmem %s0, 38
    %v2198 = vld [vmem:[%s2197] sm:$0x2]
    %vm2199 = vcmask 1041409
    %v2200 = vsel %vm2199, %v2198, %v2196
    %s2201 = scalar_lea.vmem %s0, 69
    %v2202 = vld [vmem:[%s2201] sm:$0x4]
    %vm2203 = vcmask 1042434
    %v2204 = vsel %vm2203, %v2202, %v2200
    %s2205 = scalar_lea.vmem %s0, 100
    %v2206 = vld [vmem:[%s2205] sm:$0x8]
    %vm2207 = vcmask 1043459
    %v2208 = vsel %vm2207, %v2206, %v2204
    %s2209 = scalar_lea.vmem %s0, 387
    %v2210 = vld [vmem:[%s2209] sm:$0x10]
    %vm2211 = vcmask 1044484
    %v2212 = vsel %vm2211, %v2210, %v2208
    %s2213 = scalar_lea.vmem %s0, 418
    %v2214 = vld [vmem:[%s2213] sm:$0x20]
    %vm2215 = vcmask 1045509
    %v2216 = vsel %vm2215, %v2214, %v2212
    %s2217 = scalar_lea.vmem %s0, 449
    %v2218 = vld [vmem:[%s2217] sm:$0x40]
    %vm2219 = vcmask 1046534
    %v2220 = vsel %vm2219, %v2218, %v2216
    %s2221 = scalar_lea.vmem %s0, 480
    %v2222 = vld [vmem:[%s2221] sm:$0x80]
    %vm2223 = vcmask 1047559
    %v2224 = vsel %vm2223, %v2222, %v2220
    %2225 = vrot.lane.b32.xlu0 %v2224, 63
    %v2226 = vpop.permute.xlu0 %2225
    %vm2227 = vcmask 589304
    %2228 = vst.msk [vmem:[#allocation0] sm:$0xf] %vm2227, %v2226
    %s2229 = scalar_lea.vmem [#allocation0], 68
    %2230 = vst.msk [vmem:[%s2229] sm:$0xf0] %vm2227, %v2226
    %s2231 = scalar_lea.vmem %s0, 519
    %v2232 = vld [vmem:[%s2231] sm:$0x1]
    %s2233 = scalar_lea.vmem %s0, 550
    %v2234 = vld [vmem:[%s2233] sm:$0x2]
    %vm2235 = vcmask 1041409
    %v2236 = vsel %vm2235, %v2234, %v2232
    %s2237 = scalar_lea.vmem %s0, 581
    %v2238 = vld [vmem:[%s2237] sm:$0x4]
    %vm2239 = vcmask 1042434
    %v2240 = vsel %vm2239, %v2238, %v2236
    %s2241 = scalar_lea.vmem %s0, 612
    %v2242 = vld [vmem:[%s2241] sm:$0x8]
    %vm2243 = vcmask 1043459
    %v2244 = vsel %vm2243, %v2242, %v2240
    %s2245 = scalar_lea.vmem %s0, 259
    %v2246 = vld [vmem:[%s2245] sm:$0x10]
    %vm2247 = vcmask 1044484
    %v2248 = vsel %vm2247, %v2246, %v2244
    %s2249 = scalar_lea.vmem %s0, 290
    %v2250 = vld [vmem:[%s2249] sm:$0x20]
    %vm2251 = vcmask 1045509
    %v2252 = vsel %vm2251, %v2250, %v2248
    %s2253 = scalar_lea.vmem %s0, 321
    %v2254 = vld [vmem:[%s2253] sm:$0x40]
    %vm2255 = vcmask 1046534
    %v2256 = vsel %vm2255, %v2254, %v2252
    %s2257 = scalar_lea.vmem %s0, 352
    %v2258 = vld [vmem:[%s2257] sm:$0x80]
    %vm2259 = vcmask 1047559
    %v2260 = vsel %vm2259, %v2258, %v2256
    %2261 = vrot.lane.b32.xlu0 %v2260, 63
    %v2262 = vpop.permute.xlu0 %2261
    %vm2263 = vcmask 589304
    %s2264 = scalar_lea.vmem [#allocation0], 96
    %2265 = vst.msk [vmem:[%s2264] sm:$0xf] %vm2263, %v2262
    %s2266 = scalar_lea.vmem [#allocation0], 44
    %2267 = vst.msk [vmem:[%s2266] sm:$0xf0] %vm2263, %v2262
    %s2268 = scalar_lea.vmem %s0, 775
    %v2269 = vld [vmem:[%s2268] sm:$0x1]
    %s2270 = scalar_lea.vmem %s0, 806
    %v2271 = vld [vmem:[%s2270] sm:$0x2]
    %vm2272 = vcmask 1041409
    %v2273 = vsel %vm2272, %v2271, %v2269
    %s2274 = scalar_lea.vmem %s0, 837
    %v2275 = vld [vmem:[%s2274] sm:$0x4]
    %vm2276 = vcmask 1042434
    %v2277 = vsel %vm2276, %v2275, %v2273
    %s2278 = scalar_lea.vmem %s0, 868
    %v2279 = vld [vmem:[%s2278] sm:$0x8]
    %vm2280 = vcmask 1043459
    %v2281 = vsel %vm2280, %v2279, %v2277
    %s2282 = scalar_lea.vmem %s0, 131
    %v2283 = vld [vmem:[%s2282] sm:$0x10]
    %vm2284 = vcmask 1044484
    %v2285 = vsel %vm2284, %v2283, %v2281
    %s2286 = scalar_lea.vmem %s0, 162
    %v2287 = vld [vmem:[%s2286] sm:$0x20]
    %vm2288 = vcmask 1045509
    %v2289 = vsel %vm2288, %v2287, %v2285
    %s2290 = scalar_lea.vmem %s0, 193
    %v2291 = vld [vmem:[%s2290] sm:$0x40]
    %vm2292 = vcmask 1046534
    %v2293 = vsel %vm2292, %v2291, %v2289
    %s2294 = scalar_lea.vmem %s0, 224
    %v2295 = vld [vmem:[%s2294] sm:$0x80]
    %vm2296 = vcmask 1047559
    %v2297 = vsel %vm2296, %v2295, %v2293
    %2298 = vrot.lane.b32.xlu0 %v2297, 63
    %v2299 = vpop.permute.xlu0 %2298
    %vm2300 = vcmask 589304
    %s2301 = scalar_lea.vmem [#allocation0], 144
    %2302 = vst.msk [vmem:[%s2301] sm:$0xf] %vm2300, %v2299
    %s2303 = scalar_lea.vmem [#allocation0], 20
    %2304 = vst.msk [vmem:[%s2303] sm:$0xf0] %vm2300, %v2299
    %s2305 = scalar_lea.vmem %s0, 647
    %v2306 = vld [vmem:[%s2305] sm:$0x1]
    %s2307 = scalar_lea.vmem %s0, 678
    %v2308 = vld [vmem:[%s2307] sm:$0x2]
    %vm2309 = vcmask 1041409
    %v2310 = vsel %vm2309, %v2308, %v2306
    %s2311 = scalar_lea.vmem %s0, 709
    %v2312 = vld [vmem:[%s2311] sm:$0x4]
    %vm2313 = vcmask 1042434
    %v2314 = vsel %vm2313, %v2312, %v2310
    %s2315 = scalar_lea.vmem %s0, 740
    %v2316 = vld [vmem:[%s2315] sm:$0x8]
    %vm2317 = vcmask 1043459
    %v2318 = vsel %vm2317, %v2316, %v2314
    %2319 = vrot.lane.b32.xlu0 %v2318, 63
    %v2320 = vpop.permute.xlu0 %2319
    %vm2321 = vcmask 589304
    %s2322 = scalar_lea.vmem [#allocation0], 120
    %2323 = vst.msk [vmem:[%s2322] sm:$0xf] %vm2321, %v2320
    %s2324 = scalar_lea.vmem %s0, 149
    %v2325 = vld [vmem:[%s2324] sm:$0x1]
    %s2326 = scalar_lea.vmem %s0, 180
    %v2327 = vld [vmem:[%s2326] sm:$0x2]
    %vm2328 = vcmask 1041409
    %v2329 = vsel %vm2328, %v2327, %v2325
    %s2330 = scalar_lea.vmem %s0, 211
    %v2331 = vld [vmem:[%s2330] sm:$0x4]
    %vm2332 = vcmask 1042434
    %v2333 = vsel %vm2332, %v2331, %v2329
    %s2334 = scalar_lea.vmem %s0, 242
    %v2335 = vld [vmem:[%s2334] sm:$0x8]
    %vm2336 = vcmask 1043459
    %v2337 = vsel %vm2336, %v2335, %v2333
    %s2338 = scalar_lea.vmem %s0, 17
    %v2339 = vld [vmem:[%s2338] sm:$0x10]
    %vm2340 = vcmask 1044484
    %v2341 = vsel %vm2340, %v2339, %v2337
    %s2342 = scalar_lea.vmem %s0, 48
    %v2343 = vld [vmem:[%s2342] sm:$0x20]
    %vm2344 = vcmask 1045509
    %v2345 = vsel %vm2344, %v2343, %v2341
    %s2346 = scalar_lea.vmem %s0, 79
    %v2347 = vld [vmem:[%s2346] sm:$0x40]
    %vm2348 = vcmask 1046534
    %v2349 = vsel %vm2348, %v2347, %v2345
    %s2350 = scalar_lea.vmem %s0, 110
    %v2351 = vld [vmem:[%s2350] sm:$0x80]
    %vm2352 = vcmask 1047559
    %v2353 = vsel %vm2352, %v2351, %v2349
    %2354 = vrot.lane.b32.xlu0 %v2353, 61
    %v2355 = vpop.permute.xlu0 %2354
    %vm2356 = vcmask 572904
    %s2357 = scalar_lea.vmem [#allocation0], 32
    %2358 = vst.msk [vmem:[%s2357] sm:$0xf] %vm2356, %v2355
    %s2359 = scalar_lea.vmem [#allocation0], 4
    %2360 = vst.msk [vmem:[%s2359] sm:$0xf0] %vm2356, %v2355
    %s2361 = scalar_lea.vmem %s0, 661
    %v2362 = vld [vmem:[%s2361] sm:$0x1]
    %s2363 = scalar_lea.vmem %s0, 692
    %v2364 = vld [vmem:[%s2363] sm:$0x2]
    %vm2365 = vcmask 1041409
    %v2366 = vsel %vm2365, %v2364, %v2362
    %s2367 = scalar_lea.vmem %s0, 723
    %v2368 = vld [vmem:[%s2367] sm:$0x4]
    %vm2369 = vcmask 1042434
    %v2370 = vsel %vm2369, %v2368, %v2366
    %s2371 = scalar_lea.vmem %s0, 754
    %v2372 = vld [vmem:[%s2371] sm:$0x8]
    %vm2373 = vcmask 1043459
    %v2374 = vsel %vm2373, %v2372, %v2370
    %s2375 = scalar_lea.vmem %s0, 529
    %v2376 = vld [vmem:[%s2375] sm:$0x10]
    %vm2377 = vcmask 1044484
    %v2378 = vsel %vm2377, %v2376, %v2374
    %s2379 = scalar_lea.vmem %s0, 560
    %v2380 = vld [vmem:[%s2379] sm:$0x20]
    %vm2381 = vcmask 1045509
    %v2382 = vsel %vm2381, %v2380, %v2378
    %s2383 = scalar_lea.vmem %s0, 591
    %v2384 = vld [vmem:[%s2383] sm:$0x40]
    %vm2385 = vcmask 1046534
    %v2386 = vsel %vm2385, %v2384, %v2382
    %s2387 = scalar_lea.vmem %s0, 622
    %v2388 = vld [vmem:[%s2387] sm:$0x80]
    %vm2389 = vcmask 1047559
    %v2390 = vsel %vm2389, %v2388, %v2386
    %2391 = vrot.lane.b32.xlu0 %v2390, 61
    %v2392 = vpop.permute.xlu0 %2391
    %vm2393 = vcmask 572904
    %s2394 = scalar_lea.vmem [#allocation0], 128
    %2395 = vst.msk [vmem:[%s2394] sm:$0xf] %vm2393, %v2392
    %s2396 = scalar_lea.vmem [#allocation0], 100
    %2397 = vst.msk [vmem:[%s2396] sm:$0xf0] %vm2393, %v2392
    %s2398 = scalar_lea.vmem %s0, 405
    %v2399 = vld [vmem:[%s2398] sm:$0x1]
    %s2400 = scalar_lea.vmem %s0, 436
    %v2401 = vld [vmem:[%s2400] sm:$0x2]
    %vm2402 = vcmask 1041409
    %v2403 = vsel %vm2402, %v2401, %v2399
    %s2404 = scalar_lea.vmem %s0, 467
    %v2405 = vld [vmem:[%s2404] sm:$0x4]
    %vm2406 = vcmask 1042434
    %v2407 = vsel %vm2406, %v2405, %v2403
    %s2408 = scalar_lea.vmem %s0, 498
    %v2409 = vld [vmem:[%s2408] sm:$0x8]
    %vm2410 = vcmask 1043459
    %v2411 = vsel %vm2410, %v2409, %v2407
    %s2412 = scalar_lea.vmem %s0, 273
    %v2413 = vld [vmem:[%s2412] sm:$0x10]
    %vm2414 = vcmask 1044484
    %v2415 = vsel %vm2414, %v2413, %v2411
    %s2416 = scalar_lea.vmem %s0, 304
    %v2417 = vld [vmem:[%s2416] sm:$0x20]
    %vm2418 = vcmask 1045509
    %v2419 = vsel %vm2418, %v2417, %v2415
    %s2420 = scalar_lea.vmem %s0, 335
    %v2421 = vld [vmem:[%s2420] sm:$0x40]
    %vm2422 = vcmask 1046534
    %v2423 = vsel %vm2422, %v2421, %v2419
    %s2424 = scalar_lea.vmem %s0, 366
    %v2425 = vld [vmem:[%s2424] sm:$0x80]
    %vm2426 = vcmask 1047559
    %v2427 = vsel %vm2426, %v2425, %v2423
    %2428 = vrot.lane.b32.xlu0 %v2427, 61
    %v2429 = vpop.permute.xlu0 %2428
    %vm2430 = vcmask 572904
    %s2431 = scalar_lea.vmem [#allocation0], 80
    %2432 = vst.msk [vmem:[%s2431] sm:$0xf] %vm2430, %v2429
    %s2433 = scalar_lea.vmem [#allocation0], 52
    %2434 = vst.msk [vmem:[%s2433] sm:$0xf0] %vm2430, %v2429
    %s2435 = scalar_lea.vmem %s0, 789
    %v2436 = vld [vmem:[%s2435] sm:$0x1]
    %s2437 = scalar_lea.vmem %s0, 820
    %v2438 = vld [vmem:[%s2437] sm:$0x2]
    %vm2439 = vcmask 1041409
    %v2440 = vsel %vm2439, %v2438, %v2436
    %s2441 = scalar_lea.vmem %s0, 851
    %v2442 = vld [vmem:[%s2441] sm:$0x4]
    %vm2443 = vcmask 1042434
    %v2444 = vsel %vm2443, %v2442, %v2440
    %s2445 = scalar_lea.vmem %s0, 882
    %v2446 = vld [vmem:[%s2445] sm:$0x8]
    %vm2447 = vcmask 1043459
    %v2448 = vsel %vm2447, %v2446, %v2444
    %2449 = vrot.lane.b32.xlu0 %v2448, 61
    %v2450 = vpop.permute.xlu0 %2449
    %vm2451 = vcmask 572904
    %s2452 = scalar_lea.vmem [#allocation0], 152
    %2453 = vst.msk [vmem:[%s2452] sm:$0xf] %vm2451, %v2450
    %s2454 = scalar_lea.vmem %s0, 6
    %v2455 = vld [vmem:[%s2454] sm:$0x1]
    %s2456 = scalar_lea.vmem %s0, 37
    %v2457 = vld [vmem:[%s2456] sm:$0x2]
    %vm2458 = vcmask 1041409
    %v2459 = vsel %vm2458, %v2457, %v2455
    %s2460 = scalar_lea.vmem %s0, 68
    %v2461 = vld [vmem:[%s2460] sm:$0x4]
    %vm2462 = vcmask 1042434
    %v2463 = vsel %vm2462, %v2461, %v2459
    %s2464 = scalar_lea.vmem %s0, 99
    %v2465 = vld [vmem:[%s2464] sm:$0x8]
    %vm2466 = vcmask 1043459
    %v2467 = vsel %vm2466, %v2465, %v2463
    %s2468 = scalar_lea.vmem %s0, 386
    %v2469 = vld [vmem:[%s2468] sm:$0x10]
    %vm2470 = vcmask 1044484
    %v2471 = vsel %vm2470, %v2469, %v2467
    %s2472 = scalar_lea.vmem %s0, 417
    %v2473 = vld [vmem:[%s2472] sm:$0x20]
    %vm2474 = vcmask 1045509
    %v2475 = vsel %vm2474, %v2473, %v2471
    %s2476 = scalar_lea.vmem %s0, 448
    %v2477 = vld [vmem:[%s2476] sm:$0x40]
    %vm2478 = vcmask 1046534
    %v2479 = vsel %vm2478, %v2477, %v2475
    %s2480 = scalar_lea.vmem %s0, 479
    %v2481 = vld [vmem:[%s2480] sm:$0x80]
    %vm2482 = vcmask 1047559
    %v2483 = vsel %vm2482, %v2481, %v2479
    %2484 = vrot.lane.b32.xlu0 %v2483, 54
    %v2485 = vpop.permute.xlu0 %2484
    %vm2486 = vcmask 515504
    %2487 = vst.msk [vmem:[#allocation0] sm:$0xf] %vm2486, %v2485
    %s2488 = scalar_lea.vmem [#allocation0], 68
    %2489 = vst.msk [vmem:[%s2488] sm:$0xf0] %vm2486, %v2485
    %s2490 = scalar_lea.vmem %s0, 518
    %v2491 = vld [vmem:[%s2490] sm:$0x1]
    %s2492 = scalar_lea.vmem %s0, 549
    %v2493 = vld [vmem:[%s2492] sm:$0x2]
    %vm2494 = vcmask 1041409
    %v2495 = vsel %vm2494, %v2493, %v2491
    %s2496 = scalar_lea.vmem %s0, 580
    %v2497 = vld [vmem:[%s2496] sm:$0x4]
    %vm2498 = vcmask 1042434
    %v2499 = vsel %vm2498, %v2497, %v2495
    %s2500 = scalar_lea.vmem %s0, 611
    %v2501 = vld [vmem:[%s2500] sm:$0x8]
    %vm2502 = vcmask 1043459
    %v2503 = vsel %vm2502, %v2501, %v2499
    %s2504 = scalar_lea.vmem %s0, 258
    %v2505 = vld [vmem:[%s2504] sm:$0x10]
    %vm2506 = vcmask 1044484
    %v2507 = vsel %vm2506, %v2505, %v2503
    %s2508 = scalar_lea.vmem %s0, 289
    %v2509 = vld [vmem:[%s2508] sm:$0x20]
    %vm2510 = vcmask 1045509
    %v2511 = vsel %vm2510, %v2509, %v2507
    %s2512 = scalar_lea.vmem %s0, 320
    %v2513 = vld [vmem:[%s2512] sm:$0x40]
    %vm2514 = vcmask 1046534
    %v2515 = vsel %vm2514, %v2513, %v2511
    %s2516 = scalar_lea.vmem %s0, 351
    %v2517 = vld [vmem:[%s2516] sm:$0x80]
    %vm2518 = vcmask 1047559
    %v2519 = vsel %vm2518, %v2517, %v2515
    %2520 = vrot.lane.b32.xlu0 %v2519, 54
    %v2521 = vpop.permute.xlu0 %2520
    %vm2522 = vcmask 515504
    %s2523 = scalar_lea.vmem [#allocation0], 96
    %2524 = vst.msk [vmem:[%s2523] sm:$0xf] %vm2522, %v2521
    %s2525 = scalar_lea.vmem [#allocation0], 44
    %2526 = vst.msk [vmem:[%s2525] sm:$0xf0] %vm2522, %v2521
    %s2527 = scalar_lea.vmem %s0, 774
    %v2528 = vld [vmem:[%s2527] sm:$0x1]
    %s2529 = scalar_lea.vmem %s0, 805
    %v2530 = vld [vmem:[%s2529] sm:$0x2]
    %vm2531 = vcmask 1041409
    %v2532 = vsel %vm2531, %v2530, %v2528
    %s2533 = scalar_lea.vmem %s0, 836
    %v2534 = vld [vmem:[%s2533] sm:$0x4]
    %vm2535 = vcmask 1042434
    %v2536 = vsel %vm2535, %v2534, %v2532
    %s2537 = scalar_lea.vmem %s0, 867
    %v2538 = vld [vmem:[%s2537] sm:$0x8]
    %vm2539 = vcmask 1043459
    %v2540 = vsel %vm2539, %v2538, %v2536
    %s2541 = scalar_lea.vmem %s0, 130
    %v2542 = vld [vmem:[%s2541] sm:$0x10]
    %vm2543 = vcmask 1044484
    %v2544 = vsel %vm2543, %v2542, %v2540
    %s2545 = scalar_lea.vmem %s0, 161
    %v2546 = vld [vmem:[%s2545] sm:$0x20]
    %vm2547 = vcmask 1045509
    %v2548 = vsel %vm2547, %v2546, %v2544
    %s2549 = scalar_lea.vmem %s0, 192
    %v2550 = vld [vmem:[%s2549] sm:$0x40]
    %vm2551 = vcmask 1046534
    %v2552 = vsel %vm2551, %v2550, %v2548
    %s2553 = scalar_lea.vmem %s0, 223
    %v2554 = vld [vmem:[%s2553] sm:$0x80]
    %vm2555 = vcmask 1047559
    %v2556 = vsel %vm2555, %v2554, %v2552
    %2557 = vrot.lane.b32.xlu0 %v2556, 54
    %v2558 = vpop.permute.xlu0 %2557
    %vm2559 = vcmask 515504
    %s2560 = scalar_lea.vmem [#allocation0], 144
    %2561 = vst.msk [vmem:[%s2560] sm:$0xf] %vm2559, %v2558
    %s2562 = scalar_lea.vmem [#allocation0], 20
    %2563 = vst.msk [vmem:[%s2562] sm:$0xf0] %vm2559, %v2558
    %s2564 = scalar_lea.vmem %s0, 646
    %v2565 = vld [vmem:[%s2564] sm:$0x1]
    %s2566 = scalar_lea.vmem %s0, 677
    %v2567 = vld [vmem:[%s2566] sm:$0x2]
    %vm2568 = vcmask 1041409
    %v2569 = vsel %vm2568, %v2567, %v2565
    %s2570 = scalar_lea.vmem %s0, 708
    %v2571 = vld [vmem:[%s2570] sm:$0x4]
    %vm2572 = vcmask 1042434
    %v2573 = vsel %vm2572, %v2571, %v2569
    %s2574 = scalar_lea.vmem %s0, 739
    %v2575 = vld [vmem:[%s2574] sm:$0x8]
    %vm2576 = vcmask 1043459
    %v2577 = vsel %vm2576, %v2575, %v2573
    %2578 = vrot.lane.b32.xlu0 %v2577, 54
    %v2579 = vpop.permute.xlu0 %2578
    %vm2580 = vcmask 515504
    %s2581 = scalar_lea.vmem [#allocation0], 120
    %2582 = vst.msk [vmem:[%s2581] sm:$0xf] %vm2580, %v2579
    %s2583 = scalar_lea.vmem %s0, 148
    %v2584 = vld [vmem:[%s2583] sm:$0x1]
    %s2585 = scalar_lea.vmem %s0, 179
    %v2586 = vld [vmem:[%s2585] sm:$0x2]
    %vm2587 = vcmask 1041409
    %v2588 = vsel %vm2587, %v2586, %v2584
    %s2589 = scalar_lea.vmem %s0, 210
    %v2590 = vld [vmem:[%s2589] sm:$0x4]
    %vm2591 = vcmask 1042434
    %v2592 = vsel %vm2591, %v2590, %v2588
    %s2593 = scalar_lea.vmem %s0, 241
    %v2594 = vld [vmem:[%s2593] sm:$0x8]
    %vm2595 = vcmask 1043459
    %v2596 = vsel %vm2595, %v2594, %v2592
    %s2597 = scalar_lea.vmem %s0, 16
    %v2598 = vld [vmem:[%s2597] sm:$0x10]
    %vm2599 = vcmask 1044484
    %v2600 = vsel %vm2599, %v2598, %v2596
    %s2601 = scalar_lea.vmem %s0, 47
    %v2602 = vld [vmem:[%s2601] sm:$0x20]
    %vm2603 = vcmask 1045509
    %v2604 = vsel %vm2603, %v2602, %v2600
    %s2605 = scalar_lea.vmem %s0, 78
    %v2606 = vld [vmem:[%s2605] sm:$0x40]
    %vm2607 = vcmask 1046534
    %v2608 = vsel %vm2607, %v2606, %v2604
    %s2609 = scalar_lea.vmem %s0, 109
    %v2610 = vld [vmem:[%s2609] sm:$0x80]
    %vm2611 = vcmask 1047559
    %v2612 = vsel %vm2611, %v2610, %v2608
    %2613 = vrot.lane.b32.xlu0 %v2612, 52
    %v2614 = vpop.permute.xlu0 %2613
    %vm2615 = vcmask 499104
    %s2616 = scalar_lea.vmem [#allocation0], 32
    %2617 = vst.msk [vmem:[%s2616] sm:$0xf] %vm2615, %v2614
    %s2618 = scalar_lea.vmem [#allocation0], 4
    %2619 = vst.msk [vmem:[%s2618] sm:$0xf0] %vm2615, %v2614
    %s2620 = scalar_lea.vmem %s0, 660
    %v2621 = vld [vmem:[%s2620] sm:$0x1]
    %s2622 = scalar_lea.vmem %s0, 691
    %v2623 = vld [vmem:[%s2622] sm:$0x2]
    %vm2624 = vcmask 1041409
    %v2625 = vsel %vm2624, %v2623, %v2621
    %s2626 = scalar_lea.vmem %s0, 722
    %v2627 = vld [vmem:[%s2626] sm:$0x4]
    %vm2628 = vcmask 1042434
    %v2629 = vsel %vm2628, %v2627, %v2625
    %s2630 = scalar_lea.vmem %s0, 753
    %v2631 = vld [vmem:[%s2630] sm:$0x8]
    %vm2632 = vcmask 1043459
    %v2633 = vsel %vm2632, %v2631, %v2629
    %s2634 = scalar_lea.vmem %s0, 528
    %v2635 = vld [vmem:[%s2634] sm:$0x10]
    %vm2636 = vcmask 1044484
    %v2637 = vsel %vm2636, %v2635, %v2633
    %s2638 = scalar_lea.vmem %s0, 559
    %v2639 = vld [vmem:[%s2638] sm:$0x20]
    %vm2640 = vcmask 1045509
    %v2641 = vsel %vm2640, %v2639, %v2637
    %s2642 = scalar_lea.vmem %s0, 590
    %v2643 = vld [vmem:[%s2642] sm:$0x40]
    %vm2644 = vcmask 1046534
    %v2645 = vsel %vm2644, %v2643, %v2641
    %s2646 = scalar_lea.vmem %s0, 621
    %v2647 = vld [vmem:[%s2646] sm:$0x80]
    %vm2648 = vcmask 1047559
    %v2649 = vsel %vm2648, %v2647, %v2645
    %2650 = vrot.lane.b32.xlu0 %v2649, 52
    %v2651 = vpop.permute.xlu0 %2650
    %vm2652 = vcmask 499104
    %s2653 = scalar_lea.vmem [#allocation0], 128
    %2654 = vst.msk [vmem:[%s2653] sm:$0xf] %vm2652, %v2651
    %s2655 = scalar_lea.vmem [#allocation0], 100
    %2656 = vst.msk [vmem:[%s2655] sm:$0xf0] %vm2652, %v2651
    %s2657 = scalar_lea.vmem %s0, 404
    %v2658 = vld [vmem:[%s2657] sm:$0x1]
    %s2659 = scalar_lea.vmem %s0, 435
    %v2660 = vld [vmem:[%s2659] sm:$0x2]
    %vm2661 = vcmask 1041409
    %v2662 = vsel %vm2661, %v2660, %v2658
    %s2663 = scalar_lea.vmem %s0, 466
    %v2664 = vld [vmem:[%s2663] sm:$0x4]
    %vm2665 = vcmask 1042434
    %v2666 = vsel %vm2665, %v2664, %v2662
    %s2667 = scalar_lea.vmem %s0, 497
    %v2668 = vld [vmem:[%s2667] sm:$0x8]
    %vm2669 = vcmask 1043459
    %v2670 = vsel %vm2669, %v2668, %v2666
    %s2671 = scalar_lea.vmem %s0, 272
    %v2672 = vld [vmem:[%s2671] sm:$0x10]
    %vm2673 = vcmask 1044484
    %v2674 = vsel %vm2673, %v2672, %v2670
    %s2675 = scalar_lea.vmem %s0, 303
    %v2676 = vld [vmem:[%s2675] sm:$0x20]
    %vm2677 = vcmask 1045509
    %v2678 = vsel %vm2677, %v2676, %v2674
    %s2679 = scalar_lea.vmem %s0, 334
    %v2680 = vld [vmem:[%s2679] sm:$0x40]
    %vm2681 = vcmask 1046534
    %v2682 = vsel %vm2681, %v2680, %v2678
    %s2683 = scalar_lea.vmem %s0, 365
    %v2684 = vld [vmem:[%s2683] sm:$0x80]
    %vm2685 = vcmask 1047559
    %v2686 = vsel %vm2685, %v2684, %v2682
    %2687 = vrot.lane.b32.xlu0 %v2686, 52
    %v2688 = vpop.permute.xlu0 %2687
    %vm2689 = vcmask 499104
    %s2690 = scalar_lea.vmem [#allocation0], 80
    %2691 = vst.msk [vmem:[%s2690] sm:$0xf] %vm2689, %v2688
    %s2692 = scalar_lea.vmem [#allocation0], 52
    %2693 = vst.msk [vmem:[%s2692] sm:$0xf0] %vm2689, %v2688
    %s2694 = scalar_lea.vmem %s0, 788
    %v2695 = vld [vmem:[%s2694] sm:$0x1]
    %s2696 = scalar_lea.vmem %s0, 819
    %v2697 = vld [vmem:[%s2696] sm:$0x2]
    %vm2698 = vcmask 1041409
    %v2699 = vsel %vm2698, %v2697, %v2695
    %s2700 = scalar_lea.vmem %s0, 850
    %v2701 = vld [vmem:[%s2700] sm:$0x4]
    %vm2702 = vcmask 1042434
    %v2703 = vsel %vm2702, %v2701, %v2699
    %s2704 = scalar_lea.vmem %s0, 881
    %v2705 = vld [vmem:[%s2704] sm:$0x8]
    %vm2706 = vcmask 1043459
    %v2707 = vsel %vm2706, %v2705, %v2703
    %2708 = vrot.lane.b32.xlu0 %v2707, 52
    %v2709 = vpop.permute.xlu0 %2708
    %vm2710 = vcmask 499104
    %s2711 = scalar_lea.vmem [#allocation0], 152
    %2712 = vst.msk [vmem:[%s2711] sm:$0xf] %vm2710, %v2709
    %s2713 = scalar_lea.vmem %s0, 5
    %v2714 = vld [vmem:[%s2713] sm:$0x1]
    %s2715 = scalar_lea.vmem %s0, 36
    %v2716 = vld [vmem:[%s2715] sm:$0x2]
    %vm2717 = vcmask 1041409
    %v2718 = vsel %vm2717, %v2716, %v2714
    %s2719 = scalar_lea.vmem %s0, 67
    %v2720 = vld [vmem:[%s2719] sm:$0x4]
    %vm2721 = vcmask 1042434
    %v2722 = vsel %vm2721, %v2720, %v2718
    %s2723 = scalar_lea.vmem %s0, 98
    %v2724 = vld [vmem:[%s2723] sm:$0x8]
    %vm2725 = vcmask 1043459
    %v2726 = vsel %vm2725, %v2724, %v2722
    %s2727 = scalar_lea.vmem %s0, 385
    %v2728 = vld [vmem:[%s2727] sm:$0x10]
    %vm2729 = vcmask 1044484
    %v2730 = vsel %vm2729, %v2728, %v2726
    %s2731 = scalar_lea.vmem %s0, 416
    %v2732 = vld [vmem:[%s2731] sm:$0x20]
    %vm2733 = vcmask 1045509
    %v2734 = vsel %vm2733, %v2732, %v2730
    %s2735 = scalar_lea.vmem %s0, 447
    %v2736 = vld [vmem:[%s2735] sm:$0x40]
    %vm2737 = vcmask 1046534
    %v2738 = vsel %vm2737, %v2736, %v2734
    %s2739 = scalar_lea.vmem %s0, 478
    %v2740 = vld [vmem:[%s2739] sm:$0x80]
    %vm2741 = vcmask 1047559
    %v2742 = vsel %vm2741, %v2740, %v2738
    %2743 = vrot.lane.b32.xlu0 %v2742, 45
    %v2744 = vpop.permute.xlu0 %2743
    %vm2745 = vcmask 441704
    %2746 = vst.msk [vmem:[#allocation0] sm:$0xf] %vm2745, %v2744
    %s2747 = scalar_lea.vmem [#allocation0], 68
    %2748 = vst.msk [vmem:[%s2747] sm:$0xf0] %vm2745, %v2744
    %s2749 = scalar_lea.vmem %s0, 517
    %v2750 = vld [vmem:[%s2749] sm:$0x1]
    %s2751 = scalar_lea.vmem %s0, 548
    %v2752 = vld [vmem:[%s2751] sm:$0x2]
    %vm2753 = vcmask 1041409
    %v2754 = vsel %vm2753, %v2752, %v2750
    %s2755 = scalar_lea.vmem %s0, 579
    %v2756 = vld [vmem:[%s2755] sm:$0x4]
    %vm2757 = vcmask 1042434
    %v2758 = vsel %vm2757, %v2756, %v2754
    %s2759 = scalar_lea.vmem %s0, 610
    %v2760 = vld [vmem:[%s2759] sm:$0x8]
    %vm2761 = vcmask 1043459
    %v2762 = vsel %vm2761, %v2760, %v2758
    %s2763 = scalar_lea.vmem %s0, 257
    %v2764 = vld [vmem:[%s2763] sm:$0x10]
    %vm2765 = vcmask 1044484
    %v2766 = vsel %vm2765, %v2764, %v2762
    %s2767 = scalar_lea.vmem %s0, 288
    %v2768 = vld [vmem:[%s2767] sm:$0x20]
    %vm2769 = vcmask 1045509
    %v2770 = vsel %vm2769, %v2768, %v2766
    %s2771 = scalar_lea.vmem %s0, 319
    %v2772 = vld [vmem:[%s2771] sm:$0x40]
    %vm2773 = vcmask 1046534
    %v2774 = vsel %vm2773, %v2772, %v2770
    %s2775 = scalar_lea.vmem %s0, 350
    %v2776 = vld [vmem:[%s2775] sm:$0x80]
    %vm2777 = vcmask 1047559
    %v2778 = vsel %vm2777, %v2776, %v2774
    %2779 = vrot.lane.b32.xlu0 %v2778, 45
    %v2780 = vpop.permute.xlu0 %2779
    %vm2781 = vcmask 441704
    %s2782 = scalar_lea.vmem [#allocation0], 96
    %2783 = vst.msk [vmem:[%s2782] sm:$0xf] %vm2781, %v2780
    %s2784 = scalar_lea.vmem [#allocation0], 44
    %2785 = vst.msk [vmem:[%s2784] sm:$0xf0] %vm2781, %v2780
    %s2786 = scalar_lea.vmem %s0, 773
    %v2787 = vld [vmem:[%s2786] sm:$0x1]
    %s2788 = scalar_lea.vmem %s0, 804
    %v2789 = vld [vmem:[%s2788] sm:$0x2]
    %vm2790 = vcmask 1041409
    %v2791 = vsel %vm2790, %v2789, %v2787
    %s2792 = scalar_lea.vmem %s0, 835
    %v2793 = vld [vmem:[%s2792] sm:$0x4]
    %vm2794 = vcmask 1042434
    %v2795 = vsel %vm2794, %v2793, %v2791
    %s2796 = scalar_lea.vmem %s0, 866
    %v2797 = vld [vmem:[%s2796] sm:$0x8]
    %vm2798 = vcmask 1043459
    %v2799 = vsel %vm2798, %v2797, %v2795
    %s2800 = scalar_lea.vmem %s0, 129
    %v2801 = vld [vmem:[%s2800] sm:$0x10]
    %vm2802 = vcmask 1044484
    %v2803 = vsel %vm2802, %v2801, %v2799
    %s2804 = scalar_lea.vmem %s0, 160
    %v2805 = vld [vmem:[%s2804] sm:$0x20]
    %vm2806 = vcmask 1045509
    %v2807 = vsel %vm2806, %v2805, %v2803
    %s2808 = scalar_lea.vmem %s0, 191
    %v2809 = vld [vmem:[%s2808] sm:$0x40]
    %vm2810 = vcmask 1046534
    %v2811 = vsel %vm2810, %v2809, %v2807
    %s2812 = scalar_lea.vmem %s0, 222
    %v2813 = vld [vmem:[%s2812] sm:$0x80]
    %vm2814 = vcmask 1047559
    %v2815 = vsel %vm2814, %v2813, %v2811
    %2816 = vrot.lane.b32.xlu0 %v2815, 45
    %v2817 = vpop.permute.xlu0 %2816
    %vm2818 = vcmask 441704
    %s2819 = scalar_lea.vmem [#allocation0], 144
    %2820 = vst.msk [vmem:[%s2819] sm:$0xf] %vm2818, %v2817
    %s2821 = scalar_lea.vmem [#allocation0], 20
    %2822 = vst.msk [vmem:[%s2821] sm:$0xf0] %vm2818, %v2817
    %s2823 = scalar_lea.vmem %s0, 645
    %v2824 = vld [vmem:[%s2823] sm:$0x1]
    %s2825 = scalar_lea.vmem %s0, 676
    %v2826 = vld [vmem:[%s2825] sm:$0x2]
    %vm2827 = vcmask 1041409
    %v2828 = vsel %vm2827, %v2826, %v2824
    %s2829 = scalar_lea.vmem %s0, 707
    %v2830 = vld [vmem:[%s2829] sm:$0x4]
    %vm2831 = vcmask 1042434
    %v2832 = vsel %vm2831, %v2830, %v2828
    %s2833 = scalar_lea.vmem %s0, 738
    %v2834 = vld [vmem:[%s2833] sm:$0x8]
    %vm2835 = vcmask 1043459
    %v2836 = vsel %vm2835, %v2834, %v2832
    %2837 = vrot.lane.b32.xlu0 %v2836, 45
    %v2838 = vpop.permute.xlu0 %2837
    %vm2839 = vcmask 441704
    %s2840 = scalar_lea.vmem [#allocation0], 120
    %2841 = vst.msk [vmem:[%s2840] sm:$0xf] %vm2839, %v2838
    %s2842 = scalar_lea.vmem %s0, 147
    %v2843 = vld [vmem:[%s2842] sm:$0x1]
    %s2844 = scalar_lea.vmem %s0, 178
    %v2845 = vld [vmem:[%s2844] sm:$0x2]
    %vm2846 = vcmask 1041409
    %v2847 = vsel %vm2846, %v2845, %v2843
    %s2848 = scalar_lea.vmem %s0, 209
    %v2849 = vld [vmem:[%s2848] sm:$0x4]
    %vm2850 = vcmask 1042434
    %v2851 = vsel %vm2850, %v2849, %v2847
    %s2852 = scalar_lea.vmem %s0, 240
    %v2853 = vld [vmem:[%s2852] sm:$0x8]
    %vm2854 = vcmask 1043459
    %v2855 = vsel %vm2854, %v2853, %v2851
    %s2856 = scalar_lea.vmem %s0, 15
    %v2857 = vld [vmem:[%s2856] sm:$0x10]
    %vm2858 = vcmask 1044484
    %v2859 = vsel %vm2858, %v2857, %v2855
    %s2860 = scalar_lea.vmem %s0, 46
    %v2861 = vld [vmem:[%s2860] sm:$0x20]
    %vm2862 = vcmask 1045509
    %v2863 = vsel %vm2862, %v2861, %v2859
    %s2864 = scalar_lea.vmem %s0, 77
    %v2865 = vld [vmem:[%s2864] sm:$0x40]
    %vm2866 = vcmask 1046534
    %v2867 = vsel %vm2866, %v2865, %v2863
    %s2868 = scalar_lea.vmem %s0, 108
    %v2869 = vld [vmem:[%s2868] sm:$0x80]
    %vm2870 = vcmask 1047559
    %v2871 = vsel %vm2870, %v2869, %v2867
    %2872 = vrot.lane.b32.xlu0 %v2871, 43
    %v2873 = vpop.permute.xlu0 %2872
    %vm2874 = vcmask 425304
    %s2875 = scalar_lea.vmem [#allocation0], 32
    %2876 = vst.msk [vmem:[%s2875] sm:$0xf] %vm2874, %v2873
    %s2877 = scalar_lea.vmem [#allocation0], 4
    %2878 = vst.msk [vmem:[%s2877] sm:$0xf0] %vm2874, %v2873
    %s2879 = scalar_lea.vmem %s0, 659
    %v2880 = vld [vmem:[%s2879] sm:$0x1]
    %s2881 = scalar_lea.vmem %s0, 690
    %v2882 = vld [vmem:[%s2881] sm:$0x2]
    %vm2883 = vcmask 1041409
    %v2884 = vsel %vm2883, %v2882, %v2880
    %s2885 = scalar_lea.vmem %s0, 721
    %v2886 = vld [vmem:[%s2885] sm:$0x4]
    %vm2887 = vcmask 1042434
    %v2888 = vsel %vm2887, %v2886, %v2884
    %s2889 = scalar_lea.vmem %s0, 752
    %v2890 = vld [vmem:[%s2889] sm:$0x8]
    %vm2891 = vcmask 1043459
    %v2892 = vsel %vm2891, %v2890, %v2888
    %s2893 = scalar_lea.vmem %s0, 527
    %v2894 = vld [vmem:[%s2893] sm:$0x10]
    %vm2895 = vcmask 1044484
    %v2896 = vsel %vm2895, %v2894, %v2892
    %s2897 = scalar_lea.vmem %s0, 558
    %v2898 = vld [vmem:[%s2897] sm:$0x20]
    %vm2899 = vcmask 1045509
    %v2900 = vsel %vm2899, %v2898, %v2896
    %s2901 = scalar_lea.vmem %s0, 589
    %v2902 = vld [vmem:[%s2901] sm:$0x40]
    %vm2903 = vcmask 1046534
    %v2904 = vsel %vm2903, %v2902, %v2900
    %s2905 = scalar_lea.vmem %s0, 620
    %v2906 = vld [vmem:[%s2905] sm:$0x80]
    %vm2907 = vcmask 1047559
    %v2908 = vsel %vm2907, %v2906, %v2904
    %2909 = vrot.lane.b32.xlu0 %v2908, 43
    %v2910 = vpop.permute.xlu0 %2909
    %vm2911 = vcmask 425304
    %s2912 = scalar_lea.vmem [#allocation0], 128
    %2913 = vst.msk [vmem:[%s2912] sm:$0xf] %vm2911, %v2910
    %s2914 = scalar_lea.vmem [#allocation0], 100
    %2915 = vst.msk [vmem:[%s2914] sm:$0xf0] %vm2911, %v2910
    %s2916 = scalar_lea.vmem %s0, 403
    %v2917 = vld [vmem:[%s2916] sm:$0x1]
    %s2918 = scalar_lea.vmem %s0, 434
    %v2919 = vld [vmem:[%s2918] sm:$0x2]
    %vm2920 = vcmask 1041409
    %v2921 = vsel %vm2920, %v2919, %v2917
    %s2922 = scalar_lea.vmem %s0, 465
    %v2923 = vld [vmem:[%s2922] sm:$0x4]
    %vm2924 = vcmask 1042434
    %v2925 = vsel %vm2924, %v2923, %v2921
    %s2926 = scalar_lea.vmem %s0, 496
    %v2927 = vld [vmem:[%s2926] sm:$0x8]
    %vm2928 = vcmask 1043459
    %v2929 = vsel %vm2928, %v2927, %v2925
    %s2930 = scalar_lea.vmem %s0, 271
    %v2931 = vld [vmem:[%s2930] sm:$0x10]
    %vm2932 = vcmask 1044484
    %v2933 = vsel %vm2932, %v2931, %v2929
    %s2934 = scalar_lea.vmem %s0, 302
    %v2935 = vld [vmem:[%s2934] sm:$0x20]
    %vm2936 = vcmask 1045509
    %v2937 = vsel %vm2936, %v2935, %v2933
    %s2938 = scalar_lea.vmem %s0, 333
    %v2939 = vld [vmem:[%s2938] sm:$0x40]
    %vm2940 = vcmask 1046534
    %v2941 = vsel %vm2940, %v2939, %v2937
    %s2942 = scalar_lea.vmem %s0, 364
    %v2943 = vld [vmem:[%s2942] sm:$0x80]
    %vm2944 = vcmask 1047559
    %v2945 = vsel %vm2944, %v2943, %v2941
    %2946 = vrot.lane.b32.xlu0 %v2945, 43
    %v2947 = vpop.permute.xlu0 %2946
    %vm2948 = vcmask 425304
    %s2949 = scalar_lea.vmem [#allocation0], 80
    %2950 = vst.msk [vmem:[%s2949] sm:$0xf] %vm2948, %v2947
    %s2951 = scalar_lea.vmem [#allocation0], 52
    %2952 = vst.msk [vmem:[%s2951] sm:$0xf0] %vm2948, %v2947
    %s2953 = scalar_lea.vmem %s0, 787
    %v2954 = vld [vmem:[%s2953] sm:$0x1]
    %s2955 = scalar_lea.vmem %s0, 818
    %v2956 = vld [vmem:[%s2955] sm:$0x2]
    %vm2957 = vcmask 1041409
    %v2958 = vsel %vm2957, %v2956, %v2954
    %s2959 = scalar_lea.vmem %s0, 849
    %v2960 = vld [vmem:[%s2959] sm:$0x4]
    %vm2961 = vcmask 1042434
    %v2962 = vsel %vm2961, %v2960, %v2958
    %s2963 = scalar_lea.vmem %s0, 880
    %v2964 = vld [vmem:[%s2963] sm:$0x8]
    %vm2965 = vcmask 1043459
    %v2966 = vsel %vm2965, %v2964, %v2962
    %2967 = vrot.lane.b32.xlu0 %v2966, 43
    %v2968 = vpop.permute.xlu0 %2967
    %vm2969 = vcmask 425304
    %s2970 = scalar_lea.vmem [#allocation0], 152
    %2971 = vst.msk [vmem:[%s2970] sm:$0xf] %vm2969, %v2968
    %s2972 = scalar_lea.vmem %s0, 4
    %v2973 = vld [vmem:[%s2972] sm:$0x1]
    %s2974 = scalar_lea.vmem %s0, 35
    %v2975 = vld [vmem:[%s2974] sm:$0x2]
    %vm2976 = vcmask 1041409
    %v2977 = vsel %vm2976, %v2975, %v2973
    %s2978 = scalar_lea.vmem %s0, 66
    %v2979 = vld [vmem:[%s2978] sm:$0x4]
    %vm2980 = vcmask 1042434
    %v2981 = vsel %vm2980, %v2979, %v2977
    %s2982 = scalar_lea.vmem %s0, 97
    %v2983 = vld [vmem:[%s2982] sm:$0x8]
    %vm2984 = vcmask 1043459
    %v2985 = vsel %vm2984, %v2983, %v2981
    %s2986 = scalar_lea.vmem %s0, 384
    %v2987 = vld [vmem:[%s2986] sm:$0x10]
    %vm2988 = vcmask 1044484
    %v2989 = vsel %vm2988, %v2987, %v2985
    %s2990 = scalar_lea.vmem %s0, 415
    %v2991 = vld [vmem:[%s2990] sm:$0x20]
    %vm2992 = vcmask 1045509
    %v2993 = vsel %vm2992, %v2991, %v2989
    %s2994 = scalar_lea.vmem %s0, 446
    %v2995 = vld [vmem:[%s2994] sm:$0x40]
    %vm2996 = vcmask 1046534
    %v2997 = vsel %vm2996, %v2995, %v2993
    %s2998 = scalar_lea.vmem %s0, 477
    %v2999 = vld [vmem:[%s2998] sm:$0x80]
    %vm3000 = vcmask 1047559
    %v3001 = vsel %vm3000, %v2999, %v2997
    %3002 = vrot.lane.b32.xlu0 %v3001, 36
    %v3003 = vpop.permute.xlu0 %3002
    %vm3004 = vcmask 367904
    %3005 = vst.msk [vmem:[#allocation0] sm:$0xf] %vm3004, %v3003
    %s3006 = scalar_lea.vmem [#allocation0], 68
    %3007 = vst.msk [vmem:[%s3006] sm:$0xf0] %vm3004, %v3003
    %s3008 = scalar_lea.vmem %s0, 516
    %v3009 = vld [vmem:[%s3008] sm:$0x1]
    %s3010 = scalar_lea.vmem %s0, 547
    %v3011 = vld [vmem:[%s3010] sm:$0x2]
    %vm3012 = vcmask 1041409
    %v3013 = vsel %vm3012, %v3011, %v3009
    %s3014 = scalar_lea.vmem %s0, 578
    %v3015 = vld [vmem:[%s3014] sm:$0x4]
    %vm3016 = vcmask 1042434
    %v3017 = vsel %vm3016, %v3015, %v3013
    %s3018 = scalar_lea.vmem %s0, 609
    %v3019 = vld [vmem:[%s3018] sm:$0x8]
    %vm3020 = vcmask 1043459
    %v3021 = vsel %vm3020, %v3019, %v3017
    %s3022 = scalar_lea.vmem %s0, 256
    %v3023 = vld [vmem:[%s3022] sm:$0x10]
    %vm3024 = vcmask 1044484
    %v3025 = vsel %vm3024, %v3023, %v3021
    %s3026 = scalar_lea.vmem %s0, 287
    %v3027 = vld [vmem:[%s3026] sm:$0x20]
    %vm3028 = vcmask 1045509
    %v3029 = vsel %vm3028, %v3027, %v3025
    %s3030 = scalar_lea.vmem %s0, 318
    %v3031 = vld [vmem:[%s3030] sm:$0x40]
    %vm3032 = vcmask 1046534
    %v3033 = vsel %vm3032, %v3031, %v3029
    %s3034 = scalar_lea.vmem %s0, 349
    %v3035 = vld [vmem:[%s3034] sm:$0x80]
    %vm3036 = vcmask 1047559
    %v3037 = vsel %vm3036, %v3035, %v3033
    %3038 = vrot.lane.b32.xlu0 %v3037, 36
    %v3039 = vpop.permute.xlu0 %3038
    %vm3040 = vcmask 367904
    %s3041 = scalar_lea.vmem [#allocation0], 96
    %3042 = vst.msk [vmem:[%s3041] sm:$0xf] %vm3040, %v3039
    %s3043 = scalar_lea.vmem [#allocation0], 44
    %3044 = vst.msk [vmem:[%s3043] sm:$0xf0] %vm3040, %v3039
    %s3045 = scalar_lea.vmem %s0, 772
    %v3046 = vld [vmem:[%s3045] sm:$0x1]
    %s3047 = scalar_lea.vmem %s0, 803
    %v3048 = vld [vmem:[%s3047] sm:$0x2]
    %vm3049 = vcmask 1041409
    %v3050 = vsel %vm3049, %v3048, %v3046
    %s3051 = scalar_lea.vmem %s0, 834
    %v3052 = vld [vmem:[%s3051] sm:$0x4]
    %vm3053 = vcmask 1042434
    %v3054 = vsel %vm3053, %v3052, %v3050
    %s3055 = scalar_lea.vmem %s0, 865
    %v3056 = vld [vmem:[%s3055] sm:$0x8]
    %vm3057 = vcmask 1043459
    %v3058 = vsel %vm3057, %v3056, %v3054
    %s3059 = scalar_lea.vmem %s0, 128
    %v3060 = vld [vmem:[%s3059] sm:$0x10]
    %vm3061 = vcmask 1044484
    %v3062 = vsel %vm3061, %v3060, %v3058
    %s3063 = scalar_lea.vmem %s0, 159
    %v3064 = vld [vmem:[%s3063] sm:$0x20]
    %vm3065 = vcmask 1045509
    %v3066 = vsel %vm3065, %v3064, %v3062
    %s3067 = scalar_lea.vmem %s0, 190
    %v3068 = vld [vmem:[%s3067] sm:$0x40]
    %vm3069 = vcmask 1046534
    %v3070 = vsel %vm3069, %v3068, %v3066
    %s3071 = scalar_lea.vmem %s0, 221
    %v3072 = vld [vmem:[%s3071] sm:$0x80]
    %vm3073 = vcmask 1047559
    %v3074 = vsel %vm3073, %v3072, %v3070
    %3075 = vrot.lane.b32.xlu0 %v3074, 36
    %v3076 = vpop.permute.xlu0 %3075
    %vm3077 = vcmask 367904
    %s3078 = scalar_lea.vmem [#allocation0], 144
    %3079 = vst.msk [vmem:[%s3078] sm:$0xf] %vm3077, %v3076
    %s3080 = scalar_lea.vmem [#allocation0], 20
    %3081 = vst.msk [vmem:[%s3080] sm:$0xf0] %vm3077, %v3076
    %s3082 = scalar_lea.vmem %s0, 644
    %v3083 = vld [vmem:[%s3082] sm:$0x1]
    %s3084 = scalar_lea.vmem %s0, 675
    %v3085 = vld [vmem:[%s3084] sm:$0x2]
    %vm3086 = vcmask 1041409
    %v3087 = vsel %vm3086, %v3085, %v3083
    %s3088 = scalar_lea.vmem %s0, 706
    %v3089 = vld [vmem:[%s3088] sm:$0x4]
    %vm3090 = vcmask 1042434
    %v3091 = vsel %vm3090, %v3089, %v3087
    %s3092 = scalar_lea.vmem %s0, 737
    %v3093 = vld [vmem:[%s3092] sm:$0x8]
    %vm3094 = vcmask 1043459
    %v3095 = vsel %vm3094, %v3093, %v3091
    %3096 = vrot.lane.b32.xlu0 %v3095, 36
    %v3097 = vpop.permute.xlu0 %3096
    %vm3098 = vcmask 367904
    %s3099 = scalar_lea.vmem [#allocation0], 120
    %3100 = vst.msk [vmem:[%s3099] sm:$0xf] %vm3098, %v3097
    %s3101 = scalar_lea.vmem %s0, 146
    %v3102 = vld [vmem:[%s3101] sm:$0x1]
    %s3103 = scalar_lea.vmem %s0, 177
    %v3104 = vld [vmem:[%s3103] sm:$0x2]
    %vm3105 = vcmask 1041409
    %v3106 = vsel %vm3105, %v3104, %v3102
    %s3107 = scalar_lea.vmem %s0, 208
    %v3108 = vld [vmem:[%s3107] sm:$0x4]
    %vm3109 = vcmask 1042434
    %v3110 = vsel %vm3109, %v3108, %v3106
    %s3111 = scalar_lea.vmem %s0, 239
    %v3112 = vld [vmem:[%s3111] sm:$0x8]
    %vm3113 = vcmask 1043459
    %v3114 = vsel %vm3113, %v3112, %v3110
    %s3115 = scalar_lea.vmem %s0, 14
    %v3116 = vld [vmem:[%s3115] sm:$0x10]
    %vm3117 = vcmask 1044484
    %v3118 = vsel %vm3117, %v3116, %v3114
    %s3119 = scalar_lea.vmem %s0, 45
    %v3120 = vld [vmem:[%s3119] sm:$0x20]
    %vm3121 = vcmask 1045509
    %v3122 = vsel %vm3121, %v3120, %v3118
    %s3123 = scalar_lea.vmem %s0, 76
    %v3124 = vld [vmem:[%s3123] sm:$0x40]
    %vm3125 = vcmask 1046534
    %v3126 = vsel %vm3125, %v3124, %v3122
    %s3127 = scalar_lea.vmem %s0, 107
    %v3128 = vld [vmem:[%s3127] sm:$0x80]
    %vm3129 = vcmask 1047559
    %v3130 = vsel %vm3129, %v3128, %v3126
    %3131 = vrot.lane.b32.xlu0 %v3130, 34
    %v3132 = vpop.permute.xlu0 %3131
    %vm3133 = vcmask 351504
    %s3134 = scalar_lea.vmem [#allocation0], 32
    %3135 = vst.msk [vmem:[%s3134] sm:$0xf] %vm3133, %v3132
    %s3136 = scalar_lea.vmem [#allocation0], 4
    %3137 = vst.msk [vmem:[%s3136] sm:$0xf0] %vm3133, %v3132
    %s3138 = scalar_lea.vmem %s0, 658
    %v3139 = vld [vmem:[%s3138] sm:$0x1]
    %s3140 = scalar_lea.vmem %s0, 689
    %v3141 = vld [vmem:[%s3140] sm:$0x2]
    %vm3142 = vcmask 1041409
    %v3143 = vsel %vm3142, %v3141, %v3139
    %s3144 = scalar_lea.vmem %s0, 720
    %v3145 = vld [vmem:[%s3144] sm:$0x4]
    %vm3146 = vcmask 1042434
    %v3147 = vsel %vm3146, %v3145, %v3143
    %s3148 = scalar_lea.vmem %s0, 751
    %v3149 = vld [vmem:[%s3148] sm:$0x8]
    %vm3150 = vcmask 1043459
    %v3151 = vsel %vm3150, %v3149, %v3147
    %s3152 = scalar_lea.vmem %s0, 526
    %v3153 = vld [vmem:[%s3152] sm:$0x10]
    %vm3154 = vcmask 1044484
    %v3155 = vsel %vm3154, %v3153, %v3151
    %s3156 = scalar_lea.vmem %s0, 557
    %v3157 = vld [vmem:[%s3156] sm:$0x20]
    %vm3158 = vcmask 1045509
    %v3159 = vsel %vm3158, %v3157, %v3155
    %s3160 = scalar_lea.vmem %s0, 588
    %v3161 = vld [vmem:[%s3160] sm:$0x40]
    %vm3162 = vcmask 1046534
    %v3163 = vsel %vm3162, %v3161, %v3159
    %s3164 = scalar_lea.vmem %s0, 619
    %v3165 = vld [vmem:[%s3164] sm:$0x80]
    %vm3166 = vcmask 1047559
    %v3167 = vsel %vm3166, %v3165, %v3163
    %3168 = vrot.lane.b32.xlu0 %v3167, 34
    %v3169 = vpop.permute.xlu0 %3168
    %vm3170 = vcmask 351504
    %s3171 = scalar_lea.vmem [#allocation0], 128
    %3172 = vst.msk [vmem:[%s3171] sm:$0xf] %vm3170, %v3169
    %s3173 = scalar_lea.vmem [#allocation0], 100
    %3174 = vst.msk [vmem:[%s3173] sm:$0xf0] %vm3170, %v3169
    %s3175 = scalar_lea.vmem %s0, 402
    %v3176 = vld [vmem:[%s3175] sm:$0x1]
    %s3177 = scalar_lea.vmem %s0, 433
    %v3178 = vld [vmem:[%s3177] sm:$0x2]
    %vm3179 = vcmask 1041409
    %v3180 = vsel %vm3179, %v3178, %v3176
    %s3181 = scalar_lea.vmem %s0, 464
    %v3182 = vld [vmem:[%s3181] sm:$0x4]
    %vm3183 = vcmask 1042434
    %v3184 = vsel %vm3183, %v3182, %v3180
    %s3185 = scalar_lea.vmem %s0, 495
    %v3186 = vld [vmem:[%s3185] sm:$0x8]
    %vm3187 = vcmask 1043459
    %v3188 = vsel %vm3187, %v3186, %v3184
    %s3189 = scalar_lea.vmem %s0, 270
    %v3190 = vld [vmem:[%s3189] sm:$0x10]
    %vm3191 = vcmask 1044484
    %v3192 = vsel %vm3191, %v3190, %v3188
    %s3193 = scalar_lea.vmem %s0, 301
    %v3194 = vld [vmem:[%s3193] sm:$0x20]
    %vm3195 = vcmask 1045509
    %v3196 = vsel %vm3195, %v3194, %v3192
    %s3197 = scalar_lea.vmem %s0, 332
    %v3198 = vld [vmem:[%s3197] sm:$0x40]
    %vm3199 = vcmask 1046534
    %v3200 = vsel %vm3199, %v3198, %v3196
    %s3201 = scalar_lea.vmem %s0, 363
    %v3202 = vld [vmem:[%s3201] sm:$0x80]
    %vm3203 = vcmask 1047559
    %v3204 = vsel %vm3203, %v3202, %v3200
    %3205 = vrot.lane.b32.xlu0 %v3204, 34
    %v3206 = vpop.permute.xlu0 %3205
    %vm3207 = vcmask 351504
    %s3208 = scalar_lea.vmem [#allocation0], 80
    %3209 = vst.msk [vmem:[%s3208] sm:$0xf] %vm3207, %v3206
    %s3210 = scalar_lea.vmem [#allocation0], 52
    %3211 = vst.msk [vmem:[%s3210] sm:$0xf0] %vm3207, %v3206
    %s3212 = scalar_lea.vmem %s0, 786
    %v3213 = vld [vmem:[%s3212] sm:$0x1]
    %s3214 = scalar_lea.vmem %s0, 817
    %v3215 = vld [vmem:[%s3214] sm:$0x2]
    %vm3216 = vcmask 1041409
    %v3217 = vsel %vm3216, %v3215, %v3213
    %s3218 = scalar_lea.vmem %s0, 848
    %v3219 = vld [vmem:[%s3218] sm:$0x4]
    %vm3220 = vcmask 1042434
    %v3221 = vsel %vm3220, %v3219, %v3217
    %s3222 = scalar_lea.vmem %s0, 879
    %v3223 = vld [vmem:[%s3222] sm:$0x8]
    %vm3224 = vcmask 1043459
    %v3225 = vsel %vm3224, %v3223, %v3221
    %3226 = vrot.lane.b32.xlu0 %v3225, 34
    %v3227 = vpop.permute.xlu0 %3226
    %vm3228 = vcmask 351504
    %s3229 = scalar_lea.vmem [#allocation0], 152
    %3230 = vst.msk [vmem:[%s3229] sm:$0xf] %vm3228, %v3227
    %s3231 = scalar_lea.vmem %s0, 3
    %v3232 = vld [vmem:[%s3231] sm:$0x1]
    %s3233 = scalar_lea.vmem %s0, 34
    %v3234 = vld [vmem:[%s3233] sm:$0x2]
    %vm3235 = vcmask 1041409
    %v3236 = vsel %vm3235, %v3234, %v3232
    %s3237 = scalar_lea.vmem %s0, 65
    %v3238 = vld [vmem:[%s3237] sm:$0x4]
    %vm3239 = vcmask 1042434
    %v3240 = vsel %vm3239, %v3238, %v3236
    %s3241 = scalar_lea.vmem %s0, 96
    %v3242 = vld [vmem:[%s3241] sm:$0x8]
    %vm3243 = vcmask 1043459
    %v3244 = vsel %vm3243, %v3242, %v3240
    %s3245 = scalar_lea.vmem %s0, 383
    %v3246 = vld [vmem:[%s3245] sm:$0x10]
    %vm3247 = vcmask 1044484
    %v3248 = vsel %vm3247, %v3246, %v3244
    %s3249 = scalar_lea.vmem %s0, 414
    %v3250 = vld [vmem:[%s3249] sm:$0x20]
    %vm3251 = vcmask 1045509
    %v3252 = vsel %vm3251, %v3250, %v3248
    %s3253 = scalar_lea.vmem %s0, 445
    %v3254 = vld [vmem:[%s3253] sm:$0x40]
    %vm3255 = vcmask 1046534
    %v3256 = vsel %vm3255, %v3254, %v3252
    %s3257 = scalar_lea.vmem %s0, 476
    %v3258 = vld [vmem:[%s3257] sm:$0x80]
    %vm3259 = vcmask 1047559
    %v3260 = vsel %vm3259, %v3258, %v3256
    %3261 = vrot.lane.b32.xlu0 %v3260, 27
    %v3262 = vpop.permute.xlu0 %3261
    %vm3263 = vcmask 294104
    %3264 = vst.msk [vmem:[#allocation0] sm:$0xf] %vm3263, %v3262
    %s3265 = scalar_lea.vmem [#allocation0], 68
    %3266 = vst.msk [vmem:[%s3265] sm:$0xf0] %vm3263, %v3262
    %s3267 = scalar_lea.vmem %s0, 515
    %v3268 = vld [vmem:[%s3267] sm:$0x1]
    %s3269 = scalar_lea.vmem %s0, 546
    %v3270 = vld [vmem:[%s3269] sm:$0x2]
    %vm3271 = vcmask 1041409
    %v3272 = vsel %vm3271, %v3270, %v3268
    %s3273 = scalar_lea.vmem %s0, 577
    %v3274 = vld [vmem:[%s3273] sm:$0x4]
    %vm3275 = vcmask 1042434
    %v3276 = vsel %vm3275, %v3274, %v3272
    %s3277 = scalar_lea.vmem %s0, 608
    %v3278 = vld [vmem:[%s3277] sm:$0x8]
    %vm3279 = vcmask 1043459
    %v3280 = vsel %vm3279, %v3278, %v3276
    %s3281 = scalar_lea.vmem %s0, 255
    %v3282 = vld [vmem:[%s3281] sm:$0x10]
    %vm3283 = vcmask 1044484
    %v3284 = vsel %vm3283, %v3282, %v3280
    %s3285 = scalar_lea.vmem %s0, 286
    %v3286 = vld [vmem:[%s3285] sm:$0x20]
    %vm3287 = vcmask 1045509
    %v3288 = vsel %vm3287, %v3286, %v3284
    %s3289 = scalar_lea.vmem %s0, 317
    %v3290 = vld [vmem:[%s3289] sm:$0x40]
    %vm3291 = vcmask 1046534
    %v3292 = vsel %vm3291, %v3290, %v3288
    %s3293 = scalar_lea.vmem %s0, 348
    %v3294 = vld [vmem:[%s3293] sm:$0x80]
    %vm3295 = vcmask 1047559
    %v3296 = vsel %vm3295, %v3294, %v3292
    %3297 = vrot.lane.b32.xlu0 %v3296, 27
    %v3298 = vpop.permute.xlu0 %3297
    %vm3299 = vcmask 294104
    %s3300 = scalar_lea.vmem [#allocation0], 96
    %3301 = vst.msk [vmem:[%s3300] sm:$0xf] %vm3299, %v3298
    %s3302 = scalar_lea.vmem [#allocation0], 44
    %3303 = vst.msk [vmem:[%s3302] sm:$0xf0] %vm3299, %v3298
    %s3304 = scalar_lea.vmem %s0, 771
    %v3305 = vld [vmem:[%s3304] sm:$0x1]
    %s3306 = scalar_lea.vmem %s0, 802
    %v3307 = vld [vmem:[%s3306] sm:$0x2]
    %vm3308 = vcmask 1041409
    %v3309 = vsel %vm3308, %v3307, %v3305
    %s3310 = scalar_lea.vmem %s0, 833
    %v3311 = vld [vmem:[%s3310] sm:$0x4]
    %vm3312 = vcmask 1042434
    %v3313 = vsel %vm3312, %v3311, %v3309
    %s3314 = scalar_lea.vmem %s0, 864
    %v3315 = vld [vmem:[%s3314] sm:$0x8]
    %vm3316 = vcmask 1043459
    %v3317 = vsel %vm3316, %v3315, %v3313
    %s3318 = scalar_lea.vmem %s0, 127
    %v3319 = vld [vmem:[%s3318] sm:$0x10]
    %vm3320 = vcmask 1044484
    %v3321 = vsel %vm3320, %v3319, %v3317
    %s3322 = scalar_lea.vmem %s0, 158
    %v3323 = vld [vmem:[%s3322] sm:$0x20]
    %vm3324 = vcmask 1045509
    %v3325 = vsel %vm3324, %v3323, %v3321
    %s3326 = scalar_lea.vmem %s0, 189
    %v3327 = vld [vmem:[%s3326] sm:$0x40]
    %vm3328 = vcmask 1046534
    %v3329 = vsel %vm3328, %v3327, %v3325
    %s3330 = scalar_lea.vmem %s0, 220
    %v3331 = vld [vmem:[%s3330] sm:$0x80]
    %vm3332 = vcmask 1047559
    %v3333 = vsel %vm3332, %v3331, %v3329
    %3334 = vrot.lane.b32.xlu0 %v3333, 27
    %v3335 = vpop.permute.xlu0 %3334
    %vm3336 = vcmask 294104
    %s3337 = scalar_lea.vmem [#allocation0], 144
    %3338 = vst.msk [vmem:[%s3337] sm:$0xf] %vm3336, %v3335
    %s3339 = scalar_lea.vmem [#allocation0], 20
    %3340 = vst.msk [vmem:[%s3339] sm:$0xf0] %vm3336, %v3335
    %s3341 = scalar_lea.vmem %s0, 643
    %v3342 = vld [vmem:[%s3341] sm:$0x1]
    %s3343 = scalar_lea.vmem %s0, 674
    %v3344 = vld [vmem:[%s3343] sm:$0x2]
    %vm3345 = vcmask 1041409
    %v3346 = vsel %vm3345, %v3344, %v3342
    %s3347 = scalar_lea.vmem %s0, 705
    %v3348 = vld [vmem:[%s3347] sm:$0x4]
    %vm3349 = vcmask 1042434
    %v3350 = vsel %vm3349, %v3348, %v3346
    %s3351 = scalar_lea.vmem %s0, 736
    %v3352 = vld [vmem:[%s3351] sm:$0x8]
    %vm3353 = vcmask 1043459
    %v3354 = vsel %vm3353, %v3352, %v3350
    %3355 = vrot.lane.b32.xlu0 %v3354, 27
    %v3356 = vpop.permute.xlu0 %3355
    %vm3357 = vcmask 294104
    %s3358 = scalar_lea.vmem [#allocation0], 120
    %3359 = vst.msk [vmem:[%s3358] sm:$0xf] %vm3357, %v3356
    %s3360 = scalar_lea.vmem %s0, 145
    %v3361 = vld [vmem:[%s3360] sm:$0x1]
    %s3362 = scalar_lea.vmem %s0, 176
    %v3363 = vld [vmem:[%s3362] sm:$0x2]
    %vm3364 = vcmask 1041409
    %v3365 = vsel %vm3364, %v3363, %v3361
    %s3366 = scalar_lea.vmem %s0, 207
    %v3367 = vld [vmem:[%s3366] sm:$0x4]
    %vm3368 = vcmask 1042434
    %v3369 = vsel %vm3368, %v3367, %v3365
    %s3370 = scalar_lea.vmem %s0, 238
    %v3371 = vld [vmem:[%s3370] sm:$0x8]
    %vm3372 = vcmask 1043459
    %v3373 = vsel %vm3372, %v3371, %v3369
    %s3374 = scalar_lea.vmem %s0, 13
    %v3375 = vld [vmem:[%s3374] sm:$0x10]
    %vm3376 = vcmask 1044484
    %v3377 = vsel %vm3376, %v3375, %v3373
    %s3378 = scalar_lea.vmem %s0, 44
    %v3379 = vld [vmem:[%s3378] sm:$0x20]
    %vm3380 = vcmask 1045509
    %v3381 = vsel %vm3380, %v3379, %v3377
    %s3382 = scalar_lea.vmem %s0, 75
    %v3383 = vld [vmem:[%s3382] sm:$0x40]
    %vm3384 = vcmask 1046534
    %v3385 = vsel %vm3384, %v3383, %v3381
    %s3386 = scalar_lea.vmem %s0, 106
    %v3387 = vld [vmem:[%s3386] sm:$0x80]
    %vm3388 = vcmask 1047559
    %v3389 = vsel %vm3388, %v3387, %v3385
    %3390 = vrot.lane.b32.xlu0 %v3389, 25
    %v3391 = vpop.permute.xlu0 %3390
    %vm3392 = vcmask 277704
    %s3393 = scalar_lea.vmem [#allocation0], 32
    %3394 = vst.msk [vmem:[%s3393] sm:$0xf] %vm3392, %v3391
    %s3395 = scalar_lea.vmem [#allocation0], 4
    %3396 = vst.msk [vmem:[%s3395] sm:$0xf0] %vm3392, %v3391
    %s3397 = scalar_lea.vmem %s0, 657
    %v3398 = vld [vmem:[%s3397] sm:$0x1]
    %s3399 = scalar_lea.vmem %s0, 688
    %v3400 = vld [vmem:[%s3399] sm:$0x2]
    %vm3401 = vcmask 1041409
    %v3402 = vsel %vm3401, %v3400, %v3398
    %s3403 = scalar_lea.vmem %s0, 719
    %v3404 = vld [vmem:[%s3403] sm:$0x4]
    %vm3405 = vcmask 1042434
    %v3406 = vsel %vm3405, %v3404, %v3402
    %s3407 = scalar_lea.vmem %s0, 750
    %v3408 = vld [vmem:[%s3407] sm:$0x8]
    %vm3409 = vcmask 1043459
    %v3410 = vsel %vm3409, %v3408, %v3406
    %s3411 = scalar_lea.vmem %s0, 525
    %v3412 = vld [vmem:[%s3411] sm:$0x10]
    %vm3413 = vcmask 1044484
    %v3414 = vsel %vm3413, %v3412, %v3410
    %s3415 = scalar_lea.vmem %s0, 556
    %v3416 = vld [vmem:[%s3415] sm:$0x20]
    %vm3417 = vcmask 1045509
    %v3418 = vsel %vm3417, %v3416, %v3414
    %s3419 = scalar_lea.vmem %s0, 587
    %v3420 = vld [vmem:[%s3419] sm:$0x40]
    %vm3421 = vcmask 1046534
    %v3422 = vsel %vm3421, %v3420, %v3418
    %s3423 = scalar_lea.vmem %s0, 618
    %v3424 = vld [vmem:[%s3423] sm:$0x80]
    %vm3425 = vcmask 1047559
    %v3426 = vsel %vm3425, %v3424, %v3422
    %3427 = vrot.lane.b32.xlu0 %v3426, 25
    %v3428 = vpop.permute.xlu0 %3427
    %vm3429 = vcmask 277704
    %s3430 = scalar_lea.vmem [#allocation0], 128
    %3431 = vst.msk [vmem:[%s3430] sm:$0xf] %vm3429, %v3428
    %s3432 = scalar_lea.vmem [#allocation0], 100
    %3433 = vst.msk [vmem:[%s3432] sm:$0xf0] %vm3429, %v3428
    %s3434 = scalar_lea.vmem %s0, 401
    %v3435 = vld [vmem:[%s3434] sm:$0x1]
    %s3436 = scalar_lea.vmem %s0, 432
    %v3437 = vld [vmem:[%s3436] sm:$0x2]
    %vm3438 = vcmask 1041409
    %v3439 = vsel %vm3438, %v3437, %v3435
    %s3440 = scalar_lea.vmem %s0, 463
    %v3441 = vld [vmem:[%s3440] sm:$0x4]
    %vm3442 = vcmask 1042434
    %v3443 = vsel %vm3442, %v3441, %v3439
    %s3444 = scalar_lea.vmem %s0, 494
    %v3445 = vld [vmem:[%s3444] sm:$0x8]
    %vm3446 = vcmask 1043459
    %v3447 = vsel %vm3446, %v3445, %v3443
    %s3448 = scalar_lea.vmem %s0, 269
    %v3449 = vld [vmem:[%s3448] sm:$0x10]
    %vm3450 = vcmask 1044484
    %v3451 = vsel %vm3450, %v3449, %v3447
    %s3452 = scalar_lea.vmem %s0, 300
    %v3453 = vld [vmem:[%s3452] sm:$0x20]
    %vm3454 = vcmask 1045509
    %v3455 = vsel %vm3454, %v3453, %v3451
    %s3456 = scalar_lea.vmem %s0, 331
    %v3457 = vld [vmem:[%s3456] sm:$0x40]
    %vm3458 = vcmask 1046534
    %v3459 = vsel %vm3458, %v3457, %v3455
    %s3460 = scalar_lea.vmem %s0, 362
    %v3461 = vld [vmem:[%s3460] sm:$0x80]
    %vm3462 = vcmask 1047559
    %v3463 = vsel %vm3462, %v3461, %v3459
    %3464 = vrot.lane.b32.xlu0 %v3463, 25
    %v3465 = vpop.permute.xlu0 %3464
    %vm3466 = vcmask 277704
    %s3467 = scalar_lea.vmem [#allocation0], 80
    %3468 = vst.msk [vmem:[%s3467] sm:$0xf] %vm3466, %v3465
    %s3469 = scalar_lea.vmem [#allocation0], 52
    %3470 = vst.msk [vmem:[%s3469] sm:$0xf0] %vm3466, %v3465
    %s3471 = scalar_lea.vmem %s0, 785
    %v3472 = vld [vmem:[%s3471] sm:$0x1]
    %s3473 = scalar_lea.vmem %s0, 816
    %v3474 = vld [vmem:[%s3473] sm:$0x2]
    %vm3475 = vcmask 1041409
    %v3476 = vsel %vm3475, %v3474, %v3472
    %s3477 = scalar_lea.vmem %s0, 847
    %v3478 = vld [vmem:[%s3477] sm:$0x4]
    %vm3479 = vcmask 1042434
    %v3480 = vsel %vm3479, %v3478, %v3476
    %s3481 = scalar_lea.vmem %s0, 878
    %v3482 = vld [vmem:[%s3481] sm:$0x8]
    %vm3483 = vcmask 1043459
    %v3484 = vsel %vm3483, %v3482, %v3480
    %3485 = vrot.lane.b32.xlu0 %v3484, 25
    %v3486 = vpop.permute.xlu0 %3485
    %vm3487 = vcmask 277704
    %s3488 = scalar_lea.vmem [#allocation0], 152
    %3489 = vst.msk [vmem:[%s3488] sm:$0xf] %vm3487, %v3486
    %s3490 = scalar_lea.vmem %s0, 287
    %v3491 = vld [vmem:[%s3490] sm:$0x1]
    %s3492 = scalar_lea.vmem %s0, 318
    %v3493 = vld [vmem:[%s3492] sm:$0x2]
    %vm3494 = vcmask 1041409
    %v3495 = vsel %vm3494, %v3493, %v3491
    %s3496 = scalar_lea.vmem %s0, 349
    %v3497 = vld [vmem:[%s3496] sm:$0x4]
    %vm3498 = vcmask 1042434
    %v3499 = vsel %vm3498, %v3497, %v3495
    %s3500 = scalar_lea.vmem %s0, 380
    %v3501 = vld [vmem:[%s3500] sm:$0x8]
    %vm3502 = vcmask 1043459
    %v3503 = vsel %vm3502, %v3501, %v3499
    %s3504 = scalar_lea.vmem %s0, 155
    %v3505 = vld [vmem:[%s3504] sm:$0x10]
    %vm3506 = vcmask 1044484
    %v3507 = vsel %vm3506, %v3505, %v3503
    %s3508 = scalar_lea.vmem %s0, 186
    %v3509 = vld [vmem:[%s3508] sm:$0x20]
    %vm3510 = vcmask 1045509
    %v3511 = vsel %vm3510, %v3509, %v3507
    %s3512 = scalar_lea.vmem %s0, 217
    %v3513 = vld [vmem:[%s3512] sm:$0x40]
    %vm3514 = vcmask 1046534
    %v3515 = vsel %vm3514, %v3513, %v3511
    %s3516 = scalar_lea.vmem %s0, 248
    %v3517 = vld [vmem:[%s3516] sm:$0x80]
    %vm3518 = vcmask 1047559
    %v3519 = vsel %vm3518, %v3517, %v3515
    %3520 = vrot.lane.b32.xlu0 %v3519, 23
    %v3521 = vpop.permute.xlu0 %3520
    %vm3522 = vcmask 261304
    %s3523 = scalar_lea.vmem [#allocation0], 64
    %3524 = vst.msk [vmem:[%s3523] sm:$0xf] %vm3522, %v3521
    %s3525 = scalar_lea.vmem [#allocation0], 36
    %3526 = vst.msk [vmem:[%s3525] sm:$0xf0] %vm3522, %v3521
    %s3527 = scalar_lea.vmem %s0, 799
    %v3528 = vld [vmem:[%s3527] sm:$0x1]
    %s3529 = scalar_lea.vmem %s0, 830
    %v3530 = vld [vmem:[%s3529] sm:$0x2]
    %vm3531 = vcmask 1041409
    %v3532 = vsel %vm3531, %v3530, %v3528
    %s3533 = scalar_lea.vmem %s0, 861
    %v3534 = vld [vmem:[%s3533] sm:$0x4]
    %vm3535 = vcmask 1042434
    %v3536 = vsel %vm3535, %v3534, %v3532
    %s3537 = scalar_lea.vmem %s0, 892
    %v3538 = vld [vmem:[%s3537] sm:$0x8]
    %vm3539 = vcmask 1043459
    %v3540 = vsel %vm3539, %v3538, %v3536
    %s3541 = scalar_lea.vmem %s0, 667
    %v3542 = vld [vmem:[%s3541] sm:$0x10]
    %vm3543 = vcmask 1044484
    %v3544 = vsel %vm3543, %v3542, %v3540
    %s3545 = scalar_lea.vmem %s0, 698
    %v3546 = vld [vmem:[%s3545] sm:$0x20]
    %vm3547 = vcmask 1045509
    %v3548 = vsel %vm3547, %v3546, %v3544
    %s3549 = scalar_lea.vmem %s0, 729
    %v3550 = vld [vmem:[%s3549] sm:$0x40]
    %vm3551 = vcmask 1046534
    %v3552 = vsel %vm3551, %v3550, %v3548
    %s3553 = scalar_lea.vmem %s0, 760
    %v3554 = vld [vmem:[%s3553] sm:$0x80]
    %vm3555 = vcmask 1047559
    %v3556 = vsel %vm3555, %v3554, %v3552
    %3557 = vrot.lane.b32.xlu0 %v3556, 23
    %v3558 = vpop.permute.xlu0 %3557
    %vm3559 = vcmask 261304
    %s3560 = scalar_lea.vmem [#allocation0], 160
    %3561 = vst.msk [vmem:[%s3560] sm:$0xf] %vm3559, %v3558
    %s3562 = scalar_lea.vmem [#allocation0], 132
    %3563 = vst.msk [vmem:[%s3562] sm:$0xf0] %vm3559, %v3558
    %s3564 = scalar_lea.vmem %s0, 31
    %v3565 = vld [vmem:[%s3564] sm:$0x1]
    %s3566 = scalar_lea.vmem %s0, 62
    %v3567 = vld [vmem:[%s3566] sm:$0x2]
    %vm3568 = vcmask 1041409
    %v3569 = vsel %vm3568, %v3567, %v3565
    %s3570 = scalar_lea.vmem %s0, 93
    %v3571 = vld [vmem:[%s3570] sm:$0x4]
    %vm3572 = vcmask 1042434
    %v3573 = vsel %vm3572, %v3571, %v3569
    %s3574 = scalar_lea.vmem %s0, 124
    %v3575 = vld [vmem:[%s3574] sm:$0x8]
    %vm3576 = vcmask 1043459
    %v3577 = vsel %vm3576, %v3575, %v3573
    %s3578 = scalar_lea.vmem %s0, 411
    %v3579 = vld [vmem:[%s3578] sm:$0x10]
    %vm3580 = vcmask 1044484
    %v3581 = vsel %vm3580, %v3579, %v3577
    %s3582 = scalar_lea.vmem %s0, 442
    %v3583 = vld [vmem:[%s3582] sm:$0x20]
    %vm3584 = vcmask 1045509
    %v3585 = vsel %vm3584, %v3583, %v3581
    %s3586 = scalar_lea.vmem %s0, 473
    %v3587 = vld [vmem:[%s3586] sm:$0x40]
    %vm3588 = vcmask 1046534
    %v3589 = vsel %vm3588, %v3587, %v3585
    %s3590 = scalar_lea.vmem %s0, 504
    %v3591 = vld [vmem:[%s3590] sm:$0x80]
    %vm3592 = vcmask 1047559
    %v3593 = vsel %vm3592, %v3591, %v3589
    %3594 = vrot.lane.b32.xlu0 %v3593, 23
    %v3595 = vpop.permute.xlu0 %3594
    %vm3596 = vcmask 261304
    %s3597 = scalar_lea.vmem [#allocation0], 16
    %3598 = vst.msk [vmem:[%s3597] sm:$0xf] %vm3596, %v3595
    %s3599 = scalar_lea.vmem [#allocation0], 84
    %3600 = vst.msk [vmem:[%s3599] sm:$0xf0] %vm3596, %v3595
    %s3601 = scalar_lea.vmem %s0, 543
    %v3602 = vld [vmem:[%s3601] sm:$0x1]
    %s3603 = scalar_lea.vmem %s0, 574
    %v3604 = vld [vmem:[%s3603] sm:$0x2]
    %vm3605 = vcmask 1041409
    %v3606 = vsel %vm3605, %v3604, %v3602
    %s3607 = scalar_lea.vmem %s0, 605
    %v3608 = vld [vmem:[%s3607] sm:$0x4]
    %vm3609 = vcmask 1042434
    %v3610 = vsel %vm3609, %v3608, %v3606
    %s3611 = scalar_lea.vmem %s0, 636
    %v3612 = vld [vmem:[%s3611] sm:$0x8]
    %vm3613 = vcmask 1043459
    %v3614 = vsel %vm3613, %v3612, %v3610
    %3615 = vrot.lane.b32.xlu0 %v3614, 23
    %v3616 = vpop.permute.xlu0 %3615
    %vm3617 = vcmask 261304
    %s3618 = scalar_lea.vmem [#allocation0], 112
    %3619 = vst.msk [vmem:[%s3618] sm:$0xf] %vm3617, %v3616
    %s3620 = scalar_lea.vmem %s0, 2
    %v3621 = vld [vmem:[%s3620] sm:$0x1]
    %s3622 = scalar_lea.vmem %s0, 33
    %v3623 = vld [vmem:[%s3622] sm:$0x2]
    %vm3624 = vcmask 1041409
    %v3625 = vsel %vm3624, %v3623, %v3621
    %s3626 = scalar_lea.vmem %s0, 64
    %v3627 = vld [vmem:[%s3626] sm:$0x4]
    %vm3628 = vcmask 1042434
    %v3629 = vsel %vm3628, %v3627, %v3625
    %s3630 = scalar_lea.vmem %s0, 95
    %v3631 = vld [vmem:[%s3630] sm:$0x8]
    %vm3632 = vcmask 1043459
    %v3633 = vsel %vm3632, %v3631, %v3629
    %s3634 = scalar_lea.vmem %s0, 382
    %v3635 = vld [vmem:[%s3634] sm:$0x10]
    %vm3636 = vcmask 1044484
    %v3637 = vsel %vm3636, %v3635, %v3633
    %s3638 = scalar_lea.vmem %s0, 413
    %v3639 = vld [vmem:[%s3638] sm:$0x20]
    %vm3640 = vcmask 1045509
    %v3641 = vsel %vm3640, %v3639, %v3637
    %s3642 = scalar_lea.vmem %s0, 444
    %v3643 = vld [vmem:[%s3642] sm:$0x40]
    %vm3644 = vcmask 1046534
    %v3645 = vsel %vm3644, %v3643, %v3641
    %s3646 = scalar_lea.vmem %s0, 475
    %v3647 = vld [vmem:[%s3646] sm:$0x80]
    %vm3648 = vcmask 1047559
    %v3649 = vsel %vm3648, %v3647, %v3645
    %3650 = vrot.lane.b32.xlu0 %v3649, 18
    %v3651 = vpop.permute.xlu0 %3650
    %vm3652 = vcmask 220304
    %3653 = vst.msk [vmem:[#allocation0] sm:$0xf] %vm3652, %v3651
    %s3654 = scalar_lea.vmem [#allocation0], 68
    %3655 = vst.msk [vmem:[%s3654] sm:$0xf0] %vm3652, %v3651
    %s3656 = scalar_lea.vmem %s0, 514
    %v3657 = vld [vmem:[%s3656] sm:$0x1]
    %s3658 = scalar_lea.vmem %s0, 545
    %v3659 = vld [vmem:[%s3658] sm:$0x2]
    %vm3660 = vcmask 1041409
    %v3661 = vsel %vm3660, %v3659, %v3657
    %s3662 = scalar_lea.vmem %s0, 576
    %v3663 = vld [vmem:[%s3662] sm:$0x4]
    %vm3664 = vcmask 1042434
    %v3665 = vsel %vm3664, %v3663, %v3661
    %s3666 = scalar_lea.vmem %s0, 607
    %v3667 = vld [vmem:[%s3666] sm:$0x8]
    %vm3668 = vcmask 1043459
    %v3669 = vsel %vm3668, %v3667, %v3665
    %s3670 = scalar_lea.vmem %s0, 254
    %v3671 = vld [vmem:[%s3670] sm:$0x10]
    %vm3672 = vcmask 1044484
    %v3673 = vsel %vm3672, %v3671, %v3669
    %s3674 = scalar_lea.vmem %s0, 285
    %v3675 = vld [vmem:[%s3674] sm:$0x20]
    %vm3676 = vcmask 1045509
    %v3677 = vsel %vm3676, %v3675, %v3673
    %s3678 = scalar_lea.vmem %s0, 316
    %v3679 = vld [vmem:[%s3678] sm:$0x40]
    %vm3680 = vcmask 1046534
    %v3681 = vsel %vm3680, %v3679, %v3677
    %s3682 = scalar_lea.vmem %s0, 347
    %v3683 = vld [vmem:[%s3682] sm:$0x80]
    %vm3684 = vcmask 1047559
    %v3685 = vsel %vm3684, %v3683, %v3681
    %3686 = vrot.lane.b32.xlu0 %v3685, 18
    %v3687 = vpop.permute.xlu0 %3686
    %vm3688 = vcmask 220304
    %s3689 = scalar_lea.vmem [#allocation0], 96
    %3690 = vst.msk [vmem:[%s3689] sm:$0xf] %vm3688, %v3687
    %s3691 = scalar_lea.vmem [#allocation0], 44
    %3692 = vst.msk [vmem:[%s3691] sm:$0xf0] %vm3688, %v3687
    %s3693 = scalar_lea.vmem %s0, 770
    %v3694 = vld [vmem:[%s3693] sm:$0x1]
    %s3695 = scalar_lea.vmem %s0, 801
    %v3696 = vld [vmem:[%s3695] sm:$0x2]
    %vm3697 = vcmask 1041409
    %v3698 = vsel %vm3697, %v3696, %v3694
    %s3699 = scalar_lea.vmem %s0, 832
    %v3700 = vld [vmem:[%s3699] sm:$0x4]
    %vm3701 = vcmask 1042434
    %v3702 = vsel %vm3701, %v3700, %v3698
    %s3703 = scalar_lea.vmem %s0, 863
    %v3704 = vld [vmem:[%s3703] sm:$0x8]
    %vm3705 = vcmask 1043459
    %v3706 = vsel %vm3705, %v3704, %v3702
    %s3707 = scalar_lea.vmem %s0, 126
    %v3708 = vld [vmem:[%s3707] sm:$0x10]
    %vm3709 = vcmask 1044484
    %v3710 = vsel %vm3709, %v3708, %v3706
    %s3711 = scalar_lea.vmem %s0, 157
    %v3712 = vld [vmem:[%s3711] sm:$0x20]
    %vm3713 = vcmask 1045509
    %v3714 = vsel %vm3713, %v3712, %v3710
    %s3715 = scalar_lea.vmem %s0, 188
    %v3716 = vld [vmem:[%s3715] sm:$0x40]
    %vm3717 = vcmask 1046534
    %v3718 = vsel %vm3717, %v3716, %v3714
    %s3719 = scalar_lea.vmem %s0, 219
    %v3720 = vld [vmem:[%s3719] sm:$0x80]
    %vm3721 = vcmask 1047559
    %v3722 = vsel %vm3721, %v3720, %v3718
    %3723 = vrot.lane.b32.xlu0 %v3722, 18
    %v3724 = vpop.permute.xlu0 %3723
    %vm3725 = vcmask 220304
    %s3726 = scalar_lea.vmem [#allocation0], 144
    %3727 = vst.msk [vmem:[%s3726] sm:$0xf] %vm3725, %v3724
    %s3728 = scalar_lea.vmem [#allocation0], 20
    %3729 = vst.msk [vmem:[%s3728] sm:$0xf0] %vm3725, %v3724
    %s3730 = scalar_lea.vmem %s0, 642
    %v3731 = vld [vmem:[%s3730] sm:$0x1]
    %s3732 = scalar_lea.vmem %s0, 673
    %v3733 = vld [vmem:[%s3732] sm:$0x2]
    %vm3734 = vcmask 1041409
    %v3735 = vsel %vm3734, %v3733, %v3731
    %s3736 = scalar_lea.vmem %s0, 704
    %v3737 = vld [vmem:[%s3736] sm:$0x4]
    %vm3738 = vcmask 1042434
    %v3739 = vsel %vm3738, %v3737, %v3735
    %s3740 = scalar_lea.vmem %s0, 735
    %v3741 = vld [vmem:[%s3740] sm:$0x8]
    %vm3742 = vcmask 1043459
    %v3743 = vsel %vm3742, %v3741, %v3739
    %3744 = vrot.lane.b32.xlu0 %v3743, 18
    %v3745 = vpop.permute.xlu0 %3744
    %vm3746 = vcmask 220304
    %s3747 = scalar_lea.vmem [#allocation0], 120
    %3748 = vst.msk [vmem:[%s3747] sm:$0xf] %vm3746, %v3745
    %s3749 = scalar_lea.vmem %s0, 144
    %v3750 = vld [vmem:[%s3749] sm:$0x1]
    %s3751 = scalar_lea.vmem %s0, 175
    %v3752 = vld [vmem:[%s3751] sm:$0x2]
    %vm3753 = vcmask 1041409
    %v3754 = vsel %vm3753, %v3752, %v3750
    %s3755 = scalar_lea.vmem %s0, 206
    %v3756 = vld [vmem:[%s3755] sm:$0x4]
    %vm3757 = vcmask 1042434
    %v3758 = vsel %vm3757, %v3756, %v3754
    %s3759 = scalar_lea.vmem %s0, 237
    %v3760 = vld [vmem:[%s3759] sm:$0x8]
    %vm3761 = vcmask 1043459
    %v3762 = vsel %vm3761, %v3760, %v3758
    %s3763 = scalar_lea.vmem %s0, 12
    %v3764 = vld [vmem:[%s3763] sm:$0x10]
    %vm3765 = vcmask 1044484
    %v3766 = vsel %vm3765, %v3764, %v3762
    %s3767 = scalar_lea.vmem %s0, 43
    %v3768 = vld [vmem:[%s3767] sm:$0x20]
    %vm3769 = vcmask 1045509
    %v3770 = vsel %vm3769, %v3768, %v3766
    %s3771 = scalar_lea.vmem %s0, 74
    %v3772 = vld [vmem:[%s3771] sm:$0x40]
    %vm3773 = vcmask 1046534
    %v3774 = vsel %vm3773, %v3772, %v3770
    %s3775 = scalar_lea.vmem %s0, 105
    %v3776 = vld [vmem:[%s3775] sm:$0x80]
    %vm3777 = vcmask 1047559
    %v3778 = vsel %vm3777, %v3776, %v3774
    %3779 = vrot.lane.b32.xlu0 %v3778, 16
    %v3780 = vpop.permute.xlu0 %3779
    %vm3781 = vcmask 203904
    %s3782 = scalar_lea.vmem [#allocation0], 32
    %3783 = vst.msk [vmem:[%s3782] sm:$0xf] %vm3781, %v3780
    %s3784 = scalar_lea.vmem [#allocation0], 4
    %3785 = vst.msk [vmem:[%s3784] sm:$0xf0] %vm3781, %v3780
    %s3786 = scalar_lea.vmem %s0, 656
    %v3787 = vld [vmem:[%s3786] sm:$0x1]
    %s3788 = scalar_lea.vmem %s0, 687
    %v3789 = vld [vmem:[%s3788] sm:$0x2]
    %vm3790 = vcmask 1041409
    %v3791 = vsel %vm3790, %v3789, %v3787
    %s3792 = scalar_lea.vmem %s0, 718
    %v3793 = vld [vmem:[%s3792] sm:$0x4]
    %vm3794 = vcmask 1042434
    %v3795 = vsel %vm3794, %v3793, %v3791
    %s3796 = scalar_lea.vmem %s0, 749
    %v3797 = vld [vmem:[%s3796] sm:$0x8]
    %vm3798 = vcmask 1043459
    %v3799 = vsel %vm3798, %v3797, %v3795
    %s3800 = scalar_lea.vmem %s0, 524
    %v3801 = vld [vmem:[%s3800] sm:$0x10]
    %vm3802 = vcmask 1044484
    %v3803 = vsel %vm3802, %v3801, %v3799
    %s3804 = scalar_lea.vmem %s0, 555
    %v3805 = vld [vmem:[%s3804] sm:$0x20]
    %vm3806 = vcmask 1045509
    %v3807 = vsel %vm3806, %v3805, %v3803
    %s3808 = scalar_lea.vmem %s0, 586
    %v3809 = vld [vmem:[%s3808] sm:$0x40]
    %vm3810 = vcmask 1046534
    %v3811 = vsel %vm3810, %v3809, %v3807
    %s3812 = scalar_lea.vmem %s0, 617
    %v3813 = vld [vmem:[%s3812] sm:$0x80]
    %vm3814 = vcmask 1047559
    %v3815 = vsel %vm3814, %v3813, %v3811
    %3816 = vrot.lane.b32.xlu0 %v3815, 16
    %v3817 = vpop.permute.xlu0 %3816
    %vm3818 = vcmask 203904
    %s3819 = scalar_lea.vmem [#allocation0], 128
    %3820 = vst.msk [vmem:[%s3819] sm:$0xf] %vm3818, %v3817
    %s3821 = scalar_lea.vmem [#allocation0], 100
    %3822 = vst.msk [vmem:[%s3821] sm:$0xf0] %vm3818, %v3817
    %s3823 = scalar_lea.vmem %s0, 400
    %v3824 = vld [vmem:[%s3823] sm:$0x1]
    %s3825 = scalar_lea.vmem %s0, 431
    %v3826 = vld [vmem:[%s3825] sm:$0x2]
    %vm3827 = vcmask 1041409
    %v3828 = vsel %vm3827, %v3826, %v3824
    %s3829 = scalar_lea.vmem %s0, 462
    %v3830 = vld [vmem:[%s3829] sm:$0x4]
    %vm3831 = vcmask 1042434
    %v3832 = vsel %vm3831, %v3830, %v3828
    %s3833 = scalar_lea.vmem %s0, 493
    %v3834 = vld [vmem:[%s3833] sm:$0x8]
    %vm3835 = vcmask 1043459
    %v3836 = vsel %vm3835, %v3834, %v3832
    %s3837 = scalar_lea.vmem %s0, 268
    %v3838 = vld [vmem:[%s3837] sm:$0x10]
    %vm3839 = vcmask 1044484
    %v3840 = vsel %vm3839, %v3838, %v3836
    %s3841 = scalar_lea.vmem %s0, 299
    %v3842 = vld [vmem:[%s3841] sm:$0x20]
    %vm3843 = vcmask 1045509
    %v3844 = vsel %vm3843, %v3842, %v3840
    %s3845 = scalar_lea.vmem %s0, 330
    %v3846 = vld [vmem:[%s3845] sm:$0x40]
    %vm3847 = vcmask 1046534
    %v3848 = vsel %vm3847, %v3846, %v3844
    %s3849 = scalar_lea.vmem %s0, 361
    %v3850 = vld [vmem:[%s3849] sm:$0x80]
    %vm3851 = vcmask 1047559
    %v3852 = vsel %vm3851, %v3850, %v3848
    %3853 = vrot.lane.b32.xlu0 %v3852, 16
    %v3854 = vpop.permute.xlu0 %3853
    %vm3855 = vcmask 203904
    %s3856 = scalar_lea.vmem [#allocation0], 80
    %3857 = vst.msk [vmem:[%s3856] sm:$0xf] %vm3855, %v3854
    %s3858 = scalar_lea.vmem [#allocation0], 52
    %3859 = vst.msk [vmem:[%s3858] sm:$0xf0] %vm3855, %v3854
    %s3860 = scalar_lea.vmem %s0, 784
    %v3861 = vld [vmem:[%s3860] sm:$0x1]
    %s3862 = scalar_lea.vmem %s0, 815
    %v3863 = vld [vmem:[%s3862] sm:$0x2]
    %vm3864 = vcmask 1041409
    %v3865 = vsel %vm3864, %v3863, %v3861
    %s3866 = scalar_lea.vmem %s0, 846
    %v3867 = vld [vmem:[%s3866] sm:$0x4]
    %vm3868 = vcmask 1042434
    %v3869 = vsel %vm3868, %v3867, %v3865
    %s3870 = scalar_lea.vmem %s0, 877
    %v3871 = vld [vmem:[%s3870] sm:$0x8]
    %vm3872 = vcmask 1043459
    %v3873 = vsel %vm3872, %v3871, %v3869
    %3874 = vrot.lane.b32.xlu0 %v3873, 16
    %v3875 = vpop.permute.xlu0 %3874
    %vm3876 = vcmask 203904
    %s3877 = scalar_lea.vmem [#allocation0], 152
    %3878 = vst.msk [vmem:[%s3877] sm:$0xf] %vm3876, %v3875
    %s3879 = scalar_lea.vmem %s0, 286
    %v3880 = vld [vmem:[%s3879] sm:$0x1]
    %s3881 = scalar_lea.vmem %s0, 317
    %v3882 = vld [vmem:[%s3881] sm:$0x2]
    %vm3883 = vcmask 1041409
    %v3884 = vsel %vm3883, %v3882, %v3880
    %s3885 = scalar_lea.vmem %s0, 348
    %v3886 = vld [vmem:[%s3885] sm:$0x4]
    %vm3887 = vcmask 1042434
    %v3888 = vsel %vm3887, %v3886, %v3884
    %s3889 = scalar_lea.vmem %s0, 379
    %v3890 = vld [vmem:[%s3889] sm:$0x8]
    %vm3891 = vcmask 1043459
    %v3892 = vsel %vm3891, %v3890, %v3888
    %s3893 = scalar_lea.vmem %s0, 154
    %v3894 = vld [vmem:[%s3893] sm:$0x10]
    %vm3895 = vcmask 1044484
    %v3896 = vsel %vm3895, %v3894, %v3892
    %s3897 = scalar_lea.vmem %s0, 185
    %v3898 = vld [vmem:[%s3897] sm:$0x20]
    %vm3899 = vcmask 1045509
    %v3900 = vsel %vm3899, %v3898, %v3896
    %s3901 = scalar_lea.vmem %s0, 216
    %v3902 = vld [vmem:[%s3901] sm:$0x40]
    %vm3903 = vcmask 1046534
    %v3904 = vsel %vm3903, %v3902, %v3900
    %s3905 = scalar_lea.vmem %s0, 247
    %v3906 = vld [vmem:[%s3905] sm:$0x80]
    %vm3907 = vcmask 1047559
    %v3908 = vsel %vm3907, %v3906, %v3904
    %3909 = vrot.lane.b32.xlu0 %v3908, 14
    %v3910 = vpop.permute.xlu0 %3909
    %vm3911 = vcmask 187504
    %s3912 = scalar_lea.vmem [#allocation0], 64
    %3913 = vst.msk [vmem:[%s3912] sm:$0xf] %vm3911, %v3910
    %s3914 = scalar_lea.vmem [#allocation0], 36
    %3915 = vst.msk [vmem:[%s3914] sm:$0xf0] %vm3911, %v3910
    %s3916 = scalar_lea.vmem %s0, 798
    %v3917 = vld [vmem:[%s3916] sm:$0x1]
    %s3918 = scalar_lea.vmem %s0, 829
    %v3919 = vld [vmem:[%s3918] sm:$0x2]
    %vm3920 = vcmask 1041409
    %v3921 = vsel %vm3920, %v3919, %v3917
    %s3922 = scalar_lea.vmem %s0, 860
    %v3923 = vld [vmem:[%s3922] sm:$0x4]
    %vm3924 = vcmask 1042434
    %v3925 = vsel %vm3924, %v3923, %v3921
    %s3926 = scalar_lea.vmem %s0, 891
    %v3927 = vld [vmem:[%s3926] sm:$0x8]
    %vm3928 = vcmask 1043459
    %v3929 = vsel %vm3928, %v3927, %v3925
    %s3930 = scalar_lea.vmem %s0, 666
    %v3931 = vld [vmem:[%s3930] sm:$0x10]
    %vm3932 = vcmask 1044484
    %v3933 = vsel %vm3932, %v3931, %v3929
    %s3934 = scalar_lea.vmem %s0, 697
    %v3935 = vld [vmem:[%s3934] sm:$0x20]
    %vm3936 = vcmask 1045509
    %v3937 = vsel %vm3936, %v3935, %v3933
    %s3938 = scalar_lea.vmem %s0, 728
    %v3939 = vld [vmem:[%s3938] sm:$0x40]
    %vm3940 = vcmask 1046534
    %v3941 = vsel %vm3940, %v3939, %v3937
    %s3942 = scalar_lea.vmem %s0, 759
    %v3943 = vld [vmem:[%s3942] sm:$0x80]
    %vm3944 = vcmask 1047559
    %v3945 = vsel %vm3944, %v3943, %v3941
    %3946 = vrot.lane.b32.xlu0 %v3945, 14
    %v3947 = vpop.permute.xlu0 %3946
    %vm3948 = vcmask 187504
    %s3949 = scalar_lea.vmem [#allocation0], 160
    %3950 = vst.msk [vmem:[%s3949] sm:$0xf] %vm3948, %v3947
    %s3951 = scalar_lea.vmem [#allocation0], 132
    %3952 = vst.msk [vmem:[%s3951] sm:$0xf0] %vm3948, %v3947
    %s3953 = scalar_lea.vmem %s0, 30
    %v3954 = vld [vmem:[%s3953] sm:$0x1]
    %s3955 = scalar_lea.vmem %s0, 61
    %v3956 = vld [vmem:[%s3955] sm:$0x2]
    %vm3957 = vcmask 1041409
    %v3958 = vsel %vm3957, %v3956, %v3954
    %s3959 = scalar_lea.vmem %s0, 92
    %v3960 = vld [vmem:[%s3959] sm:$0x4]
    %vm3961 = vcmask 1042434
    %v3962 = vsel %vm3961, %v3960, %v3958
    %s3963 = scalar_lea.vmem %s0, 123
    %v3964 = vld [vmem:[%s3963] sm:$0x8]
    %vm3965 = vcmask 1043459
    %v3966 = vsel %vm3965, %v3964, %v3962
    %s3967 = scalar_lea.vmem %s0, 410
    %v3968 = vld [vmem:[%s3967] sm:$0x10]
    %vm3969 = vcmask 1044484
    %v3970 = vsel %vm3969, %v3968, %v3966
    %s3971 = scalar_lea.vmem %s0, 441
    %v3972 = vld [vmem:[%s3971] sm:$0x20]
    %vm3973 = vcmask 1045509
    %v3974 = vsel %vm3973, %v3972, %v3970
    %s3975 = scalar_lea.vmem %s0, 472
    %v3976 = vld [vmem:[%s3975] sm:$0x40]
    %vm3977 = vcmask 1046534
    %v3978 = vsel %vm3977, %v3976, %v3974
    %s3979 = scalar_lea.vmem %s0, 503
    %v3980 = vld [vmem:[%s3979] sm:$0x80]
    %vm3981 = vcmask 1047559
    %v3982 = vsel %vm3981, %v3980, %v3978
    %3983 = vrot.lane.b32.xlu0 %v3982, 14
    %v3984 = vpop.permute.xlu0 %3983
    %vm3985 = vcmask 187504
    %s3986 = scalar_lea.vmem [#allocation0], 16
    %3987 = vst.msk [vmem:[%s3986] sm:$0xf] %vm3985, %v3984
    %s3988 = scalar_lea.vmem [#allocation0], 84
    %3989 = vst.msk [vmem:[%s3988] sm:$0xf0] %vm3985, %v3984
    %s3990 = scalar_lea.vmem %s0, 542
    %v3991 = vld [vmem:[%s3990] sm:$0x1]
    %s3992 = scalar_lea.vmem %s0, 573
    %v3993 = vld [vmem:[%s3992] sm:$0x2]
    %vm3994 = vcmask 1041409
    %v3995 = vsel %vm3994, %v3993, %v3991
    %s3996 = scalar_lea.vmem %s0, 604
    %v3997 = vld [vmem:[%s3996] sm:$0x4]
    %vm3998 = vcmask 1042434
    %v3999 = vsel %vm3998, %v3997, %v3995
    %s4000 = scalar_lea.vmem %s0, 635
    %v4001 = vld [vmem:[%s4000] sm:$0x8]
    %vm4002 = vcmask 1043459
    %v4003 = vsel %vm4002, %v4001, %v3999
    %4004 = vrot.lane.b32.xlu0 %v4003, 14
    %v4005 = vpop.permute.xlu0 %4004
    %vm4006 = vcmask 187504
    %s4007 = scalar_lea.vmem [#allocation0], 112
    %4008 = vst.msk [vmem:[%s4007] sm:$0xf] %vm4006, %v4005
    %s4009 = scalar_lea.vmem %s0, 1
    %v4010 = vld [vmem:[%s4009] sm:$0x1]
    %s4011 = scalar_lea.vmem %s0, 32
    %v4012 = vld [vmem:[%s4011] sm:$0x2]
    %vm4013 = vcmask 1041409
    %v4014 = vsel %vm4013, %v4012, %v4010
    %s4015 = scalar_lea.vmem %s0, 63
    %v4016 = vld [vmem:[%s4015] sm:$0x4]
    %vm4017 = vcmask 1042434
    %v4018 = vsel %vm4017, %v4016, %v4014
    %s4019 = scalar_lea.vmem %s0, 94
    %v4020 = vld [vmem:[%s4019] sm:$0x8]
    %vm4021 = vcmask 1043459
    %v4022 = vsel %vm4021, %v4020, %v4018
    %s4023 = scalar_lea.vmem %s0, 381
    %v4024 = vld [vmem:[%s4023] sm:$0x10]
    %vm4025 = vcmask 1044484
    %v4026 = vsel %vm4025, %v4024, %v4022
    %s4027 = scalar_lea.vmem %s0, 412
    %v4028 = vld [vmem:[%s4027] sm:$0x20]
    %vm4029 = vcmask 1045509
    %v4030 = vsel %vm4029, %v4028, %v4026
    %s4031 = scalar_lea.vmem %s0, 443
    %v4032 = vld [vmem:[%s4031] sm:$0x40]
    %vm4033 = vcmask 1046534
    %v4034 = vsel %vm4033, %v4032, %v4030
    %s4035 = scalar_lea.vmem %s0, 474
    %v4036 = vld [vmem:[%s4035] sm:$0x80]
    %vm4037 = vcmask 1047559
    %v4038 = vsel %vm4037, %v4036, %v4034
    %4039 = vrot.lane.b32.xlu0 %v4038, 9
    %v4040 = vpop.permute.xlu0 %4039
    %vm4041 = vcmask 146504
    %4042 = vst.msk [vmem:[#allocation0] sm:$0xf] %vm4041, %v4040
    %s4043 = scalar_lea.vmem [#allocation0], 68
    %4044 = vst.msk [vmem:[%s4043] sm:$0xf0] %vm4041, %v4040
    %s4045 = scalar_lea.vmem %s0, 513
    %v4046 = vld [vmem:[%s4045] sm:$0x1]
    %s4047 = scalar_lea.vmem %s0, 544
    %v4048 = vld [vmem:[%s4047] sm:$0x2]
    %vm4049 = vcmask 1041409
    %v4050 = vsel %vm4049, %v4048, %v4046
    %s4051 = scalar_lea.vmem %s0, 575
    %v4052 = vld [vmem:[%s4051] sm:$0x4]
    %vm4053 = vcmask 1042434
    %v4054 = vsel %vm4053, %v4052, %v4050
    %s4055 = scalar_lea.vmem %s0, 606
    %v4056 = vld [vmem:[%s4055] sm:$0x8]
    %vm4057 = vcmask 1043459
    %v4058 = vsel %vm4057, %v4056, %v4054
    %s4059 = scalar_lea.vmem %s0, 253
    %v4060 = vld [vmem:[%s4059] sm:$0x10]
    %vm4061 = vcmask 1044484
    %v4062 = vsel %vm4061, %v4060, %v4058
    %s4063 = scalar_lea.vmem %s0, 284
    %v4064 = vld [vmem:[%s4063] sm:$0x20]
    %vm4065 = vcmask 1045509
    %v4066 = vsel %vm4065, %v4064, %v4062
    %s4067 = scalar_lea.vmem %s0, 315
    %v4068 = vld [vmem:[%s4067] sm:$0x40]
    %vm4069 = vcmask 1046534
    %v4070 = vsel %vm4069, %v4068, %v4066
    %s4071 = scalar_lea.vmem %s0, 346
    %v4072 = vld [vmem:[%s4071] sm:$0x80]
    %vm4073 = vcmask 1047559
    %v4074 = vsel %vm4073, %v4072, %v4070
    %4075 = vrot.lane.b32.xlu0 %v4074, 9
    %v4076 = vpop.permute.xlu0 %4075
    %vm4077 = vcmask 146504
    %s4078 = scalar_lea.vmem [#allocation0], 96
    %4079 = vst.msk [vmem:[%s4078] sm:$0xf] %vm4077, %v4076
    %s4080 = scalar_lea.vmem [#allocation0], 44
    %4081 = vst.msk [vmem:[%s4080] sm:$0xf0] %vm4077, %v4076
    %s4082 = scalar_lea.vmem %s0, 769
    %v4083 = vld [vmem:[%s4082] sm:$0x1]
    %s4084 = scalar_lea.vmem %s0, 800
    %v4085 = vld [vmem:[%s4084] sm:$0x2]
    %vm4086 = vcmask 1041409
    %v4087 = vsel %vm4086, %v4085, %v4083
    %s4088 = scalar_lea.vmem %s0, 831
    %v4089 = vld [vmem:[%s4088] sm:$0x4]
    %vm4090 = vcmask 1042434
    %v4091 = vsel %vm4090, %v4089, %v4087
    %s4092 = scalar_lea.vmem %s0, 862
    %v4093 = vld [vmem:[%s4092] sm:$0x8]
    %vm4094 = vcmask 1043459
    %v4095 = vsel %vm4094, %v4093, %v4091
    %s4096 = scalar_lea.vmem %s0, 125
    %v4097 = vld [vmem:[%s4096] sm:$0x10]
    %vm4098 = vcmask 1044484
    %v4099 = vsel %vm4098, %v4097, %v4095
    %s4100 = scalar_lea.vmem %s0, 156
    %v4101 = vld [vmem:[%s4100] sm:$0x20]
    %vm4102 = vcmask 1045509
    %v4103 = vsel %vm4102, %v4101, %v4099
    %s4104 = scalar_lea.vmem %s0, 187
    %v4105 = vld [vmem:[%s4104] sm:$0x40]
    %vm4106 = vcmask 1046534
    %v4107 = vsel %vm4106, %v4105, %v4103
    %s4108 = scalar_lea.vmem %s0, 218
    %v4109 = vld [vmem:[%s4108] sm:$0x80]
    %vm4110 = vcmask 1047559
    %v4111 = vsel %vm4110, %v4109, %v4107
    %4112 = vrot.lane.b32.xlu0 %v4111, 9
    %v4113 = vpop.permute.xlu0 %4112
    %vm4114 = vcmask 146504
    %s4115 = scalar_lea.vmem [#allocation0], 144
    %4116 = vst.msk [vmem:[%s4115] sm:$0xf] %vm4114, %v4113
    %s4117 = scalar_lea.vmem [#allocation0], 20
    %4118 = vst.msk [vmem:[%s4117] sm:$0xf0] %vm4114, %v4113
    %s4119 = scalar_lea.vmem %s0, 641
    %v4120 = vld [vmem:[%s4119] sm:$0x1]
    %s4121 = scalar_lea.vmem %s0, 672
    %v4122 = vld [vmem:[%s4121] sm:$0x2]
    %vm4123 = vcmask 1041409
    %v4124 = vsel %vm4123, %v4122, %v4120
    %s4125 = scalar_lea.vmem %s0, 703
    %v4126 = vld [vmem:[%s4125] sm:$0x4]
    %vm4127 = vcmask 1042434
    %v4128 = vsel %vm4127, %v4126, %v4124
    %s4129 = scalar_lea.vmem %s0, 734
    %v4130 = vld [vmem:[%s4129] sm:$0x8]
    %vm4131 = vcmask 1043459
    %v4132 = vsel %vm4131, %v4130, %v4128
    %4133 = vrot.lane.b32.xlu0 %v4132, 9
    %v4134 = vpop.permute.xlu0 %4133
    %vm4135 = vcmask 146504
    %s4136 = scalar_lea.vmem [#allocation0], 120
    %4137 = vst.msk [vmem:[%s4136] sm:$0xf] %vm4135, %v4134
    %s4138 = scalar_lea.vmem %s0, 143
    %v4139 = vld [vmem:[%s4138] sm:$0x1]
    %s4140 = scalar_lea.vmem %s0, 174
    %v4141 = vld [vmem:[%s4140] sm:$0x2]
    %vm4142 = vcmask 1041409
    %v4143 = vsel %vm4142, %v4141, %v4139
    %s4144 = scalar_lea.vmem %s0, 205
    %v4145 = vld [vmem:[%s4144] sm:$0x4]
    %vm4146 = vcmask 1042434
    %v4147 = vsel %vm4146, %v4145, %v4143
    %s4148 = scalar_lea.vmem %s0, 236
    %v4149 = vld [vmem:[%s4148] sm:$0x8]
    %vm4150 = vcmask 1043459
    %v4151 = vsel %vm4150, %v4149, %v4147
    %s4152 = scalar_lea.vmem %s0, 11
    %v4153 = vld [vmem:[%s4152] sm:$0x10]
    %vm4154 = vcmask 1044484
    %v4155 = vsel %vm4154, %v4153, %v4151
    %s4156 = scalar_lea.vmem %s0, 42
    %v4157 = vld [vmem:[%s4156] sm:$0x20]
    %vm4158 = vcmask 1045509
    %v4159 = vsel %vm4158, %v4157, %v4155
    %s4160 = scalar_lea.vmem %s0, 73
    %v4161 = vld [vmem:[%s4160] sm:$0x40]
    %vm4162 = vcmask 1046534
    %v4163 = vsel %vm4162, %v4161, %v4159
    %s4164 = scalar_lea.vmem %s0, 104
    %v4165 = vld [vmem:[%s4164] sm:$0x80]
    %vm4166 = vcmask 1047559
    %v4167 = vsel %vm4166, %v4165, %v4163
    %4168 = vrot.lane.b32.xlu0 %v4167, 7
    %v4169 = vpop.permute.xlu0 %4168
    %vm4170 = vcmask 130104
    %s4171 = scalar_lea.vmem [#allocation0], 32
    %4172 = vst.msk [vmem:[%s4171] sm:$0xf] %vm4170, %v4169
    %s4173 = scalar_lea.vmem [#allocation0], 4
    %4174 = vst.msk [vmem:[%s4173] sm:$0xf0] %vm4170, %v4169
    %s4175 = scalar_lea.vmem %s0, 655
    %v4176 = vld [vmem:[%s4175] sm:$0x1]
    %s4177 = scalar_lea.vmem %s0, 686
    %v4178 = vld [vmem:[%s4177] sm:$0x2]
    %vm4179 = vcmask 1041409
    %v4180 = vsel %vm4179, %v4178, %v4176
    %s4181 = scalar_lea.vmem %s0, 717
    %v4182 = vld [vmem:[%s4181] sm:$0x4]
    %vm4183 = vcmask 1042434
    %v4184 = vsel %vm4183, %v4182, %v4180
    %s4185 = scalar_lea.vmem %s0, 748
    %v4186 = vld [vmem:[%s4185] sm:$0x8]
    %vm4187 = vcmask 1043459
    %v4188 = vsel %vm4187, %v4186, %v4184
    %s4189 = scalar_lea.vmem %s0, 523
    %v4190 = vld [vmem:[%s4189] sm:$0x10]
    %vm4191 = vcmask 1044484
    %v4192 = vsel %vm4191, %v4190, %v4188
    %s4193 = scalar_lea.vmem %s0, 554
    %v4194 = vld [vmem:[%s4193] sm:$0x20]
    %vm4195 = vcmask 1045509
    %v4196 = vsel %vm4195, %v4194, %v4192
    %s4197 = scalar_lea.vmem %s0, 585
    %v4198 = vld [vmem:[%s4197] sm:$0x40]
    %vm4199 = vcmask 1046534
    %v4200 = vsel %vm4199, %v4198, %v4196
    %s4201 = scalar_lea.vmem %s0, 616
    %v4202 = vld [vmem:[%s4201] sm:$0x80]
    %vm4203 = vcmask 1047559
    %v4204 = vsel %vm4203, %v4202, %v4200
    %4205 = vrot.lane.b32.xlu0 %v4204, 7
    %v4206 = vpop.permute.xlu0 %4205
    %vm4207 = vcmask 130104
    %s4208 = scalar_lea.vmem [#allocation0], 128
    %4209 = vst.msk [vmem:[%s4208] sm:$0xf] %vm4207, %v4206
    %s4210 = scalar_lea.vmem [#allocation0], 100
    %4211 = vst.msk [vmem:[%s4210] sm:$0xf0] %vm4207, %v4206
    %s4212 = scalar_lea.vmem %s0, 399
    %v4213 = vld [vmem:[%s4212] sm:$0x1]
    %s4214 = scalar_lea.vmem %s0, 430
    %v4215 = vld [vmem:[%s4214] sm:$0x2]
    %vm4216 = vcmask 1041409
    %v4217 = vsel %vm4216, %v4215, %v4213
    %s4218 = scalar_lea.vmem %s0, 461
    %v4219 = vld [vmem:[%s4218] sm:$0x4]
    %vm4220 = vcmask 1042434
    %v4221 = vsel %vm4220, %v4219, %v4217
    %s4222 = scalar_lea.vmem %s0, 492
    %v4223 = vld [vmem:[%s4222] sm:$0x8]
    %vm4224 = vcmask 1043459
    %v4225 = vsel %vm4224, %v4223, %v4221
    %s4226 = scalar_lea.vmem %s0, 267
    %v4227 = vld [vmem:[%s4226] sm:$0x10]
    %vm4228 = vcmask 1044484
    %v4229 = vsel %vm4228, %v4227, %v4225
    %s4230 = scalar_lea.vmem %s0, 298
    %v4231 = vld [vmem:[%s4230] sm:$0x20]
    %vm4232 = vcmask 1045509
    %v4233 = vsel %vm4232, %v4231, %v4229
    %s4234 = scalar_lea.vmem %s0, 329
    %v4235 = vld [vmem:[%s4234] sm:$0x40]
    %vm4236 = vcmask 1046534
    %v4237 = vsel %vm4236, %v4235, %v4233
    %s4238 = scalar_lea.vmem %s0, 360
    %v4239 = vld [vmem:[%s4238] sm:$0x80]
    %vm4240 = vcmask 1047559
    %v4241 = vsel %vm4240, %v4239, %v4237
    %4242 = vrot.lane.b32.xlu0 %v4241, 7
    %v4243 = vpop.permute.xlu0 %4242
    %vm4244 = vcmask 130104
    %s4245 = scalar_lea.vmem [#allocation0], 80
    %4246 = vst.msk [vmem:[%s4245] sm:$0xf] %vm4244, %v4243
    %s4247 = scalar_lea.vmem [#allocation0], 52
    %4248 = vst.msk [vmem:[%s4247] sm:$0xf0] %vm4244, %v4243
    %s4249 = scalar_lea.vmem %s0, 783
    %v4250 = vld [vmem:[%s4249] sm:$0x1]
    %s4251 = scalar_lea.vmem %s0, 814
    %v4252 = vld [vmem:[%s4251] sm:$0x2]
    %vm4253 = vcmask 1041409
    %v4254 = vsel %vm4253, %v4252, %v4250
    %s4255 = scalar_lea.vmem %s0, 845
    %v4256 = vld [vmem:[%s4255] sm:$0x4]
    %vm4257 = vcmask 1042434
    %v4258 = vsel %vm4257, %v4256, %v4254
    %s4259 = scalar_lea.vmem %s0, 876
    %v4260 = vld [vmem:[%s4259] sm:$0x8]
    %vm4261 = vcmask 1043459
    %v4262 = vsel %vm4261, %v4260, %v4258
    %4263 = vrot.lane.b32.xlu0 %v4262, 7
    %v4264 = vpop.permute.xlu0 %4263
    %vm4265 = vcmask 130104
    %s4266 = scalar_lea.vmem [#allocation0], 152
    %4267 = vst.msk [vmem:[%s4266] sm:$0xf] %vm4265, %v4264
    %s4268 = scalar_lea.vmem %s0, 285
    %v4269 = vld [vmem:[%s4268] sm:$0x1]
    %s4270 = scalar_lea.vmem %s0, 316
    %v4271 = vld [vmem:[%s4270] sm:$0x2]
    %vm4272 = vcmask 1041409
    %v4273 = vsel %vm4272, %v4271, %v4269
    %s4274 = scalar_lea.vmem %s0, 347
    %v4275 = vld [vmem:[%s4274] sm:$0x4]
    %vm4276 = vcmask 1042434
    %v4277 = vsel %vm4276, %v4275, %v4273
    %s4278 = scalar_lea.vmem %s0, 378
    %v4279 = vld [vmem:[%s4278] sm:$0x8]
    %vm4280 = vcmask 1043459
    %v4281 = vsel %vm4280, %v4279, %v4277
    %s4282 = scalar_lea.vmem %s0, 153
    %v4283 = vld [vmem:[%s4282] sm:$0x10]
    %vm4284 = vcmask 1044484
    %v4285 = vsel %vm4284, %v4283, %v4281
    %s4286 = scalar_lea.vmem %s0, 184
    %v4287 = vld [vmem:[%s4286] sm:$0x20]
    %vm4288 = vcmask 1045509
    %v4289 = vsel %vm4288, %v4287, %v4285
    %s4290 = scalar_lea.vmem %s0, 215
    %v4291 = vld [vmem:[%s4290] sm:$0x40]
    %vm4292 = vcmask 1046534
    %v4293 = vsel %vm4292, %v4291, %v4289
    %s4294 = scalar_lea.vmem %s0, 246
    %v4295 = vld [vmem:[%s4294] sm:$0x80]
    %vm4296 = vcmask 1047559
    %v4297 = vsel %vm4296, %v4295, %v4293
    %4298 = vrot.lane.b32.xlu0 %v4297, 5
    %v4299 = vpop.permute.xlu0 %4298
    %vm4300 = vcmask 113704
    %s4301 = scalar_lea.vmem [#allocation0], 64
    %4302 = vst.msk [vmem:[%s4301] sm:$0xf] %vm4300, %v4299
    %s4303 = scalar_lea.vmem [#allocation0], 36
    %4304 = vst.msk [vmem:[%s4303] sm:$0xf0] %vm4300, %v4299
    %s4305 = scalar_lea.vmem %s0, 797
    %v4306 = vld [vmem:[%s4305] sm:$0x1]
    %s4307 = scalar_lea.vmem %s0, 828
    %v4308 = vld [vmem:[%s4307] sm:$0x2]
    %vm4309 = vcmask 1041409
    %v4310 = vsel %vm4309, %v4308, %v4306
    %s4311 = scalar_lea.vmem %s0, 859
    %v4312 = vld [vmem:[%s4311] sm:$0x4]
    %vm4313 = vcmask 1042434
    %v4314 = vsel %vm4313, %v4312, %v4310
    %s4315 = scalar_lea.vmem %s0, 890
    %v4316 = vld [vmem:[%s4315] sm:$0x8]
    %vm4317 = vcmask 1043459
    %v4318 = vsel %vm4317, %v4316, %v4314
    %s4319 = scalar_lea.vmem %s0, 665
    %v4320 = vld [vmem:[%s4319] sm:$0x10]
    %vm4321 = vcmask 1044484
    %v4322 = vsel %vm4321, %v4320, %v4318
    %s4323 = scalar_lea.vmem %s0, 696
    %v4324 = vld [vmem:[%s4323] sm:$0x20]
    %vm4325 = vcmask 1045509
    %v4326 = vsel %vm4325, %v4324, %v4322
    %s4327 = scalar_lea.vmem %s0, 727
    %v4328 = vld [vmem:[%s4327] sm:$0x40]
    %vm4329 = vcmask 1046534
    %v4330 = vsel %vm4329, %v4328, %v4326
    %s4331 = scalar_lea.vmem %s0, 758
    %v4332 = vld [vmem:[%s4331] sm:$0x80]
    %vm4333 = vcmask 1047559
    %v4334 = vsel %vm4333, %v4332, %v4330
    %4335 = vrot.lane.b32.xlu0 %v4334, 5
    %v4336 = vpop.permute.xlu0 %4335
    %vm4337 = vcmask 113704
    %s4338 = scalar_lea.vmem [#allocation0], 160
    %4339 = vst.msk [vmem:[%s4338] sm:$0xf] %vm4337, %v4336
    %s4340 = scalar_lea.vmem [#allocation0], 132
    %4341 = vst.msk [vmem:[%s4340] sm:$0xf0] %vm4337, %v4336
    %s4342 = scalar_lea.vmem %s0, 29
    %v4343 = vld [vmem:[%s4342] sm:$0x1]
    %s4344 = scalar_lea.vmem %s0, 60
    %v4345 = vld [vmem:[%s4344] sm:$0x2]
    %vm4346 = vcmask 1041409
    %v4347 = vsel %vm4346, %v4345, %v4343
    %s4348 = scalar_lea.vmem %s0, 91
    %v4349 = vld [vmem:[%s4348] sm:$0x4]
    %vm4350 = vcmask 1042434
    %v4351 = vsel %vm4350, %v4349, %v4347
    %s4352 = scalar_lea.vmem %s0, 122
    %v4353 = vld [vmem:[%s4352] sm:$0x8]
    %vm4354 = vcmask 1043459
    %v4355 = vsel %vm4354, %v4353, %v4351
    %s4356 = scalar_lea.vmem %s0, 409
    %v4357 = vld [vmem:[%s4356] sm:$0x10]
    %vm4358 = vcmask 1044484
    %v4359 = vsel %vm4358, %v4357, %v4355
    %s4360 = scalar_lea.vmem %s0, 440
    %v4361 = vld [vmem:[%s4360] sm:$0x20]
    %vm4362 = vcmask 1045509
    %v4363 = vsel %vm4362, %v4361, %v4359
    %s4364 = scalar_lea.vmem %s0, 471
    %v4365 = vld [vmem:[%s4364] sm:$0x40]
    %vm4366 = vcmask 1046534
    %v4367 = vsel %vm4366, %v4365, %v4363
    %s4368 = scalar_lea.vmem %s0, 502
    %v4369 = vld [vmem:[%s4368] sm:$0x80]
    %vm4370 = vcmask 1047559
    %v4371 = vsel %vm4370, %v4369, %v4367
    %4372 = vrot.lane.b32.xlu0 %v4371, 5
    %v4373 = vpop.permute.xlu0 %4372
    %vm4374 = vcmask 113704
    %s4375 = scalar_lea.vmem [#allocation0], 16
    %4376 = vst.msk [vmem:[%s4375] sm:$0xf] %vm4374, %v4373
    %s4377 = scalar_lea.vmem [#allocation0], 84
    %4378 = vst.msk [vmem:[%s4377] sm:$0xf0] %vm4374, %v4373
    %s4379 = scalar_lea.vmem %s0, 541
    %v4380 = vld [vmem:[%s4379] sm:$0x1]
    %s4381 = scalar_lea.vmem %s0, 572
    %v4382 = vld [vmem:[%s4381] sm:$0x2]
    %vm4383 = vcmask 1041409
    %v4384 = vsel %vm4383, %v4382, %v4380
    %s4385 = scalar_lea.vmem %s0, 603
    %v4386 = vld [vmem:[%s4385] sm:$0x4]
    %vm4387 = vcmask 1042434
    %v4388 = vsel %vm4387, %v4386, %v4384
    %s4389 = scalar_lea.vmem %s0, 634
    %v4390 = vld [vmem:[%s4389] sm:$0x8]
    %vm4391 = vcmask 1043459
    %v4392 = vsel %vm4391, %v4390, %v4388
    %4393 = vrot.lane.b32.xlu0 %v4392, 5
    %v4394 = vpop.permute.xlu0 %4393
    %vm4395 = vcmask 113704
    %s4396 = scalar_lea.vmem [#allocation0], 112
    %4397 = vst.msk [vmem:[%s4396] sm:$0xf] %vm4395, %v4394
    %s4399 = sshll.u32 1, 4
    %s4400 = ssub.s32 %s4399, 1
    %v4402 = vld [vmem:[#allocation0] sm:%s4400]
    %s4403 = sshll.u32 1, 4
    %s4404 = ssub.s32 %s4403, 1
    %4405 = vst [vmem:[%s1] sm:%s4404] %v4402
    %s4406 = scalar_lea.vmem [#allocation0], 8
    %v4407 = vld [vmem:[%s4406] sm:%s4400]
    %s4408 = sshll.u32 1, 4
    %s4409 = ssub.s32 %s4408, 1
    %s4410 = scalar_lea.vmem %s1, 4
    %4411 = vst [vmem:[%s4410] sm:%s4409] %v4407
    %s4412 = scalar_lea.vmem [#allocation0], 16
    %v4413 = vld [vmem:[%s4412] sm:%s4400]
    %s4414 = sshll.u32 1, 4
    %s4415 = ssub.s32 %s4414, 1
    %s4416 = smul.addr 4, 2
    %s4417 = scalar_lea.vmem %s1, %s4416
    %4418 = vst [vmem:[%s4417] sm:%s4415] %v4413
    %s4419 = scalar_lea.vmem [#allocation0], 24
    %v4420 = vld [vmem:[%s4419] sm:%s4400]
    %s4421 = sshll.u32 1, 4
    %s4422 = ssub.s32 %s4421, 1
    %s4423 = smul.addr 4, 3
    %s4424 = scalar_lea.vmem %s1, %s4423
    %4425 = vst [vmem:[%s4424] sm:%s4422] %v4420
    %s4426 = scalar_lea.vmem [#allocation0], 32
    %v4427 = vld [vmem:[%s4426] sm:%s4400]
    %s4428 = sshll.u32 1, 4
    %s4429 = ssub.s32 %s4428, 1
    %s4430 = smul.addr 4, 4
    %s4431 = scalar_lea.vmem %s1, %s4430
    %4432 = vst [vmem:[%s4431] sm:%s4429] %v4427
    %s4433 = scalar_lea.vmem [#allocation0], 40
    %v4434 = vld [vmem:[%s4433] sm:%s4400]
    %s4435 = sshll.u32 1, 4
    %s4436 = ssub.s32 %s4435, 1
    %s4437 = smul.addr 4, 5
    %s4438 = scalar_lea.vmem %s1, %s4437
    %4439 = vst [vmem:[%s4438] sm:%s4436] %v4434
    %s4440 = scalar_lea.vmem [#allocation0], 48
    %v4441 = vld [vmem:[%s4440] sm:%s4400]
    %s4442 = sshll.u32 1, 4
    %s4443 = ssub.s32 %s4442, 1
    %s4444 = smul.addr 4, 6
    %s4445 = scalar_lea.vmem %s1, %s4444
    %4446 = vst [vmem:[%s4445] sm:%s4443] %v4441
    %s4447 = scalar_lea.vmem [#allocation0], 56
    %v4448 = vld [vmem:[%s4447] sm:%s4400]
    %s4449 = sshll.u32 1, 4
    %s4450 = ssub.s32 %s4449, 1
    %s4451 = smul.addr 4, 7
    %s4452 = scalar_lea.vmem %s1, %s4451
    %4453 = vst [vmem:[%s4452] sm:%s4450] %v4448
    %s4454 = scalar_lea.vmem [#allocation0], 64
    %v4455 = vld [vmem:[%s4454] sm:%s4400]
    %s4456 = sshll.u32 1, 4
    %s4457 = ssub.s32 %s4456, 1
    %s4458 = smul.addr 4, 8
    %s4459 = scalar_lea.vmem %s1, %s4458
    %4460 = vst [vmem:[%s4459] sm:%s4457] %v4455
    %s4461 = scalar_lea.vmem [#allocation0], 72
    %v4462 = vld [vmem:[%s4461] sm:%s4400]
    %s4463 = sshll.u32 1, 4
    %s4464 = ssub.s32 %s4463, 1
    %s4465 = smul.addr 4, 9
    %s4466 = scalar_lea.vmem %s1, %s4465
    %4467 = vst [vmem:[%s4466] sm:%s4464] %v4462
    %s4468 = scalar_lea.vmem [#allocation0], 80
    %v4469 = vld [vmem:[%s4468] sm:%s4400]
    %s4470 = sshll.u32 1, 4
    %s4471 = ssub.s32 %s4470, 1
    %s4472 = smul.addr 4, 10
    %s4473 = scalar_lea.vmem %s1, %s4472
    %4474 = vst [vmem:[%s4473] sm:%s4471] %v4469
    %s4475 = scalar_lea.vmem [#allocation0], 88
    %v4476 = vld [vmem:[%s4475] sm:%s4400]
    %s4477 = sshll.u32 1, 4
    %s4478 = ssub.s32 %s4477, 1
    %s4479 = smul.addr 4, 11
    %s4480 = scalar_lea.vmem %s1, %s4479
    %4481 = vst [vmem:[%s4480] sm:%s4478] %v4476
    %s4482 = scalar_lea.vmem [#allocation0], 96
    %v4483 = vld [vmem:[%s4482] sm:%s4400]
    %s4484 = sshll.u32 1, 4
    %s4485 = ssub.s32 %s4484, 1
    %s4486 = smul.addr 4, 12
    %s4487 = scalar_lea.vmem %s1, %s4486
    %4488 = vst [vmem:[%s4487] sm:%s4485] %v4483
    %s4489 = scalar_lea.vmem [#allocation0], 104
    %v4490 = vld [vmem:[%s4489] sm:%s4400]
    %s4491 = sshll.u32 1, 4
    %s4492 = ssub.s32 %s4491, 1
    %s4493 = smul.addr 4, 13
    %s4494 = scalar_lea.vmem %s1, %s4493
    %4495 = vst [vmem:[%s4494] sm:%s4492] %v4490
    %s4496 = scalar_lea.vmem [#allocation0], 112
    %v4497 = vld [vmem:[%s4496] sm:%s4400]
    %s4498 = sshll.u32 1, 4
    %s4499 = ssub.s32 %s4498, 1
    %s4500 = smul.addr 4, 14
    %s4501 = scalar_lea.vmem %s1, %s4500
    %4502 = vst [vmem:[%s4501] sm:%s4499] %v4497
    %s4503 = scalar_lea.vmem [#allocation0], 120
    %v4504 = vld [vmem:[%s4503] sm:%s4400]
    %s4505 = sshll.u32 1, 4
    %s4506 = ssub.s32 %s4505, 1
    %s4507 = smul.addr 4, 15
    %s4508 = scalar_lea.vmem %s1, %s4507
    %4509 = vst [vmem:[%s4508] sm:%s4506] %v4504
    %s4510 = scalar_lea.vmem [#allocation0], 128
    %v4511 = vld [vmem:[%s4510] sm:%s4400]
    %s4512 = sshll.u32 1, 4
    %s4513 = ssub.s32 %s4512, 1
    %s4514 = smul.addr 4, 16
    %s4515 = scalar_lea.vmem %s1, %s4514
    %4516 = vst [vmem:[%s4515] sm:%s4513] %v4511
    %s4517 = scalar_lea.vmem [#allocation0], 136
    %v4518 = vld [vmem:[%s4517] sm:%s4400]
    %s4519 = sshll.u32 1, 4
    %s4520 = ssub.s32 %s4519, 1
    %s4521 = smul.addr 4, 17
    %s4522 = scalar_lea.vmem %s1, %s4521
    %4523 = vst [vmem:[%s4522] sm:%s4520] %v4518
    %s4524 = scalar_lea.vmem [#allocation0], 144
    %v4525 = vld [vmem:[%s4524] sm:%s4400]
    %s4526 = sshll.u32 1, 4
    %s4527 = ssub.s32 %s4526, 1
    %s4528 = smul.addr 4, 18
    %s4529 = scalar_lea.vmem %s1, %s4528
    %4530 = vst [vmem:[%s4529] sm:%s4527] %v4525
    %s4531 = scalar_lea.vmem [#allocation0], 152
    %v4532 = vld [vmem:[%s4531] sm:%s4400]
    %s4533 = sshll.u32 1, 4
    %s4534 = ssub.s32 %s4533, 1
    %s4535 = smul.addr 4, 19
    %s4536 = scalar_lea.vmem %s1, %s4535
    %4537 = vst [vmem:[%s4536] sm:%s4534] %v4532
    %s4538 = scalar_lea.vmem [#allocation0], 160
    %v4539 = vld [vmem:[%s4538] sm:%s4400]
    %s4540 = sshll.u32 1, 4
    %s4541 = ssub.s32 %s4540, 1
    %s4542 = smul.addr 4, 20
    %s4543 = scalar_lea.vmem %s1, %s4542
    %4544 = vst [vmem:[%s4543] sm:%s4541] %v4539

// kernel: run_neural_cde.1
$region0: #{run_neural_cde.1}
  #allocation0 [shape = 'u32[]', space=smem, size = 0x4, offset = 0x4, fixed_abs, tag = 'smem constant byte address 0x4 - core index']
  #allocation1 [shape = 'u32[144,128]{1,0:T(1,128)}', space=vmem, size = 0x12000, scoped, tag = 'internal scratch']
  %s0 = inlined_call_operand.vmem [shape: f32[4,9], index: 0, kind: input, shape index: {}]
  %s1 = inlined_call_operand.vmem [shape: f32[7,4,288], index: 1, kind: input, shape index: {}]
  %s2 = inlined_call_operand.vmem [shape: bf16[9,32], index: 2, kind: input, shape index: {}]
  %s3 = inlined_call_operand.vmem [shape: f32[1,32], index: 3, kind: input, shape index: {}]
  %s4 = inlined_call_operand.vmem [shape: bf16[32,50], index: 4, kind: input, shape index: {}]
  %s5 = inlined_call_operand.vmem [shape: f32[1,50], index: 5, kind: input, shape index: {}]
  %s6 = inlined_call_operand.vmem [shape: bf16[50,50], index: 6, kind: input, shape index: {}]
  %s7 = inlined_call_operand.vmem [shape: f32[1,50], index: 7, kind: input, shape index: {}]
  %s8 = inlined_call_operand.vmem [shape: bf16[50,50], index: 8, kind: input, shape index: {}]
  %s9 = inlined_call_operand.vmem [shape: f32[1,50], index: 9, kind: input, shape index: {}]
  %s10 = inlined_call_operand.vmem [shape: bf16[50,288], index: 10, kind: input, shape index: {}]
  %s11 = inlined_call_operand.vmem [shape: f32[1,288], index: 11, kind: input, shape index: {}]
  %s12 = inlined_call_operand.vmem [shape: bf16[288,32], index: 12, kind: input, shape index: {}]
  %s13 = inlined_call_operand.vmem [shape: f32[8,4,32], index: 13, kind: output, shape index: {}]
  %s14 = sld [smem:[#allocation0]]
  $region62: #{run_neural_cde.1} parent=0
    _
  %s16 = ssub.s32 1, %s14
  %s17 = scalar_select 0, %s16, %s14
  // Predicated region
  $region2: #{run_neural_cde.1} parent=0 // pred_check
    _
  $region3: #{run_neural_cde.1} parent=0 // pred_check_branch
    %19 = sbr.rel (0) target = $region5
  $region4: #{run_neural_cde.1} parent=0 // pred_region
    _
  $region5: #{run_neural_cde.1} parent=0 // pred_fallthru
    _
  // Predicated region
  $region6: #{run_neural_cde.1} parent=0 // pred_check
    _
  $region7: #{run_neural_cde.1} parent=0 // pred_check_branch
    %21 = sbr.rel (0) target = $region9
  $region8: #{run_neural_cde.1} parent=0 // pred_region
    _
  $region9: #{run_neural_cde.1} parent=0 // pred_fallthru
    _
  // Predicated region
  $region10: #{run_neural_cde.1} parent=0 // pred_check
    _
  $region11: #{run_neural_cde.1} parent=0 // pred_check_branch
    %23 = sbr.rel (0) target = $region13
  $region12: #{run_neural_cde.1} parent=0 // pred_region
    _
  $region13: #{run_neural_cde.1} parent=0 // pred_fallthru
    _
  // Predicated region
  $region14: #{run_neural_cde.1} parent=0 // pred_check
    _
  $region15: #{run_neural_cde.1} parent=0 // pred_check_branch
    %25 = sbr.rel (0) target = $region17
  $region16: #{run_neural_cde.1} parent=0 // pred_region
    _
  $region17: #{run_neural_cde.1} parent=0 // pred_fallthru
    _
  // Predicated region
  $region18: #{run_neural_cde.1} parent=0 // pred_check
    _
  $region19: #{run_neural_cde.1} parent=0 // pred_check_branch
    %27 = sbr.rel (0) target = $region21
  $region20: #{run_neural_cde.1} parent=0 // pred_region
    _
  $region21: #{run_neural_cde.1} parent=0 // pred_fallthru
    _
  // Predicated region
  $region22: #{run_neural_cde.1} parent=0 // pred_check
    _
  $region23: #{run_neural_cde.1} parent=0 // pred_check_branch
    %29 = sbr.rel (0) target = $region25
  $region24: #{run_neural_cde.1} parent=0 // pred_region
    _
  $region25: #{run_neural_cde.1} parent=0 // pred_fallthru
    _
  // Predicated region
  $region26: #{run_neural_cde.1} parent=0 // pred_check
    _
  $region27: #{run_neural_cde.1} parent=0 // pred_check_branch
    %31 = sbr.rel (0) target = $region29
  $region28: #{run_neural_cde.1} parent=0 // pred_region
    _
  $region29: #{run_neural_cde.1} parent=0 // pred_fallthru
    _
  // Predicated region
  $region30: #{run_neural_cde.1} parent=0 // pred_check
    _
  $region31: #{run_neural_cde.1} parent=0 // pred_check_branch
    %33 = sbr.rel (0) target = $region33
  $region32: #{run_neural_cde.1} parent=0 // pred_region
    _
  $region33: #{run_neural_cde.1} parent=0 // pred_fallthru
    _
  // Predicated region
  $region34: #{run_neural_cde.1} parent=0 // pred_check
    _
  $region35: #{run_neural_cde.1} parent=0 // pred_check_branch
    %35 = sbr.rel (0) target = $region37
  $region36: #{run_neural_cde.1} parent=0 // pred_region
    _
  $region37: #{run_neural_cde.1} parent=0 // pred_fallthru
    _
  // Predicated region
  $region38: #{run_neural_cde.1} parent=0 // pred_check
    _
  $region39: #{run_neural_cde.1} parent=0 // pred_check_branch
    %37 = sbr.rel (0) target = $region41
  $region40: #{run_neural_cde.1} parent=0 // pred_region
    _
  $region41: #{run_neural_cde.1} parent=0 // pred_fallthru
    _
  // Predicated region
  $region42: #{run_neural_cde.1} parent=0 // pred_check
    _
  $region43: #{run_neural_cde.1} parent=0 // pred_check_branch
    %39 = sbr.rel (0) target = $region45
  $region44: #{run_neural_cde.1} parent=0 // pred_region
    _
  $region45: #{run_neural_cde.1} parent=0 // pred_fallthru
    _
  // Predicated region
  $region46: #{run_neural_cde.1} parent=0 // pred_check
    _
  $region47: #{run_neural_cde.1} parent=0 // pred_check_branch
    %41 = sbr.rel (0) target = $region49
  $region48: #{run_neural_cde.1} parent=0 // pred_region
    _
  $region49: #{run_neural_cde.1} parent=0 // pred_fallthru
    _
  // Predicated region
  $region50: #{run_neural_cde.1} parent=0 // pred_check
    _
  $region51: #{run_neural_cde.1} parent=0 // pred_check_branch
    %43 = sbr.rel (0) target = $region53
  $region52: #{run_neural_cde.1} parent=0 // pred_region
    _
  $region53: #{run_neural_cde.1} parent=0 // pred_fallthru
    _
  %v45 = vld [vmem:[%s5] sm:$0x1]
  %v47 = vlaneseq
  %v48 = vshrl.u32 %v47, 7
  %v49 = vsub.s32 0, %v48
  %v50 = vrot.slane %v45, %v49
  %v52 = vld [vmem:[%s7] sm:$0x1]
  %v54 = vlaneseq
  %v55 = vshrl.u32 %v54, 7
  %v56 = vsub.s32 0, %v55
  %v57 = vrot.slane %v52, %v56
  %v59 = vld [vmem:[%s9] sm:$0x1]
  %v61 = vlaneseq
  %v62 = vshrl.u32 %v61, 7
  %v63 = vsub.s32 0, %v62
  %v64 = vrot.slane %v59, %v63
  %v66 = vld [vmem:[%s11] sm:$0x7]
  %v68 = vlaneseq
  %v69 = vshrl.u32 %v68, 7
  %v70 = vsub.s32 0, %v69
  %v71 = vrot.slane %v66, %v70
  %v72 = vlaneseq
  %v73 = vshrl.u32 %v72, 7
  %v74 = vsub.s32 1, %v73
  %v75 = vrot.slane %v66, %v74
  %v76 = vlaneseq
  %v77 = vshrl.u32 %v76, 7
  %v78 = vsub.s32 2, %v77
  %v79 = vrot.slane %v66, %v78
  %v83 = vld [vmem:[%s0] sm:$0xf]
  %v84 = vpack.c.bf16 %v83, %v83
  %v85 = vld [vmem:[%s2] sm:$0xf]
  %v86 = vld [vmem:[%s2 + $0x4] sm:$0x1]
  %v87 = vld [vmem:[%s3] sm:$0x1]
  %v89 = vlaneseq
  %v90 = vshrl.u32 %v89, 7
  %v91 = vsub.s32 0, %v90
  %v92 = vrot.slane %v87, %v91
  %v96 = vunpack.c.l.b16 %v85
  %v97 = vunpack.c.l.b16 %v86
  %v98 = vpack.c.b16 %v97, %v96
  %vm99 = vcmask 72704
  %v101 = vsel %vm99, %v84, 0
  %vm103 = vcmask 1043456
  %vm104 = vcmask 1044480
  %v105 = vsel %vm103, 4294967295, 65535
  %v106 = vsel %vm104, %v105, 0
  %v108 = vand.u32 %v98, %v106
  %110 = vmatprep.subr.bf16.mxu0 0
  %111 = vmatpush1.bf16.msra.mxu0 0
  %112 = vmatprep.subr.bf16.mxu0 0
  %113 = vmatpush1.bf16.msra.mxu0 0
  %114 = vmatprep.subr.bf16.mxu0 0
  %115 = vmatpush1.bf16.msra.mxu0 0
  %116 = vmatprep.subr.bf16.mxu0 0
  %117 = vmatpush1.bf16.msra.mxu0 0
  %118 = vmatprep.subr.bf16.mxu0 0
  %119 = vmatpush1.bf16.msra.mxu0 0
  %120 = vmatprep.subr.bf16.mxu0 0
  %121 = vmatpush1.bf16.msra.mxu0 0
  %122 = vmatprep.subr.bf16.mxu0 0
  %123 = vmatpush1.bf16.msra.mxu0 0
  %124 = vmatprep.subr.bf16.mxu0 0
  %125 = vmatpush1.bf16.msra.mxu0 %v108
  %126 = vmatprep.subr.bf16.mxu0 0
  %127 = vmatpush2.bf16.msra.mxu0 0
  %128 = vmatprep.subr.bf16.mxu0 0
  %129 = vmatpush2.bf16.msra.mxu0 0
  %130 = vmatprep.subr.bf16.mxu0 0
  %131 = vmatpush2.bf16.msra.mxu0 0
  %132 = vmatprep.subr.bf16.mxu0 0
  %133 = vmatpush2.bf16.msra.mxu0 0
  %134 = vmatprep.subr.bf16.mxu0 0
  %135 = vmatpush2.bf16.msra.mxu0 0
  %136 = vmatprep.subr.bf16.mxu0 0
  %137 = vmatpush2.bf16.msra.mxu0 0
  %138 = vmatprep.subr.bf16.mxu0 0
  %139 = vmatpush2.bf16.msra.mxu0 0
  %140 = vmatprep.subr.bf16.mxu0 0
  %141 = vmatpush2.bf16.msra.mxu0 0
  %142 = vmatprep.mubr.bf16.mxu0 0
  %143 = vmatmul.mubr.bf16.gmra.mxu0 %v101
  %v144 = vpop.f32.mrf.mxu0
  %v145 = vadd.f32 %v92, %v144
  %v146 = vpop.f32.mrf.mxu0
  %v147 = vpop.f32.mrf.mxu0
  %v148 = vpop.f32.mrf.mxu0
  %149 = vdwg.mxu0
  %vm150 = vcmask 257024
  %151 = vst.msk [vmem:[%s13] sm:$0xf] %vm150, %v145
  %v152 = vpack.c.bf16 %v145, %v145
  %v153 = vld [vmem:[%s4] sm:$0xf]
  %v154 = vld [vmem:[%s4 + $0x4] sm:$0xf]
  %v155 = vld [vmem:[%s4 + $0x8] sm:$0xf]
  %v156 = vld [vmem:[%s4 + $0xc] sm:$0xf]
  %v161 = vunpack.c.l.b16 %v153
  %v162 = vunpack.c.l.b16 %v154
  %v163 = vunpack.c.l.b16 %v155
  %v164 = vunpack.c.l.b16 %v156
  %v165 = vpack.c.b16 %v162, %v161
  %v166 = vpack.c.b16 %v164, %v163
  %vm169 = vcmask 261120
  %v171 = vsel %vm169, %v152, 0
  %173 = vmatprep.subr.bf16.mxu0 0
  %174 = vmatpush1.bf16.msra.mxu0 0
  %175 = vmatprep.subr.bf16.mxu0 0
  %176 = vmatpush1.bf16.msra.mxu0 0
  %177 = vmatprep.subr.bf16.mxu0 0
  %178 = vmatpush1.bf16.msra.mxu0 0
  %179 = vmatprep.subr.bf16.mxu0 0
  %180 = vmatpush1.bf16.msra.mxu0 0
  %181 = vmatprep.subr.bf16.mxu0 0
  %182 = vmatpush1.bf16.msra.mxu0 0
  %183 = vmatprep.subr.bf16.mxu0 0
  %184 = vmatpush1.bf16.msra.mxu0 0
  %185 = vmatprep.subr.bf16.mxu0 0
  %186 = vmatpush1.bf16.msra.mxu0 %v166
  %187 = vmatprep.subr.bf16.mxu0 0
  %188 = vmatpush1.bf16.msra.mxu0 %v165
  %189 = vmatprep.subr.bf16.mxu0 0
  %190 = vmatpush2.bf16.msra.mxu0 0
  %191 = vmatprep.subr.bf16.mxu0 0
  %192 = vmatpush2.bf16.msra.mxu0 0
  %193 = vmatprep.subr.bf16.mxu0 0
  %194 = vmatpush2.bf16.msra.mxu0 0
  %195 = vmatprep.subr.bf16.mxu0 0
  %196 = vmatpush2.bf16.msra.mxu0 0
  %197 = vmatprep.subr.bf16.mxu0 0
  %198 = vmatpush2.bf16.msra.mxu0 0
  %199 = vmatprep.subr.bf16.mxu0 0
  %200 = vmatpush2.bf16.msra.mxu0 0
  %201 = vmatprep.subr.bf16.mxu0 0
  %202 = vmatpush2.bf16.msra.mxu0 0
  %203 = vmatprep.subr.bf16.mxu0 0
  %204 = vmatpush2.bf16.msra.mxu0 0
  %205 = vmatprep.mubr.bf16.mxu0 0
  %206 = vmatmul.mubr.bf16.gmra.mxu0 %v171
  %v207 = vpop.f32.mrf.mxu0
  %v208 = vadd.f32 %v50, %v207
  %v209 = vpop.f32.mrf.mxu0
  %v210 = vpop.f32.mrf.mxu0
  %v211 = vpop.f32.mrf.mxu0
  %212 = vdwg.mxu0
  %v213 = vmax.f32 %v208, 0.0
  %v214 = vpack.c.bf16 %v213, %v213
  %v215 = vld [vmem:[%s6] sm:$0xf]
  %v216 = vld [vmem:[%s6 + $0x4] sm:$0xf]
  %v217 = vld [vmem:[%s6 + $0x8] sm:$0xf]
  %v218 = vld [vmem:[%s6 + $0xc] sm:$0xf]
  %v219 = vld [vmem:[%s6 + $0x10] sm:$0xf]
  %v220 = vld [vmem:[%s6 + $0x14] sm:$0xf]
  %v221 = vld [vmem:[%s6 + $0x18] sm:$0x1]
  %v229 = vunpack.c.l.b16 %v215
  %v230 = vunpack.c.l.b16 %v216
  %v231 = vunpack.c.l.b16 %v217
  %v232 = vunpack.c.l.b16 %v218
  %v233 = vunpack.c.l.b16 %v219
  %v234 = vunpack.c.l.b16 %v220
  %v235 = vunpack.c.l.b16 %v221
  %v236 = vpack.c.b16 %v230, %v229
  %v237 = vpack.c.b16 %v232, %v231
  %v238 = vpack.c.b16 %v234, %v233
  %v239 = vpack.c.b16 %v235, %v235
  %vm243 = vcmask 408576
  %v245 = vsel %vm243, %v214, 0
  %vm247 = vcmask 1040384
  %v249 = vsel %vm247, %v239, 0
  %251 = vmatprep.subr.bf16.mxu0 0
  %252 = vmatpush1.bf16.msra.mxu0 0
  %253 = vmatprep.subr.bf16.mxu0 0
  %254 = vmatpush1.bf16.msra.mxu0 0
  %255 = vmatprep.subr.bf16.mxu0 0
  %256 = vmatpush1.bf16.msra.mxu0 0
  %257 = vmatprep.subr.bf16.mxu0 0
  %258 = vmatpush1.bf16.msra.mxu0 0
  %259 = vmatprep.subr.bf16.mxu0 0
  %260 = vmatpush1.bf16.msra.mxu0 %v249
  %261 = vmatprep.subr.bf16.mxu0 0
  %262 = vmatpush1.bf16.msra.mxu0 %v238
  %263 = vmatprep.subr.bf16.mxu0 0
  %264 = vmatpush1.bf16.msra.mxu0 %v237
  %265 = vmatprep.subr.bf16.mxu0 0
  %266 = vmatpush1.bf16.msra.mxu0 %v236
  %267 = vmatprep.subr.bf16.mxu0 0
  %268 = vmatpush2.bf16.msra.mxu0 0
  %269 = vmatprep.subr.bf16.mxu0 0
  %270 = vmatpush2.bf16.msra.mxu0 0
  %271 = vmatprep.subr.bf16.mxu0 0
  %272 = vmatpush2.bf16.msra.mxu0 0
  %273 = vmatprep.subr.bf16.mxu0 0
  %274 = vmatpush2.bf16.msra.mxu0 0
  %275 = vmatprep.subr.bf16.mxu0 0
  %276 = vmatpush2.bf16.msra.mxu0 0
  %277 = vmatprep.subr.bf16.mxu0 0
  %278 = vmatpush2.bf16.msra.mxu0 0
  %279 = vmatprep.subr.bf16.mxu0 0
  %280 = vmatpush2.bf16.msra.mxu0 0
  %281 = vmatprep.subr.bf16.mxu0 0
  %282 = vmatpush2.bf16.msra.mxu0 0
  %283 = vmatprep.mubr.bf16.mxu0 0
  %284 = vmatmul.mubr.bf16.gmra.mxu0 %v245
  %v285 = vpop.f32.mrf.mxu0
  %v286 = vadd.f32 %v57, %v285
  %v287 = vpop.f32.mrf.mxu0
  %v288 = vpop.f32.mrf.mxu0
  %v289 = vpop.f32.mrf.mxu0
  %290 = vdwg.mxu0
  %v291 = vmax.f32 %v286, 0.0
  %v292 = vpack.c.bf16 %v291, %v291
  %v293 = vld [vmem:[%s8] sm:$0xf]
  %v294 = vld [vmem:[%s8 + $0x4] sm:$0xf]
  %v295 = vld [vmem:[%s8 + $0x8] sm:$0xf]
  %v296 = vld [vmem:[%s8 + $0xc] sm:$0xf]
  %v297 = vld [vmem:[%s8 + $0x10] sm:$0xf]
  %v298 = vld [vmem:[%s8 + $0x14] sm:$0xf]
  %v299 = vld [vmem:[%s8 + $0x18] sm:$0x1]
  %v307 = vunpack.c.l.b16 %v293
  %v308 = vunpack.c.l.b16 %v294
  %v309 = vunpack.c.l.b16 %v295
  %v310 = vunpack.c.l.b16 %v296
  %v311 = vunpack.c.l.b16 %v297
  %v312 = vunpack.c.l.b16 %v298
  %v313 = vunpack.c.l.b16 %v299
  %v314 = vpack.c.b16 %v308, %v307
  %v315 = vpack.c.b16 %v310, %v309
  %v316 = vpack.c.b16 %v312, %v311
  %v317 = vpack.c.b16 %v313, %v313
  %v322 = vsel %vm243, %v292, 0
  %v325 = vsel %vm247, %v317, 0
  %327 = vmatprep.subr.bf16.mxu0 0
  %328 = vmatpush1.bf16.msra.mxu0 0
  %329 = vmatprep.subr.bf16.mxu0 0
  %330 = vmatpush1.bf16.msra.mxu0 0
  %331 = vmatprep.subr.bf16.mxu0 0
  %332 = vmatpush1.bf16.msra.mxu0 0
  %333 = vmatprep.subr.bf16.mxu0 0
  %334 = vmatpush1.bf16.msra.mxu0 0
  %335 = vmatprep.subr.bf16.mxu0 0
  %336 = vmatpush1.bf16.msra.mxu0 %v325
  %337 = vmatprep.subr.bf16.mxu0 0
  %338 = vmatpush1.bf16.msra.mxu0 %v316
  %339 = vmatprep.subr.bf16.mxu0 0
  %340 = vmatpush1.bf16.msra.mxu0 %v315
  %341 = vmatprep.subr.bf16.mxu0 0
  %342 = vmatpush1.bf16.msra.mxu0 %v314
  %343 = vmatprep.subr.bf16.mxu0 0
  %344 = vmatpush2.bf16.msra.mxu0 0
  %345 = vmatprep.subr.bf16.mxu0 0
  %346 = vmatpush2.bf16.msra.mxu0 0
  %347 = vmatprep.subr.bf16.mxu0 0
  %348 = vmatpush2.bf16.msra.mxu0 0
  %349 = vmatprep.subr.bf16.mxu0 0
  %350 = vmatpush2.bf16.msra.mxu0 0
  %351 = vmatprep.subr.bf16.mxu0 0
  %352 = vmatpush2.bf16.msra.mxu0 0
  %353 = vmatprep.subr.bf16.mxu0 0
  %354 = vmatpush2.bf16.msra.mxu0 0
  %355 = vmatprep.subr.bf16.mxu0 0
  %356 = vmatpush2.bf16.msra.mxu0 0
  %357 = vmatprep.subr.bf16.mxu0 0
  %358 = vmatpush2.bf16.msra.mxu0 0
  %359 = vmatprep.mubr.bf16.mxu0 0
  %360 = vmatmul.mubr.bf16.gmra.mxu0 %v322
  %v361 = vpop.f32.mrf.mxu0
  %v362 = vadd.f32 %v64, %v361
  %v363 = vpop.f32.mrf.mxu0
  %v364 = vpop.f32.mrf.mxu0
  %v365 = vpop.f32.mrf.mxu0
  %366 = vdwg.mxu0
  %v367 = vmax.f32 %v362, 0.0
  %v368 = vpack.c.bf16 %v367, %v367
  %v369 = vld [vmem:[%s10] sm:$0xff]
  %v370 = vld [vmem:[%s10 + $0x8] sm:$0xf]
  %v371 = vld [vmem:[%s10 + $0xc] sm:$0xff]
  %v372 = vld [vmem:[%s10 + $0x14] sm:$0xf]
  %v373 = vld [vmem:[%s10 + $0x18] sm:$0xff]
  %v374 = vld [vmem:[%s10 + $0x20] sm:$0xf]
  %v375 = vld [vmem:[%s10 + $0x24] sm:$0xff]
  %v376 = vld [vmem:[%s10 + $0x2c] sm:$0xf]
  %v377 = vld [vmem:[%s10 + $0x30] sm:$0xff]
  %v378 = vld [vmem:[%s10 + $0x38] sm:$0xf]
  %v379 = vld [vmem:[%s10 + $0x3c] sm:$0xff]
  %v380 = vld [vmem:[%s10 + $0x44] sm:$0xf]
  %v381 = vld [vmem:[%s10 + $0x48] sm:$0x11]
  %v382 = vld [vmem:[%s10 + $0x50] sm:$0x1]
  %v397 = vunpack.c.l.b16 %v369
  %v398 = vunpack.c.h.b16 %v369
  %v399 = vunpack.c.l.b16 %v370
  %v400 = vunpack.c.l.b16 %v371
  %v401 = vunpack.c.h.b16 %v371
  %v402 = vunpack.c.l.b16 %v372
  %v403 = vunpack.c.l.b16 %v373
  %v404 = vunpack.c.h.b16 %v373
  %v405 = vunpack.c.l.b16 %v374
  %v406 = vunpack.c.l.b16 %v375
  %v407 = vunpack.c.h.b16 %v375
  %v408 = vunpack.c.l.b16 %v376
  %v409 = vunpack.c.l.b16 %v377
  %v410 = vunpack.c.h.b16 %v377
  %v411 = vunpack.c.l.b16 %v378
  %v412 = vunpack.c.l.b16 %v379
  %v413 = vunpack.c.h.b16 %v379
  %v414 = vunpack.c.l.b16 %v380
  %v415 = vunpack.c.l.b16 %v381
  %v416 = vunpack.c.h.b16 %v381
  %v417 = vunpack.c.l.b16 %v382
  %v418 = vpack.c.b16 %v400, %v397
  %v419 = vpack.c.b16 %v401, %v398
  %v420 = vpack.c.b16 %v402, %v399
  %v421 = vpack.c.b16 %v406, %v403
  %v422 = vpack.c.b16 %v407, %v404
  %v423 = vpack.c.b16 %v408, %v405
  %v424 = vpack.c.b16 %v412, %v409
  %v425 = vpack.c.b16 %v413, %v410
  %v426 = vpack.c.b16 %v414, %v411
  %v427 = vpack.c.b16 %v415, %v415
  %v428 = vpack.c.b16 %v416, %v416
  %v429 = vpack.c.b16 %v417, %v417
  %v440 = vsel %vm243, %v368, 0
  %v443 = vsel %vm247, %v427, 0
  %v446 = vsel %vm247, %v428, 0
  %v449 = vsel %vm247, %v429, 0
  %451 = vmatprep.subr.bf16.mxu0 0
  %452 = vmatpush1.bf16.msra.mxu0 0
  %453 = vmatprep.subr.bf16.mxu0 0
  %454 = vmatpush1.bf16.msra.mxu0 0
  %455 = vmatprep.subr.bf16.mxu0 0
  %456 = vmatpush1.bf16.msra.mxu0 0
  %457 = vmatprep.subr.bf16.mxu0 0
  %458 = vmatpush1.bf16.msra.mxu0 0
  %459 = vmatprep.subr.bf16.mxu0 %v446
  %460 = vmatpush1.bf16.msra.mxu0 %v443
  %461 = vmatprep.subr.bf16.mxu0 %v425
  %462 = vmatpush1.bf16.msra.mxu0 %v424
  %463 = vmatprep.subr.bf16.mxu0 %v422
  %464 = vmatpush1.bf16.msra.mxu0 %v421
  %465 = vmatprep.subr.bf16.mxu0 %v419
  %466 = vmatpush1.bf16.msra.mxu0 %v418
  %467 = vmatprep.subr.bf16.mxu0 0
  %468 = vmatpush2.bf16.msra.mxu0 0
  %469 = vmatprep.subr.bf16.mxu0 0
  %470 = vmatpush2.bf16.msra.mxu0 0
  %471 = vmatprep.subr.bf16.mxu0 0
  %472 = vmatpush2.bf16.msra.mxu0 0
  %473 = vmatprep.subr.bf16.mxu0 0
  %474 = vmatpush2.bf16.msra.mxu0 0
  %475 = vmatprep.subr.bf16.mxu0 0
  %476 = vmatpush2.bf16.msra.mxu0 0
  %477 = vmatprep.subr.bf16.mxu0 0
  %478 = vmatpush2.bf16.msra.mxu0 0
  %479 = vmatprep.subr.bf16.mxu0 0
  %480 = vmatpush2.bf16.msra.mxu0 0
  %481 = vmatprep.subr.bf16.mxu0 0
  %482 = vmatpush2.bf16.msra.mxu0 0
  %483 = vmatprep.mubr.bf16.mxu0 0
  %484 = vmatmul.mubr.bf16.gmra.mxu0 %v440
  %v485 = vpop.f32.mrf.mxu0
  %v486 = vadd.f32 %v71, %v485
  %v487 = vpop.f32.mrf.mxu0
  %v488 = vadd.f32 %v75, %v487
  %v489 = vpop.f32.mrf.mxu0
  %v490 = vpop.f32.mrf.mxu0
  %491 = vdwg.mxu0
  %492 = vmatprep.subr.bf16.mxu0 0
  %493 = vmatpush1.bf16.msra.mxu0 0
  %494 = vmatprep.subr.bf16.mxu0 0
  %495 = vmatpush1.bf16.msra.mxu0 0
  %496 = vmatprep.subr.bf16.mxu0 0
  %497 = vmatpush1.bf16.msra.mxu0 0
  %498 = vmatprep.subr.bf16.mxu0 0
  %499 = vmatpush1.bf16.msra.mxu0 0
  %500 = vmatprep.subr.bf16.mxu0 0
  %501 = vmatpush1.bf16.msra.mxu0 %v449
  %502 = vmatprep.subr.bf16.mxu0 0
  %503 = vmatpush1.bf16.msra.mxu0 %v426
  %504 = vmatprep.subr.bf16.mxu0 0
  %505 = vmatpush1.bf16.msra.mxu0 %v423
  %506 = vmatprep.subr.bf16.mxu0 0
  %507 = vmatpush1.bf16.msra.mxu0 %v420
  %508 = vmatprep.subr.bf16.mxu0 0
  %509 = vmatpush2.bf16.msra.mxu0 0
  %510 = vmatprep.subr.bf16.mxu0 0
  %511 = vmatpush2.bf16.msra.mxu0 0
  %512 = vmatprep.subr.bf16.mxu0 0
  %513 = vmatpush2.bf16.msra.mxu0 0
  %514 = vmatprep.subr.bf16.mxu0 0
  %515 = vmatpush2.bf16.msra.mxu0 0
  %516 = vmatprep.subr.bf16.mxu0 0
  %517 = vmatpush2.bf16.msra.mxu0 0
  %518 = vmatprep.subr.bf16.mxu0 0
  %519 = vmatpush2.bf16.msra.mxu0 0
  %520 = vmatprep.subr.bf16.mxu0 0
  %521 = vmatpush2.bf16.msra.mxu0 0
  %522 = vmatprep.subr.bf16.mxu0 0
  %523 = vmatpush2.bf16.msra.mxu0 0
  %524 = vmatprep.mubr.bf16.mxu0 0
  %525 = vmatmul.mubr.bf16.gmra.mxu0 %v440
  %v526 = vpop.f32.mrf.mxu0
  %v527 = vadd.f32 %v79, %v526
  %v528 = vpop.f32.mrf.mxu0
  %v529 = vpop.f32.mrf.mxu0
  %v530 = vpop.f32.mrf.mxu0
  %531 = vdwg.mxu0
  %v532 = vtanh.pop %v486
  %v533 = vtanh.pop %v488
  %v534 = vtanh.pop %v527
  %v535 = vld [vmem:[%s1] sm:$0xff]
  %v536 = vld [vmem:[%s1 + $0x8] sm:$0xf]
  %v538 = vcombine.high %v535, %v535
  %v540 = vmul.f32 %v532, %v535
  %v541 = vmul.f32 %v533, %v538
  %v542 = vmul.f32 %v534, %v536
  %v543 = vpack.c.bf16 %v540, %v540
  %v544 = vpack.c.bf16 %v541, %v541
  %v545 = vpack.c.bf16 %v542, %v542
  %v546 = vld [vmem:[%s12] sm:$0xf]
  %v547 = vld [vmem:[%s12 + $0x4] sm:$0xf]
  %v548 = vld [vmem:[%s12 + $0x8] sm:$0xf]
  %v549 = vld [vmem:[%s12 + $0xc] sm:$0xf]
  %v550 = vld [vmem:[%s12 + $0x10] sm:$0xf]
  %v551 = vld [vmem:[%s12 + $0x14] sm:$0xf]
  %v552 = vld [vmem:[%s12 + $0x18] sm:$0xf]
  %v553 = vld [vmem:[%s12 + $0x1c] sm:$0xf]
  %v554 = vld [vmem:[%s12 + $0x20] sm:$0xf]
  %v555 = vld [vmem:[%s12 + $0x24] sm:$0xf]
  %v556 = vld [vmem:[%s12 + $0x28] sm:$0xf]
  %v557 = vld [vmem:[%s12 + $0x2c] sm:$0xf]
  %v558 = vld [vmem:[%s12 + $0x30] sm:$0xf]
  %v559 = vld [vmem:[%s12 + $0x34] sm:$0xf]
  %v560 = vld [vmem:[%s12 + $0x38] sm:$0xf]
  %v561 = vld [vmem:[%s12 + $0x3c] sm:$0xf]
  %v562 = vld [vmem:[%s12 + $0x40] sm:$0xf]
  %v563 = vld [vmem:[%s12 + $0x44] sm:$0xf]
  %v564 = vld [vmem:[%s12 + $0x48] sm:$0xf]
  %v565 = vld [vmem:[%s12 + $0x4c] sm:$0xf]
  %v566 = vld [vmem:[%s12 + $0x50] sm:$0xf]
  %v567 = vld [vmem:[%s12 + $0x54] sm:$0xf]
  %v568 = vld [vmem:[%s12 + $0x58] sm:$0xf]
  %v569 = vld [vmem:[%s12 + $0x5c] sm:$0xf]
  %v570 = vld [vmem:[%s12 + $0x60] sm:$0xf]
  %v571 = vld [vmem:[%s12 + $0x64] sm:$0xf]
  %v572 = vld [vmem:[%s12 + $0x68] sm:$0xf]
  %v573 = vld [vmem:[%s12 + $0x6c] sm:$0xf]
  %v574 = vld [vmem:[%s12 + $0x70] sm:$0xf]
  %v575 = vld [vmem:[%s12 + $0x74] sm:$0xf]
  %v576 = vld [vmem:[%s12 + $0x78] sm:$0xf]
  %v577 = vld [vmem:[%s12 + $0x7c] sm:$0xf]
  %v578 = vld [vmem:[%s12 + $0x80] sm:$0xf]
  %v579 = vld [vmem:[%s12 + $0x84] sm:$0xf]
  %v580 = vld [vmem:[%s12 + $0x88] sm:$0xf]
  %v581 = vld [vmem:[%s12 + $0x8c] sm:$0xf]
  %v618 = vunpack.c.l.b16 %v546
  %v619 = vunpack.c.l.b16 %v547
  %v620 = vunpack.c.l.b16 %v548
  %v621 = vunpack.c.l.b16 %v549
  %v622 = vunpack.c.l.b16 %v550
  %v623 = vunpack.c.l.b16 %v551
  %v624 = vunpack.c.l.b16 %v552
  %v625 = vunpack.c.l.b16 %v553
  %v626 = vunpack.c.l.b16 %v554
  %v627 = vunpack.c.l.b16 %v555
  %v628 = vunpack.c.l.b16 %v556
  %v629 = vunpack.c.l.b16 %v557
  %v630 = vunpack.c.l.b16 %v558
  %v631 = vunpack.c.l.b16 %v559
  %v632 = vunpack.c.l.b16 %v560
  %v633 = vunpack.c.l.b16 %v561
  %v634 = vunpack.c.l.b16 %v562
  %v635 = vunpack.c.l.b16 %v563
  %v636 = vunpack.c.l.b16 %v564
  %v637 = vunpack.c.l.b16 %v565
  %v638 = vunpack.c.l.b16 %v566
  %v639 = vunpack.c.l.b16 %v567
  %v640 = vunpack.c.l.b16 %v568
  %v641 = vunpack.c.l.b16 %v569
  %v642 = vunpack.c.l.b16 %v570
  %v643 = vunpack.c.l.b16 %v571
  %v644 = vunpack.c.l.b16 %v572
  %v645 = vunpack.c.l.b16 %v573
  %v646 = vunpack.c.l.b16 %v574
  %v647 = vunpack.c.l.b16 %v575
  %v648 = vunpack.c.l.b16 %v576
  %v649 = vunpack.c.l.b16 %v577
  %v650 = vunpack.c.l.b16 %v578
  %v651 = vunpack.c.l.b16 %v579
  %v652 = vunpack.c.l.b16 %v580
  %v653 = vunpack.c.l.b16 %v581
  %v654 = vpack.c.b16 %v619, %v618
  %v655 = vpack.c.b16 %v621, %v620
  %v656 = vpack.c.b16 %v623, %v622
  %v657 = vpack.c.b16 %v625, %v624
  %v658 = vpack.c.b16 %v627, %v626
  %v659 = vpack.c.b16 %v629, %v628
  %v660 = vpack.c.b16 %v631, %v630
  %v661 = vpack.c.b16 %v633, %v632
  %v662 = vpack.c.b16 %v635, %v634
  %v663 = vpack.c.b16 %v637, %v636
  %v664 = vpack.c.b16 %v639, %v638
  %v665 = vpack.c.b16 %v641, %v640
  %v666 = vpack.c.b16 %v643, %v642
  %v667 = vpack.c.b16 %v645, %v644
  %v668 = vpack.c.b16 %v647, %v646
  %v669 = vpack.c.b16 %v649, %v648
  %v670 = vpack.c.b16 %v651, %v650
  %v671 = vpack.c.b16 %v653, %v652
  %v691 = vsel %vm169, %v545, 0
  %693 = vmatprep.subr.bf16.mxu0 0
  %694 = vmatpush1.bf16.msra.mxu0 %v661
  %695 = vmatprep.subr.bf16.mxu0 0
  %696 = vmatpush1.bf16.msra.mxu0 %v660
  %697 = vmatprep.subr.bf16.mxu0 0
  %698 = vmatpush1.bf16.msra.mxu0 %v659
  %699 = vmatprep.subr.bf16.mxu0 0
  %700 = vmatpush1.bf16.msra.mxu0 %v658
  %701 = vmatprep.subr.bf16.mxu0 0
  %702 = vmatpush1.bf16.msra.mxu0 %v657
  %703 = vmatprep.subr.bf16.mxu0 0
  %704 = vmatpush1.bf16.msra.mxu0 %v656
  %705 = vmatprep.subr.bf16.mxu0 0
  %706 = vmatpush1.bf16.msra.mxu0 %v655
  %707 = vmatprep.subr.bf16.mxu0 0
  %708 = vmatpush1.bf16.msra.mxu0 %v654
  %709 = vmatprep.subr.bf16.mxu0 0
  %710 = vmatpush2.bf16.msra.mxu0 %v669
  %711 = vmatprep.subr.bf16.mxu0 0
  %712 = vmatpush2.bf16.msra.mxu0 %v668
  %713 = vmatprep.subr.bf16.mxu0 0
  %714 = vmatpush2.bf16.msra.mxu0 %v667
  %715 = vmatprep.subr.bf16.mxu0 0
  %716 = vmatpush2.bf16.msra.mxu0 %v666
  %717 = vmatprep.subr.bf16.mxu0 0
  %718 = vmatpush2.bf16.msra.mxu0 %v665
  %719 = vmatprep.subr.bf16.mxu0 0
  %720 = vmatpush2.bf16.msra.mxu0 %v664
  %721 = vmatprep.subr.bf16.mxu0 0
  %722 = vmatpush2.bf16.msra.mxu0 %v663
  %723 = vmatprep.subr.bf16.mxu0 0
  %724 = vmatpush2.bf16.msra.mxu0 %v662
  %725 = vmatprep.mubr.bf16.mxu0 %v544
  %726 = vmatmul.mubr.bf16.gmra.mxu0 %v543
  %v727 = vpop.f32.mrf.mxu0
  %v728 = vadd.f32 0.0, %v727
  %v729 = vpop.f32.mrf.mxu0
  %v730 = vpop.f32.mrf.mxu0
  %v731 = vpop.f32.mrf.mxu0
  %732 = vdwg.mxu0
  %733 = vmatprep.subr.bf16.mxu0 0
  %734 = vmatpush1.bf16.msra.mxu0 0
  %735 = vmatprep.subr.bf16.mxu0 0
  %736 = vmatpush1.bf16.msra.mxu0 0
  %737 = vmatprep.subr.bf16.mxu0 0
  %738 = vmatpush1.bf16.msra.mxu0 0
  %739 = vmatprep.subr.bf16.mxu0 0
  %740 = vmatpush1.bf16.msra.mxu0 0
  %741 = vmatprep.subr.bf16.mxu0 0
  %742 = vmatpush1.bf16.msra.mxu0 0
  %743 = vmatprep.subr.bf16.mxu0 0
  %744 = vmatpush1.bf16.msra.mxu0 0
  %745 = vmatprep.subr.bf16.mxu0 0
  %746 = vmatpush1.bf16.msra.mxu0 %v671
  %747 = vmatprep.subr.bf16.mxu0 0
  %748 = vmatpush1.bf16.msra.mxu0 %v670
  %749 = vmatprep.subr.bf16.mxu0 0
  %750 = vmatpush2.bf16.msra.mxu0 0
  %751 = vmatprep.subr.bf16.mxu0 0
  %752 = vmatpush2.bf16.msra.mxu0 0
  %753 = vmatprep.subr.bf16.mxu0 0
  %754 = vmatpush2.bf16.msra.mxu0 0
  %755 = vmatprep.subr.bf16.mxu0 0
  %756 = vmatpush2.bf16.msra.mxu0 0
  %757 = vmatprep.subr.bf16.mxu0 0
  %758 = vmatpush2.bf16.msra.mxu0 0
  %759 = vmatprep.subr.bf16.mxu0 0
  %760 = vmatpush2.bf16.msra.mxu0 0
  %761 = vmatprep.subr.bf16.mxu0 0
  %762 = vmatpush2.bf16.msra.mxu0 0
  %763 = vmatprep.subr.bf16.mxu0 0
  %764 = vmatpush2.bf16.msra.mxu0 0
  %765 = vmatprep.mubr.bf16.mxu0 0
  %766 = vmatmul.mubr.bf16.gmra.mxu0 %v691
  %v767 = vpop.f32.mrf.mxu0
  %v768 = vadd.f32 %v728, %v767
  %v769 = vpop.f32.mrf.mxu0
  %v770 = vpop.f32.mrf.mxu0
  %v771 = vpop.f32.mrf.mxu0
  %772 = vdwg.mxu0
  %v773 = vadd.f32 %v145, %v768
  %s774 = scalar_lea.vmem %s13, 4
  %775 = vst.msk [vmem:[%s774] sm:$0xf] %vm150, %v773
  %v776 = vpack.c.bf16 %v773, %v773
  %v777 = vld [vmem:[%s4] sm:$0xf]
  %v778 = vld [vmem:[%s4 + $0x4] sm:$0xf]
  %v779 = vld [vmem:[%s4 + $0x8] sm:$0xf]
  %v780 = vld [vmem:[%s4 + $0xc] sm:$0xf]
  %v785 = vunpack.c.l.b16 %v777
  %v786 = vunpack.c.l.b16 %v778
  %v787 = vunpack.c.l.b16 %v779
  %v788 = vunpack.c.l.b16 %v780
  %v789 = vpack.c.b16 %v786, %v785
  %v790 = vpack.c.b16 %v788, %v787
  %v794 = vsel %vm169, %v776, 0
  %796 = vmatprep.subr.bf16.mxu0 0
  %797 = vmatpush1.bf16.msra.mxu0 0
  %798 = vmatprep.subr.bf16.mxu0 0
  %799 = vmatpush1.bf16.msra.mxu0 0
  %800 = vmatprep.subr.bf16.mxu0 0
  %801 = vmatpush1.bf16.msra.mxu0 0
  %802 = vmatprep.subr.bf16.mxu0 0
  %803 = vmatpush1.bf16.msra.mxu0 0
  %804 = vmatprep.subr.bf16.mxu0 0
  %805 = vmatpush1.bf16.msra.mxu0 0
  %806 = vmatprep.subr.bf16.mxu0 0
  %807 = vmatpush1.bf16.msra.mxu0 0
  %808 = vmatprep.subr.bf16.mxu0 0
  %809 = vmatpush1.bf16.msra.mxu0 %v790
  %810 = vmatprep.subr.bf16.mxu0 0
  %811 = vmatpush1.bf16.msra.mxu0 %v789
  %812 = vmatprep.subr.bf16.mxu0 0
  %813 = vmatpush2.bf16.msra.mxu0 0
  %814 = vmatprep.subr.bf16.mxu0 0
  %815 = vmatpush2.bf16.msra.mxu0 0
  %816 = vmatprep.subr.bf16.mxu0 0
  %817 = vmatpush2.bf16.msra.mxu0 0
  %818 = vmatprep.subr.bf16.mxu0 0
  %819 = vmatpush2.bf16.msra.mxu0 0
  %820 = vmatprep.subr.bf16.mxu0 0
  %821 = vmatpush2.bf16.msra.mxu0 0
  %822 = vmatprep.subr.bf16.mxu0 0
  %823 = vmatpush2.bf16.msra.mxu0 0
  %824 = vmatprep.subr.bf16.mxu0 0
  %825 = vmatpush2.bf16.msra.mxu0 0
  %826 = vmatprep.subr.bf16.mxu0 0
  %827 = vmatpush2.bf16.msra.mxu0 0
  %828 = vmatprep.mubr.bf16.mxu0 0
  %829 = vmatmul.mubr.bf16.gmra.mxu0 %v794
  %v830 = vpop.f32.mrf.mxu0
  %v831 = vadd.f32 %v50, %v830
  %v832 = vpop.f32.mrf.mxu0
  %v833 = vpop.f32.mrf.mxu0
  %v834 = vpop.f32.mrf.mxu0
  %835 = vdwg.mxu0
  %v836 = vmax.f32 %v831, 0.0
  %v837 = vpack.c.bf16 %v836, %v836
  %v838 = vld [vmem:[%s6] sm:$0xf]
  %v839 = vld [vmem:[%s6 + $0x4] sm:$0xf]
  %v840 = vld [vmem:[%s6 + $0x8] sm:$0xf]
  %v841 = vld [vmem:[%s6 + $0xc] sm:$0xf]
  %v842 = vld [vmem:[%s6 + $0x10] sm:$0xf]
  %v843 = vld [vmem:[%s6 + $0x14] sm:$0xf]
  %v844 = vld [vmem:[%s6 + $0x18] sm:$0x1]
  %v852 = vunpack.c.l.b16 %v838
  %v853 = vunpack.c.l.b16 %v839
  %v854 = vunpack.c.l.b16 %v840
  %v855 = vunpack.c.l.b16 %v841
  %v856 = vunpack.c.l.b16 %v842
  %v857 = vunpack.c.l.b16 %v843
  %v858 = vunpack.c.l.b16 %v844
  %v859 = vpack.c.b16 %v853, %v852
  %v860 = vpack.c.b16 %v855, %v854
  %v861 = vpack.c.b16 %v857, %v856
  %v862 = vpack.c.b16 %v858, %v858
  %v867 = vsel %vm243, %v837, 0
  %v870 = vsel %vm247, %v862, 0
  %872 = vmatprep.subr.bf16.mxu0 0
  %873 = vmatpush1.bf16.msra.mxu0 0
  %874 = vmatprep.subr.bf16.mxu0 0
  %875 = vmatpush1.bf16.msra.mxu0 0
  %876 = vmatprep.subr.bf16.mxu0 0
  %877 = vmatpush1.bf16.msra.mxu0 0
  %878 = vmatprep.subr.bf16.mxu0 0
  %879 = vmatpush1.bf16.msra.mxu0 0
  %880 = vmatprep.subr.bf16.mxu0 0
  %881 = vmatpush1.bf16.msra.mxu0 %v870
  %882 = vmatprep.subr.bf16.mxu0 0
  %883 = vmatpush1.bf16.msra.mxu0 %v861
  %884 = vmatprep.subr.bf16.mxu0 0
  %885 = vmatpush1.bf16.msra.mxu0 %v860
  %886 = vmatprep.subr.bf16.mxu0 0
  %887 = vmatpush1.bf16.msra.mxu0 %v859
  %888 = vmatprep.subr.bf16.mxu0 0
  %889 = vmatpush2.bf16.msra.mxu0 0
  %890 = vmatprep.subr.bf16.mxu0 0
  %891 = vmatpush2.bf16.msra.mxu0 0
  %892 = vmatprep.subr.bf16.mxu0 0
  %893 = vmatpush2.bf16.msra.mxu0 0
  %894 = vmatprep.subr.bf16.mxu0 0
  %895 = vmatpush2.bf16.msra.mxu0 0
  %896 = vmatprep.subr.bf16.mxu0 0
  %897 = vmatpush2.bf16.msra.mxu0 0
  %898 = vmatprep.subr.bf16.mxu0 0
  %899 = vmatpush2.bf16.msra.mxu0 0
  %900 = vmatprep.subr.bf16.mxu0 0
  %901 = vmatpush2.bf16.msra.mxu0 0
  %902 = vmatprep.subr.bf16.mxu0 0
  %903 = vmatpush2.bf16.msra.mxu0 0
  %904 = vmatprep.mubr.bf16.mxu0 0
  %905 = vmatmul.mubr.bf16.gmra.mxu0 %v867
  %v906 = vpop.f32.mrf.mxu0
  %v907 = vadd.f32 %v57, %v906
  %v908 = vpop.f32.mrf.mxu0
  %v909 = vpop.f32.mrf.mxu0
  %v910 = vpop.f32.mrf.mxu0
  %911 = vdwg.mxu0
  %v912 = vmax.f32 %v907, 0.0
  %v913 = vpack.c.bf16 %v912, %v912
  %v914 = vld [vmem:[%s8] sm:$0xf]
  %v915 = vld [vmem:[%s8 + $0x4] sm:$0xf]
  %v916 = vld [vmem:[%s8 + $0x8] sm:$0xf]
  %v917 = vld [vmem:[%s8 + $0xc] sm:$0xf]
  %v918 = vld [vmem:[%s8 + $0x10] sm:$0xf]
  %v919 = vld [vmem:[%s8 + $0x14] sm:$0xf]
  %v920 = vld [vmem:[%s8 + $0x18] sm:$0x1]
  %v928 = vunpack.c.l.b16 %v914
  %v929 = vunpack.c.l.b16 %v915
  %v930 = vunpack.c.l.b16 %v916
  %v931 = vunpack.c.l.b16 %v917
  %v932 = vunpack.c.l.b16 %v918
  %v933 = vunpack.c.l.b16 %v919
  %v934 = vunpack.c.l.b16 %v920
  %v935 = vpack.c.b16 %v929, %v928
  %v936 = vpack.c.b16 %v931, %v930
  %v937 = vpack.c.b16 %v933, %v932
  %v938 = vpack.c.b16 %v934, %v934
  %v943 = vsel %vm243, %v913, 0
  %v946 = vsel %vm247, %v938, 0
  %948 = vmatprep.subr.bf16.mxu0 0
  %949 = vmatpush1.bf16.msra.mxu0 0
  %950 = vmatprep.subr.bf16.mxu0 0
  %951 = vmatpush1.bf16.msra.mxu0 0
  %952 = vmatprep.subr.bf16.mxu0 0
  %953 = vmatpush1.bf16.msra.mxu0 0
  %954 = vmatprep.subr.bf16.mxu0 0
  %955 = vmatpush1.bf16.msra.mxu0 0
  %956 = vmatprep.subr.bf16.mxu0 0
  %957 = vmatpush1.bf16.msra.mxu0 %v946
  %958 = vmatprep.subr.bf16.mxu0 0
  %959 = vmatpush1.bf16.msra.mxu0 %v937
  %960 = vmatprep.subr.bf16.mxu0 0
  %961 = vmatpush1.bf16.msra.mxu0 %v936
  %962 = vmatprep.subr.bf16.mxu0 0
  %963 = vmatpush1.bf16.msra.mxu0 %v935
  %964 = vmatprep.subr.bf16.mxu0 0
  %965 = vmatpush2.bf16.msra.mxu0 0
  %966 = vmatprep.subr.bf16.mxu0 0
  %967 = vmatpush2.bf16.msra.mxu0 0
  %968 = vmatprep.subr.bf16.mxu0 0
  %969 = vmatpush2.bf16.msra.mxu0 0
  %970 = vmatprep.subr.bf16.mxu0 0
  %971 = vmatpush2.bf16.msra.mxu0 0
  %972 = vmatprep.subr.bf16.mxu0 0
  %973 = vmatpush2.bf16.msra.mxu0 0
  %974 = vmatprep.subr.bf16.mxu0 0
  %975 = vmatpush2.bf16.msra.mxu0 0
  %976 = vmatprep.subr.bf16.mxu0 0
  %977 = vmatpush2.bf16.msra.mxu0 0
  %978 = vmatprep.subr.bf16.mxu0 0
  %979 = vmatpush2.bf16.msra.mxu0 0
  %980 = vmatprep.mubr.bf16.mxu0 0
  %981 = vmatmul.mubr.bf16.gmra.mxu0 %v943
  %v982 = vpop.f32.mrf.mxu0
  %v983 = vadd.f32 %v64, %v982
  %v984 = vpop.f32.mrf.mxu0
  %v985 = vpop.f32.mrf.mxu0
  %v986 = vpop.f32.mrf.mxu0
  %987 = vdwg.mxu0
  %v988 = vmax.f32 %v983, 0.0
  %v989 = vpack.c.bf16 %v988, %v988
  %v990 = vld [vmem:[%s10] sm:$0xff]
  %v991 = vld [vmem:[%s10 + $0x8] sm:$0xf]
  %v992 = vld [vmem:[%s10 + $0xc] sm:$0xff]
  %v993 = vld [vmem:[%s10 + $0x14] sm:$0xf]
  %v994 = vld [vmem:[%s10 + $0x18] sm:$0xff]
  %v995 = vld [vmem:[%s10 + $0x20] sm:$0xf]
  %v996 = vld [vmem:[%s10 + $0x24] sm:$0xff]
  %v997 = vld [vmem:[%s10 + $0x2c] sm:$0xf]
  %v998 = vld [vmem:[%s10 + $0x30] sm:$0xff]
  %v999 = vld [vmem:[%s10 + $0x38] sm:$0xf]
  %v1000 = vld [vmem:[%s10 + $0x3c] sm:$0xff]
  %v1001 = vld [vmem:[%s10 + $0x44] sm:$0xf]
  %v1002 = vld [vmem:[%s10 + $0x48] sm:$0x11]
  %v1003 = vld [vmem:[%s10 + $0x50] sm:$0x1]
  %v1018 = vunpack.c.l.b16 %v990
  %v1019 = vunpack.c.h.b16 %v990
  %v1020 = vunpack.c.l.b16 %v991
  %v1021 = vunpack.c.l.b16 %v992
  %v1022 = vunpack.c.h.b16 %v992
  %v1023 = vunpack.c.l.b16 %v993
  %v1024 = vunpack.c.l.b16 %v994
  %v1025 = vunpack.c.h.b16 %v994
  %v1026 = vunpack.c.l.b16 %v995
  %v1027 = vunpack.c.l.b16 %v996
  %v1028 = vunpack.c.h.b16 %v996
  %v1029 = vunpack.c.l.b16 %v997
  %v1030 = vunpack.c.l.b16 %v998
  %v1031 = vunpack.c.h.b16 %v998
  %v1032 = vunpack.c.l.b16 %v999
  %v1033 = vunpack.c.l.b16 %v1000
  %v1034 = vunpack.c.h.b16 %v1000
  %v1035 = vunpack.c.l.b16 %v1001
  %v1036 = vunpack.c.l.b16 %v1002
  %v1037 = vunpack.c.h.b16 %v1002
  %v1038 = vunpack.c.l.b16 %v1003
  %v1039 = vpack.c.b16 %v1021, %v1018
  %v1040 = vpack.c.b16 %v1022, %v1019
  %v1041 = vpack.c.b16 %v1023, %v1020
  %v1042 = vpack.c.b16 %v1027, %v1024
  %v1043 = vpack.c.b16 %v1028, %v1025
  %v1044 = vpack.c.b16 %v1029, %v1026
  %v1045 = vpack.c.b16 %v1033, %v1030
  %v1046 = vpack.c.b16 %v1034, %v1031
  %v1047 = vpack.c.b16 %v1035, %v1032
  %v1048 = vpack.c.b16 %v1036, %v1036
  %v1049 = vpack.c.b16 %v1037, %v1037
  %v1050 = vpack.c.b16 %v1038, %v1038
  %v1061 = vsel %vm243, %v989, 0
  %v1064 = vsel %vm247, %v1048, 0
  %v1067 = vsel %vm247, %v1049, 0
  %v1070 = vsel %vm247, %v1050, 0
  %1072 = vmatprep.subr.bf16.mxu0 0
  %1073 = vmatpush1.bf16.msra.mxu0 0
  %1074 = vmatprep.subr.bf16.mxu0 0
  %1075 = vmatpush1.bf16.msra.mxu0 0
  %1076 = vmatprep.subr.bf16.mxu0 0
  %1077 = vmatpush1.bf16.msra.mxu0 0
  %1078 = vmatprep.subr.bf16.mxu0 0
  %1079 = vmatpush1.bf16.msra.mxu0 0
  %1080 = vmatprep.subr.bf16.mxu0 %v1067
  %1081 = vmatpush1.bf16.msra.mxu0 %v1064
  %1082 = vmatprep.subr.bf16.mxu0 %v1046
  %1083 = vmatpush1.bf16.msra.mxu0 %v1045
  %1084 = vmatprep.subr.bf16.mxu0 %v1043
  %1085 = vmatpush1.bf16.msra.mxu0 %v1042
  %1086 = vmatprep.subr.bf16.mxu0 %v1040
  %1087 = vmatpush1.bf16.msra.mxu0 %v1039
  %1088 = vmatprep.subr.bf16.mxu0 0
  %1089 = vmatpush2.bf16.msra.mxu0 0
  %1090 = vmatprep.subr.bf16.mxu0 0
  %1091 = vmatpush2.bf16.msra.mxu0 0
  %1092 = vmatprep.subr.bf16.mxu0 0
  %1093 = vmatpush2.bf16.msra.mxu0 0
  %1094 = vmatprep.subr.bf16.mxu0 0
  %1095 = vmatpush2.bf16.msra.mxu0 0
  %1096 = vmatprep.subr.bf16.mxu0 0
  %1097 = vmatpush2.bf16.msra.mxu0 0
  %1098 = vmatprep.subr.bf16.mxu0 0
  %1099 = vmatpush2.bf16.msra.mxu0 0
  %1100 = vmatprep.subr.bf16.mxu0 0
  %1101 = vmatpush2.bf16.msra.mxu0 0
  %1102 = vmatprep.subr.bf16.mxu0 0
  %1103 = vmatpush2.bf16.msra.mxu0 0
  %1104 = vmatprep.mubr.bf16.mxu0 0
  %1105 = vmatmul.mubr.bf16.gmra.mxu0 %v1061
  %v1106 = vpop.f32.mrf.mxu0
  %v1107 = vadd.f32 %v71, %v1106
  %v1108 = vpop.f32.mrf.mxu0
  %v1109 = vadd.f32 %v75, %v1108
  %v1110 = vpop.f32.mrf.mxu0
  %v1111 = vpop.f32.mrf.mxu0
  %1112 = vdwg.mxu0
  %1113 = vmatprep.subr.bf16.mxu0 0
  %1114 = vmatpush1.bf16.msra.mxu0 0
  %1115 = vmatprep.subr.bf16.mxu0 0
  %1116 = vmatpush1.bf16.msra.mxu0 0
  %1117 = vmatprep.subr.bf16.mxu0 0
  %1118 = vmatpush1.bf16.msra.mxu0 0
  %1119 = vmatprep.subr.bf16.mxu0 0
  %1120 = vmatpush1.bf16.msra.mxu0 0
  %1121 = vmatprep.subr.bf16.mxu0 0
  %1122 = vmatpush1.bf16.msra.mxu0 %v1070
  %1123 = vmatprep.subr.bf16.mxu0 0
  %1124 = vmatpush1.bf16.msra.mxu0 %v1047
  %1125 = vmatprep.subr.bf16.mxu0 0
  %1126 = vmatpush1.bf16.msra.mxu0 %v1044
  %1127 = vmatprep.subr.bf16.mxu0 0
  %1128 = vmatpush1.bf16.msra.mxu0 %v1041
  %1129 = vmatprep.subr.bf16.mxu0 0
  %1130 = vmatpush2.bf16.msra.mxu0 0
  %1131 = vmatprep.subr.bf16.mxu0 0
  %1132 = vmatpush2.bf16.msra.mxu0 0
  %1133 = vmatprep.subr.bf16.mxu0 0
  %1134 = vmatpush2.bf16.msra.mxu0 0
  %1135 = vmatprep.subr.bf16.mxu0 0
  %1136 = vmatpush2.bf16.msra.mxu0 0
  %1137 = vmatprep.subr.bf16.mxu0 0
  %1138 = vmatpush2.bf16.msra.mxu0 0
  %1139 = vmatprep.subr.bf16.mxu0 0
  %1140 = vmatpush2.bf16.msra.mxu0 0
  %1141 = vmatprep.subr.bf16.mxu0 0
  %1142 = vmatpush2.bf16.msra.mxu0 0
  %1143 = vmatprep.subr.bf16.mxu0 0
  %1144 = vmatpush2.bf16.msra.mxu0 0
  %1145 = vmatprep.mubr.bf16.mxu0 0
  %1146 = vmatmul.mubr.bf16.gmra.mxu0 %v1061
  %v1147 = vpop.f32.mrf.mxu0
  %v1148 = vadd.f32 %v79, %v1147
  %v1149 = vpop.f32.mrf.mxu0
  %v1150 = vpop.f32.mrf.mxu0
  %v1151 = vpop.f32.mrf.mxu0
  %1152 = vdwg.mxu0
  %v1153 = vtanh.pop %v1107
  %v1154 = vtanh.pop %v1109
  %v1155 = vtanh.pop %v1148
  %s1156 = scalar_lea.vmem %s1, 12
  %v1157 = vld [vmem:[%s1156] sm:$0xff]
  %v1158 = vld [vmem:[%s1156 + $0x8] sm:$0xf]
  %v1160 = vcombine.high %v1157, %v1157
  %v1162 = vmul.f32 %v1153, %v1157
  %v1163 = vmul.f32 %v1154, %v1160
  %v1164 = vmul.f32 %v1155, %v1158
  %v1165 = vpack.c.bf16 %v1162, %v1162
  %v1166 = vpack.c.bf16 %v1163, %v1163
  %v1167 = vpack.c.bf16 %v1164, %v1164
  %v1168 = vld [vmem:[%s12] sm:$0xf]
  %v1169 = vld [vmem:[%s12 + $0x4] sm:$0xf]
  %v1170 = vld [vmem:[%s12 + $0x8] sm:$0xf]
  %v1171 = vld [vmem:[%s12 + $0xc] sm:$0xf]
  %v1172 = vld [vmem:[%s12 + $0x10] sm:$0xf]
  %v1173 = vld [vmem:[%s12 + $0x14] sm:$0xf]
  %v1174 = vld [vmem:[%s12 + $0x18] sm:$0xf]
  %v1175 = vld [vmem:[%s12 + $0x1c] sm:$0xf]
  %v1176 = vld [vmem:[%s12 + $0x20] sm:$0xf]
  %v1177 = vld [vmem:[%s12 + $0x24] sm:$0xf]
  %v1178 = vld [vmem:[%s12 + $0x28] sm:$0xf]
  %v1179 = vld [vmem:[%s12 + $0x2c] sm:$0xf]
  %v1180 = vld [vmem:[%s12 + $0x30] sm:$0xf]
  %v1181 = vld [vmem:[%s12 + $0x34] sm:$0xf]
  %v1182 = vld [vmem:[%s12 + $0x38] sm:$0xf]
  %v1183 = vld [vmem:[%s12 + $0x3c] sm:$0xf]
  %v1184 = vld [vmem:[%s12 + $0x40] sm:$0xf]
  %v1185 = vld [vmem:[%s12 + $0x44] sm:$0xf]
  %v1186 = vld [vmem:[%s12 + $0x48] sm:$0xf]
  %v1187 = vld [vmem:[%s12 + $0x4c] sm:$0xf]
  %v1188 = vld [vmem:[%s12 + $0x50] sm:$0xf]
  %v1189 = vld [vmem:[%s12 + $0x54] sm:$0xf]
  %v1190 = vld [vmem:[%s12 + $0x58] sm:$0xf]
  %v1191 = vld [vmem:[%s12 + $0x5c] sm:$0xf]
  %v1192 = vld [vmem:[%s12 + $0x60] sm:$0xf]
  %v1193 = vld [vmem:[%s12 + $0x64] sm:$0xf]
  %v1194 = vld [vmem:[%s12 + $0x68] sm:$0xf]
  %v1195 = vld [vmem:[%s12 + $0x6c] sm:$0xf]
  %v1196 = vld [vmem:[%s12 + $0x70] sm:$0xf]
  %v1197 = vld [vmem:[%s12 + $0x74] sm:$0xf]
  %v1198 = vld [vmem:[%s12 + $0x78] sm:$0xf]
  %v1199 = vld [vmem:[%s12 + $0x7c] sm:$0xf]
  %v1200 = vld [vmem:[%s12 + $0x80] sm:$0xf]
  %v1201 = vld [vmem:[%s12 + $0x84] sm:$0xf]
  %v1202 = vld [vmem:[%s12 + $0x88] sm:$0xf]
  %v1203 = vld [vmem:[%s12 + $0x8c] sm:$0xf]
  %v1240 = vunpack.c.l.b16 %v1168
  %v1241 = vunpack.c.l.b16 %v1169
  %v1242 = vunpack.c.l.b16 %v1170
  %v1243 = vunpack.c.l.b16 %v1171
  %v1244 = vunpack.c.l.b16 %v1172
  %v1245 = vunpack.c.l.b16 %v1173
  %v1246 = vunpack.c.l.b16 %v1174
  %v1247 = vunpack.c.l.b16 %v1175
  %v1248 = vunpack.c.l.b16 %v1176
  %v1249 = vunpack.c.l.b16 %v1177
  %v1250 = vunpack.c.l.b16 %v1178
  %v1251 = vunpack.c.l.b16 %v1179
  %v1252 = vunpack.c.l.b16 %v1180
  %v1253 = vunpack.c.l.b16 %v1181
  %v1254 = vunpack.c.l.b16 %v1182
  %v1255 = vunpack.c.l.b16 %v1183
  %v1256 = vunpack.c.l.b16 %v1184
  %v1257 = vunpack.c.l.b16 %v1185
  %v1258 = vunpack.c.l.b16 %v1186
  %v1259 = vunpack.c.l.b16 %v1187
  %v1260 = vunpack.c.l.b16 %v1188
  %v1261 = vunpack.c.l.b16 %v1189
  %v1262 = vunpack.c.l.b16 %v1190
  %v1263 = vunpack.c.l.b16 %v1191
  %v1264 = vunpack.c.l.b16 %v1192
  %v1265 = vunpack.c.l.b16 %v1193
  %v1266 = vunpack.c.l.b16 %v1194
  %v1267 = vunpack.c.l.b16 %v1195
  %v1268 = vunpack.c.l.b16 %v1196
  %v1269 = vunpack.c.l.b16 %v1197
  %v1270 = vunpack.c.l.b16 %v1198
  %v1271 = vunpack.c.l.b16 %v1199
  %v1272 = vunpack.c.l.b16 %v1200
  %v1273 = vunpack.c.l.b16 %v1201
  %v1274 = vunpack.c.l.b16 %v1202
  %v1275 = vunpack.c.l.b16 %v1203
  %v1276 = vpack.c.b16 %v1241, %v1240
  %v1277 = vpack.c.b16 %v1243, %v1242
  %v1278 = vpack.c.b16 %v1245, %v1244
  %v1279 = vpack.c.b16 %v1247, %v1246
  %v1280 = vpack.c.b16 %v1249, %v1248
  %v1281 = vpack.c.b16 %v1251, %v1250
  %v1282 = vpack.c.b16 %v1253, %v1252
  %v1283 = vpack.c.b16 %v1255, %v1254
  %v1284 = vpack.c.b16 %v1257, %v1256
  %v1285 = vpack.c.b16 %v1259, %v1258
  %v1286 = vpack.c.b16 %v1261, %v1260
  %v1287 = vpack.c.b16 %v1263, %v1262
  %v1288 = vpack.c.b16 %v1265, %v1264
  %v1289 = vpack.c.b16 %v1267, %v1266
  %v1290 = vpack.c.b16 %v1269, %v1268
  %v1291 = vpack.c.b16 %v1271, %v1270
  %v1292 = vpack.c.b16 %v1273, %v1272
  %v1293 = vpack.c.b16 %v1275, %v1274
  %v1313 = vsel %vm169, %v1167, 0
  %1315 = vmatprep.subr.bf16.mxu0 0
  %1316 = vmatpush1.bf16.msra.mxu0 %v1283
  %1317 = vmatprep.subr.bf16.mxu0 0
  %1318 = vmatpush1.bf16.msra.mxu0 %v1282
  %1319 = vmatprep.subr.bf16.mxu0 0
  %1320 = vmatpush1.bf16.msra.mxu0 %v1281
  %1321 = vmatprep.subr.bf16.mxu0 0
  %1322 = vmatpush1.bf16.msra.mxu0 %v1280
  %1323 = vmatprep.subr.bf16.mxu0 0
  %1324 = vmatpush1.bf16.msra.mxu0 %v1279
  %1325 = vmatprep.subr.bf16.mxu0 0
  %1326 = vmatpush1.bf16.msra.mxu0 %v1278
  %1327 = vmatprep.subr.bf16.mxu0 0
  %1328 = vmatpush1.bf16.msra.mxu0 %v1277
  %1329 = vmatprep.subr.bf16.mxu0 0
  %1330 = vmatpush1.bf16.msra.mxu0 %v1276
  %1331 = vmatprep.subr.bf16.mxu0 0
  %1332 = vmatpush2.bf16.msra.mxu0 %v1291
  %1333 = vmatprep.subr.bf16.mxu0 0
  %1334 = vmatpush2.bf16.msra.mxu0 %v1290
  %1335 = vmatprep.subr.bf16.mxu0 0
  %1336 = vmatpush2.bf16.msra.mxu0 %v1289
  %1337 = vmatprep.subr.bf16.mxu0 0
  %1338 = vmatpush2.bf16.msra.mxu0 %v1288
  %1339 = vmatprep.subr.bf16.mxu0 0
  %1340 = vmatpush2.bf16.msra.mxu0 %v1287
  %1341 = vmatprep.subr.bf16.mxu0 0
  %1342 = vmatpush2.bf16.msra.mxu0 %v1286
  %1343 = vmatprep.subr.bf16.mxu0 0
  %1344 = vmatpush2.bf16.msra.mxu0 %v1285
  %1345 = vmatprep.subr.bf16.mxu0 0
  %1346 = vmatpush2.bf16.msra.mxu0 %v1284
  %1347 = vmatprep.mubr.bf16.mxu0 %v1166
  %1348 = vmatmul.mubr.bf16.gmra.mxu0 %v1165
  %v1349 = vpop.f32.mrf.mxu0
  %v1350 = vadd.f32 0.0, %v1349
  %v1351 = vpop.f32.mrf.mxu0
  %v1352 = vpop.f32.mrf.mxu0
  %v1353 = vpop.f32.mrf.mxu0
  %1354 = vdwg.mxu0
  %1355 = vmatprep.subr.bf16.mxu0 0
  %1356 = vmatpush1.bf16.msra.mxu0 0
  %1357 = vmatprep.subr.bf16.mxu0 0
  %1358 = vmatpush1.bf16.msra.mxu0 0
  %1359 = vmatprep.subr.bf16.mxu0 0
  %1360 = vmatpush1.bf16.msra.mxu0 0
  %1361 = vmatprep.subr.bf16.mxu0 0
  %1362 = vmatpush1.bf16.msra.mxu0 0
  %1363 = vmatprep.subr.bf16.mxu0 0
  %1364 = vmatpush1.bf16.msra.mxu0 0
  %1365 = vmatprep.subr.bf16.mxu0 0
  %1366 = vmatpush1.bf16.msra.mxu0 0
  %1367 = vmatprep.subr.bf16.mxu0 0
  %1368 = vmatpush1.bf16.msra.mxu0 %v1293
  %1369 = vmatprep.subr.bf16.mxu0 0
  %1370 = vmatpush1.bf16.msra.mxu0 %v1292
  %1371 = vmatprep.subr.bf16.mxu0 0
  %1372 = vmatpush2.bf16.msra.mxu0 0
  %1373 = vmatprep.subr.bf16.mxu0 0
  %1374 = vmatpush2.bf16.msra.mxu0 0
  %1375 = vmatprep.subr.bf16.mxu0 0
  %1376 = vmatpush2.bf16.msra.mxu0 0
  %1377 = vmatprep.subr.bf16.mxu0 0
  %1378 = vmatpush2.bf16.msra.mxu0 0
  %1379 = vmatprep.subr.bf16.mxu0 0
  %1380 = vmatpush2.bf16.msra.mxu0 0
  %1381 = vmatprep.subr.bf16.mxu0 0
  %1382 = vmatpush2.bf16.msra.mxu0 0
  %1383 = vmatprep.subr.bf16.mxu0 0
  %1384 = vmatpush2.bf16.msra.mxu0 0
  %1385 = vmatprep.subr.bf16.mxu0 0
  %1386 = vmatpush2.bf16.msra.mxu0 0
  %1387 = vmatprep.mubr.bf16.mxu0 0
  %1388 = vmatmul.mubr.bf16.gmra.mxu0 %v1313
  %v1389 = vpop.f32.mrf.mxu0
  %v1390 = vadd.f32 %v1350, %v1389
  %v1391 = vpop.f32.mrf.mxu0
  %v1392 = vpop.f32.mrf.mxu0
  %v1393 = vpop.f32.mrf.mxu0
  %1394 = vdwg.mxu0
  %v1395 = vadd.f32 %v773, %v1390
  %s1396 = scalar_lea.vmem %s13, 8
  %1397 = vst.msk [vmem:[%s1396] sm:$0xf] %vm150, %v1395
  %v1398 = vpack.c.bf16 %v1395, %v1395
  %v1399 = vld [vmem:[%s4] sm:$0xf]
  %v1400 = vld [vmem:[%s4 + $0x4] sm:$0xf]
  %v1401 = vld [vmem:[%s4 + $0x8] sm:$0xf]
  %v1402 = vld [vmem:[%s4 + $0xc] sm:$0xf]
  %v1407 = vunpack.c.l.b16 %v1399
  %v1408 = vunpack.c.l.b16 %v1400
  %v1409 = vunpack.c.l.b16 %v1401
  %v1410 = vunpack.c.l.b16 %v1402
  %v1411 = vpack.c.b16 %v1408, %v1407
  %v1412 = vpack.c.b16 %v1410, %v1409
  %v1416 = vsel %vm169, %v1398, 0
  %1418 = vmatprep.subr.bf16.mxu0 0
  %1419 = vmatpush1.bf16.msra.mxu0 0
  %1420 = vmatprep.subr.bf16.mxu0 0
  %1421 = vmatpush1.bf16.msra.mxu0 0
  %1422 = vmatprep.subr.bf16.mxu0 0
  %1423 = vmatpush1.bf16.msra.mxu0 0
  %1424 = vmatprep.subr.bf16.mxu0 0
  %1425 = vmatpush1.bf16.msra.mxu0 0
  %1426 = vmatprep.subr.bf16.mxu0 0
  %1427 = vmatpush1.bf16.msra.mxu0 0
  %1428 = vmatprep.subr.bf16.mxu0 0
  %1429 = vmatpush1.bf16.msra.mxu0 0
  %1430 = vmatprep.subr.bf16.mxu0 0
  %1431 = vmatpush1.bf16.msra.mxu0 %v1412
  %1432 = vmatprep.subr.bf16.mxu0 0
  %1433 = vmatpush1.bf16.msra.mxu0 %v1411
  %1434 = vmatprep.subr.bf16.mxu0 0
  %1435 = vmatpush2.bf16.msra.mxu0 0
  %1436 = vmatprep.subr.bf16.mxu0 0
  %1437 = vmatpush2.bf16.msra.mxu0 0
  %1438 = vmatprep.subr.bf16.mxu0 0
  %1439 = vmatpush2.bf16.msra.mxu0 0
  %1440 = vmatprep.subr.bf16.mxu0 0
  %1441 = vmatpush2.bf16.msra.mxu0 0
  %1442 = vmatprep.subr.bf16.mxu0 0
  %1443 = vmatpush2.bf16.msra.mxu0 0
  %1444 = vmatprep.subr.bf16.mxu0 0
  %1445 = vmatpush2.bf16.msra.mxu0 0
  %1446 = vmatprep.subr.bf16.mxu0 0
  %1447 = vmatpush2.bf16.msra.mxu0 0
  %1448 = vmatprep.subr.bf16.mxu0 0
  %1449 = vmatpush2.bf16.msra.mxu0 0
  %1450 = vmatprep.mubr.bf16.mxu0 0
  %1451 = vmatmul.mubr.bf16.gmra.mxu0 %v1416
  %v1452 = vpop.f32.mrf.mxu0
  %v1453 = vadd.f32 %v50, %v1452
  %v1454 = vpop.f32.mrf.mxu0
  %v1455 = vpop.f32.mrf.mxu0
  %v1456 = vpop.f32.mrf.mxu0
  %1457 = vdwg.mxu0
  %v1458 = vmax.f32 %v1453, 0.0
  %v1459 = vpack.c.bf16 %v1458, %v1458
  %v1460 = vld [vmem:[%s6] sm:$0xf]
  %v1461 = vld [vmem:[%s6 + $0x4] sm:$0xf]
  %v1462 = vld [vmem:[%s6 + $0x8] sm:$0xf]
  %v1463 = vld [vmem:[%s6 + $0xc] sm:$0xf]
  %v1464 = vld [vmem:[%s6 + $0x10] sm:$0xf]
  %v1465 = vld [vmem:[%s6 + $0x14] sm:$0xf]
  %v1466 = vld [vmem:[%s6 + $0x18] sm:$0x1]
  %v1474 = vunpack.c.l.b16 %v1460
  %v1475 = vunpack.c.l.b16 %v1461
  %v1476 = vunpack.c.l.b16 %v1462
  %v1477 = vunpack.c.l.b16 %v1463
  %v1478 = vunpack.c.l.b16 %v1464
  %v1479 = vunpack.c.l.b16 %v1465
  %v1480 = vunpack.c.l.b16 %v1466
  %v1481 = vpack.c.b16 %v1475, %v1474
  %v1482 = vpack.c.b16 %v1477, %v1476
  %v1483 = vpack.c.b16 %v1479, %v1478
  %v1484 = vpack.c.b16 %v1480, %v1480
  %v1489 = vsel %vm243, %v1459, 0
  %v1492 = vsel %vm247, %v1484, 0
  %1494 = vmatprep.subr.bf16.mxu0 0
  %1495 = vmatpush1.bf16.msra.mxu0 0
  %1496 = vmatprep.subr.bf16.mxu0 0
  %1497 = vmatpush1.bf16.msra.mxu0 0
  %1498 = vmatprep.subr.bf16.mxu0 0
  %1499 = vmatpush1.bf16.msra.mxu0 0
  %1500 = vmatprep.subr.bf16.mxu0 0
  %1501 = vmatpush1.bf16.msra.mxu0 0
  %1502 = vmatprep.subr.bf16.mxu0 0
  %1503 = vmatpush1.bf16.msra.mxu0 %v1492
  %1504 = vmatprep.subr.bf16.mxu0 0
  %1505 = vmatpush1.bf16.msra.mxu0 %v1483
  %1506 = vmatprep.subr.bf16.mxu0 0
  %1507 = vmatpush1.bf16.msra.mxu0 %v1482
  %1508 = vmatprep.subr.bf16.mxu0 0
  %1509 = vmatpush1.bf16.msra.mxu0 %v1481
  %1510 = vmatprep.subr.bf16.mxu0 0
  %1511 = vmatpush2.bf16.msra.mxu0 0
  %1512 = vmatprep.subr.bf16.mxu0 0
  %1513 = vmatpush2.bf16.msra.mxu0 0
  %1514 = vmatprep.subr.bf16.mxu0 0
  %1515 = vmatpush2.bf16.msra.mxu0 0
  %1516 = vmatprep.subr.bf16.mxu0 0
  %1517 = vmatpush2.bf16.msra.mxu0 0
  %1518 = vmatprep.subr.bf16.mxu0 0
  %1519 = vmatpush2.bf16.msra.mxu0 0
  %1520 = vmatprep.subr.bf16.mxu0 0
  %1521 = vmatpush2.bf16.msra.mxu0 0
  %1522 = vmatprep.subr.bf16.mxu0 0
  %1523 = vmatpush2.bf16.msra.mxu0 0
  %1524 = vmatprep.subr.bf16.mxu0 0
  %1525 = vmatpush2.bf16.msra.mxu0 0
  %1526 = vmatprep.mubr.bf16.mxu0 0
  %1527 = vmatmul.mubr.bf16.gmra.mxu0 %v1489
  %v1528 = vpop.f32.mrf.mxu0
  %v1529 = vadd.f32 %v57, %v1528
  %v1530 = vpop.f32.mrf.mxu0
  %v1531 = vpop.f32.mrf.mxu0
  %v1532 = vpop.f32.mrf.mxu0
  %1533 = vdwg.mxu0
  %v1534 = vmax.f32 %v1529, 0.0
  %v1535 = vpack.c.bf16 %v1534, %v1534
  %v1536 = vld [vmem:[%s8] sm:$0xf]
  %v1537 = vld [vmem:[%s8 + $0x4] sm:$0xf]
  %v1538 = vld [vmem:[%s8 + $0x8] sm:$0xf]
  %v1539 = vld [vmem:[%s8 + $0xc] sm:$0xf]
  %v1540 = vld [vmem:[%s8 + $0x10] sm:$0xf]
  %v1541 = vld [vmem:[%s8 + $0x14] sm:$0xf]
  %v1542 = vld [vmem:[%s8 + $0x18] sm:$0x1]
  %v1550 = vunpack.c.l.b16 %v1536
  %v1551 = vunpack.c.l.b16 %v1537
  %v1552 = vunpack.c.l.b16 %v1538
  %v1553 = vunpack.c.l.b16 %v1539
  %v1554 = vunpack.c.l.b16 %v1540
  %v1555 = vunpack.c.l.b16 %v1541
  %v1556 = vunpack.c.l.b16 %v1542
  %v1557 = vpack.c.b16 %v1551, %v1550
  %v1558 = vpack.c.b16 %v1553, %v1552
  %v1559 = vpack.c.b16 %v1555, %v1554
  %v1560 = vpack.c.b16 %v1556, %v1556
  %v1565 = vsel %vm243, %v1535, 0
  %v1568 = vsel %vm247, %v1560, 0
  %1570 = vmatprep.subr.bf16.mxu0 0
  %1571 = vmatpush1.bf16.msra.mxu0 0
  %1572 = vmatprep.subr.bf16.mxu0 0
  %1573 = vmatpush1.bf16.msra.mxu0 0
  %1574 = vmatprep.subr.bf16.mxu0 0
  %1575 = vmatpush1.bf16.msra.mxu0 0
  %1576 = vmatprep.subr.bf16.mxu0 0
  %1577 = vmatpush1.bf16.msra.mxu0 0
  %1578 = vmatprep.subr.bf16.mxu0 0
  %1579 = vmatpush1.bf16.msra.mxu0 %v1568
  %1580 = vmatprep.subr.bf16.mxu0 0
  %1581 = vmatpush1.bf16.msra.mxu0 %v1559
  %1582 = vmatprep.subr.bf16.mxu0 0
  %1583 = vmatpush1.bf16.msra.mxu0 %v1558
  %1584 = vmatprep.subr.bf16.mxu0 0
  %1585 = vmatpush1.bf16.msra.mxu0 %v1557
  %1586 = vmatprep.subr.bf16.mxu0 0
  %1587 = vmatpush2.bf16.msra.mxu0 0
  %1588 = vmatprep.subr.bf16.mxu0 0
  %1589 = vmatpush2.bf16.msra.mxu0 0
  %1590 = vmatprep.subr.bf16.mxu0 0
  %1591 = vmatpush2.bf16.msra.mxu0 0
  %1592 = vmatprep.subr.bf16.mxu0 0
  %1593 = vmatpush2.bf16.msra.mxu0 0
  %1594 = vmatprep.subr.bf16.mxu0 0
  %1595 = vmatpush2.bf16.msra.mxu0 0
  %1596 = vmatprep.subr.bf16.mxu0 0
  %1597 = vmatpush2.bf16.msra.mxu0 0
  %1598 = vmatprep.subr.bf16.mxu0 0
  %1599 = vmatpush2.bf16.msra.mxu0 0
  %1600 = vmatprep.subr.bf16.mxu0 0
  %1601 = vmatpush2.bf16.msra.mxu0 0
  %1602 = vmatprep.mubr.bf16.mxu0 0
  %1603 = vmatmul.mubr.bf16.gmra.mxu0 %v1565
  %v1604 = vpop.f32.mrf.mxu0
  %v1605 = vadd.f32 %v64, %v1604
  %v1606 = vpop.f32.mrf.mxu0
  %v1607 = vpop.f32.mrf.mxu0
  %v1608 = vpop.f32.mrf.mxu0
  %1609 = vdwg.mxu0
  %v1610 = vmax.f32 %v1605, 0.0
  %v1611 = vpack.c.bf16 %v1610, %v1610
  %v1612 = vld [vmem:[%s10] sm:$0xff]
  %v1613 = vld [vmem:[%s10 + $0x8] sm:$0xf]
  %v1614 = vld [vmem:[%s10 + $0xc] sm:$0xff]
  %v1615 = vld [vmem:[%s10 + $0x14] sm:$0xf]
  %v1616 = vld [vmem:[%s10 + $0x18] sm:$0xff]
  %v1617 = vld [vmem:[%s10 + $0x20] sm:$0xf]
  %v1618 = vld [vmem:[%s10 + $0x24] sm:$0xff]
  %v1619 = vld [vmem:[%s10 + $0x2c] sm:$0xf]
  %v1620 = vld [vmem:[%s10 + $0x30] sm:$0xff]
  %v1621 = vld [vmem:[%s10 + $0x38] sm:$0xf]
  %v1622 = vld [vmem:[%s10 + $0x3c] sm:$0xff]
  %v1623 = vld [vmem:[%s10 + $0x44] sm:$0xf]
  %v1624 = vld [vmem:[%s10 + $0x48] sm:$0x11]
  %v1625 = vld [vmem:[%s10 + $0x50] sm:$0x1]
  %v1640 = vunpack.c.l.b16 %v1612
  %v1641 = vunpack.c.h.b16 %v1612
  %v1642 = vunpack.c.l.b16 %v1613
  %v1643 = vunpack.c.l.b16 %v1614
  %v1644 = vunpack.c.h.b16 %v1614
  %v1645 = vunpack.c.l.b16 %v1615
  %v1646 = vunpack.c.l.b16 %v1616
  %v1647 = vunpack.c.h.b16 %v1616
  %v1648 = vunpack.c.l.b16 %v1617
  %v1649 = vunpack.c.l.b16 %v1618
  %v1650 = vunpack.c.h.b16 %v1618
  %v1651 = vunpack.c.l.b16 %v1619
  %v1652 = vunpack.c.l.b16 %v1620
  %v1653 = vunpack.c.h.b16 %v1620
  %v1654 = vunpack.c.l.b16 %v1621
  %v1655 = vunpack.c.l.b16 %v1622
  %v1656 = vunpack.c.h.b16 %v1622
  %v1657 = vunpack.c.l.b16 %v1623
  %v1658 = vunpack.c.l.b16 %v1624
  %v1659 = vunpack.c.h.b16 %v1624
  %v1660 = vunpack.c.l.b16 %v1625
  %v1661 = vpack.c.b16 %v1643, %v1640
  %v1662 = vpack.c.b16 %v1644, %v1641
  %v1663 = vpack.c.b16 %v1645, %v1642
  %v1664 = vpack.c.b16 %v1649, %v1646
  %v1665 = vpack.c.b16 %v1650, %v1647
  %v1666 = vpack.c.b16 %v1651, %v1648
  %v1667 = vpack.c.b16 %v1655, %v1652
  %v1668 = vpack.c.b16 %v1656, %v1653
  %v1669 = vpack.c.b16 %v1657, %v1654
  %v1670 = vpack.c.b16 %v1658, %v1658
  %v1671 = vpack.c.b16 %v1659, %v1659
  %v1672 = vpack.c.b16 %v1660, %v1660
  %v1683 = vsel %vm243, %v1611, 0
  %v1686 = vsel %vm247, %v1670, 0
  %v1689 = vsel %vm247, %v1671, 0
  %v1692 = vsel %vm247, %v1672, 0
  %1694 = vmatprep.subr.bf16.mxu0 0
  %1695 = vmatpush1.bf16.msra.mxu0 0
  %1696 = vmatprep.subr.bf16.mxu0 0
  %1697 = vmatpush1.bf16.msra.mxu0 0
  %1698 = vmatprep.subr.bf16.mxu0 0
  %1699 = vmatpush1.bf16.msra.mxu0 0
  %1700 = vmatprep.subr.bf16.mxu0 0
  %1701 = vmatpush1.bf16.msra.mxu0 0
  %1702 = vmatprep.subr.bf16.mxu0 %v1689
  %1703 = vmatpush1.bf16.msra.mxu0 %v1686
  %1704 = vmatprep.subr.bf16.mxu0 %v1668
  %1705 = vmatpush1.bf16.msra.mxu0 %v1667
  %1706 = vmatprep.subr.bf16.mxu0 %v1665
  %1707 = vmatpush1.bf16.msra.mxu0 %v1664
  %1708 = vmatprep.subr.bf16.mxu0 %v1662
  %1709 = vmatpush1.bf16.msra.mxu0 %v1661
  %1710 = vmatprep.subr.bf16.mxu0 0
  %1711 = vmatpush2.bf16.msra.mxu0 0
  %1712 = vmatprep.subr.bf16.mxu0 0
  %1713 = vmatpush2.bf16.msra.mxu0 0
  %1714 = vmatprep.subr.bf16.mxu0 0
  %1715 = vmatpush2.bf16.msra.mxu0 0
  %1716 = vmatprep.subr.bf16.mxu0 0
  %1717 = vmatpush2.bf16.msra.mxu0 0
  %1718 = vmatprep.subr.bf16.mxu0 0
  %1719 = vmatpush2.bf16.msra.mxu0 0
  %1720 = vmatprep.subr.bf16.mxu0 0
  %1721 = vmatpush2.bf16.msra.mxu0 0
  %1722 = vmatprep.subr.bf16.mxu0 0
  %1723 = vmatpush2.bf16.msra.mxu0 0
  %1724 = vmatprep.subr.bf16.mxu0 0
  %1725 = vmatpush2.bf16.msra.mxu0 0
  %1726 = vmatprep.mubr.bf16.mxu0 0
  %1727 = vmatmul.mubr.bf16.gmra.mxu0 %v1683
  %v1728 = vpop.f32.mrf.mxu0
  %v1729 = vadd.f32 %v71, %v1728
  %v1730 = vpop.f32.mrf.mxu0
  %v1731 = vadd.f32 %v75, %v1730
  %v1732 = vpop.f32.mrf.mxu0
  %v1733 = vpop.f32.mrf.mxu0
  %1734 = vdwg.mxu0
  %1735 = vmatprep.subr.bf16.mxu0 0
  %1736 = vmatpush1.bf16.msra.mxu0 0
  %1737 = vmatprep.subr.bf16.mxu0 0
  %1738 = vmatpush1.bf16.msra.mxu0 0
  %1739 = vmatprep.subr.bf16.mxu0 0
  %1740 = vmatpush1.bf16.msra.mxu0 0
  %1741 = vmatprep.subr.bf16.mxu0 0
  %1742 = vmatpush1.bf16.msra.mxu0 0
  %1743 = vmatprep.subr.bf16.mxu0 0
  %1744 = vmatpush1.bf16.msra.mxu0 %v1692
  %1745 = vmatprep.subr.bf16.mxu0 0
  %1746 = vmatpush1.bf16.msra.mxu0 %v1669
  %1747 = vmatprep.subr.bf16.mxu0 0
  %1748 = vmatpush1.bf16.msra.mxu0 %v1666
  %1749 = vmatprep.subr.bf16.mxu0 0
  %1750 = vmatpush1.bf16.msra.mxu0 %v1663
  %1751 = vmatprep.subr.bf16.mxu0 0
  %1752 = vmatpush2.bf16.msra.mxu0 0
  %1753 = vmatprep.subr.bf16.mxu0 0
  %1754 = vmatpush2.bf16.msra.mxu0 0
  %1755 = vmatprep.subr.bf16.mxu0 0
  %1756 = vmatpush2.bf16.msra.mxu0 0
  %1757 = vmatprep.subr.bf16.mxu0 0
  %1758 = vmatpush2.bf16.msra.mxu0 0
  %1759 = vmatprep.subr.bf16.mxu0 0
  %1760 = vmatpush2.bf16.msra.mxu0 0
  %1761 = vmatprep.subr.bf16.mxu0 0
  %1762 = vmatpush2.bf16.msra.mxu0 0
  %1763 = vmatprep.subr.bf16.mxu0 0
  %1764 = vmatpush2.bf16.msra.mxu0 0
  %1765 = vmatprep.subr.bf16.mxu0 0
  %1766 = vmatpush2.bf16.msra.mxu0 0
  %1767 = vmatprep.mubr.bf16.mxu0 0
  %1768 = vmatmul.mubr.bf16.gmra.mxu0 %v1683
  %v1769 = vpop.f32.mrf.mxu0
  %v1770 = vadd.f32 %v79, %v1769
  %v1771 = vpop.f32.mrf.mxu0
  %v1772 = vpop.f32.mrf.mxu0
  %v1773 = vpop.f32.mrf.mxu0
  %1774 = vdwg.mxu0
  %v1775 = vtanh.pop %v1729
  %v1776 = vtanh.pop %v1731
  %v1777 = vtanh.pop %v1770
  %s1778 = scalar_lea.vmem %s1, 24
  %v1779 = vld [vmem:[%s1778] sm:$0xff]
  %v1780 = vld [vmem:[%s1778 + $0x8] sm:$0xf]
  %v1782 = vcombine.high %v1779, %v1779
  %v1784 = vmul.f32 %v1775, %v1779
  %v1785 = vmul.f32 %v1776, %v1782
  %v1786 = vmul.f32 %v1777, %v1780
  %v1787 = vpack.c.bf16 %v1784, %v1784
  %v1788 = vpack.c.bf16 %v1785, %v1785
  %v1789 = vpack.c.bf16 %v1786, %v1786
  %v1790 = vld [vmem:[%s12] sm:$0xf]
  %v1791 = vld [vmem:[%s12 + $0x4] sm:$0xf]
  %v1792 = vld [vmem:[%s12 + $0x8] sm:$0xf]
  %v1793 = vld [vmem:[%s12 + $0xc] sm:$0xf]
  %v1794 = vld [vmem:[%s12 + $0x10] sm:$0xf]
  %v1795 = vld [vmem:[%s12 + $0x14] sm:$0xf]
  %v1796 = vld [vmem:[%s12 + $0x18] sm:$0xf]
  %v1797 = vld [vmem:[%s12 + $0x1c] sm:$0xf]
  %v1798 = vld [vmem:[%s12 + $0x20] sm:$0xf]
  %v1799 = vld [vmem:[%s12 + $0x24] sm:$0xf]
  %v1800 = vld [vmem:[%s12 + $0x28] sm:$0xf]
  %v1801 = vld [vmem:[%s12 + $0x2c] sm:$0xf]
  %v1802 = vld [vmem:[%s12 + $0x30] sm:$0xf]
  %v1803 = vld [vmem:[%s12 + $0x34] sm:$0xf]
  %v1804 = vld [vmem:[%s12 + $0x38] sm:$0xf]
  %v1805 = vld [vmem:[%s12 + $0x3c] sm:$0xf]
  %v1806 = vld [vmem:[%s12 + $0x40] sm:$0xf]
  %v1807 = vld [vmem:[%s12 + $0x44] sm:$0xf]
  %v1808 = vld [vmem:[%s12 + $0x48] sm:$0xf]
  %v1809 = vld [vmem:[%s12 + $0x4c] sm:$0xf]
  %v1810 = vld [vmem:[%s12 + $0x50] sm:$0xf]
  %v1811 = vld [vmem:[%s12 + $0x54] sm:$0xf]
  %v1812 = vld [vmem:[%s12 + $0x58] sm:$0xf]
  %v1813 = vld [vmem:[%s12 + $0x5c] sm:$0xf]
  %v1814 = vld [vmem:[%s12 + $0x60] sm:$0xf]
  %v1815 = vld [vmem:[%s12 + $0x64] sm:$0xf]
  %v1816 = vld [vmem:[%s12 + $0x68] sm:$0xf]
  %v1817 = vld [vmem:[%s12 + $0x6c] sm:$0xf]
  %v1818 = vld [vmem:[%s12 + $0x70] sm:$0xf]
  %v1819 = vld [vmem:[%s12 + $0x74] sm:$0xf]
  %v1820 = vld [vmem:[%s12 + $0x78] sm:$0xf]
  %v1821 = vld [vmem:[%s12 + $0x7c] sm:$0xf]
  %v1822 = vld [vmem:[%s12 + $0x80] sm:$0xf]
  %v1823 = vld [vmem:[%s12 + $0x84] sm:$0xf]
  %v1824 = vld [vmem:[%s12 + $0x88] sm:$0xf]
  %v1825 = vld [vmem:[%s12 + $0x8c] sm:$0xf]
  %v1862 = vunpack.c.l.b16 %v1790
  %v1863 = vunpack.c.l.b16 %v1791
  %v1864 = vunpack.c.l.b16 %v1792
  %v1865 = vunpack.c.l.b16 %v1793
  %v1866 = vunpack.c.l.b16 %v1794
  %v1867 = vunpack.c.l.b16 %v1795
  %v1868 = vunpack.c.l.b16 %v1796
  %v1869 = vunpack.c.l.b16 %v1797
  %v1870 = vunpack.c.l.b16 %v1798
  %v1871 = vunpack.c.l.b16 %v1799
  %v1872 = vunpack.c.l.b16 %v1800
  %v1873 = vunpack.c.l.b16 %v1801
  %v1874 = vunpack.c.l.b16 %v1802
  %v1875 = vunpack.c.l.b16 %v1803
  %v1876 = vunpack.c.l.b16 %v1804
  %v1877 = vunpack.c.l.b16 %v1805
  %v1878 = vunpack.c.l.b16 %v1806
  %v1879 = vunpack.c.l.b16 %v1807
  %v1880 = vunpack.c.l.b16 %v1808
  %v1881 = vunpack.c.l.b16 %v1809
  %v1882 = vunpack.c.l.b16 %v1810
  %v1883 = vunpack.c.l.b16 %v1811
  %v1884 = vunpack.c.l.b16 %v1812
  %v1885 = vunpack.c.l.b16 %v1813
  %v1886 = vunpack.c.l.b16 %v1814
  %v1887 = vunpack.c.l.b16 %v1815
  %v1888 = vunpack.c.l.b16 %v1816
  %v1889 = vunpack.c.l.b16 %v1817
  %v1890 = vunpack.c.l.b16 %v1818
  %v1891 = vunpack.c.l.b16 %v1819
  %v1892 = vunpack.c.l.b16 %v1820
  %v1893 = vunpack.c.l.b16 %v1821
  %v1894 = vunpack.c.l.b16 %v1822
  %v1895 = vunpack.c.l.b16 %v1823
  %v1896 = vunpack.c.l.b16 %v1824
  %v1897 = vunpack.c.l.b16 %v1825
  %v1898 = vpack.c.b16 %v1863, %v1862
  %v1899 = vpack.c.b16 %v1865, %v1864
  %v1900 = vpack.c.b16 %v1867, %v1866
  %v1901 = vpack.c.b16 %v1869, %v1868
  %v1902 = vpack.c.b16 %v1871, %v1870
  %v1903 = vpack.c.b16 %v1873, %v1872
  %v1904 = vpack.c.b16 %v1875, %v1874
  %v1905 = vpack.c.b16 %v1877, %v1876
  %v1906 = vpack.c.b16 %v1879, %v1878
  %v1907 = vpack.c.b16 %v1881, %v1880
  %v1908 = vpack.c.b16 %v1883, %v1882
  %v1909 = vpack.c.b16 %v1885, %v1884
  %v1910 = vpack.c.b16 %v1887, %v1886
  %v1911 = vpack.c.b16 %v1889, %v1888
  %v1912 = vpack.c.b16 %v1891, %v1890
  %v1913 = vpack.c.b16 %v1893, %v1892
  %v1914 = vpack.c.b16 %v1895, %v1894
  %v1915 = vpack.c.b16 %v1897, %v1896
  %v1935 = vsel %vm169, %v1789, 0
  %1937 = vmatprep.subr.bf16.mxu0 0
  %1938 = vmatpush1.bf16.msra.mxu0 %v1905
  %1939 = vmatprep.subr.bf16.mxu0 0
  %1940 = vmatpush1.bf16.msra.mxu0 %v1904
  %1941 = vmatprep.subr.bf16.mxu0 0
  %1942 = vmatpush1.bf16.msra.mxu0 %v1903
  %1943 = vmatprep.subr.bf16.mxu0 0
  %1944 = vmatpush1.bf16.msra.mxu0 %v1902
  %1945 = vmatprep.subr.bf16.mxu0 0
  %1946 = vmatpush1.bf16.msra.mxu0 %v1901
  %1947 = vmatprep.subr.bf16.mxu0 0
  %1948 = vmatpush1.bf16.msra.mxu0 %v1900
  %1949 = vmatprep.subr.bf16.mxu0 0
  %1950 = vmatpush1.bf16.msra.mxu0 %v1899
  %1951 = vmatprep.subr.bf16.mxu0 0
  %1952 = vmatpush1.bf16.msra.mxu0 %v1898
  %1953 = vmatprep.subr.bf16.mxu0 0
  %1954 = vmatpush2.bf16.msra.mxu0 %v1913
  %1955 = vmatprep.subr.bf16.mxu0 0
  %1956 = vmatpush2.bf16.msra.mxu0 %v1912
  %1957 = vmatprep.subr.bf16.mxu0 0
  %1958 = vmatpush2.bf16.msra.mxu0 %v1911
  %1959 = vmatprep.subr.bf16.mxu0 0
  %1960 = vmatpush2.bf16.msra.mxu0 %v1910
  %1961 = vmatprep.subr.bf16.mxu0 0
  %1962 = vmatpush2.bf16.msra.mxu0 %v1909
  %1963 = vmatprep.subr.bf16.mxu0 0
  %1964 = vmatpush2.bf16.msra.mxu0 %v1908
  %1965 = vmatprep.subr.bf16.mxu0 0
  %1966 = vmatpush2.bf16.msra.mxu0 %v1907
  %1967 = vmatprep.subr.bf16.mxu0 0
  %1968 = vmatpush2.bf16.msra.mxu0 %v1906
  %1969 = vmatprep.mubr.bf16.mxu0 %v1788
  %1970 = vmatmul.mubr.bf16.gmra.mxu0 %v1787
  %v1971 = vpop.f32.mrf.mxu0
  %v1972 = vadd.f32 0.0, %v1971
  %v1973 = vpop.f32.mrf.mxu0
  %v1974 = vpop.f32.mrf.mxu0
  %v1975 = vpop.f32.mrf.mxu0
  %1976 = vdwg.mxu0
  %1977 = vmatprep.subr.bf16.mxu0 0
  %1978 = vmatpush1.bf16.msra.mxu0 0
  %1979 = vmatprep.subr.bf16.mxu0 0
  %1980 = vmatpush1.bf16.msra.mxu0 0
  %1981 = vmatprep.subr.bf16.mxu0 0
  %1982 = vmatpush1.bf16.msra.mxu0 0
  %1983 = vmatprep.subr.bf16.mxu0 0
  %1984 = vmatpush1.bf16.msra.mxu0 0
  %1985 = vmatprep.subr.bf16.mxu0 0
  %1986 = vmatpush1.bf16.msra.mxu0 0
  %1987 = vmatprep.subr.bf16.mxu0 0
  %1988 = vmatpush1.bf16.msra.mxu0 0
  %1989 = vmatprep.subr.bf16.mxu0 0
  %1990 = vmatpush1.bf16.msra.mxu0 %v1915
  %1991 = vmatprep.subr.bf16.mxu0 0
  %1992 = vmatpush1.bf16.msra.mxu0 %v1914
  %1993 = vmatprep.subr.bf16.mxu0 0
  %1994 = vmatpush2.bf16.msra.mxu0 0
  %1995 = vmatprep.subr.bf16.mxu0 0
  %1996 = vmatpush2.bf16.msra.mxu0 0
  %1997 = vmatprep.subr.bf16.mxu0 0
  %1998 = vmatpush2.bf16.msra.mxu0 0
  %1999 = vmatprep.subr.bf16.mxu0 0
  %2000 = vmatpush2.bf16.msra.mxu0 0
  %2001 = vmatprep.subr.bf16.mxu0 0
  %2002 = vmatpush2.bf16.msra.mxu0 0
  %2003 = vmatprep.subr.bf16.mxu0 0
  %2004 = vmatpush2.bf16.msra.mxu0 0
  %2005 = vmatprep.subr.bf16.mxu0 0
  %2006 = vmatpush2.bf16.msra.mxu0 0
  %2007 = vmatprep.subr.bf16.mxu0 0
  %2008 = vmatpush2.bf16.msra.mxu0 0
  %2009 = vmatprep.mubr.bf16.mxu0 0
  %2010 = vmatmul.mubr.bf16.gmra.mxu0 %v1935
  %v2011 = vpop.f32.mrf.mxu0
  %v2012 = vadd.f32 %v1972, %v2011
  %v2013 = vpop.f32.mrf.mxu0
  %v2014 = vpop.f32.mrf.mxu0
  %v2015 = vpop.f32.mrf.mxu0
  %2016 = vdwg.mxu0
  %v2017 = vadd.f32 %v1395, %v2012
  %s2018 = scalar_lea.vmem %s13, 12
  %2019 = vst.msk [vmem:[%s2018] sm:$0xf] %vm150, %v2017
  %v2020 = vpack.c.bf16 %v2017, %v2017
  %v2021 = vld [vmem:[%s4] sm:$0xf]
  %v2022 = vld [vmem:[%s4 + $0x4] sm:$0xf]
  %v2023 = vld [vmem:[%s4 + $0x8] sm:$0xf]
  %v2024 = vld [vmem:[%s4 + $0xc] sm:$0xf]
  %v2029 = vunpack.c.l.b16 %v2021
  %v2030 = vunpack.c.l.b16 %v2022
  %v2031 = vunpack.c.l.b16 %v2023
  %v2032 = vunpack.c.l.b16 %v2024
  %v2033 = vpack.c.b16 %v2030, %v2029
  %v2034 = vpack.c.b16 %v2032, %v2031
  %v2038 = vsel %vm169, %v2020, 0
  %2040 = vmatprep.subr.bf16.mxu0 0
  %2041 = vmatpush1.bf16.msra.mxu0 0
  %2042 = vmatprep.subr.bf16.mxu0 0
  %2043 = vmatpush1.bf16.msra.mxu0 0
  %2044 = vmatprep.subr.bf16.mxu0 0
  %2045 = vmatpush1.bf16.msra.mxu0 0
  %2046 = vmatprep.subr.bf16.mxu0 0
  %2047 = vmatpush1.bf16.msra.mxu0 0
  %2048 = vmatprep.subr.bf16.mxu0 0
  %2049 = vmatpush1.bf16.msra.mxu0 0
  %2050 = vmatprep.subr.bf16.mxu0 0
  %2051 = vmatpush1.bf16.msra.mxu0 0
  %2052 = vmatprep.subr.bf16.mxu0 0
  %2053 = vmatpush1.bf16.msra.mxu0 %v2034
  %2054 = vmatprep.subr.bf16.mxu0 0
  %2055 = vmatpush1.bf16.msra.mxu0 %v2033
  %2056 = vmatprep.subr.bf16.mxu0 0
  %2057 = vmatpush2.bf16.msra.mxu0 0
  %2058 = vmatprep.subr.bf16.mxu0 0
  %2059 = vmatpush2.bf16.msra.mxu0 0
  %2060 = vmatprep.subr.bf16.mxu0 0
  %2061 = vmatpush2.bf16.msra.mxu0 0
  %2062 = vmatprep.subr.bf16.mxu0 0
  %2063 = vmatpush2.bf16.msra.mxu0 0
  %2064 = vmatprep.subr.bf16.mxu0 0
  %2065 = vmatpush2.bf16.msra.mxu0 0
  %2066 = vmatprep.subr.bf16.mxu0 0
  %2067 = vmatpush2.bf16.msra.mxu0 0
  %2068 = vmatprep.subr.bf16.mxu0 0
  %2069 = vmatpush2.bf16.msra.mxu0 0
  %2070 = vmatprep.subr.bf16.mxu0 0
  %2071 = vmatpush2.bf16.msra.mxu0 0
  %2072 = vmatprep.mubr.bf16.mxu0 0
  %2073 = vmatmul.mubr.bf16.gmra.mxu0 %v2038
  %v2074 = vpop.f32.mrf.mxu0
  %v2075 = vadd.f32 %v50, %v2074
  %v2076 = vpop.f32.mrf.mxu0
  %v2077 = vpop.f32.mrf.mxu0
  %v2078 = vpop.f32.mrf.mxu0
  %2079 = vdwg.mxu0
  %v2080 = vmax.f32 %v2075, 0.0
  %v2081 = vpack.c.bf16 %v2080, %v2080
  %v2082 = vld [vmem:[%s6] sm:$0xf]
  %v2083 = vld [vmem:[%s6 + $0x4] sm:$0xf]
  %v2084 = vld [vmem:[%s6 + $0x8] sm:$0xf]
  %v2085 = vld [vmem:[%s6 + $0xc] sm:$0xf]
  %v2086 = vld [vmem:[%s6 + $0x10] sm:$0xf]
  %v2087 = vld [vmem:[%s6 + $0x14] sm:$0xf]
  %v2088 = vld [vmem:[%s6 + $0x18] sm:$0x1]
  %v2096 = vunpack.c.l.b16 %v2082
  %v2097 = vunpack.c.l.b16 %v2083
  %v2098 = vunpack.c.l.b16 %v2084
  %v2099 = vunpack.c.l.b16 %v2085
  %v2100 = vunpack.c.l.b16 %v2086
  %v2101 = vunpack.c.l.b16 %v2087
  %v2102 = vunpack.c.l.b16 %v2088
  %v2103 = vpack.c.b16 %v2097, %v2096
  %v2104 = vpack.c.b16 %v2099, %v2098
  %v2105 = vpack.c.b16 %v2101, %v2100
  %v2106 = vpack.c.b16 %v2102, %v2102
  %v2111 = vsel %vm243, %v2081, 0
  %v2114 = vsel %vm247, %v2106, 0
  %2116 = vmatprep.subr.bf16.mxu0 0
  %2117 = vmatpush1.bf16.msra.mxu0 0
  %2118 = vmatprep.subr.bf16.mxu0 0
  %2119 = vmatpush1.bf16.msra.mxu0 0
  %2120 = vmatprep.subr.bf16.mxu0 0
  %2121 = vmatpush1.bf16.msra.mxu0 0
  %2122 = vmatprep.subr.bf16.mxu0 0
  %2123 = vmatpush1.bf16.msra.mxu0 0
  %2124 = vmatprep.subr.bf16.mxu0 0
  %2125 = vmatpush1.bf16.msra.mxu0 %v2114
  %2126 = vmatprep.subr.bf16.mxu0 0
  %2127 = vmatpush1.bf16.msra.mxu0 %v2105
  %2128 = vmatprep.subr.bf16.mxu0 0
  %2129 = vmatpush1.bf16.msra.mxu0 %v2104
  %2130 = vmatprep.subr.bf16.mxu0 0
  %2131 = vmatpush1.bf16.msra.mxu0 %v2103
  %2132 = vmatprep.subr.bf16.mxu0 0
  %2133 = vmatpush2.bf16.msra.mxu0 0
  %2134 = vmatprep.subr.bf16.mxu0 0
  %2135 = vmatpush2.bf16.msra.mxu0 0
  %2136 = vmatprep.subr.bf16.mxu0 0
  %2137 = vmatpush2.bf16.msra.mxu0 0
  %2138 = vmatprep.subr.bf16.mxu0 0
  %2139 = vmatpush2.bf16.msra.mxu0 0
  %2140 = vmatprep.subr.bf16.mxu0 0
  %2141 = vmatpush2.bf16.msra.mxu0 0
  %2142 = vmatprep.subr.bf16.mxu0 0
  %2143 = vmatpush2.bf16.msra.mxu0 0
  %2144 = vmatprep.subr.bf16.mxu0 0
  %2145 = vmatpush2.bf16.msra.mxu0 0
  %2146 = vmatprep.subr.bf16.mxu0 0
  %2147 = vmatpush2.bf16.msra.mxu0 0
  %2148 = vmatprep.mubr.bf16.mxu0 0
  %2149 = vmatmul.mubr.bf16.gmra.mxu0 %v2111
  %v2150 = vpop.f32.mrf.mxu0
  %v2151 = vadd.f32 %v57, %v2150
  %v2152 = vpop.f32.mrf.mxu0
  %v2153 = vpop.f32.mrf.mxu0
  %v2154 = vpop.f32.mrf.mxu0
  %2155 = vdwg.mxu0
  %v2156 = vmax.f32 %v2151, 0.0
  %v2157 = vpack.c.bf16 %v2156, %v2156
  %v2158 = vld [vmem:[%s8] sm:$0xf]
  %v2159 = vld [vmem:[%s8 + $0x4] sm:$0xf]
  %v2160 = vld [vmem:[%s8 + $0x8] sm:$0xf]
  %v2161 = vld [vmem:[%s8 + $0xc] sm:$0xf]
  %v2162 = vld [vmem:[%s8 + $0x10] sm:$0xf]
  %v2163 = vld [vmem:[%s8 + $0x14] sm:$0xf]
  %v2164 = vld [vmem:[%s8 + $0x18] sm:$0x1]
  %v2172 = vunpack.c.l.b16 %v2158
  %v2173 = vunpack.c.l.b16 %v2159
  %v2174 = vunpack.c.l.b16 %v2160
  %v2175 = vunpack.c.l.b16 %v2161
  %v2176 = vunpack.c.l.b16 %v2162
  %v2177 = vunpack.c.l.b16 %v2163
  %v2178 = vunpack.c.l.b16 %v2164
  %v2179 = vpack.c.b16 %v2173, %v2172
  %v2180 = vpack.c.b16 %v2175, %v2174
  %v2181 = vpack.c.b16 %v2177, %v2176
  %v2182 = vpack.c.b16 %v2178, %v2178
  %v2187 = vsel %vm243, %v2157, 0
  %v2190 = vsel %vm247, %v2182, 0
  %2192 = vmatprep.subr.bf16.mxu0 0
  %2193 = vmatpush1.bf16.msra.mxu0 0
  %2194 = vmatprep.subr.bf16.mxu0 0
  %2195 = vmatpush1.bf16.msra.mxu0 0
  %2196 = vmatprep.subr.bf16.mxu0 0
  %2197 = vmatpush1.bf16.msra.mxu0 0
  %2198 = vmatprep.subr.bf16.mxu0 0
  %2199 = vmatpush1.bf16.msra.mxu0 0
  %2200 = vmatprep.subr.bf16.mxu0 0
  %2201 = vmatpush1.bf16.msra.mxu0 %v2190
  %2202 = vmatprep.subr.bf16.mxu0 0
  %2203 = vmatpush1.bf16.msra.mxu0 %v2181
  %2204 = vmatprep.subr.bf16.mxu0 0
  %2205 = vmatpush1.bf16.msra.mxu0 %v2180
  %2206 = vmatprep.subr.bf16.mxu0 0
  %2207 = vmatpush1.bf16.msra.mxu0 %v2179
  %2208 = vmatprep.subr.bf16.mxu0 0
  %2209 = vmatpush2.bf16.msra.mxu0 0
  %2210 = vmatprep.subr.bf16.mxu0 0
  %2211 = vmatpush2.bf16.msra.mxu0 0
  %2212 = vmatprep.subr.bf16.mxu0 0
  %2213 = vmatpush2.bf16.msra.mxu0 0
  %2214 = vmatprep.subr.bf16.mxu0 0
  %2215 = vmatpush2.bf16.msra.mxu0 0
  %2216 = vmatprep.subr.bf16.mxu0 0
  %2217 = vmatpush2.bf16.msra.mxu0 0
  %2218 = vmatprep.subr.bf16.mxu0 0
  %2219 = vmatpush2.bf16.msra.mxu0 0
  %2220 = vmatprep.subr.bf16.mxu0 0
  %2221 = vmatpush2.bf16.msra.mxu0 0
  %2222 = vmatprep.subr.bf16.mxu0 0
  %2223 = vmatpush2.bf16.msra.mxu0 0
  %2224 = vmatprep.mubr.bf16.mxu0 0
  %2225 = vmatmul.mubr.bf16.gmra.mxu0 %v2187
  %v2226 = vpop.f32.mrf.mxu0
  %v2227 = vadd.f32 %v64, %v2226
  %v2228 = vpop.f32.mrf.mxu0
  %v2229 = vpop.f32.mrf.mxu0
  %v2230 = vpop.f32.mrf.mxu0
  %2231 = vdwg.mxu0
  %v2232 = vmax.f32 %v2227, 0.0
  %v2233 = vpack.c.bf16 %v2232, %v2232
  %v2234 = vld [vmem:[%s10] sm:$0xff]
  %v2235 = vld [vmem:[%s10 + $0x8] sm:$0xf]
  %v2236 = vld [vmem:[%s10 + $0xc] sm:$0xff]
  %v2237 = vld [vmem:[%s10 + $0x14] sm:$0xf]
  %v2238 = vld [vmem:[%s10 + $0x18] sm:$0xff]
  %v2239 = vld [vmem:[%s10 + $0x20] sm:$0xf]
  %v2240 = vld [vmem:[%s10 + $0x24] sm:$0xff]
  %v2241 = vld [vmem:[%s10 + $0x2c] sm:$0xf]
  %v2242 = vld [vmem:[%s10 + $0x30] sm:$0xff]
  %v2243 = vld [vmem:[%s10 + $0x38] sm:$0xf]
  %v2244 = vld [vmem:[%s10 + $0x3c] sm:$0xff]
  %v2245 = vld [vmem:[%s10 + $0x44] sm:$0xf]
  %v2246 = vld [vmem:[%s10 + $0x48] sm:$0x11]
  %v2247 = vld [vmem:[%s10 + $0x50] sm:$0x1]
  %v2262 = vunpack.c.l.b16 %v2234
  %v2263 = vunpack.c.h.b16 %v2234
  %v2264 = vunpack.c.l.b16 %v2235
  %v2265 = vunpack.c.l.b16 %v2236
  %v2266 = vunpack.c.h.b16 %v2236
  %v2267 = vunpack.c.l.b16 %v2237
  %v2268 = vunpack.c.l.b16 %v2238
  %v2269 = vunpack.c.h.b16 %v2238
  %v2270 = vunpack.c.l.b16 %v2239
  %v2271 = vunpack.c.l.b16 %v2240
  %v2272 = vunpack.c.h.b16 %v2240
  %v2273 = vunpack.c.l.b16 %v2241
  %v2274 = vunpack.c.l.b16 %v2242
  %v2275 = vunpack.c.h.b16 %v2242
  %v2276 = vunpack.c.l.b16 %v2243
  %v2277 = vunpack.c.l.b16 %v2244
  %v2278 = vunpack.c.h.b16 %v2244
  %v2279 = vunpack.c.l.b16 %v2245
  %v2280 = vunpack.c.l.b16 %v2246
  %v2281 = vunpack.c.h.b16 %v2246
  %v2282 = vunpack.c.l.b16 %v2247
  %v2283 = vpack.c.b16 %v2265, %v2262
  %v2284 = vpack.c.b16 %v2266, %v2263
  %v2285 = vpack.c.b16 %v2267, %v2264
  %v2286 = vpack.c.b16 %v2271, %v2268
  %v2287 = vpack.c.b16 %v2272, %v2269
  %v2288 = vpack.c.b16 %v2273, %v2270
  %v2289 = vpack.c.b16 %v2277, %v2274
  %v2290 = vpack.c.b16 %v2278, %v2275
  %v2291 = vpack.c.b16 %v2279, %v2276
  %v2292 = vpack.c.b16 %v2280, %v2280
  %v2293 = vpack.c.b16 %v2281, %v2281
  %v2294 = vpack.c.b16 %v2282, %v2282
  %v2305 = vsel %vm243, %v2233, 0
  %v2308 = vsel %vm247, %v2292, 0
  %v2311 = vsel %vm247, %v2293, 0
  %v2314 = vsel %vm247, %v2294, 0
  %2316 = vmatprep.subr.bf16.mxu0 0
  %2317 = vmatpush1.bf16.msra.mxu0 0
  %2318 = vmatprep.subr.bf16.mxu0 0
  %2319 = vmatpush1.bf16.msra.mxu0 0
  %2320 = vmatprep.subr.bf16.mxu0 0
  %2321 = vmatpush1.bf16.msra.mxu0 0
  %2322 = vmatprep.subr.bf16.mxu0 0
  %2323 = vmatpush1.bf16.msra.mxu0 0
  %2324 = vmatprep.subr.bf16.mxu0 %v2311
  %2325 = vmatpush1.bf16.msra.mxu0 %v2308
  %2326 = vmatprep.subr.bf16.mxu0 %v2290
  %2327 = vmatpush1.bf16.msra.mxu0 %v2289
  %2328 = vmatprep.subr.bf16.mxu0 %v2287
  %2329 = vmatpush1.bf16.msra.mxu0 %v2286
  %2330 = vmatprep.subr.bf16.mxu0 %v2284
  %2331 = vmatpush1.bf16.msra.mxu0 %v2283
  %2332 = vmatprep.subr.bf16.mxu0 0
  %2333 = vmatpush2.bf16.msra.mxu0 0
  %2334 = vmatprep.subr.bf16.mxu0 0
  %2335 = vmatpush2.bf16.msra.mxu0 0
  %2336 = vmatprep.subr.bf16.mxu0 0
  %2337 = vmatpush2.bf16.msra.mxu0 0
  %2338 = vmatprep.subr.bf16.mxu0 0
  %2339 = vmatpush2.bf16.msra.mxu0 0
  %2340 = vmatprep.subr.bf16.mxu0 0
  %2341 = vmatpush2.bf16.msra.mxu0 0
  %2342 = vmatprep.subr.bf16.mxu0 0
  %2343 = vmatpush2.bf16.msra.mxu0 0
  %2344 = vmatprep.subr.bf16.mxu0 0
  %2345 = vmatpush2.bf16.msra.mxu0 0
  %2346 = vmatprep.subr.bf16.mxu0 0
  %2347 = vmatpush2.bf16.msra.mxu0 0
  %2348 = vmatprep.mubr.bf16.mxu0 0
  %2349 = vmatmul.mubr.bf16.gmra.mxu0 %v2305
  %v2350 = vpop.f32.mrf.mxu0
  %v2351 = vadd.f32 %v71, %v2350
  %v2352 = vpop.f32.mrf.mxu0
  %v2353 = vadd.f32 %v75, %v2352
  %v2354 = vpop.f32.mrf.mxu0
  %v2355 = vpop.f32.mrf.mxu0
  %2356 = vdwg.mxu0
  %2357 = vmatprep.subr.bf16.mxu0 0
  %2358 = vmatpush1.bf16.msra.mxu0 0
  %2359 = vmatprep.subr.bf16.mxu0 0
  %2360 = vmatpush1.bf16.msra.mxu0 0
  %2361 = vmatprep.subr.bf16.mxu0 0
  %2362 = vmatpush1.bf16.msra.mxu0 0
  %2363 = vmatprep.subr.bf16.mxu0 0
  %2364 = vmatpush1.bf16.msra.mxu0 0
  %2365 = vmatprep.subr.bf16.mxu0 0
  %2366 = vmatpush1.bf16.msra.mxu0 %v2314
  %2367 = vmatprep.subr.bf16.mxu0 0
  %2368 = vmatpush1.bf16.msra.mxu0 %v2291
  %2369 = vmatprep.subr.bf16.mxu0 0
  %2370 = vmatpush1.bf16.msra.mxu0 %v2288
  %2371 = vmatprep.subr.bf16.mxu0 0
  %2372 = vmatpush1.bf16.msra.mxu0 %v2285
  %2373 = vmatprep.subr.bf16.mxu0 0
  %2374 = vmatpush2.bf16.msra.mxu0 0
  %2375 = vmatprep.subr.bf16.mxu0 0
  %2376 = vmatpush2.bf16.msra.mxu0 0
  %2377 = vmatprep.subr.bf16.mxu0 0
  %2378 = vmatpush2.bf16.msra.mxu0 0
  %2379 = vmatprep.subr.bf16.mxu0 0
  %2380 = vmatpush2.bf16.msra.mxu0 0
  %2381 = vmatprep.subr.bf16.mxu0 0
  %2382 = vmatpush2.bf16.msra.mxu0 0
  %2383 = vmatprep.subr.bf16.mxu0 0
  %2384 = vmatpush2.bf16.msra.mxu0 0
  %2385 = vmatprep.subr.bf16.mxu0 0
  %2386 = vmatpush2.bf16.msra.mxu0 0
  %2387 = vmatprep.subr.bf16.mxu0 0
  %2388 = vmatpush2.bf16.msra.mxu0 0
  %2389 = vmatprep.mubr.bf16.mxu0 0
  %2390 = vmatmul.mubr.bf16.gmra.mxu0 %v2305
  %v2391 = vpop.f32.mrf.mxu0
  %v2392 = vadd.f32 %v79, %v2391
  %v2393 = vpop.f32.mrf.mxu0
  %v2394 = vpop.f32.mrf.mxu0
  %v2395 = vpop.f32.mrf.mxu0
  %2396 = vdwg.mxu0
  %v2397 = vtanh.pop %v2351
  %v2398 = vtanh.pop %v2353
  %v2399 = vtanh.pop %v2392
  %s2400 = scalar_lea.vmem %s1, 36
  %v2401 = vld [vmem:[%s2400] sm:$0xff]
  %v2402 = vld [vmem:[%s2400 + $0x8] sm:$0xf]
  %v2404 = vcombine.high %v2401, %v2401
  %v2406 = vmul.f32 %v2397, %v2401
  %v2407 = vmul.f32 %v2398, %v2404
  %v2408 = vmul.f32 %v2399, %v2402
  %v2409 = vpack.c.bf16 %v2406, %v2406
  %v2410 = vpack.c.bf16 %v2407, %v2407
  %v2411 = vpack.c.bf16 %v2408, %v2408
  %v2412 = vld [vmem:[%s12] sm:$0xf]
  %v2413 = vld [vmem:[%s12 + $0x4] sm:$0xf]
  %v2414 = vld [vmem:[%s12 + $0x8] sm:$0xf]
  %v2415 = vld [vmem:[%s12 + $0xc] sm:$0xf]
  %v2416 = vld [vmem:[%s12 + $0x10] sm:$0xf]
  %v2417 = vld [vmem:[%s12 + $0x14] sm:$0xf]
  %v2418 = vld [vmem:[%s12 + $0x18] sm:$0xf]
  %v2419 = vld [vmem:[%s12 + $0x1c] sm:$0xf]
  %v2420 = vld [vmem:[%s12 + $0x20] sm:$0xf]
  %v2421 = vld [vmem:[%s12 + $0x24] sm:$0xf]
  %v2422 = vld [vmem:[%s12 + $0x28] sm:$0xf]
  %v2423 = vld [vmem:[%s12 + $0x2c] sm:$0xf]
  %v2424 = vld [vmem:[%s12 + $0x30] sm:$0xf]
  %v2425 = vld [vmem:[%s12 + $0x34] sm:$0xf]
  %v2426 = vld [vmem:[%s12 + $0x38] sm:$0xf]
  %v2427 = vld [vmem:[%s12 + $0x3c] sm:$0xf]
  %v2428 = vld [vmem:[%s12 + $0x40] sm:$0xf]
  %v2429 = vld [vmem:[%s12 + $0x44] sm:$0xf]
  %v2430 = vld [vmem:[%s12 + $0x48] sm:$0xf]
  %v2431 = vld [vmem:[%s12 + $0x4c] sm:$0xf]
  %v2432 = vld [vmem:[%s12 + $0x50] sm:$0xf]
  %v2433 = vld [vmem:[%s12 + $0x54] sm:$0xf]
  %v2434 = vld [vmem:[%s12 + $0x58] sm:$0xf]
  %v2435 = vld [vmem:[%s12 + $0x5c] sm:$0xf]
  %v2436 = vld [vmem:[%s12 + $0x60] sm:$0xf]
  %v2437 = vld [vmem:[%s12 + $0x64] sm:$0xf]
  %v2438 = vld [vmem:[%s12 + $0x68] sm:$0xf]
  %v2439 = vld [vmem:[%s12 + $0x6c] sm:$0xf]
  %v2440 = vld [vmem:[%s12 + $0x70] sm:$0xf]
  %v2441 = vld [vmem:[%s12 + $0x74] sm:$0xf]
  %v2442 = vld [vmem:[%s12 + $0x78] sm:$0xf]
  %v2443 = vld [vmem:[%s12 + $0x7c] sm:$0xf]
  %v2444 = vld [vmem:[%s12 + $0x80] sm:$0xf]
  %v2445 = vld [vmem:[%s12 + $0x84] sm:$0xf]
  %v2446 = vld [vmem:[%s12 + $0x88] sm:$0xf]
  %v2447 = vld [vmem:[%s12 + $0x8c] sm:$0xf]
  %v2484 = vunpack.c.l.b16 %v2412
  %v2485 = vunpack.c.l.b16 %v2413
  %v2486 = vunpack.c.l.b16 %v2414
  %v2487 = vunpack.c.l.b16 %v2415
  %v2488 = vunpack.c.l.b16 %v2416
  %v2489 = vunpack.c.l.b16 %v2417
  %v2490 = vunpack.c.l.b16 %v2418
  %v2491 = vunpack.c.l.b16 %v2419
  %v2492 = vunpack.c.l.b16 %v2420
  %v2493 = vunpack.c.l.b16 %v2421
  %v2494 = vunpack.c.l.b16 %v2422
  %v2495 = vunpack.c.l.b16 %v2423
  %v2496 = vunpack.c.l.b16 %v2424
  %v2497 = vunpack.c.l.b16 %v2425
  %v2498 = vunpack.c.l.b16 %v2426
  %v2499 = vunpack.c.l.b16 %v2427
  %v2500 = vunpack.c.l.b16 %v2428
  %v2501 = vunpack.c.l.b16 %v2429
  %v2502 = vunpack.c.l.b16 %v2430
  %v2503 = vunpack.c.l.b16 %v2431
  %v2504 = vunpack.c.l.b16 %v2432
  %v2505 = vunpack.c.l.b16 %v2433
  %v2506 = vunpack.c.l.b16 %v2434
  %v2507 = vunpack.c.l.b16 %v2435
  %v2508 = vunpack.c.l.b16 %v2436
  %v2509 = vunpack.c.l.b16 %v2437
  %v2510 = vunpack.c.l.b16 %v2438
  %v2511 = vunpack.c.l.b16 %v2439
  %v2512 = vunpack.c.l.b16 %v2440
  %v2513 = vunpack.c.l.b16 %v2441
  %v2514 = vunpack.c.l.b16 %v2442
  %v2515 = vunpack.c.l.b16 %v2443
  %v2516 = vunpack.c.l.b16 %v2444
  %v2517 = vunpack.c.l.b16 %v2445
  %v2518 = vunpack.c.l.b16 %v2446
  %v2519 = vunpack.c.l.b16 %v2447
  %v2520 = vpack.c.b16 %v2485, %v2484
  %v2521 = vpack.c.b16 %v2487, %v2486
  %v2522 = vpack.c.b16 %v2489, %v2488
  %v2523 = vpack.c.b16 %v2491, %v2490
  %v2524 = vpack.c.b16 %v2493, %v2492
  %v2525 = vpack.c.b16 %v2495, %v2494
  %v2526 = vpack.c.b16 %v2497, %v2496
  %v2527 = vpack.c.b16 %v2499, %v2498
  %v2528 = vpack.c.b16 %v2501, %v2500
  %v2529 = vpack.c.b16 %v2503, %v2502
  %v2530 = vpack.c.b16 %v2505, %v2504
  %v2531 = vpack.c.b16 %v2507, %v2506
  %v2532 = vpack.c.b16 %v2509, %v2508
  %v2533 = vpack.c.b16 %v2511, %v2510
  %v2534 = vpack.c.b16 %v2513, %v2512
  %v2535 = vpack.c.b16 %v2515, %v2514
  %v2536 = vpack.c.b16 %v2517, %v2516
  %v2537 = vpack.c.b16 %v2519, %v2518
  %v2557 = vsel %vm169, %v2411, 0
  %2559 = vmatprep.subr.bf16.mxu0 0
  %2560 = vmatpush1.bf16.msra.mxu0 %v2527
  %2561 = vmatprep.subr.bf16.mxu0 0
  %2562 = vmatpush1.bf16.msra.mxu0 %v2526
  %2563 = vmatprep.subr.bf16.mxu0 0
  %2564 = vmatpush1.bf16.msra.mxu0 %v2525
  %2565 = vmatprep.subr.bf16.mxu0 0
  %2566 = vmatpush1.bf16.msra.mxu0 %v2524
  %2567 = vmatprep.subr.bf16.mxu0 0
  %2568 = vmatpush1.bf16.msra.mxu0 %v2523
  %2569 = vmatprep.subr.bf16.mxu0 0
  %2570 = vmatpush1.bf16.msra.mxu0 %v2522
  %2571 = vmatprep.subr.bf16.mxu0 0
  %2572 = vmatpush1.bf16.msra.mxu0 %v2521
  %2573 = vmatprep.subr.bf16.mxu0 0
  %2574 = vmatpush1.bf16.msra.mxu0 %v2520
  %2575 = vmatprep.subr.bf16.mxu0 0
  %2576 = vmatpush2.bf16.msra.mxu0 %v2535
  %2577 = vmatprep.subr.bf16.mxu0 0
  %2578 = vmatpush2.bf16.msra.mxu0 %v2534
  %2579 = vmatprep.subr.bf16.mxu0 0
  %2580 = vmatpush2.bf16.msra.mxu0 %v2533
  %2581 = vmatprep.subr.bf16.mxu0 0
  %2582 = vmatpush2.bf16.msra.mxu0 %v2532
  %2583 = vmatprep.subr.bf16.mxu0 0
  %2584 = vmatpush2.bf16.msra.mxu0 %v2531
  %2585 = vmatprep.subr.bf16.mxu0 0
  %2586 = vmatpush2.bf16.msra.mxu0 %v2530
  %2587 = vmatprep.subr.bf16.mxu0 0
  %2588 = vmatpush2.bf16.msra.mxu0 %v2529
  %2589 = vmatprep.subr.bf16.mxu0 0
  %2590 = vmatpush2.bf16.msra.mxu0 %v2528
  %2591 = vmatprep.mubr.bf16.mxu0 %v2410
  %2592 = vmatmul.mubr.bf16.gmra.mxu0 %v2409
  %v2593 = vpop.f32.mrf.mxu0
  %v2594 = vadd.f32 0.0, %v2593
  %v2595 = vpop.f32.mrf.mxu0
  %v2596 = vpop.f32.mrf.mxu0
  %v2597 = vpop.f32.mrf.mxu0
  %2598 = vdwg.mxu0
  %2599 = vmatprep.subr.bf16.mxu0 0
  %2600 = vmatpush1.bf16.msra.mxu0 0
  %2601 = vmatprep.subr.bf16.mxu0 0
  %2602 = vmatpush1.bf16.msra.mxu0 0
  %2603 = vmatprep.subr.bf16.mxu0 0
  %2604 = vmatpush1.bf16.msra.mxu0 0
  %2605 = vmatprep.subr.bf16.mxu0 0
  %2606 = vmatpush1.bf16.msra.mxu0 0
  %2607 = vmatprep.subr.bf16.mxu0 0
  %2608 = vmatpush1.bf16.msra.mxu0 0
  %2609 = vmatprep.subr.bf16.mxu0 0
  %2610 = vmatpush1.bf16.msra.mxu0 0
  %2611 = vmatprep.subr.bf16.mxu0 0
  %2612 = vmatpush1.bf16.msra.mxu0 %v2537
  %2613 = vmatprep.subr.bf16.mxu0 0
  %2614 = vmatpush1.bf16.msra.mxu0 %v2536
  %2615 = vmatprep.subr.bf16.mxu0 0
  %2616 = vmatpush2.bf16.msra.mxu0 0
  %2617 = vmatprep.subr.bf16.mxu0 0
  %2618 = vmatpush2.bf16.msra.mxu0 0
  %2619 = vmatprep.subr.bf16.mxu0 0
  %2620 = vmatpush2.bf16.msra.mxu0 0
  %2621 = vmatprep.subr.bf16.mxu0 0
  %2622 = vmatpush2.bf16.msra.mxu0 0
  %2623 = vmatprep.subr.bf16.mxu0 0
  %2624 = vmatpush2.bf16.msra.mxu0 0
  %2625 = vmatprep.subr.bf16.mxu0 0
  %2626 = vmatpush2.bf16.msra.mxu0 0
  %2627 = vmatprep.subr.bf16.mxu0 0
  %2628 = vmatpush2.bf16.msra.mxu0 0
  %2629 = vmatprep.subr.bf16.mxu0 0
  %2630 = vmatpush2.bf16.msra.mxu0 0
  %2631 = vmatprep.mubr.bf16.mxu0 0
  %2632 = vmatmul.mubr.bf16.gmra.mxu0 %v2557
  %v2633 = vpop.f32.mrf.mxu0
  %v2634 = vadd.f32 %v2594, %v2633
  %v2635 = vpop.f32.mrf.mxu0
  %v2636 = vpop.f32.mrf.mxu0
  %v2637 = vpop.f32.mrf.mxu0
  %2638 = vdwg.mxu0
  %v2639 = vadd.f32 %v2017, %v2634
  %s2640 = scalar_lea.vmem %s13, 16
  %2641 = vst.msk [vmem:[%s2640] sm:$0xf] %vm150, %v2639
  %v2642 = vpack.c.bf16 %v2639, %v2639
  %v2643 = vld [vmem:[%s4] sm:$0xf]
  %v2644 = vld [vmem:[%s4 + $0x4] sm:$0xf]
  %v2645 = vld [vmem:[%s4 + $0x8] sm:$0xf]
  %v2646 = vld [vmem:[%s4 + $0xc] sm:$0xf]
  %v2651 = vunpack.c.l.b16 %v2643
  %v2652 = vunpack.c.l.b16 %v2644
  %v2653 = vunpack.c.l.b16 %v2645
  %v2654 = vunpack.c.l.b16 %v2646
  %v2655 = vpack.c.b16 %v2652, %v2651
  %v2656 = vpack.c.b16 %v2654, %v2653
  %v2660 = vsel %vm169, %v2642, 0
  %2662 = vmatprep.subr.bf16.mxu0 0
  %2663 = vmatpush1.bf16.msra.mxu0 0
  %2664 = vmatprep.subr.bf16.mxu0 0
  %2665 = vmatpush1.bf16.msra.mxu0 0
  %2666 = vmatprep.subr.bf16.mxu0 0
  %2667 = vmatpush1.bf16.msra.mxu0 0
  %2668 = vmatprep.subr.bf16.mxu0 0
  %2669 = vmatpush1.bf16.msra.mxu0 0
  %2670 = vmatprep.subr.bf16.mxu0 0
  %2671 = vmatpush1.bf16.msra.mxu0 0
  %2672 = vmatprep.subr.bf16.mxu0 0
  %2673 = vmatpush1.bf16.msra.mxu0 0
  %2674 = vmatprep.subr.bf16.mxu0 0
  %2675 = vmatpush1.bf16.msra.mxu0 %v2656
  %2676 = vmatprep.subr.bf16.mxu0 0
  %2677 = vmatpush1.bf16.msra.mxu0 %v2655
  %2678 = vmatprep.subr.bf16.mxu0 0
  %2679 = vmatpush2.bf16.msra.mxu0 0
  %2680 = vmatprep.subr.bf16.mxu0 0
  %2681 = vmatpush2.bf16.msra.mxu0 0
  %2682 = vmatprep.subr.bf16.mxu0 0
  %2683 = vmatpush2.bf16.msra.mxu0 0
  %2684 = vmatprep.subr.bf16.mxu0 0
  %2685 = vmatpush2.bf16.msra.mxu0 0
  %2686 = vmatprep.subr.bf16.mxu0 0
  %2687 = vmatpush2.bf16.msra.mxu0 0
  %2688 = vmatprep.subr.bf16.mxu0 0
  %2689 = vmatpush2.bf16.msra.mxu0 0
  %2690 = vmatprep.subr.bf16.mxu0 0
  %2691 = vmatpush2.bf16.msra.mxu0 0
  %2692 = vmatprep.subr.bf16.mxu0 0
  %2693 = vmatpush2.bf16.msra.mxu0 0
  %2694 = vmatprep.mubr.bf16.mxu0 0
  %2695 = vmatmul.mubr.bf16.gmra.mxu0 %v2660
  %v2696 = vpop.f32.mrf.mxu0
  %v2697 = vadd.f32 %v50, %v2696
  %v2698 = vpop.f32.mrf.mxu0
  %v2699 = vpop.f32.mrf.mxu0
  %v2700 = vpop.f32.mrf.mxu0
  %2701 = vdwg.mxu0
  %v2702 = vmax.f32 %v2697, 0.0
  %v2703 = vpack.c.bf16 %v2702, %v2702
  %v2704 = vld [vmem:[%s6] sm:$0xf]
  %v2705 = vld [vmem:[%s6 + $0x4] sm:$0xf]
  %v2706 = vld [vmem:[%s6 + $0x8] sm:$0xf]
  %v2707 = vld [vmem:[%s6 + $0xc] sm:$0xf]
  %v2708 = vld [vmem:[%s6 + $0x10] sm:$0xf]
  %v2709 = vld [vmem:[%s6 + $0x14] sm:$0xf]
  %v2710 = vld [vmem:[%s6 + $0x18] sm:$0x1]
  %v2718 = vunpack.c.l.b16 %v2704
  %v2719 = vunpack.c.l.b16 %v2705
  %v2720 = vunpack.c.l.b16 %v2706
  %v2721 = vunpack.c.l.b16 %v2707
  %v2722 = vunpack.c.l.b16 %v2708
  %v2723 = vunpack.c.l.b16 %v2709
  %v2724 = vunpack.c.l.b16 %v2710
  %v2725 = vpack.c.b16 %v2719, %v2718
  %v2726 = vpack.c.b16 %v2721, %v2720
  %v2727 = vpack.c.b16 %v2723, %v2722
  %v2728 = vpack.c.b16 %v2724, %v2724
  %v2733 = vsel %vm243, %v2703, 0
  %v2736 = vsel %vm247, %v2728, 0
  %2738 = vmatprep.subr.bf16.mxu0 0
  %2739 = vmatpush1.bf16.msra.mxu0 0
  %2740 = vmatprep.subr.bf16.mxu0 0
  %2741 = vmatpush1.bf16.msra.mxu0 0
  %2742 = vmatprep.subr.bf16.mxu0 0
  %2743 = vmatpush1.bf16.msra.mxu0 0
  %2744 = vmatprep.subr.bf16.mxu0 0
  %2745 = vmatpush1.bf16.msra.mxu0 0
  %2746 = vmatprep.subr.bf16.mxu0 0
  %2747 = vmatpush1.bf16.msra.mxu0 %v2736
  %2748 = vmatprep.subr.bf16.mxu0 0
  %2749 = vmatpush1.bf16.msra.mxu0 %v2727
  %2750 = vmatprep.subr.bf16.mxu0 0
  %2751 = vmatpush1.bf16.msra.mxu0 %v2726
  %2752 = vmatprep.subr.bf16.mxu0 0
  %2753 = vmatpush1.bf16.msra.mxu0 %v2725
  %2754 = vmatprep.subr.bf16.mxu0 0
  %2755 = vmatpush2.bf16.msra.mxu0 0
  %2756 = vmatprep.subr.bf16.mxu0 0
  %2757 = vmatpush2.bf16.msra.mxu0 0
  %2758 = vmatprep.subr.bf16.mxu0 0
  %2759 = vmatpush2.bf16.msra.mxu0 0
  %2760 = vmatprep.subr.bf16.mxu0 0
  %2761 = vmatpush2.bf16.msra.mxu0 0
  %2762 = vmatprep.subr.bf16.mxu0 0
  %2763 = vmatpush2.bf16.msra.mxu0 0
  %2764 = vmatprep.subr.bf16.mxu0 0
  %2765 = vmatpush2.bf16.msra.mxu0 0
  %2766 = vmatprep.subr.bf16.mxu0 0
  %2767 = vmatpush2.bf16.msra.mxu0 0
  %2768 = vmatprep.subr.bf16.mxu0 0
  %2769 = vmatpush2.bf16.msra.mxu0 0
  %2770 = vmatprep.mubr.bf16.mxu0 0
  %2771 = vmatmul.mubr.bf16.gmra.mxu0 %v2733
  %v2772 = vpop.f32.mrf.mxu0
  %v2773 = vadd.f32 %v57, %v2772
  %v2774 = vpop.f32.mrf.mxu0
  %v2775 = vpop.f32.mrf.mxu0
  %v2776 = vpop.f32.mrf.mxu0
  %2777 = vdwg.mxu0
  %v2778 = vmax.f32 %v2773, 0.0
  %v2779 = vpack.c.bf16 %v2778, %v2778
  %v2780 = vld [vmem:[%s8] sm:$0xf]
  %v2781 = vld [vmem:[%s8 + $0x4] sm:$0xf]
  %v2782 = vld [vmem:[%s8 + $0x8] sm:$0xf]
  %v2783 = vld [vmem:[%s8 + $0xc] sm:$0xf]
  %v2784 = vld [vmem:[%s8 + $0x10] sm:$0xf]
  %v2785 = vld [vmem:[%s8 + $0x14] sm:$0xf]
  %v2786 = vld [vmem:[%s8 + $0x18] sm:$0x1]
  %v2794 = vunpack.c.l.b16 %v2780
  %v2795 = vunpack.c.l.b16 %v2781
  %v2796 = vunpack.c.l.b16 %v2782
  %v2797 = vunpack.c.l.b16 %v2783
  %v2798 = vunpack.c.l.b16 %v2784
  %v2799 = vunpack.c.l.b16 %v2785
  %v2800 = vunpack.c.l.b16 %v2786
  %v2801 = vpack.c.b16 %v2795, %v2794
  %v2802 = vpack.c.b16 %v2797, %v2796
  %v2803 = vpack.c.b16 %v2799, %v2798
  %v2804 = vpack.c.b16 %v2800, %v2800
  %v2809 = vsel %vm243, %v2779, 0
  %v2812 = vsel %vm247, %v2804, 0
  %2814 = vmatprep.subr.bf16.mxu0 0
  %2815 = vmatpush1.bf16.msra.mxu0 0
  %2816 = vmatprep.subr.bf16.mxu0 0
  %2817 = vmatpush1.bf16.msra.mxu0 0
  %2818 = vmatprep.subr.bf16.mxu0 0
  %2819 = vmatpush1.bf16.msra.mxu0 0
  %2820 = vmatprep.subr.bf16.mxu0 0
  %2821 = vmatpush1.bf16.msra.mxu0 0
  %2822 = vmatprep.subr.bf16.mxu0 0
  %2823 = vmatpush1.bf16.msra.mxu0 %v2812
  %2824 = vmatprep.subr.bf16.mxu0 0
  %2825 = vmatpush1.bf16.msra.mxu0 %v2803
  %2826 = vmatprep.subr.bf16.mxu0 0
  %2827 = vmatpush1.bf16.msra.mxu0 %v2802
  %2828 = vmatprep.subr.bf16.mxu0 0
  %2829 = vmatpush1.bf16.msra.mxu0 %v2801
  %2830 = vmatprep.subr.bf16.mxu0 0
  %2831 = vmatpush2.bf16.msra.mxu0 0
  %2832 = vmatprep.subr.bf16.mxu0 0
  %2833 = vmatpush2.bf16.msra.mxu0 0
  %2834 = vmatprep.subr.bf16.mxu0 0
  %2835 = vmatpush2.bf16.msra.mxu0 0
  %2836 = vmatprep.subr.bf16.mxu0 0
  %2837 = vmatpush2.bf16.msra.mxu0 0
  %2838 = vmatprep.subr.bf16.mxu0 0
  %2839 = vmatpush2.bf16.msra.mxu0 0
  %2840 = vmatprep.subr.bf16.mxu0 0
  %2841 = vmatpush2.bf16.msra.mxu0 0
  %2842 = vmatprep.subr.bf16.mxu0 0
  %2843 = vmatpush2.bf16.msra.mxu0 0
  %2844 = vmatprep.subr.bf16.mxu0 0
  %2845 = vmatpush2.bf16.msra.mxu0 0
  %2846 = vmatprep.mubr.bf16.mxu0 0
  %2847 = vmatmul.mubr.bf16.gmra.mxu0 %v2809
  %v2848 = vpop.f32.mrf.mxu0
  %v2849 = vadd.f32 %v64, %v2848
  %v2850 = vpop.f32.mrf.mxu0
  %v2851 = vpop.f32.mrf.mxu0
  %v2852 = vpop.f32.mrf.mxu0
  %2853 = vdwg.mxu0
  %v2854 = vmax.f32 %v2849, 0.0
  %v2855 = vpack.c.bf16 %v2854, %v2854
  %v2856 = vld [vmem:[%s10] sm:$0xff]
  %v2857 = vld [vmem:[%s10 + $0x8] sm:$0xf]
  %v2858 = vld [vmem:[%s10 + $0xc] sm:$0xff]
  %v2859 = vld [vmem:[%s10 + $0x14] sm:$0xf]
  %v2860 = vld [vmem:[%s10 + $0x18] sm:$0xff]
  %v2861 = vld [vmem:[%s10 + $0x20] sm:$0xf]
  %v2862 = vld [vmem:[%s10 + $0x24] sm:$0xff]
  %v2863 = vld [vmem:[%s10 + $0x2c] sm:$0xf]
  %v2864 = vld [vmem:[%s10 + $0x30] sm:$0xff]
  %v2865 = vld [vmem:[%s10 + $0x38] sm:$0xf]
  %v2866 = vld [vmem:[%s10 + $0x3c] sm:$0xff]
  %v2867 = vld [vmem:[%s10 + $0x44] sm:$0xf]
  %v2868 = vld [vmem:[%s10 + $0x48] sm:$0x11]
  %v2869 = vld [vmem:[%s10 + $0x50] sm:$0x1]
  %v2884 = vunpack.c.l.b16 %v2856
  %v2885 = vunpack.c.h.b16 %v2856
  %v2886 = vunpack.c.l.b16 %v2857
  %v2887 = vunpack.c.l.b16 %v2858
  %v2888 = vunpack.c.h.b16 %v2858
  %v2889 = vunpack.c.l.b16 %v2859
  %v2890 = vunpack.c.l.b16 %v2860
  %v2891 = vunpack.c.h.b16 %v2860
  %v2892 = vunpack.c.l.b16 %v2861
  %v2893 = vunpack.c.l.b16 %v2862
  %v2894 = vunpack.c.h.b16 %v2862
  %v2895 = vunpack.c.l.b16 %v2863
  %v2896 = vunpack.c.l.b16 %v2864
  %v2897 = vunpack.c.h.b16 %v2864
  %v2898 = vunpack.c.l.b16 %v2865
  %v2899 = vunpack.c.l.b16 %v2866
  %v2900 = vunpack.c.h.b16 %v2866
  %v2901 = vunpack.c.l.b16 %v2867
  %v2902 = vunpack.c.l.b16 %v2868
  %v2903 = vunpack.c.h.b16 %v2868
  %v2904 = vunpack.c.l.b16 %v2869
  %v2905 = vpack.c.b16 %v2887, %v2884
  %v2906 = vpack.c.b16 %v2888, %v2885
  %v2907 = vpack.c.b16 %v2889, %v2886
  %v2908 = vpack.c.b16 %v2893, %v2890
  %v2909 = vpack.c.b16 %v2894, %v2891
  %v2910 = vpack.c.b16 %v2895, %v2892
  %v2911 = vpack.c.b16 %v2899, %v2896
  %v2912 = vpack.c.b16 %v2900, %v2897
  %v2913 = vpack.c.b16 %v2901, %v2898
  %v2914 = vpack.c.b16 %v2902, %v2902
  %v2915 = vpack.c.b16 %v2903, %v2903
  %v2916 = vpack.c.b16 %v2904, %v2904
  %v2927 = vsel %vm243, %v2855, 0
  %v2930 = vsel %vm247, %v2914, 0
  %v2933 = vsel %vm247, %v2915, 0
  %v2936 = vsel %vm247, %v2916, 0
  %2938 = vmatprep.subr.bf16.mxu0 0
  %2939 = vmatpush1.bf16.msra.mxu0 0
  %2940 = vmatprep.subr.bf16.mxu0 0
  %2941 = vmatpush1.bf16.msra.mxu0 0
  %2942 = vmatprep.subr.bf16.mxu0 0
  %2943 = vmatpush1.bf16.msra.mxu0 0
  %2944 = vmatprep.subr.bf16.mxu0 0
  %2945 = vmatpush1.bf16.msra.mxu0 0
  %2946 = vmatprep.subr.bf16.mxu0 %v2933
  %2947 = vmatpush1.bf16.msra.mxu0 %v2930
  %2948 = vmatprep.subr.bf16.mxu0 %v2912
  %2949 = vmatpush1.bf16.msra.mxu0 %v2911
  %2950 = vmatprep.subr.bf16.mxu0 %v2909
  %2951 = vmatpush1.bf16.msra.mxu0 %v2908
  %2952 = vmatprep.subr.bf16.mxu0 %v2906
  %2953 = vmatpush1.bf16.msra.mxu0 %v2905
  %2954 = vmatprep.subr.bf16.mxu0 0
  %2955 = vmatpush2.bf16.msra.mxu0 0
  %2956 = vmatprep.subr.bf16.mxu0 0
  %2957 = vmatpush2.bf16.msra.mxu0 0
  %2958 = vmatprep.subr.bf16.mxu0 0
  %2959 = vmatpush2.bf16.msra.mxu0 0
  %2960 = vmatprep.subr.bf16.mxu0 0
  %2961 = vmatpush2.bf16.msra.mxu0 0
  %2962 = vmatprep.subr.bf16.mxu0 0
  %2963 = vmatpush2.bf16.msra.mxu0 0
  %2964 = vmatprep.subr.bf16.mxu0 0
  %2965 = vmatpush2.bf16.msra.mxu0 0
  %2966 = vmatprep.subr.bf16.mxu0 0
  %2967 = vmatpush2.bf16.msra.mxu0 0
  %2968 = vmatprep.subr.bf16.mxu0 0
  %2969 = vmatpush2.bf16.msra.mxu0 0
  %2970 = vmatprep.mubr.bf16.mxu0 0
  %2971 = vmatmul.mubr.bf16.gmra.mxu0 %v2927
  %v2972 = vpop.f32.mrf.mxu0
  %v2973 = vadd.f32 %v71, %v2972
  %v2974 = vpop.f32.mrf.mxu0
  %v2975 = vadd.f32 %v75, %v2974
  %v2976 = vpop.f32.mrf.mxu0
  %v2977 = vpop.f32.mrf.mxu0
  %2978 = vdwg.mxu0
  %2979 = vmatprep.subr.bf16.mxu0 0
  %2980 = vmatpush1.bf16.msra.mxu0 0
  %2981 = vmatprep.subr.bf16.mxu0 0
  %2982 = vmatpush1.bf16.msra.mxu0 0
  %2983 = vmatprep.subr.bf16.mxu0 0
  %2984 = vmatpush1.bf16.msra.mxu0 0
  %2985 = vmatprep.subr.bf16.mxu0 0
  %2986 = vmatpush1.bf16.msra.mxu0 0
  %2987 = vmatprep.subr.bf16.mxu0 0
  %2988 = vmatpush1.bf16.msra.mxu0 %v2936
  %2989 = vmatprep.subr.bf16.mxu0 0
  %2990 = vmatpush1.bf16.msra.mxu0 %v2913
  %2991 = vmatprep.subr.bf16.mxu0 0
  %2992 = vmatpush1.bf16.msra.mxu0 %v2910
  %2993 = vmatprep.subr.bf16.mxu0 0
  %2994 = vmatpush1.bf16.msra.mxu0 %v2907
  %2995 = vmatprep.subr.bf16.mxu0 0
  %2996 = vmatpush2.bf16.msra.mxu0 0
  %2997 = vmatprep.subr.bf16.mxu0 0
  %2998 = vmatpush2.bf16.msra.mxu0 0
  %2999 = vmatprep.subr.bf16.mxu0 0
  %3000 = vmatpush2.bf16.msra.mxu0 0
  %3001 = vmatprep.subr.bf16.mxu0 0
  %3002 = vmatpush2.bf16.msra.mxu0 0
  %3003 = vmatprep.subr.bf16.mxu0 0
  %3004 = vmatpush2.bf16.msra.mxu0 0
  %3005 = vmatprep.subr.bf16.mxu0 0
  %3006 = vmatpush2.bf16.msra.mxu0 0
  %3007 = vmatprep.subr.bf16.mxu0 0
  %3008 = vmatpush2.bf16.msra.mxu0 0
  %3009 = vmatprep.subr.bf16.mxu0 0
  %3010 = vmatpush2.bf16.msra.mxu0 0
  %3011 = vmatprep.mubr.bf16.mxu0 0
  %3012 = vmatmul.mubr.bf16.gmra.mxu0 %v2927
  %v3013 = vpop.f32.mrf.mxu0
  %v3014 = vadd.f32 %v79, %v3013
  %v3015 = vpop.f32.mrf.mxu0
  %v3016 = vpop.f32.mrf.mxu0
  %v3017 = vpop.f32.mrf.mxu0
  %3018 = vdwg.mxu0
  %v3019 = vtanh.pop %v2973
  %v3020 = vtanh.pop %v2975
  %v3021 = vtanh.pop %v3014
  %s3022 = scalar_lea.vmem %s1, 48
  %v3023 = vld [vmem:[%s3022] sm:$0xff]
  %v3024 = vld [vmem:[%s3022 + $0x8] sm:$0xf]
  %v3026 = vcombine.high %v3023, %v3023
  %v3028 = vmul.f32 %v3019, %v3023
  %v3029 = vmul.f32 %v3020, %v3026
  %v3030 = vmul.f32 %v3021, %v3024
  %v3031 = vpack.c.bf16 %v3028, %v3028
  %v3032 = vpack.c.bf16 %v3029, %v3029
  %v3033 = vpack.c.bf16 %v3030, %v3030
  %v3034 = vld [vmem:[%s12] sm:$0xf]
  %v3035 = vld [vmem:[%s12 + $0x4] sm:$0xf]
  %v3036 = vld [vmem:[%s12 + $0x8] sm:$0xf]
  %v3037 = vld [vmem:[%s12 + $0xc] sm:$0xf]
  %v3038 = vld [vmem:[%s12 + $0x10] sm:$0xf]
  %v3039 = vld [vmem:[%s12 + $0x14] sm:$0xf]
  %v3040 = vld [vmem:[%s12 + $0x18] sm:$0xf]
  %v3041 = vld [vmem:[%s12 + $0x1c] sm:$0xf]
  %v3042 = vld [vmem:[%s12 + $0x20] sm:$0xf]
  %v3043 = vld [vmem:[%s12 + $0x24] sm:$0xf]
  %v3044 = vld [vmem:[%s12 + $0x28] sm:$0xf]
  %v3045 = vld [vmem:[%s12 + $0x2c] sm:$0xf]
  %v3046 = vld [vmem:[%s12 + $0x30] sm:$0xf]
  %v3047 = vld [vmem:[%s12 + $0x34] sm:$0xf]
  %v3048 = vld [vmem:[%s12 + $0x38] sm:$0xf]
  %v3049 = vld [vmem:[%s12 + $0x3c] sm:$0xf]
  %v3050 = vld [vmem:[%s12 + $0x40] sm:$0xf]
  %v3051 = vld [vmem:[%s12 + $0x44] sm:$0xf]
  %v3052 = vld [vmem:[%s12 + $0x48] sm:$0xf]
  %v3053 = vld [vmem:[%s12 + $0x4c] sm:$0xf]
  %v3054 = vld [vmem:[%s12 + $0x50] sm:$0xf]
  %v3055 = vld [vmem:[%s12 + $0x54] sm:$0xf]
  %v3056 = vld [vmem:[%s12 + $0x58] sm:$0xf]
  %v3057 = vld [vmem:[%s12 + $0x5c] sm:$0xf]
  %v3058 = vld [vmem:[%s12 + $0x60] sm:$0xf]
  %v3059 = vld [vmem:[%s12 + $0x64] sm:$0xf]
  %v3060 = vld [vmem:[%s12 + $0x68] sm:$0xf]
  %v3061 = vld [vmem:[%s12 + $0x6c] sm:$0xf]
  %v3062 = vld [vmem:[%s12 + $0x70] sm:$0xf]
  %v3063 = vld [vmem:[%s12 + $0x74] sm:$0xf]
  %v3064 = vld [vmem:[%s12 + $0x78] sm:$0xf]
  %v3065 = vld [vmem:[%s12 + $0x7c] sm:$0xf]
  %v3066 = vld [vmem:[%s12 + $0x80] sm:$0xf]
  %v3067 = vld [vmem:[%s12 + $0x84] sm:$0xf]
  %v3068 = vld [vmem:[%s12 + $0x88] sm:$0xf]
  %v3069 = vld [vmem:[%s12 + $0x8c] sm:$0xf]
  %v3106 = vunpack.c.l.b16 %v3034
  %v3107 = vunpack.c.l.b16 %v3035
  %v3108 = vunpack.c.l.b16 %v3036
  %v3109 = vunpack.c.l.b16 %v3037
  %v3110 = vunpack.c.l.b16 %v3038
  %v3111 = vunpack.c.l.b16 %v3039
  %v3112 = vunpack.c.l.b16 %v3040
  %v3113 = vunpack.c.l.b16 %v3041
  %v3114 = vunpack.c.l.b16 %v3042
  %v3115 = vunpack.c.l.b16 %v3043
  %v3116 = vunpack.c.l.b16 %v3044
  %v3117 = vunpack.c.l.b16 %v3045
  %v3118 = vunpack.c.l.b16 %v3046
  %v3119 = vunpack.c.l.b16 %v3047
  %v3120 = vunpack.c.l.b16 %v3048
  %v3121 = vunpack.c.l.b16 %v3049
  %v3122 = vunpack.c.l.b16 %v3050
  %v3123 = vunpack.c.l.b16 %v3051
  %v3124 = vunpack.c.l.b16 %v3052
  %v3125 = vunpack.c.l.b16 %v3053
  %v3126 = vunpack.c.l.b16 %v3054
  %v3127 = vunpack.c.l.b16 %v3055
  %v3128 = vunpack.c.l.b16 %v3056
  %v3129 = vunpack.c.l.b16 %v3057
  %v3130 = vunpack.c.l.b16 %v3058
  %v3131 = vunpack.c.l.b16 %v3059
  %v3132 = vunpack.c.l.b16 %v3060
  %v3133 = vunpack.c.l.b16 %v3061
  %v3134 = vunpack.c.l.b16 %v3062
  %v3135 = vunpack.c.l.b16 %v3063
  %v3136 = vunpack.c.l.b16 %v3064
  %v3137 = vunpack.c.l.b16 %v3065
  %v3138 = vunpack.c.l.b16 %v3066
  %v3139 = vunpack.c.l.b16 %v3067
  %v3140 = vunpack.c.l.b16 %v3068
  %v3141 = vunpack.c.l.b16 %v3069
  %v3142 = vpack.c.b16 %v3107, %v3106
  %v3143 = vpack.c.b16 %v3109, %v3108
  %v3144 = vpack.c.b16 %v3111, %v3110
  %v3145 = vpack.c.b16 %v3113, %v3112
  %v3146 = vpack.c.b16 %v3115, %v3114
  %v3147 = vpack.c.b16 %v3117, %v3116
  %v3148 = vpack.c.b16 %v3119, %v3118
  %v3149 = vpack.c.b16 %v3121, %v3120
  %v3150 = vpack.c.b16 %v3123, %v3122
  %v3151 = vpack.c.b16 %v3125, %v3124
  %v3152 = vpack.c.b16 %v3127, %v3126
  %v3153 = vpack.c.b16 %v3129, %v3128
  %v3154 = vpack.c.b16 %v3131, %v3130
  %v3155 = vpack.c.b16 %v3133, %v3132
  %v3156 = vpack.c.b16 %v3135, %v3134
  %v3157 = vpack.c.b16 %v3137, %v3136
  %v3158 = vpack.c.b16 %v3139, %v3138
  %v3159 = vpack.c.b16 %v3141, %v3140
  %v3179 = vsel %vm169, %v3033, 0
  %3181 = vmatprep.subr.bf16.mxu0 0
  %3182 = vmatpush1.bf16.msra.mxu0 %v3149
  %3183 = vmatprep.subr.bf16.mxu0 0
  %3184 = vmatpush1.bf16.msra.mxu0 %v3148
  %3185 = vmatprep.subr.bf16.mxu0 0
  %3186 = vmatpush1.bf16.msra.mxu0 %v3147
  %3187 = vmatprep.subr.bf16.mxu0 0
  %3188 = vmatpush1.bf16.msra.mxu0 %v3146
  %3189 = vmatprep.subr.bf16.mxu0 0
  %3190 = vmatpush1.bf16.msra.mxu0 %v3145
  %3191 = vmatprep.subr.bf16.mxu0 0
  %3192 = vmatpush1.bf16.msra.mxu0 %v3144
  %3193 = vmatprep.subr.bf16.mxu0 0
  %3194 = vmatpush1.bf16.msra.mxu0 %v3143
  %3195 = vmatprep.subr.bf16.mxu0 0
  %3196 = vmatpush1.bf16.msra.mxu0 %v3142
  %3197 = vmatprep.subr.bf16.mxu0 0
  %3198 = vmatpush2.bf16.msra.mxu0 %v3157
  %3199 = vmatprep.subr.bf16.mxu0 0
  %3200 = vmatpush2.bf16.msra.mxu0 %v3156
  %3201 = vmatprep.subr.bf16.mxu0 0
  %3202 = vmatpush2.bf16.msra.mxu0 %v3155
  %3203 = vmatprep.subr.bf16.mxu0 0
  %3204 = vmatpush2.bf16.msra.mxu0 %v3154
  %3205 = vmatprep.subr.bf16.mxu0 0
  %3206 = vmatpush2.bf16.msra.mxu0 %v3153
  %3207 = vmatprep.subr.bf16.mxu0 0
  %3208 = vmatpush2.bf16.msra.mxu0 %v3152
  %3209 = vmatprep.subr.bf16.mxu0 0
  %3210 = vmatpush2.bf16.msra.mxu0 %v3151
  %3211 = vmatprep.subr.bf16.mxu0 0
  %3212 = vmatpush2.bf16.msra.mxu0 %v3150
  %3213 = vmatprep.mubr.bf16.mxu0 %v3032
  %3214 = vmatmul.mubr.bf16.gmra.mxu0 %v3031
  %v3215 = vpop.f32.mrf.mxu0
  %v3216 = vadd.f32 0.0, %v3215
  %v3217 = vpop.f32.mrf.mxu0
  %v3218 = vpop.f32.mrf.mxu0
  %v3219 = vpop.f32.mrf.mxu0
  %3220 = vdwg.mxu0
  %3221 = vmatprep.subr.bf16.mxu0 0
  %3222 = vmatpush1.bf16.msra.mxu0 0
  %3223 = vmatprep.subr.bf16.mxu0 0
  %3224 = vmatpush1.bf16.msra.mxu0 0
  %3225 = vmatprep.subr.bf16.mxu0 0
  %3226 = vmatpush1.bf16.msra.mxu0 0
  %3227 = vmatprep.subr.bf16.mxu0 0
  %3228 = vmatpush1.bf16.msra.mxu0 0
  %3229 = vmatprep.subr.bf16.mxu0 0
  %3230 = vmatpush1.bf16.msra.mxu0 0
  %3231 = vmatprep.subr.bf16.mxu0 0
  %3232 = vmatpush1.bf16.msra.mxu0 0
  %3233 = vmatprep.subr.bf16.mxu0 0
  %3234 = vmatpush1.bf16.msra.mxu0 %v3159
  %3235 = vmatprep.subr.bf16.mxu0 0
  %3236 = vmatpush1.bf16.msra.mxu0 %v3158
  %3237 = vmatprep.subr.bf16.mxu0 0
  %3238 = vmatpush2.bf16.msra.mxu0 0
  %3239 = vmatprep.subr.bf16.mxu0 0
  %3240 = vmatpush2.bf16.msra.mxu0 0
  %3241 = vmatprep.subr.bf16.mxu0 0
  %3242 = vmatpush2.bf16.msra.mxu0 0
  %3243 = vmatprep.subr.bf16.mxu0 0
  %3244 = vmatpush2.bf16.msra.mxu0 0
  %3245 = vmatprep.subr.bf16.mxu0 0
  %3246 = vmatpush2.bf16.msra.mxu0 0
  %3247 = vmatprep.subr.bf16.mxu0 0
  %3248 = vmatpush2.bf16.msra.mxu0 0
  %3249 = vmatprep.subr.bf16.mxu0 0
  %3250 = vmatpush2.bf16.msra.mxu0 0
  %3251 = vmatprep.subr.bf16.mxu0 0
  %3252 = vmatpush2.bf16.msra.mxu0 0
  %3253 = vmatprep.mubr.bf16.mxu0 0
  %3254 = vmatmul.mubr.bf16.gmra.mxu0 %v3179
  %v3255 = vpop.f32.mrf.mxu0
  %v3256 = vadd.f32 %v3216, %v3255
  %v3257 = vpop.f32.mrf.mxu0
  %v3258 = vpop.f32.mrf.mxu0
  %v3259 = vpop.f32.mrf.mxu0
  %3260 = vdwg.mxu0
  %v3261 = vadd.f32 %v2639, %v3256
  %s3262 = scalar_lea.vmem %s13, 20
  %3263 = vst.msk [vmem:[%s3262] sm:$0xf] %vm150, %v3261
  %v3264 = vpack.c.bf16 %v3261, %v3261
  %v3265 = vld [vmem:[%s4] sm:$0xf]
  %v3266 = vld [vmem:[%s4 + $0x4] sm:$0xf]
  %v3267 = vld [vmem:[%s4 + $0x8] sm:$0xf]
  %v3268 = vld [vmem:[%s4 + $0xc] sm:$0xf]
  %v3273 = vunpack.c.l.b16 %v3265
  %v3274 = vunpack.c.l.b16 %v3266
  %v3275 = vunpack.c.l.b16 %v3267
  %v3276 = vunpack.c.l.b16 %v3268
  %v3277 = vpack.c.b16 %v3274, %v3273
  %v3278 = vpack.c.b16 %v3276, %v3275
  %v3282 = vsel %vm169, %v3264, 0
  %3284 = vmatprep.subr.bf16.mxu0 0
  %3285 = vmatpush1.bf16.msra.mxu0 0
  %3286 = vmatprep.subr.bf16.mxu0 0
  %3287 = vmatpush1.bf16.msra.mxu0 0
  %3288 = vmatprep.subr.bf16.mxu0 0
  %3289 = vmatpush1.bf16.msra.mxu0 0
  %3290 = vmatprep.subr.bf16.mxu0 0
  %3291 = vmatpush1.bf16.msra.mxu0 0
  %3292 = vmatprep.subr.bf16.mxu0 0
  %3293 = vmatpush1.bf16.msra.mxu0 0
  %3294 = vmatprep.subr.bf16.mxu0 0
  %3295 = vmatpush1.bf16.msra.mxu0 0
  %3296 = vmatprep.subr.bf16.mxu0 0
  %3297 = vmatpush1.bf16.msra.mxu0 %v3278
  %3298 = vmatprep.subr.bf16.mxu0 0
  %3299 = vmatpush1.bf16.msra.mxu0 %v3277
  %3300 = vmatprep.subr.bf16.mxu0 0
  %3301 = vmatpush2.bf16.msra.mxu0 0
  %3302 = vmatprep.subr.bf16.mxu0 0
  %3303 = vmatpush2.bf16.msra.mxu0 0
  %3304 = vmatprep.subr.bf16.mxu0 0
  %3305 = vmatpush2.bf16.msra.mxu0 0
  %3306 = vmatprep.subr.bf16.mxu0 0
  %3307 = vmatpush2.bf16.msra.mxu0 0
  %3308 = vmatprep.subr.bf16.mxu0 0
  %3309 = vmatpush2.bf16.msra.mxu0 0
  %3310 = vmatprep.subr.bf16.mxu0 0
  %3311 = vmatpush2.bf16.msra.mxu0 0
  %3312 = vmatprep.subr.bf16.mxu0 0
  %3313 = vmatpush2.bf16.msra.mxu0 0
  %3314 = vmatprep.subr.bf16.mxu0 0
  %3315 = vmatpush2.bf16.msra.mxu0 0
  %3316 = vmatprep.mubr.bf16.mxu0 0
  %3317 = vmatmul.mubr.bf16.gmra.mxu0 %v3282
  %v3318 = vpop.f32.mrf.mxu0
  %v3319 = vadd.f32 %v50, %v3318
  %v3320 = vpop.f32.mrf.mxu0
  %v3321 = vpop.f32.mrf.mxu0
  %v3322 = vpop.f32.mrf.mxu0
  %3323 = vdwg.mxu0
  %v3324 = vmax.f32 %v3319, 0.0
  %v3325 = vpack.c.bf16 %v3324, %v3324
  %v3326 = vld [vmem:[%s6] sm:$0xf]
  %v3327 = vld [vmem:[%s6 + $0x4] sm:$0xf]
  %v3328 = vld [vmem:[%s6 + $0x8] sm:$0xf]
  %v3329 = vld [vmem:[%s6 + $0xc] sm:$0xf]
  %v3330 = vld [vmem:[%s6 + $0x10] sm:$0xf]
  %v3331 = vld [vmem:[%s6 + $0x14] sm:$0xf]
  %v3332 = vld [vmem:[%s6 + $0x18] sm:$0x1]
  %v3340 = vunpack.c.l.b16 %v3326
  %v3341 = vunpack.c.l.b16 %v3327
  %v3342 = vunpack.c.l.b16 %v3328
  %v3343 = vunpack.c.l.b16 %v3329
  %v3344 = vunpack.c.l.b16 %v3330
  %v3345 = vunpack.c.l.b16 %v3331
  %v3346 = vunpack.c.l.b16 %v3332
  %v3347 = vpack.c.b16 %v3341, %v3340
  %v3348 = vpack.c.b16 %v3343, %v3342
  %v3349 = vpack.c.b16 %v3345, %v3344
  %v3350 = vpack.c.b16 %v3346, %v3346
  %v3355 = vsel %vm243, %v3325, 0
  %v3358 = vsel %vm247, %v3350, 0
  %3360 = vmatprep.subr.bf16.mxu0 0
  %3361 = vmatpush1.bf16.msra.mxu0 0
  %3362 = vmatprep.subr.bf16.mxu0 0
  %3363 = vmatpush1.bf16.msra.mxu0 0
  %3364 = vmatprep.subr.bf16.mxu0 0
  %3365 = vmatpush1.bf16.msra.mxu0 0
  %3366 = vmatprep.subr.bf16.mxu0 0
  %3367 = vmatpush1.bf16.msra.mxu0 0
  %3368 = vmatprep.subr.bf16.mxu0 0
  %3369 = vmatpush1.bf16.msra.mxu0 %v3358
  %3370 = vmatprep.subr.bf16.mxu0 0
  %3371 = vmatpush1.bf16.msra.mxu0 %v3349
  %3372 = vmatprep.subr.bf16.mxu0 0
  %3373 = vmatpush1.bf16.msra.mxu0 %v3348
  %3374 = vmatprep.subr.bf16.mxu0 0
  %3375 = vmatpush1.bf16.msra.mxu0 %v3347
  %3376 = vmatprep.subr.bf16.mxu0 0
  %3377 = vmatpush2.bf16.msra.mxu0 0
  %3378 = vmatprep.subr.bf16.mxu0 0
  %3379 = vmatpush2.bf16.msra.mxu0 0
  %3380 = vmatprep.subr.bf16.mxu0 0
  %3381 = vmatpush2.bf16.msra.mxu0 0
  %3382 = vmatprep.subr.bf16.mxu0 0
  %3383 = vmatpush2.bf16.msra.mxu0 0
  %3384 = vmatprep.subr.bf16.mxu0 0
  %3385 = vmatpush2.bf16.msra.mxu0 0
  %3386 = vmatprep.subr.bf16.mxu0 0
  %3387 = vmatpush2.bf16.msra.mxu0 0
  %3388 = vmatprep.subr.bf16.mxu0 0
  %3389 = vmatpush2.bf16.msra.mxu0 0
  %3390 = vmatprep.subr.bf16.mxu0 0
  %3391 = vmatpush2.bf16.msra.mxu0 0
  %3392 = vmatprep.mubr.bf16.mxu0 0
  %3393 = vmatmul.mubr.bf16.gmra.mxu0 %v3355
  %v3394 = vpop.f32.mrf.mxu0
  %v3395 = vadd.f32 %v57, %v3394
  %v3396 = vpop.f32.mrf.mxu0
  %v3397 = vpop.f32.mrf.mxu0
  %v3398 = vpop.f32.mrf.mxu0
  %3399 = vdwg.mxu0
  %v3400 = vmax.f32 %v3395, 0.0
  %v3401 = vpack.c.bf16 %v3400, %v3400
  %v3402 = vld [vmem:[%s8] sm:$0xf]
  %v3403 = vld [vmem:[%s8 + $0x4] sm:$0xf]
  %v3404 = vld [vmem:[%s8 + $0x8] sm:$0xf]
  %v3405 = vld [vmem:[%s8 + $0xc] sm:$0xf]
  %v3406 = vld [vmem:[%s8 + $0x10] sm:$0xf]
  %v3407 = vld [vmem:[%s8 + $0x14] sm:$0xf]
  %v3408 = vld [vmem:[%s8 + $0x18] sm:$0x1]
  %v3416 = vunpack.c.l.b16 %v3402
  %v3417 = vunpack.c.l.b16 %v3403
  %v3418 = vunpack.c.l.b16 %v3404
  %v3419 = vunpack.c.l.b16 %v3405
  %v3420 = vunpack.c.l.b16 %v3406
  %v3421 = vunpack.c.l.b16 %v3407
  %v3422 = vunpack.c.l.b16 %v3408
  %v3423 = vpack.c.b16 %v3417, %v3416
  %v3424 = vpack.c.b16 %v3419, %v3418
  %v3425 = vpack.c.b16 %v3421, %v3420
  %v3426 = vpack.c.b16 %v3422, %v3422
  %v3431 = vsel %vm243, %v3401, 0
  %v3434 = vsel %vm247, %v3426, 0
  %3436 = vmatprep.subr.bf16.mxu0 0
  %3437 = vmatpush1.bf16.msra.mxu0 0
  %3438 = vmatprep.subr.bf16.mxu0 0
  %3439 = vmatpush1.bf16.msra.mxu0 0
  %3440 = vmatprep.subr.bf16.mxu0 0
  %3441 = vmatpush1.bf16.msra.mxu0 0
  %3442 = vmatprep.subr.bf16.mxu0 0
  %3443 = vmatpush1.bf16.msra.mxu0 0
  %3444 = vmatprep.subr.bf16.mxu0 0
  %3445 = vmatpush1.bf16.msra.mxu0 %v3434
  %3446 = vmatprep.subr.bf16.mxu0 0
  %3447 = vmatpush1.bf16.msra.mxu0 %v3425
  %3448 = vmatprep.subr.bf16.mxu0 0
  %3449 = vmatpush1.bf16.msra.mxu0 %v3424
  %3450 = vmatprep.subr.bf16.mxu0 0
  %3451 = vmatpush1.bf16.msra.mxu0 %v3423
  %3452 = vmatprep.subr.bf16.mxu0 0
  %3453 = vmatpush2.bf16.msra.mxu0 0
  %3454 = vmatprep.subr.bf16.mxu0 0
  %3455 = vmatpush2.bf16.msra.mxu0 0
  %3456 = vmatprep.subr.bf16.mxu0 0
  %3457 = vmatpush2.bf16.msra.mxu0 0
  %3458 = vmatprep.subr.bf16.mxu0 0
  %3459 = vmatpush2.bf16.msra.mxu0 0
  %3460 = vmatprep.subr.bf16.mxu0 0
  %3461 = vmatpush2.bf16.msra.mxu0 0
  %3462 = vmatprep.subr.bf16.mxu0 0
  %3463 = vmatpush2.bf16.msra.mxu0 0
  %3464 = vmatprep.subr.bf16.mxu0 0
  %3465 = vmatpush2.bf16.msra.mxu0 0
  %3466 = vmatprep.subr.bf16.mxu0 0
  %3467 = vmatpush2.bf16.msra.mxu0 0
  %3468 = vmatprep.mubr.bf16.mxu0 0
  %3469 = vmatmul.mubr.bf16.gmra.mxu0 %v3431
  %v3470 = vpop.f32.mrf.mxu0
  %v3471 = vadd.f32 %v64, %v3470
  %v3472 = vpop.f32.mrf.mxu0
  %v3473 = vpop.f32.mrf.mxu0
  %v3474 = vpop.f32.mrf.mxu0
  %3475 = vdwg.mxu0
  %v3476 = vmax.f32 %v3471, 0.0
  %v3477 = vpack.c.bf16 %v3476, %v3476
  %v3478 = vld [vmem:[%s10] sm:$0xff]
  %v3479 = vld [vmem:[%s10 + $0x8] sm:$0xf]
  %v3480 = vld [vmem:[%s10 + $0xc] sm:$0xff]
  %v3481 = vld [vmem:[%s10 + $0x14] sm:$0xf]
  %v3482 = vld [vmem:[%s10 + $0x18] sm:$0xff]
  %v3483 = vld [vmem:[%s10 + $0x20] sm:$0xf]
  %v3484 = vld [vmem:[%s10 + $0x24] sm:$0xff]
  %v3485 = vld [vmem:[%s10 + $0x2c] sm:$0xf]
  %v3486 = vld [vmem:[%s10 + $0x30] sm:$0xff]
  %v3487 = vld [vmem:[%s10 + $0x38] sm:$0xf]
  %v3488 = vld [vmem:[%s10 + $0x3c] sm:$0xff]
  %v3489 = vld [vmem:[%s10 + $0x44] sm:$0xf]
  %v3490 = vld [vmem:[%s10 + $0x48] sm:$0x11]
  %v3491 = vld [vmem:[%s10 + $0x50] sm:$0x1]
  %v3506 = vunpack.c.l.b16 %v3478
  %v3507 = vunpack.c.h.b16 %v3478
  %v3508 = vunpack.c.l.b16 %v3479
  %v3509 = vunpack.c.l.b16 %v3480
  %v3510 = vunpack.c.h.b16 %v3480
  %v3511 = vunpack.c.l.b16 %v3481
  %v3512 = vunpack.c.l.b16 %v3482
  %v3513 = vunpack.c.h.b16 %v3482
  %v3514 = vunpack.c.l.b16 %v3483
  %v3515 = vunpack.c.l.b16 %v3484
  %v3516 = vunpack.c.h.b16 %v3484
  %v3517 = vunpack.c.l.b16 %v3485
  %v3518 = vunpack.c.l.b16 %v3486
  %v3519 = vunpack.c.h.b16 %v3486
  %v3520 = vunpack.c.l.b16 %v3487
  %v3521 = vunpack.c.l.b16 %v3488
  %v3522 = vunpack.c.h.b16 %v3488
  %v3523 = vunpack.c.l.b16 %v3489
  %v3524 = vunpack.c.l.b16 %v3490
  %v3525 = vunpack.c.h.b16 %v3490
  %v3526 = vunpack.c.l.b16 %v3491
  %v3527 = vpack.c.b16 %v3509, %v3506
  %v3528 = vpack.c.b16 %v3510, %v3507
  %v3529 = vpack.c.b16 %v3511, %v3508
  %v3530 = vpack.c.b16 %v3515, %v3512
  %v3531 = vpack.c.b16 %v3516, %v3513
  %v3532 = vpack.c.b16 %v3517, %v3514
  %v3533 = vpack.c.b16 %v3521, %v3518
  %v3534 = vpack.c.b16 %v3522, %v3519
  %v3535 = vpack.c.b16 %v3523, %v3520
  %v3536 = vpack.c.b16 %v3524, %v3524
  %v3537 = vpack.c.b16 %v3525, %v3525
  %v3538 = vpack.c.b16 %v3526, %v3526
  %v3549 = vsel %vm243, %v3477, 0
  %v3552 = vsel %vm247, %v3536, 0
  %v3555 = vsel %vm247, %v3537, 0
  %v3558 = vsel %vm247, %v3538, 0
  %3560 = vmatprep.subr.bf16.mxu0 0
  %3561 = vmatpush1.bf16.msra.mxu0 0
  %3562 = vmatprep.subr.bf16.mxu0 0
  %3563 = vmatpush1.bf16.msra.mxu0 0
  %3564 = vmatprep.subr.bf16.mxu0 0
  %3565 = vmatpush1.bf16.msra.mxu0 0
  %3566 = vmatprep.subr.bf16.mxu0 0
  %3567 = vmatpush1.bf16.msra.mxu0 0
  %3568 = vmatprep.subr.bf16.mxu0 %v3555
  %3569 = vmatpush1.bf16.msra.mxu0 %v3552
  %3570 = vmatprep.subr.bf16.mxu0 %v3534
  %3571 = vmatpush1.bf16.msra.mxu0 %v3533
  %3572 = vmatprep.subr.bf16.mxu0 %v3531
  %3573 = vmatpush1.bf16.msra.mxu0 %v3530
  %3574 = vmatprep.subr.bf16.mxu0 %v3528
  %3575 = vmatpush1.bf16.msra.mxu0 %v3527
  %3576 = vmatprep.subr.bf16.mxu0 0
  %3577 = vmatpush2.bf16.msra.mxu0 0
  %3578 = vmatprep.subr.bf16.mxu0 0
  %3579 = vmatpush2.bf16.msra.mxu0 0
  %3580 = vmatprep.subr.bf16.mxu0 0
  %3581 = vmatpush2.bf16.msra.mxu0 0
  %3582 = vmatprep.subr.bf16.mxu0 0
  %3583 = vmatpush2.bf16.msra.mxu0 0
  %3584 = vmatprep.subr.bf16.mxu0 0
  %3585 = vmatpush2.bf16.msra.mxu0 0
  %3586 = vmatprep.subr.bf16.mxu0 0
  %3587 = vmatpush2.bf16.msra.mxu0 0
  %3588 = vmatprep.subr.bf16.mxu0 0
  %3589 = vmatpush2.bf16.msra.mxu0 0
  %3590 = vmatprep.subr.bf16.mxu0 0
  %3591 = vmatpush2.bf16.msra.mxu0 0
  %3592 = vmatprep.mubr.bf16.mxu0 0
  %3593 = vmatmul.mubr.bf16.gmra.mxu0 %v3549
  %v3594 = vpop.f32.mrf.mxu0
  %v3595 = vadd.f32 %v71, %v3594
  %v3596 = vpop.f32.mrf.mxu0
  %v3597 = vadd.f32 %v75, %v3596
  %v3598 = vpop.f32.mrf.mxu0
  %v3599 = vpop.f32.mrf.mxu0
  %3600 = vdwg.mxu0
  %3601 = vmatprep.subr.bf16.mxu0 0
  %3602 = vmatpush1.bf16.msra.mxu0 0
  %3603 = vmatprep.subr.bf16.mxu0 0
  %3604 = vmatpush1.bf16.msra.mxu0 0
  %3605 = vmatprep.subr.bf16.mxu0 0
  %3606 = vmatpush1.bf16.msra.mxu0 0
  %3607 = vmatprep.subr.bf16.mxu0 0
  %3608 = vmatpush1.bf16.msra.mxu0 0
  %3609 = vmatprep.subr.bf16.mxu0 0
  %3610 = vmatpush1.bf16.msra.mxu0 %v3558
  %3611 = vmatprep.subr.bf16.mxu0 0
  %3612 = vmatpush1.bf16.msra.mxu0 %v3535
  %3613 = vmatprep.subr.bf16.mxu0 0
  %3614 = vmatpush1.bf16.msra.mxu0 %v3532
  %3615 = vmatprep.subr.bf16.mxu0 0
  %3616 = vmatpush1.bf16.msra.mxu0 %v3529
  %3617 = vmatprep.subr.bf16.mxu0 0
  %3618 = vmatpush2.bf16.msra.mxu0 0
  %3619 = vmatprep.subr.bf16.mxu0 0
  %3620 = vmatpush2.bf16.msra.mxu0 0
  %3621 = vmatprep.subr.bf16.mxu0 0
  %3622 = vmatpush2.bf16.msra.mxu0 0
  %3623 = vmatprep.subr.bf16.mxu0 0
  %3624 = vmatpush2.bf16.msra.mxu0 0
  %3625 = vmatprep.subr.bf16.mxu0 0
  %3626 = vmatpush2.bf16.msra.mxu0 0
  %3627 = vmatprep.subr.bf16.mxu0 0
  %3628 = vmatpush2.bf16.msra.mxu0 0
  %3629 = vmatprep.subr.bf16.mxu0 0
  %3630 = vmatpush2.bf16.msra.mxu0 0
  %3631 = vmatprep.subr.bf16.mxu0 0
  %3632 = vmatpush2.bf16.msra.mxu0 0
  %3633 = vmatprep.mubr.bf16.mxu0 0
  %3634 = vmatmul.mubr.bf16.gmra.mxu0 %v3549
  %v3635 = vpop.f32.mrf.mxu0
  %v3636 = vadd.f32 %v79, %v3635
  %v3637 = vpop.f32.mrf.mxu0
  %v3638 = vpop.f32.mrf.mxu0
  %v3639 = vpop.f32.mrf.mxu0
  %3640 = vdwg.mxu0
  %v3641 = vtanh.pop %v3595
  %v3642 = vtanh.pop %v3597
  %v3643 = vtanh.pop %v3636
  %s3644 = scalar_lea.vmem %s1, 60
  %v3645 = vld [vmem:[%s3644] sm:$0xff]
  %v3646 = vld [vmem:[%s3644 + $0x8] sm:$0xf]
  %v3648 = vcombine.high %v3645, %v3645
  %v3650 = vmul.f32 %v3641, %v3645
  %v3651 = vmul.f32 %v3642, %v3648
  %v3652 = vmul.f32 %v3643, %v3646
  %v3653 = vpack.c.bf16 %v3650, %v3650
  %v3654 = vpack.c.bf16 %v3651, %v3651
  %v3655 = vpack.c.bf16 %v3652, %v3652
  %v3656 = vld [vmem:[%s12] sm:$0xf]
  %v3657 = vld [vmem:[%s12 + $0x4] sm:$0xf]
  %v3658 = vld [vmem:[%s12 + $0x8] sm:$0xf]
  %v3659 = vld [vmem:[%s12 + $0xc] sm:$0xf]
  %v3660 = vld [vmem:[%s12 + $0x10] sm:$0xf]
  %v3661 = vld [vmem:[%s12 + $0x14] sm:$0xf]
  %v3662 = vld [vmem:[%s12 + $0x18] sm:$0xf]
  %v3663 = vld [vmem:[%s12 + $0x1c] sm:$0xf]
  %v3664 = vld [vmem:[%s12 + $0x20] sm:$0xf]
  %v3665 = vld [vmem:[%s12 + $0x24] sm:$0xf]
  %v3666 = vld [vmem:[%s12 + $0x28] sm:$0xf]
  %v3667 = vld [vmem:[%s12 + $0x2c] sm:$0xf]
  %v3668 = vld [vmem:[%s12 + $0x30] sm:$0xf]
  %v3669 = vld [vmem:[%s12 + $0x34] sm:$0xf]
  %v3670 = vld [vmem:[%s12 + $0x38] sm:$0xf]
  %v3671 = vld [vmem:[%s12 + $0x3c] sm:$0xf]
  %v3672 = vld [vmem:[%s12 + $0x40] sm:$0xf]
  %v3673 = vld [vmem:[%s12 + $0x44] sm:$0xf]
  %v3674 = vld [vmem:[%s12 + $0x48] sm:$0xf]
  %v3675 = vld [vmem:[%s12 + $0x4c] sm:$0xf]
  %v3676 = vld [vmem:[%s12 + $0x50] sm:$0xf]
  %v3677 = vld [vmem:[%s12 + $0x54] sm:$0xf]
  %v3678 = vld [vmem:[%s12 + $0x58] sm:$0xf]
  %v3679 = vld [vmem:[%s12 + $0x5c] sm:$0xf]
  %v3680 = vld [vmem:[%s12 + $0x60] sm:$0xf]
  %v3681 = vld [vmem:[%s12 + $0x64] sm:$0xf]
  %v3682 = vld [vmem:[%s12 + $0x68] sm:$0xf]
  %v3683 = vld [vmem:[%s12 + $0x6c] sm:$0xf]
  %v3684 = vld [vmem:[%s12 + $0x70] sm:$0xf]
  %v3685 = vld [vmem:[%s12 + $0x74] sm:$0xf]
  %v3686 = vld [vmem:[%s12 + $0x78] sm:$0xf]
  %v3687 = vld [vmem:[%s12 + $0x7c] sm:$0xf]
  %v3688 = vld [vmem:[%s12 + $0x80] sm:$0xf]
  %v3689 = vld [vmem:[%s12 + $0x84] sm:$0xf]
  %v3690 = vld [vmem:[%s12 + $0x88] sm:$0xf]
  %v3691 = vld [vmem:[%s12 + $0x8c] sm:$0xf]
  %v3728 = vunpack.c.l.b16 %v3656
  %v3729 = vunpack.c.l.b16 %v3657
  %v3730 = vunpack.c.l.b16 %v3658
  %v3731 = vunpack.c.l.b16 %v3659
  %v3732 = vunpack.c.l.b16 %v3660
  %v3733 = vunpack.c.l.b16 %v3661
  %v3734 = vunpack.c.l.b16 %v3662
  %v3735 = vunpack.c.l.b16 %v3663
  %v3736 = vunpack.c.l.b16 %v3664
  %v3737 = vunpack.c.l.b16 %v3665
  %v3738 = vunpack.c.l.b16 %v3666
  %v3739 = vunpack.c.l.b16 %v3667
  %v3740 = vunpack.c.l.b16 %v3668
  %v3741 = vunpack.c.l.b16 %v3669
  %v3742 = vunpack.c.l.b16 %v3670
  %v3743 = vunpack.c.l.b16 %v3671
  %v3744 = vunpack.c.l.b16 %v3672
  %v3745 = vunpack.c.l.b16 %v3673
  %v3746 = vunpack.c.l.b16 %v3674
  %v3747 = vunpack.c.l.b16 %v3675
  %v3748 = vunpack.c.l.b16 %v3676
  %v3749 = vunpack.c.l.b16 %v3677
  %v3750 = vunpack.c.l.b16 %v3678
  %v3751 = vunpack.c.l.b16 %v3679
  %v3752 = vunpack.c.l.b16 %v3680
  %v3753 = vunpack.c.l.b16 %v3681
  %v3754 = vunpack.c.l.b16 %v3682
  %v3755 = vunpack.c.l.b16 %v3683
  %v3756 = vunpack.c.l.b16 %v3684
  %v3757 = vunpack.c.l.b16 %v3685
  %v3758 = vunpack.c.l.b16 %v3686
  %v3759 = vunpack.c.l.b16 %v3687
  %v3760 = vunpack.c.l.b16 %v3688
  %v3761 = vunpack.c.l.b16 %v3689
  %v3762 = vunpack.c.l.b16 %v3690
  %v3763 = vunpack.c.l.b16 %v3691
  %v3764 = vpack.c.b16 %v3729, %v3728
  %v3765 = vpack.c.b16 %v3731, %v3730
  %v3766 = vpack.c.b16 %v3733, %v3732
  %v3767 = vpack.c.b16 %v3735, %v3734
  %v3768 = vpack.c.b16 %v3737, %v3736
  %v3769 = vpack.c.b16 %v3739, %v3738
  %v3770 = vpack.c.b16 %v3741, %v3740
  %v3771 = vpack.c.b16 %v3743, %v3742
  %v3772 = vpack.c.b16 %v3745, %v3744
  %v3773 = vpack.c.b16 %v3747, %v3746
  %v3774 = vpack.c.b16 %v3749, %v3748
  %v3775 = vpack.c.b16 %v3751, %v3750
  %v3776 = vpack.c.b16 %v3753, %v3752
  %v3777 = vpack.c.b16 %v3755, %v3754
  %v3778 = vpack.c.b16 %v3757, %v3756
  %v3779 = vpack.c.b16 %v3759, %v3758
  %v3780 = vpack.c.b16 %v3761, %v3760
  %v3781 = vpack.c.b16 %v3763, %v3762
  %v3801 = vsel %vm169, %v3655, 0
  %3803 = vmatprep.subr.bf16.mxu0 0
  %3804 = vmatpush1.bf16.msra.mxu0 %v3771
  %3805 = vmatprep.subr.bf16.mxu0 0
  %3806 = vmatpush1.bf16.msra.mxu0 %v3770
  %3807 = vmatprep.subr.bf16.mxu0 0
  %3808 = vmatpush1.bf16.msra.mxu0 %v3769
  %3809 = vmatprep.subr.bf16.mxu0 0
  %3810 = vmatpush1.bf16.msra.mxu0 %v3768
  %3811 = vmatprep.subr.bf16.mxu0 0
  %3812 = vmatpush1.bf16.msra.mxu0 %v3767
  %3813 = vmatprep.subr.bf16.mxu0 0
  %3814 = vmatpush1.bf16.msra.mxu0 %v3766
  %3815 = vmatprep.subr.bf16.mxu0 0
  %3816 = vmatpush1.bf16.msra.mxu0 %v3765
  %3817 = vmatprep.subr.bf16.mxu0 0
  %3818 = vmatpush1.bf16.msra.mxu0 %v3764
  %3819 = vmatprep.subr.bf16.mxu0 0
  %3820 = vmatpush2.bf16.msra.mxu0 %v3779
  %3821 = vmatprep.subr.bf16.mxu0 0
  %3822 = vmatpush2.bf16.msra.mxu0 %v3778
  %3823 = vmatprep.subr.bf16.mxu0 0
  %3824 = vmatpush2.bf16.msra.mxu0 %v3777
  %3825 = vmatprep.subr.bf16.mxu0 0
  %3826 = vmatpush2.bf16.msra.mxu0 %v3776
  %3827 = vmatprep.subr.bf16.mxu0 0
  %3828 = vmatpush2.bf16.msra.mxu0 %v3775
  %3829 = vmatprep.subr.bf16.mxu0 0
  %3830 = vmatpush2.bf16.msra.mxu0 %v3774
  %3831 = vmatprep.subr.bf16.mxu0 0
  %3832 = vmatpush2.bf16.msra.mxu0 %v3773
  %3833 = vmatprep.subr.bf16.mxu0 0
  %3834 = vmatpush2.bf16.msra.mxu0 %v3772
  %3835 = vmatprep.mubr.bf16.mxu0 %v3654
  %3836 = vmatmul.mubr.bf16.gmra.mxu0 %v3653
  %v3837 = vpop.f32.mrf.mxu0
  %v3838 = vadd.f32 0.0, %v3837
  %v3839 = vpop.f32.mrf.mxu0
  %v3840 = vpop.f32.mrf.mxu0
  %v3841 = vpop.f32.mrf.mxu0
  %3842 = vdwg.mxu0
  %3843 = vmatprep.subr.bf16.mxu0 0
  %3844 = vmatpush1.bf16.msra.mxu0 0
  %3845 = vmatprep.subr.bf16.mxu0 0
  %3846 = vmatpush1.bf16.msra.mxu0 0
  %3847 = vmatprep.subr.bf16.mxu0 0
  %3848 = vmatpush1.bf16.msra.mxu0 0
  %3849 = vmatprep.subr.bf16.mxu0 0
  %3850 = vmatpush1.bf16.msra.mxu0 0
  %3851 = vmatprep.subr.bf16.mxu0 0
  %3852 = vmatpush1.bf16.msra.mxu0 0
  %3853 = vmatprep.subr.bf16.mxu0 0
  %3854 = vmatpush1.bf16.msra.mxu0 0
  %3855 = vmatprep.subr.bf16.mxu0 0
  %3856 = vmatpush1.bf16.msra.mxu0 %v3781
  %3857 = vmatprep.subr.bf16.mxu0 0
  %3858 = vmatpush1.bf16.msra.mxu0 %v3780
  %3859 = vmatprep.subr.bf16.mxu0 0
  %3860 = vmatpush2.bf16.msra.mxu0 0
  %3861 = vmatprep.subr.bf16.mxu0 0
  %3862 = vmatpush2.bf16.msra.mxu0 0
  %3863 = vmatprep.subr.bf16.mxu0 0
  %3864 = vmatpush2.bf16.msra.mxu0 0
  %3865 = vmatprep.subr.bf16.mxu0 0
  %3866 = vmatpush2.bf16.msra.mxu0 0
  %3867 = vmatprep.subr.bf16.mxu0 0
  %3868 = vmatpush2.bf16.msra.mxu0 0
  %3869 = vmatprep.subr.bf16.mxu0 0
  %3870 = vmatpush2.bf16.msra.mxu0 0
  %3871 = vmatprep.subr.bf16.mxu0 0
  %3872 = vmatpush2.bf16.msra.mxu0 0
  %3873 = vmatprep.subr.bf16.mxu0 0
  %3874 = vmatpush2.bf16.msra.mxu0 0
  %3875 = vmatprep.mubr.bf16.mxu0 0
  %3876 = vmatmul.mubr.bf16.gmra.mxu0 %v3801
  %v3877 = vpop.f32.mrf.mxu0
  %v3878 = vadd.f32 %v3838, %v3877
  %v3879 = vpop.f32.mrf.mxu0
  %v3880 = vpop.f32.mrf.mxu0
  %v3881 = vpop.f32.mrf.mxu0
  %3882 = vdwg.mxu0
  %v3883 = vadd.f32 %v3261, %v3878
  %s3884 = scalar_lea.vmem %s13, 24
  %3885 = vst.msk [vmem:[%s3884] sm:$0xf] %vm150, %v3883
  %v3886 = vpack.c.bf16 %v3883, %v3883
  %v3887 = vld [vmem:[%s4] sm:$0xf]
  %v3888 = vld [vmem:[%s4 + $0x4] sm:$0xf]
  %v3889 = vld [vmem:[%s4 + $0x8] sm:$0xf]
  %v3890 = vld [vmem:[%s4 + $0xc] sm:$0xf]
  %v3895 = vunpack.c.l.b16 %v3887
  %v3896 = vunpack.c.l.b16 %v3888
  %v3897 = vunpack.c.l.b16 %v3889
  %v3898 = vunpack.c.l.b16 %v3890
  %v3899 = vpack.c.b16 %v3896, %v3895
  %v3900 = vpack.c.b16 %v3898, %v3897
  %v3904 = vsel %vm169, %v3886, 0
  %3906 = vmatprep.subr.bf16.mxu0 0
  %3907 = vmatpush1.bf16.msra.mxu0 0
  %3908 = vmatprep.subr.bf16.mxu0 0
  %3909 = vmatpush1.bf16.msra.mxu0 0
  %3910 = vmatprep.subr.bf16.mxu0 0
  %3911 = vmatpush1.bf16.msra.mxu0 0
  %3912 = vmatprep.subr.bf16.mxu0 0
  %3913 = vmatpush1.bf16.msra.mxu0 0
  %3914 = vmatprep.subr.bf16.mxu0 0
  %3915 = vmatpush1.bf16.msra.mxu0 0
  %3916 = vmatprep.subr.bf16.mxu0 0
  %3917 = vmatpush1.bf16.msra.mxu0 0
  %3918 = vmatprep.subr.bf16.mxu0 0
  %3919 = vmatpush1.bf16.msra.mxu0 %v3900
  %3920 = vmatprep.subr.bf16.mxu0 0
  %3921 = vmatpush1.bf16.msra.mxu0 %v3899
  %3922 = vmatprep.subr.bf16.mxu0 0
  %3923 = vmatpush2.bf16.msra.mxu0 0
  %3924 = vmatprep.subr.bf16.mxu0 0
  %3925 = vmatpush2.bf16.msra.mxu0 0
  %3926 = vmatprep.subr.bf16.mxu0 0
  %3927 = vmatpush2.bf16.msra.mxu0 0
  %3928 = vmatprep.subr.bf16.mxu0 0
  %3929 = vmatpush2.bf16.msra.mxu0 0
  %3930 = vmatprep.subr.bf16.mxu0 0
  %3931 = vmatpush2.bf16.msra.mxu0 0
  %3932 = vmatprep.subr.bf16.mxu0 0
  %3933 = vmatpush2.bf16.msra.mxu0 0
  %3934 = vmatprep.subr.bf16.mxu0 0
  %3935 = vmatpush2.bf16.msra.mxu0 0
  %3936 = vmatprep.subr.bf16.mxu0 0
  %3937 = vmatpush2.bf16.msra.mxu0 0
  %3938 = vmatprep.mubr.bf16.mxu0 0
  %3939 = vmatmul.mubr.bf16.gmra.mxu0 %v3904
  %v3940 = vpop.f32.mrf.mxu0
  %v3941 = vadd.f32 %v50, %v3940
  %v3942 = vpop.f32.mrf.mxu0
  %v3943 = vpop.f32.mrf.mxu0
  %v3944 = vpop.f32.mrf.mxu0
  %3945 = vdwg.mxu0
  %v3946 = vmax.f32 %v3941, 0.0
  %v3947 = vpack.c.bf16 %v3946, %v3946
  %v3948 = vld [vmem:[%s6] sm:$0xf]
  %v3949 = vld [vmem:[%s6 + $0x4] sm:$0xf]
  %v3950 = vld [vmem:[%s6 + $0x8] sm:$0xf]
  %v3951 = vld [vmem:[%s6 + $0xc] sm:$0xf]
  %v3952 = vld [vmem:[%s6 + $0x10] sm:$0xf]
  %v3953 = vld [vmem:[%s6 + $0x14] sm:$0xf]
  %v3954 = vld [vmem:[%s6 + $0x18] sm:$0x1]
  %v3962 = vunpack.c.l.b16 %v3948
  %v3963 = vunpack.c.l.b16 %v3949
  %v3964 = vunpack.c.l.b16 %v3950
  %v3965 = vunpack.c.l.b16 %v3951
  %v3966 = vunpack.c.l.b16 %v3952
  %v3967 = vunpack.c.l.b16 %v3953
  %v3968 = vunpack.c.l.b16 %v3954
  %v3969 = vpack.c.b16 %v3963, %v3962
  %v3970 = vpack.c.b16 %v3965, %v3964
  %v3971 = vpack.c.b16 %v3967, %v3966
  %v3972 = vpack.c.b16 %v3968, %v3968
  %v3977 = vsel %vm243, %v3947, 0
  %v3980 = vsel %vm247, %v3972, 0
  %3982 = vmatprep.subr.bf16.mxu0 0
  %3983 = vmatpush1.bf16.msra.mxu0 0
  %3984 = vmatprep.subr.bf16.mxu0 0
  %3985 = vmatpush1.bf16.msra.mxu0 0
  %3986 = vmatprep.subr.bf16.mxu0 0
  %3987 = vmatpush1.bf16.msra.mxu0 0
  %3988 = vmatprep.subr.bf16.mxu0 0
  %3989 = vmatpush1.bf16.msra.mxu0 0
  %3990 = vmatprep.subr.bf16.mxu0 0
  %3991 = vmatpush1.bf16.msra.mxu0 %v3980
  %3992 = vmatprep.subr.bf16.mxu0 0
  %3993 = vmatpush1.bf16.msra.mxu0 %v3971
  %3994 = vmatprep.subr.bf16.mxu0 0
  %3995 = vmatpush1.bf16.msra.mxu0 %v3970
  %3996 = vmatprep.subr.bf16.mxu0 0
  %3997 = vmatpush1.bf16.msra.mxu0 %v3969
  %3998 = vmatprep.subr.bf16.mxu0 0
  %3999 = vmatpush2.bf16.msra.mxu0 0
  %4000 = vmatprep.subr.bf16.mxu0 0
  %4001 = vmatpush2.bf16.msra.mxu0 0
  %4002 = vmatprep.subr.bf16.mxu0 0
  %4003 = vmatpush2.bf16.msra.mxu0 0
  %4004 = vmatprep.subr.bf16.mxu0 0
  %4005 = vmatpush2.bf16.msra.mxu0 0
  %4006 = vmatprep.subr.bf16.mxu0 0
  %4007 = vmatpush2.bf16.msra.mxu0 0
  %4008 = vmatprep.subr.bf16.mxu0 0
  %4009 = vmatpush2.bf16.msra.mxu0 0
  %4010 = vmatprep.subr.bf16.mxu0 0
  %4011 = vmatpush2.bf16.msra.mxu0 0
  %4012 = vmatprep.subr.bf16.mxu0 0
  %4013 = vmatpush2.bf16.msra.mxu0 0
  %4014 = vmatprep.mubr.bf16.mxu0 0
  %4015 = vmatmul.mubr.bf16.gmra.mxu0 %v3977
  %v4016 = vpop.f32.mrf.mxu0
  %v4017 = vadd.f32 %v57, %v4016
  %v4018 = vpop.f32.mrf.mxu0
  %v4019 = vpop.f32.mrf.mxu0
  %v4020 = vpop.f32.mrf.mxu0
  %4021 = vdwg.mxu0
  %v4022 = vmax.f32 %v4017, 0.0
  %v4023 = vpack.c.bf16 %v4022, %v4022
  %v4024 = vld [vmem:[%s8] sm:$0xf]
  %v4025 = vld [vmem:[%s8 + $0x4] sm:$0xf]
  %v4026 = vld [vmem:[%s8 + $0x8] sm:$0xf]
  %v4027 = vld [vmem:[%s8 + $0xc] sm:$0xf]
  %v4028 = vld [vmem:[%s8 + $0x10] sm:$0xf]
  %v4029 = vld [vmem:[%s8 + $0x14] sm:$0xf]
  %v4030 = vld [vmem:[%s8 + $0x18] sm:$0x1]
  %v4038 = vunpack.c.l.b16 %v4024
  %v4039 = vunpack.c.l.b16 %v4025
  %v4040 = vunpack.c.l.b16 %v4026
  %v4041 = vunpack.c.l.b16 %v4027
  %v4042 = vunpack.c.l.b16 %v4028
  %v4043 = vunpack.c.l.b16 %v4029
  %v4044 = vunpack.c.l.b16 %v4030
  %v4045 = vpack.c.b16 %v4039, %v4038
  %v4046 = vpack.c.b16 %v4041, %v4040
  %v4047 = vpack.c.b16 %v4043, %v4042
  %v4048 = vpack.c.b16 %v4044, %v4044
  %v4053 = vsel %vm243, %v4023, 0
  %v4056 = vsel %vm247, %v4048, 0
  %4058 = vmatprep.subr.bf16.mxu0 0
  %4059 = vmatpush1.bf16.msra.mxu0 0
  %4060 = vmatprep.subr.bf16.mxu0 0
  %4061 = vmatpush1.bf16.msra.mxu0 0
  %4062 = vmatprep.subr.bf16.mxu0 0
  %4063 = vmatpush1.bf16.msra.mxu0 0
  %4064 = vmatprep.subr.bf16.mxu0 0
  %4065 = vmatpush1.bf16.msra.mxu0 0
  %4066 = vmatprep.subr.bf16.mxu0 0
  %4067 = vmatpush1.bf16.msra.mxu0 %v4056
  %4068 = vmatprep.subr.bf16.mxu0 0
  %4069 = vmatpush1.bf16.msra.mxu0 %v4047
  %4070 = vmatprep.subr.bf16.mxu0 0
  %4071 = vmatpush1.bf16.msra.mxu0 %v4046
  %4072 = vmatprep.subr.bf16.mxu0 0
  %4073 = vmatpush1.bf16.msra.mxu0 %v4045
  %4074 = vmatprep.subr.bf16.mxu0 0
  %4075 = vmatpush2.bf16.msra.mxu0 0
  %4076 = vmatprep.subr.bf16.mxu0 0
  %4077 = vmatpush2.bf16.msra.mxu0 0
  %4078 = vmatprep.subr.bf16.mxu0 0
  %4079 = vmatpush2.bf16.msra.mxu0 0
  %4080 = vmatprep.subr.bf16.mxu0 0
  %4081 = vmatpush2.bf16.msra.mxu0 0
  %4082 = vmatprep.subr.bf16.mxu0 0
  %4083 = vmatpush2.bf16.msra.mxu0 0
  %4084 = vmatprep.subr.bf16.mxu0 0
  %4085 = vmatpush2.bf16.msra.mxu0 0
  %4086 = vmatprep.subr.bf16.mxu0 0
  %4087 = vmatpush2.bf16.msra.mxu0 0
  %4088 = vmatprep.subr.bf16.mxu0 0
  %4089 = vmatpush2.bf16.msra.mxu0 0
  %4090 = vmatprep.mubr.bf16.mxu0 0
  %4091 = vmatmul.mubr.bf16.gmra.mxu0 %v4053
  %v4092 = vpop.f32.mrf.mxu0
  %v4093 = vadd.f32 %v64, %v4092
  %v4094 = vpop.f32.mrf.mxu0
  %v4095 = vpop.f32.mrf.mxu0
  %v4096 = vpop.f32.mrf.mxu0
  %4097 = vdwg.mxu0
  %v4098 = vmax.f32 %v4093, 0.0
  %v4099 = vpack.c.bf16 %v4098, %v4098
  %v4100 = vld [vmem:[%s10] sm:$0xff]
  %v4101 = vld [vmem:[%s10 + $0x8] sm:$0xf]
  %v4102 = vld [vmem:[%s10 + $0xc] sm:$0xff]
  %v4103 = vld [vmem:[%s10 + $0x14] sm:$0xf]
  %v4104 = vld [vmem:[%s10 + $0x18] sm:$0xff]
  %v4105 = vld [vmem:[%s10 + $0x20] sm:$0xf]
  %v4106 = vld [vmem:[%s10 + $0x24] sm:$0xff]
  %v4107 = vld [vmem:[%s10 + $0x2c] sm:$0xf]
  %v4108 = vld [vmem:[%s10 + $0x30] sm:$0xff]
  %v4109 = vld [vmem:[%s10 + $0x38] sm:$0xf]
  %v4110 = vld [vmem:[%s10 + $0x3c] sm:$0xff]
  %v4111 = vld [vmem:[%s10 + $0x44] sm:$0xf]
  %v4112 = vld [vmem:[%s10 + $0x48] sm:$0x11]
  %v4113 = vld [vmem:[%s10 + $0x50] sm:$0x1]
  %v4128 = vunpack.c.l.b16 %v4100
  %v4129 = vunpack.c.h.b16 %v4100
  %v4130 = vunpack.c.l.b16 %v4101
  %v4131 = vunpack.c.l.b16 %v4102
  %v4132 = vunpack.c.h.b16 %v4102
  %v4133 = vunpack.c.l.b16 %v4103
  %v4134 = vunpack.c.l.b16 %v4104
  %v4135 = vunpack.c.h.b16 %v4104
  %v4136 = vunpack.c.l.b16 %v4105
  %v4137 = vunpack.c.l.b16 %v4106
  %v4138 = vunpack.c.h.b16 %v4106
  %v4139 = vunpack.c.l.b16 %v4107
  %v4140 = vunpack.c.l.b16 %v4108
  %v4141 = vunpack.c.h.b16 %v4108
  %v4142 = vunpack.c.l.b16 %v4109
  %v4143 = vunpack.c.l.b16 %v4110
  %v4144 = vunpack.c.h.b16 %v4110
  %v4145 = vunpack.c.l.b16 %v4111
  %v4146 = vunpack.c.l.b16 %v4112
  %v4147 = vunpack.c.h.b16 %v4112
  %v4148 = vunpack.c.l.b16 %v4113
  %v4149 = vpack.c.b16 %v4131, %v4128
  %v4150 = vpack.c.b16 %v4132, %v4129
  %v4151 = vpack.c.b16 %v4133, %v4130
  %v4152 = vpack.c.b16 %v4137, %v4134
  %v4153 = vpack.c.b16 %v4138, %v4135
  %v4154 = vpack.c.b16 %v4139, %v4136
  %v4155 = vpack.c.b16 %v4143, %v4140
  %v4156 = vpack.c.b16 %v4144, %v4141
  %v4157 = vpack.c.b16 %v4145, %v4142
  %v4158 = vpack.c.b16 %v4146, %v4146
  %v4159 = vpack.c.b16 %v4147, %v4147
  %v4160 = vpack.c.b16 %v4148, %v4148
  %v4171 = vsel %vm243, %v4099, 0
  %v4174 = vsel %vm247, %v4158, 0
  %v4177 = vsel %vm247, %v4159, 0
  %v4180 = vsel %vm247, %v4160, 0
  %4182 = vmatprep.subr.bf16.mxu0 0
  %4183 = vmatpush1.bf16.msra.mxu0 0
  %4184 = vmatprep.subr.bf16.mxu0 0
  %4185 = vmatpush1.bf16.msra.mxu0 0
  %4186 = vmatprep.subr.bf16.mxu0 0
  %4187 = vmatpush1.bf16.msra.mxu0 0
  %4188 = vmatprep.subr.bf16.mxu0 0
  %4189 = vmatpush1.bf16.msra.mxu0 0
  %4190 = vmatprep.subr.bf16.mxu0 %v4177
  %4191 = vmatpush1.bf16.msra.mxu0 %v4174
  %4192 = vmatprep.subr.bf16.mxu0 %v4156
  %4193 = vmatpush1.bf16.msra.mxu0 %v4155
  %4194 = vmatprep.subr.bf16.mxu0 %v4153
  %4195 = vmatpush1.bf16.msra.mxu0 %v4152
  %4196 = vmatprep.subr.bf16.mxu0 %v4150
  %4197 = vmatpush1.bf16.msra.mxu0 %v4149
  %4198 = vmatprep.subr.bf16.mxu0 0
  %4199 = vmatpush2.bf16.msra.mxu0 0
  %4200 = vmatprep.subr.bf16.mxu0 0
  %4201 = vmatpush2.bf16.msra.mxu0 0
  %4202 = vmatprep.subr.bf16.mxu0 0
  %4203 = vmatpush2.bf16.msra.mxu0 0
  %4204 = vmatprep.subr.bf16.mxu0 0
  %4205 = vmatpush2.bf16.msra.mxu0 0
  %4206 = vmatprep.subr.bf16.mxu0 0
  %4207 = vmatpush2.bf16.msra.mxu0 0
  %4208 = vmatprep.subr.bf16.mxu0 0
  %4209 = vmatpush2.bf16.msra.mxu0 0
  %4210 = vmatprep.subr.bf16.mxu0 0
  %4211 = vmatpush2.bf16.msra.mxu0 0
  %4212 = vmatprep.subr.bf16.mxu0 0
  %4213 = vmatpush2.bf16.msra.mxu0 0
  %4214 = vmatprep.mubr.bf16.mxu0 0
  %4215 = vmatmul.mubr.bf16.gmra.mxu0 %v4171
  %v4216 = vpop.f32.mrf.mxu0
  %v4217 = vadd.f32 %v71, %v4216
  %v4218 = vpop.f32.mrf.mxu0
  %v4219 = vadd.f32 %v75, %v4218
  %v4220 = vpop.f32.mrf.mxu0
  %v4221 = vpop.f32.mrf.mxu0
  %4222 = vdwg.mxu0
  %4223 = vmatprep.subr.bf16.mxu0 0
  %4224 = vmatpush1.bf16.msra.mxu0 0
  %4225 = vmatprep.subr.bf16.mxu0 0
  %4226 = vmatpush1.bf16.msra.mxu0 0
  %4227 = vmatprep.subr.bf16.mxu0 0
  %4228 = vmatpush1.bf16.msra.mxu0 0
  %4229 = vmatprep.subr.bf16.mxu0 0
  %4230 = vmatpush1.bf16.msra.mxu0 0
  %4231 = vmatprep.subr.bf16.mxu0 0
  %4232 = vmatpush1.bf16.msra.mxu0 %v4180
  %4233 = vmatprep.subr.bf16.mxu0 0
  %4234 = vmatpush1.bf16.msra.mxu0 %v4157
  %4235 = vmatprep.subr.bf16.mxu0 0
  %4236 = vmatpush1.bf16.msra.mxu0 %v4154
  %4237 = vmatprep.subr.bf16.mxu0 0
  %4238 = vmatpush1.bf16.msra.mxu0 %v4151
  %4239 = vmatprep.subr.bf16.mxu0 0
  %4240 = vmatpush2.bf16.msra.mxu0 0
  %4241 = vmatprep.subr.bf16.mxu0 0
  %4242 = vmatpush2.bf16.msra.mxu0 0
  %4243 = vmatprep.subr.bf16.mxu0 0
  %4244 = vmatpush2.bf16.msra.mxu0 0
  %4245 = vmatprep.subr.bf16.mxu0 0
  %4246 = vmatpush2.bf16.msra.mxu0 0
  %4247 = vmatprep.subr.bf16.mxu0 0
  %4248 = vmatpush2.bf16.msra.mxu0 0
  %4249 = vmatprep.subr.bf16.mxu0 0
  %4250 = vmatpush2.bf16.msra.mxu0 0
  %4251 = vmatprep.subr.bf16.mxu0 0
  %4252 = vmatpush2.bf16.msra.mxu0 0
  %4253 = vmatprep.subr.bf16.mxu0 0
  %4254 = vmatpush2.bf16.msra.mxu0 0
  %4255 = vmatprep.mubr.bf16.mxu0 0
  %4256 = vmatmul.mubr.bf16.gmra.mxu0 %v4171
  %v4257 = vpop.f32.mrf.mxu0
  %v4258 = vadd.f32 %v79, %v4257
  %v4259 = vpop.f32.mrf.mxu0
  %v4260 = vpop.f32.mrf.mxu0
  %v4261 = vpop.f32.mrf.mxu0
  %4262 = vdwg.mxu0
  %v4263 = vtanh.pop %v4217
  %v4264 = vtanh.pop %v4219
  %v4265 = vtanh.pop %v4258
  %s4266 = scalar_lea.vmem %s1, 72
  %v4267 = vld [vmem:[%s4266] sm:$0xff]
  %v4268 = vld [vmem:[%s4266 + $0x8] sm:$0xf]
  %v4270 = vcombine.high %v4267, %v4267
  %v4272 = vmul.f32 %v4263, %v4267
  %v4273 = vmul.f32 %v4264, %v4270
  %v4274 = vmul.f32 %v4265, %v4268
  %v4275 = vpack.c.bf16 %v4272, %v4272
  %v4276 = vpack.c.bf16 %v4273, %v4273
  %v4277 = vpack.c.bf16 %v4274, %v4274
  %v4278 = vld [vmem:[%s12] sm:$0xf]
  %v4279 = vld [vmem:[%s12 + $0x4] sm:$0xf]
  %v4280 = vld [vmem:[%s12 + $0x8] sm:$0xf]
  %v4281 = vld [vmem:[%s12 + $0xc] sm:$0xf]
  %v4282 = vld [vmem:[%s12 + $0x10] sm:$0xf]
  %v4283 = vld [vmem:[%s12 + $0x14] sm:$0xf]
  %v4284 = vld [vmem:[%s12 + $0x18] sm:$0xf]
  %v4285 = vld [vmem:[%s12 + $0x1c] sm:$0xf]
  %v4286 = vld [vmem:[%s12 + $0x20] sm:$0xf]
  %v4287 = vld [vmem:[%s12 + $0x24] sm:$0xf]
  %v4288 = vld [vmem:[%s12 + $0x28] sm:$0xf]
  %v4289 = vld [vmem:[%s12 + $0x2c] sm:$0xf]
  %v4290 = vld [vmem:[%s12 + $0x30] sm:$0xf]
  %v4291 = vld [vmem:[%s12 + $0x34] sm:$0xf]
  %v4292 = vld [vmem:[%s12 + $0x38] sm:$0xf]
  %v4293 = vld [vmem:[%s12 + $0x3c] sm:$0xf]
  %v4294 = vld [vmem:[%s12 + $0x40] sm:$0xf]
  %v4295 = vld [vmem:[%s12 + $0x44] sm:$0xf]
  %v4296 = vld [vmem:[%s12 + $0x48] sm:$0xf]
  %v4297 = vld [vmem:[%s12 + $0x4c] sm:$0xf]
  %v4298 = vld [vmem:[%s12 + $0x50] sm:$0xf]
  %v4299 = vld [vmem:[%s12 + $0x54] sm:$0xf]
  %v4300 = vld [vmem:[%s12 + $0x58] sm:$0xf]
  %v4301 = vld [vmem:[%s12 + $0x5c] sm:$0xf]
  %v4302 = vld [vmem:[%s12 + $0x60] sm:$0xf]
  %v4303 = vld [vmem:[%s12 + $0x64] sm:$0xf]
  %v4304 = vld [vmem:[%s12 + $0x68] sm:$0xf]
  %v4305 = vld [vmem:[%s12 + $0x6c] sm:$0xf]
  %v4306 = vld [vmem:[%s12 + $0x70] sm:$0xf]
  %v4307 = vld [vmem:[%s12 + $0x74] sm:$0xf]
  %v4308 = vld [vmem:[%s12 + $0x78] sm:$0xf]
  %v4309 = vld [vmem:[%s12 + $0x7c] sm:$0xf]
  %v4310 = vld [vmem:[%s12 + $0x80] sm:$0xf]
  %v4311 = vld [vmem:[%s12 + $0x84] sm:$0xf]
  %v4312 = vld [vmem:[%s12 + $0x88] sm:$0xf]
  %v4313 = vld [vmem:[%s12 + $0x8c] sm:$0xf]
  %v4350 = vunpack.c.l.b16 %v4278
  %v4351 = vunpack.c.l.b16 %v4279
  %v4352 = vunpack.c.l.b16 %v4280
  %v4353 = vunpack.c.l.b16 %v4281
  %v4354 = vunpack.c.l.b16 %v4282
  %v4355 = vunpack.c.l.b16 %v4283
  %v4356 = vunpack.c.l.b16 %v4284
  %v4357 = vunpack.c.l.b16 %v4285
  %v4358 = vunpack.c.l.b16 %v4286
  %v4359 = vunpack.c.l.b16 %v4287
  %v4360 = vunpack.c.l.b16 %v4288
  %v4361 = vunpack.c.l.b16 %v4289
  %v4362 = vunpack.c.l.b16 %v4290
  %v4363 = vunpack.c.l.b16 %v4291
  %v4364 = vunpack.c.l.b16 %v4292
  %v4365 = vunpack.c.l.b16 %v4293
  %v4366 = vunpack.c.l.b16 %v4294
  %v4367 = vunpack.c.l.b16 %v4295
  %v4368 = vunpack.c.l.b16 %v4296
  %v4369 = vunpack.c.l.b16 %v4297
  %v4370 = vunpack.c.l.b16 %v4298
  %v4371 = vunpack.c.l.b16 %v4299
  %v4372 = vunpack.c.l.b16 %v4300
  %v4373 = vunpack.c.l.b16 %v4301
  %v4374 = vunpack.c.l.b16 %v4302
  %v4375 = vunpack.c.l.b16 %v4303
  %v4376 = vunpack.c.l.b16 %v4304
  %v4377 = vunpack.c.l.b16 %v4305
  %v4378 = vunpack.c.l.b16 %v4306
  %v4379 = vunpack.c.l.b16 %v4307
  %v4380 = vunpack.c.l.b16 %v4308
  %v4381 = vunpack.c.l.b16 %v4309
  %v4382 = vunpack.c.l.b16 %v4310
  %v4383 = vunpack.c.l.b16 %v4311
  %v4384 = vunpack.c.l.b16 %v4312
  %v4385 = vunpack.c.l.b16 %v4313
  %v4386 = vpack.c.b16 %v4351, %v4350
  %v4387 = vpack.c.b16 %v4353, %v4352
  %v4388 = vpack.c.b16 %v4355, %v4354
  %v4389 = vpack.c.b16 %v4357, %v4356
  %v4390 = vpack.c.b16 %v4359, %v4358
  %v4391 = vpack.c.b16 %v4361, %v4360
  %v4392 = vpack.c.b16 %v4363, %v4362
  %v4393 = vpack.c.b16 %v4365, %v4364
  %v4394 = vpack.c.b16 %v4367, %v4366
  %v4395 = vpack.c.b16 %v4369, %v4368
  %v4396 = vpack.c.b16 %v4371, %v4370
  %v4397 = vpack.c.b16 %v4373, %v4372
  %v4398 = vpack.c.b16 %v4375, %v4374
  %v4399 = vpack.c.b16 %v4377, %v4376
  %v4400 = vpack.c.b16 %v4379, %v4378
  %v4401 = vpack.c.b16 %v4381, %v4380
  %v4402 = vpack.c.b16 %v4383, %v4382
  %v4403 = vpack.c.b16 %v4385, %v4384
  %v4423 = vsel %vm169, %v4277, 0
  %4425 = vmatprep.subr.bf16.mxu0 0
  %4426 = vmatpush1.bf16.msra.mxu0 %v4393
  %4427 = vmatprep.subr.bf16.mxu0 0
  %4428 = vmatpush1.bf16.msra.mxu0 %v4392
  %4429 = vmatprep.subr.bf16.mxu0 0
  %4430 = vmatpush1.bf16.msra.mxu0 %v4391
  %4431 = vmatprep.subr.bf16.mxu0 0
  %4432 = vmatpush1.bf16.msra.mxu0 %v4390
  %4433 = vmatprep.subr.bf16.mxu0 0
  %4434 = vmatpush1.bf16.msra.mxu0 %v4389
  %4435 = vmatprep.subr.bf16.mxu0 0
  %4436 = vmatpush1.bf16.msra.mxu0 %v4388
  %4437 = vmatprep.subr.bf16.mxu0 0
  %4438 = vmatpush1.bf16.msra.mxu0 %v4387
  %4439 = vmatprep.subr.bf16.mxu0 0
  %4440 = vmatpush1.bf16.msra.mxu0 %v4386
  %4441 = vmatprep.subr.bf16.mxu0 0
  %4442 = vmatpush2.bf16.msra.mxu0 %v4401
  %4443 = vmatprep.subr.bf16.mxu0 0
  %4444 = vmatpush2.bf16.msra.mxu0 %v4400
  %4445 = vmatprep.subr.bf16.mxu0 0
  %4446 = vmatpush2.bf16.msra.mxu0 %v4399
  %4447 = vmatprep.subr.bf16.mxu0 0
  %4448 = vmatpush2.bf16.msra.mxu0 %v4398
  %4449 = vmatprep.subr.bf16.mxu0 0
  %4450 = vmatpush2.bf16.msra.mxu0 %v4397
  %4451 = vmatprep.subr.bf16.mxu0 0
  %4452 = vmatpush2.bf16.msra.mxu0 %v4396
  %4453 = vmatprep.subr.bf16.mxu0 0
  %4454 = vmatpush2.bf16.msra.mxu0 %v4395
  %4455 = vmatprep.subr.bf16.mxu0 0
  %4456 = vmatpush2.bf16.msra.mxu0 %v4394
  %4457 = vmatprep.mubr.bf16.mxu0 %v4276
  %4458 = vmatmul.mubr.bf16.gmra.mxu0 %v4275
  %v4459 = vpop.f32.mrf.mxu0
  %v4460 = vadd.f32 0.0, %v4459
  %v4461 = vpop.f32.mrf.mxu0
  %v4462 = vpop.f32.mrf.mxu0
  %v4463 = vpop.f32.mrf.mxu0
  %4464 = vdwg.mxu0
  %4465 = vmatprep.subr.bf16.mxu0 0
  %4466 = vmatpush1.bf16.msra.mxu0 0
  %4467 = vmatprep.subr.bf16.mxu0 0
  %4468 = vmatpush1.bf16.msra.mxu0 0
  %4469 = vmatprep.subr.bf16.mxu0 0
  %4470 = vmatpush1.bf16.msra.mxu0 0
  %4471 = vmatprep.subr.bf16.mxu0 0
  %4472 = vmatpush1.bf16.msra.mxu0 0
  %4473 = vmatprep.subr.bf16.mxu0 0
  %4474 = vmatpush1.bf16.msra.mxu0 0
  %4475 = vmatprep.subr.bf16.mxu0 0
  %4476 = vmatpush1.bf16.msra.mxu0 0
  %4477 = vmatprep.subr.bf16.mxu0 0
  %4478 = vmatpush1.bf16.msra.mxu0 %v4403
  %4479 = vmatprep.subr.bf16.mxu0 0
  %4480 = vmatpush1.bf16.msra.mxu0 %v4402
  %4481 = vmatprep.subr.bf16.mxu0 0
  %4482 = vmatpush2.bf16.msra.mxu0 0
  %4483 = vmatprep.subr.bf16.mxu0 0
  %4484 = vmatpush2.bf16.msra.mxu0 0
  %4485 = vmatprep.subr.bf16.mxu0 0
  %4486 = vmatpush2.bf16.msra.mxu0 0
  %4487 = vmatprep.subr.bf16.mxu0 0
  %4488 = vmatpush2.bf16.msra.mxu0 0
  %4489 = vmatprep.subr.bf16.mxu0 0
  %4490 = vmatpush2.bf16.msra.mxu0 0
  %4491 = vmatprep.subr.bf16.mxu0 0
  %4492 = vmatpush2.bf16.msra.mxu0 0
  %4493 = vmatprep.subr.bf16.mxu0 0
  %4494 = vmatpush2.bf16.msra.mxu0 0
  %4495 = vmatprep.subr.bf16.mxu0 0
  %4496 = vmatpush2.bf16.msra.mxu0 0
  %4497 = vmatprep.mubr.bf16.mxu0 0
  %4498 = vmatmul.mubr.bf16.gmra.mxu0 %v4423
  %v4499 = vpop.f32.mrf.mxu0
  %v4500 = vadd.f32 %v4460, %v4499
  %v4501 = vpop.f32.mrf.mxu0
  %v4502 = vpop.f32.mrf.mxu0
  %v4503 = vpop.f32.mrf.mxu0
  %4504 = vdwg.mxu0
  %v4505 = vadd.f32 %v3883, %v4500
  %s4506 = scalar_lea.vmem %s13, 28
  %4507 = vst.msk [vmem:[%s4506] sm:$0xf] %vm150, %v4505
  // Predicated region
  $region54: #{run_neural_cde.1} parent=0 // pred_check
    _
  $region55: #{run_neural_cde.1} parent=0 // pred_check_branch
    %4509 = sbr.rel (0) target = $region57
  $region56: #{run_neural_cde.1} parent=0 // pred_region
    _
  $region57: #{run_neural_cde.1} parent=0 // pred_fallthru
    _
  // Predicated region
  $region58: #{run_neural_cde.1} parent=0 // pred_check
    _
  $region59: #{run_neural_cde.1} parent=0 // pred_check_branch
    %4511 = sbr.rel (0) target = $region61
  $region60: #{run_neural_cde.1} parent=0 // pred_region
    _
  $region61: #{run_neural_cde.1} parent=0 // pred_fallthru
    _

</llo_original>
